<compile_context>
chip_gen: v7x
topology: tpu7x:2x2x1
jax: 0.10.0
libtpu: 0.0.40
codegen_flags: <defaults>
</compile_context>

<pallas_src>
import jax
import jax.numpy as jnp
import numpy as np
from jax.experimental import pallas as pl
from jax.experimental.pallas import tpu as pltpu

K = 4            # every ConvTranspose2d in the module uses a 4x4 kernel
BN_EPS = 1e-5    # PyTorch BatchNorm2d default
LANE = 128
MAX_TILE_M = 1024


def _round_up(x, m):
    return (x + m - 1) // m * m


def _pick_tile(mp):
    """Row-tile size and padded row count (sublane-aligned, tile-divisible)."""
    mp8 = _round_up(max(mp, 1), 8)
    tile = min(MAX_TILE_M, mp8)
    return _round_up(mp8, tile), tile


# ----------------------------------------------------------------------------
# Pallas kernels
# ----------------------------------------------------------------------------
def _gemm_stats_kernel(cols_ref, w_ref, y_ref, sum_ref, sq_ref):
    # cols: (TILE_M, Kd) bf16, w: (Kd, Co) bf16 -> f32 MXU accumulation.
    acc = jnp.dot(cols_ref[...], w_ref[...], preferred_element_type=jnp.float32)
    y_ref[...] = acc.astype(y_ref.dtype)
    # Per-tile, per-channel partial sums for the two-pass BatchNorm.
    s = jnp.sum(acc, axis=0, keepdims=True)            # (1, Co)
    q = jnp.sum(acc * acc, axis=0, keepdims=True)      # (1, Co)
    sum_ref[...] = jnp.broadcast_to(s, sum_ref.shape)  # (8, Co)
    sq_ref[...] = jnp.broadcast_to(q, sq_ref.shape)


def _gemm_tanh_kernel(cols_ref, w_ref, y_ref):
    acc = jnp.dot(cols_ref[...], w_ref[...], preferred_element_type=jnp.float32)
    y_ref[...] = jnp.tanh(acc).astype(y_ref.dtype)


def _bn_relu_kernel(y_ref, scale_ref, shift_ref, o_ref):
    y = y_ref[...].astype(jnp.float32)
    o = jnp.maximum(y * scale_ref[...] + shift_ref[...], 0.0)
    o_ref[...] = o.astype(o_ref.dtype)


# ----------------------------------------------------------------------------
# pallas_call wrappers
# ----------------------------------------------------------------------------
def _phase_gemm_stats(cols, w, tile_m):
    """Per-phase GEMM + BN partial stats.

    cols is either (P, Mp, Kd) (one cols matrix per phase) or (Mp, Kd)
    (a single matrix shared by all phases, e.g. the 1x1-input first layer).
    """
    P, Kd, Co = w.shape
    if cols.ndim == 2:
        Mp = cols.shape[0]
        cols_spec = pl.BlockSpec((tile_m, Kd), lambda p, t: (t, 0))
    else:
        Mp = cols.shape[1]
        cols_spec = pl.BlockSpec((None, tile_m, Kd), lambda p, t: (p, t, 0))
    T = Mp // tile_m
    return pl.pallas_call(
        _gemm_stats_kernel,
        grid=(P, T),  # T innermost -> per-phase weight block stays resident
        in_specs=[
            cols_spec,
            pl.BlockSpec((None, Kd, Co), lambda p, t: (p, 0, 0)),
        ],
        out_specs=[
            pl.BlockSpec((None, tile_m, Co), lambda p, t: (p, t, 0)),
            pl.BlockSpec((None, None, 8, Co), lambda p, t: (p, t, 0, 0)),
            pl.BlockSpec((None, None, 8, Co), lambda p, t: (p, t, 0, 0)),
        ],
        out_shape=(
            jax.ShapeDtypeStruct((P, Mp, Co), jnp.bfloat16),
            jax.ShapeDtypeStruct((P, T, 8, Co), jnp.float32),
            jax.ShapeDtypeStruct((P, T, 8, Co), jnp.float32),
        ),
        compiler_params=pltpu.CompilerParams(
            dimension_semantics=("parallel", "parallel")),
    )(cols, w)


def _phase_gemm_tanh(cols, w, tile_m):
    P, Mp, Kd = cols.shape
    Co = w.shape[2]  # lane-padded to a multiple of 128
    T = Mp // tile_m
    return pl.pallas_call(
        _gemm_tanh_kernel,
        grid=(P, T),
        in_specs=[
            pl.BlockSpec((None, tile_m, Kd), lambda p, t: (p, t, 0)),
            pl.BlockSpec((None, Kd, Co), lambda p, t: (p, 0, 0)),
        ],
        out_specs=pl.BlockSpec((None, tile_m, Co), lambda p, t: (p, t, 0)),
        out_shape=jax.ShapeDtypeStruct((P, Mp, Co), jnp.float32),
        compiler_params=pltpu.CompilerParams(
            dimension_semantics=("parallel", "parallel")),
    )(cols, w)


def _bn_relu_apply(y, scale, shift, tile_m):
    P, Mp, Co = y.shape
    T = Mp // tile_m
    return pl.pallas_call(
        _bn_relu_kernel,
        grid=(P, T),
        in_specs=[
            pl.BlockSpec((None, tile_m, Co), lambda p, t: (p, t, 0)),
            pl.BlockSpec((1, Co), lambda p, t: (0, 0)),
            pl.BlockSpec((1, Co), lambda p, t: (0, 0)),
        ],
        out_specs=pl.BlockSpec((None, tile_m, Co), lambda p, t: (p, t, 0)),
        out_shape=jax.ShapeDtypeStruct((P, Mp, Co), jnp.bfloat16),
        compiler_params=pltpu.CompilerParams(
            dimension_semantics=("parallel", "parallel")),
    )(y, scale, shift)


# ----------------------------------------------------------------------------
# JAX glue: phase im2col (non-zero taps only), pixel-shuffle, BN stat folding
# ----------------------------------------------------------------------------
def _phase_cols_s2(a):
    """Non-zero-tap im2col for stride-2, pad-1, 4x4 ConvTranspose2d.

    a: (N, H, W, C)  ->  (4, N*H*W, 4*C); phase p = py*2+px covers output
    pixels (2m+py, 2l+px), each a 2x2-tap dot with phase-specific weights.
    """
    N, H, W, C = a.shape
    ap = jnp.pad(a, ((0, 0), (1, 1), (1, 1), (0, 0)))
    phases = []
    for py in range(2):
        for px in range(2):
            taps = [ap[:, py + dy:py + dy + H, px + dx:px + dx + W, :]
                    for dy in range(2) for dx in range(2)]
            phases.append(
                jnp.concatenate(taps, axis=-1).reshape(N * H * W, 4 * C))
    return jnp.stack(phases, axis=0)


def _interleave_s2(y, N, H, W, Co):
    """(4, N*H*W, Co) phase outputs -> (N, 2H, 2W, Co) (pixel shuffle)."""
    y = y.reshape(2, 2, N, H, W, Co)
    y = jnp.transpose(y, (2, 3, 0, 4, 1, 5))
    return y.reshape(N, 2 * H, 2 * W, Co)


def _pad_rows(cols, mp_pad):
    P, Mp, Kd = cols.shape
    if mp_pad == Mp:
        return cols
    return jnp.pad(cols, ((0, 0), (0, mp_pad - Mp), (0, 0)))


def _bn_from_stats(s_sum, s_sq, count, gamma, beta):
    # Padded rows are all-zero cols -> contribute 0 to sum/sumsq; divide by the
    # true element count so training-mode (biased) batch stats are exact.
    tot = jnp.sum(s_sum[:, :, 0, :], axis=(0, 1))
    totq = jnp.sum(s_sq[:, :, 0, :], axis=(0, 1))
    mean = tot / count
    var = totq / count - mean * mean
    scale = gamma * jax.lax.rsqrt(var + BN_EPS)
    shift = beta - mean * scale
    return (scale.reshape(1, -1).astype(jnp.float32),
            shift.reshape(1, -1).astype(jnp.float32))


# ----------------------------------------------------------------------------
# Layers
# ----------------------------------------------------------------------------
def _layer1(x2, w_ph, gamma, beta):
    """ConvTranspose2d(Cin, Co, 4, 1, 0) on 1x1 input + BN + ReLU.

    x2: (N, Cin) bf16, w_ph: (16, Cin, Co) bf16 -> (N, 4, 4, Co) bf16 NHWC.
    The single (N, Cin) matrix is shared by all 16 phase GEMMs via the
    BlockSpec index_map (no 16x broadcast materialized in HBM).
    """
    N, Cin = x2.shape
    Co = w_ph.shape[2]
    mp_pad, tile = _pick_tile(N)
    xp = jnp.pad(x2, ((0, mp_pad - N), (0, 0)))                # (mp_pad, Cin)
    y, s_sum, s_sq = _phase_gemm_stats(xp, w_ph, tile)
    scale, shift = _bn_from_stats(s_sum, s_sq, 16.0 * N, gamma, beta)
    act = _bn_relu_apply(y, scale, shift, tile)[:, :N, :]      # (16, N, Co)
    return jnp.transpose(act.reshape(4, 4, N, Co), (2, 0, 1, 3))


def _layer_up(a, w_ph, gamma, beta):
    """Stride-2 ConvTranspose2d + BN(train stats) + ReLU, NHWC bf16 in/out."""
    N, H, W, Cin = a.shape
    Co = w_ph.shape[2]
    Mp = N * H * W
    mp_pad, tile = _pick_tile(Mp)
    cols = _pad_rows(_phase_cols_s2(a), mp_pad)
    y, s_sum, s_sq = _phase_gemm_stats(cols, w_ph, tile)
    scale, shift = _bn_from_stats(s_sum, s_sq, 4.0 * Mp, gamma, beta)
    act = _bn_relu_apply(y, scale, shift, tile)[:, :Mp, :]
    return _interleave_s2(act, N, H, W, Co)


def _layer_final(a, w_ph_padded, nc):
    """Stride-2 ConvTranspose2d + Tanh; lane-dense (128-wide) GEMM output."""
    N, H, W, Cin = a.shape
    Mp = N * H * W
    mp_pad, tile = _pick_tile(Mp)
    cols = _pad_rows(_phase_cols_s2(a), mp_pad)
    y = _phase_gemm_tanh(cols, w_ph_padded, tile)   # (4, mp_pad, 128) f32
    y = y[:, :Mp, :nc]
    return _interleave_s2(y, N, H, W, nc)


# ----------------------------------------------------------------------------
# Weight preparation (torch ConvTranspose2d layout -> phase GEMM weights)
# ----------------------------------------------------------------------------
def _prep_w1(w):
    # (Cin, Cout, 4, 4) -> (16, Cin, Cout): out[:, oy, ox, :] = x @ w[:, :, oy, ox]
    return jnp.transpose(w, (2, 3, 0, 1)).reshape(
        16, w.shape[0], w.shape[1]).astype(jnp.bfloat16)


def _prep_w_s2(w):
    # (Cin, Cout, 4, 4) -> (4, 4*Cin, Cout): only the non-zero taps per phase.
    # Output row 2m+py, col 2l+px reads xpad[m+py+dy, l+px+dx] with kernel tap
    # (3-py-2*dy, 3-px-2*dx)   [derived from oy = iy*2 - 1 + ky].
    mats = []
    for py in range(2):
        for px in range(2):
            taps = [w[:, :, 3 - py - 2 * dy, 3 - px - 2 * dx]
                    for dy in range(2) for dx in range(2)]
            mats.append(jnp.concatenate(taps, axis=0))       # (4*Cin, Cout)
    return jnp.stack(mats, axis=0).astype(jnp.bfloat16)


def _prep_w_final(w):
    wp = _prep_w_s2(w)                     # (4, 4*Cin, nc)
    nc = wp.shape[2]
    return jnp.pad(wp, ((0, 0), (0, 0), (0, _round_up(nc, LANE) - nc)))


# ----------------------------------------------------------------------------
# ACGAN_Generator.forward
# ----------------------------------------------------------------------------
def acgan_generator_forward(noise_nchw, params):
    # noise: (N, nz+1, 1, 1) -> image: (N, nc, 64, 64)
    N, Cin0 = noise_nchw.shape[0], noise_nchw.shape[1]
    nc = params["w5_raw"].shape[1]
    x = noise_nchw.reshape(N, Cin0).astype(jnp.bfloat16)
    x = _layer1(x, params["w1"], params["g1"], params["b1"])       # (N,4,4,8g)
    x = _layer_up(x, params["w2"], params["g2"], params["b2"])     # (N,8,8,4g)
    x = _layer_up(x, params["w3"], params["g3"], params["b3"])     # (N,16,16,2g)
    x = _layer_up(x, params["w4"], params["g4"], params["b4"])     # (N,32,32,g)
    x = _layer_final(x, params["w5"], nc)                          # (N,64,64,nc)
    return jnp.transpose(x, (0, 3, 1, 2)).astype(jnp.float32)      # NCHW


def init_params(key, nz, ngf, nc):
    chans = [nz + 1, ngf * 8, ngf * 4, ngf * 2, ngf, nc]
    params = {}
    keys = jax.random.split(key, 16)
    ki = 0
    for i in range(5):
        cin, cout = chans[i], chans[i + 1]
        w = 0.02 * jax.random.normal(keys[ki], (cin, cout, K, K), jnp.float32)
        ki += 1
        params[f"w{i+1}_raw"] = w                 # torch-layout (for reference)
        if i == 0:
            params["w1"] = _prep_w1(w)
        elif i < 4:
            params[f"w{i+1}"] = _prep_w_s2(w)
        else:
            params["w5"] = _prep_w_final(w)
        if i < 4:                                 # BatchNorm affine params
            params[f"g{i+1}"] = 1.0 + 0.1 * jax.random.normal(
                keys[ki], (cout,), jnp.float32); ki += 1
            params[f"b{i+1}"] = 0.1 * jax.random.normal(
                keys[ki], (cout,), jnp.float32); ki += 1
    return params


# ----------------------------------------------------------------------------
# Pure-JAX reference (XLA conv, f32) for a sanity check
# ----------------------------------------------------------------------------
def _ref_deconv(x, w, stride, pad):
    rhs = jnp.transpose(w[:, :, ::-1, ::-1], (1, 0, 2, 3))  # OIHW, flipped
    return jax.lax.conv_general_dilated(
        x, rhs, window_strides=(1, 1),
        padding=[(K - 1 - pad, K - 1 - pad)] * 2,
        lhs_dilation=(stride, stride),
        dimension_numbers=("NCHW", "OIHW", "NCHW"),
        precision=jax.lax.Precision.HIGHEST)


def _ref_bn_relu(x, gamma, beta):
    mean = x.mean(axis=(0, 2, 3), keepdims=True)
    var = jnp.square(x - mean).mean(axis=(0, 2, 3), keepdims=True)
    y = (x - mean) * jax.lax.rsqrt(var + BN_EPS)
    y = y * gamma.reshape(1, -1, 1, 1) + beta.reshape(1, -1, 1, 1)
    return jnp.maximum(y, 0.0)


def reference_forward(noise, params):
    x = noise.astype(jnp.float32)
    x = _ref_bn_relu(_ref_deconv(x, params["w1_raw"], 1, 0), params["g1"], params["b1"])
    x = _ref_bn_relu(_ref_deconv(x, params["w2_raw"], 2, 1), params["g2"], params["b2"])
    x = _ref_bn_relu(_ref_deconv(x, params["w3_raw"], 2, 1), params["g3"], params["b3"])
    x = _ref_bn_relu(_ref_deconv(x, params["w4_raw"], 2, 1), params["g4"], params["b4"])
    return jnp.tanh(_ref_deconv(x, params["w5_raw"], 2, 1))


if __name__ == "__main__":
    # Small config consistent with the module: nz=8, ngf=4, nc=3, batch=2.
    nz, ngf, nc, batch = 8, 4, 3, 2
    key = jax.random.PRNGKey(0)
    kp, kn = jax.random.split(key)
    params = init_params(kp, nz, ngf, nc)
    noise = jax.random.normal(kn, (batch, nz + 1, 1, 1), jnp.float32)

    out = jax.jit(acgan_generator_forward)(noise, params)
    out = jax.block_until_ready(out)
    assert out.shape == (batch, nc, 64, 64), out.shape

    ref = reference_forward(noise, params)
    np.testing.assert_allclose(np.asarray(out), np.asarray(ref),
                               atol=2e-2, rtol=2e-2)
    print("KERNEL_OK")
</pallas_src>

<mosaic_0001>
module attributes {stable_mosaic.version = 11 : i64} {
  func.func @_gemm_stats_kernel(%arg0: i32, %arg1: i32, %arg2: memref<8x9xbf16, #tpu.memory_space<vmem>>, %arg3: memref<1x9x32xbf16, #tpu.memory_space<vmem>>, %arg4: memref<1x8x32xbf16, #tpu.memory_space<vmem>>, %arg5: memref<1x1x8x32xf32, #tpu.memory_space<vmem>>, %arg6: memref<1x1x8x32xf32, #tpu.memory_space<vmem>>) attributes {dimension_semantics = [#tpu.dimension_semantics<parallel>, #tpu.dimension_semantics<parallel>], iteration_bounds = array<i64: 16, 1>, scalar_prefetch = 0 : i64, scratch_operands = 0 : i64, tpu.core_type = #tpu.core_type<tc>, window_params = [{transform_indices = @transform_0, window_bounds = array<i64: 8, 9>}, {transform_indices = @transform_1, window_bounds = array<i64: 1, 9, 32>}, {transform_indices = @transform_2, window_bounds = array<i64: 1, 8, 32>}, {transform_indices = @transform_3, window_bounds = array<i64: 1, 1, 8, 32>}, {transform_indices = @transform_4, window_bounds = array<i64: 1, 1, 8, 32>}]} {
    %c0 = arith.constant 0 : index
    %c0_0 = arith.constant 0 : index
    %0 = vector.load %arg2[%c0, %c0_0] : memref<8x9xbf16, #tpu.memory_space<vmem>>, vector<8x9xbf16>
    %c0_1 = arith.constant 0 : index
    %c0_2 = arith.constant 0 : index
    %c0_3 = arith.constant 0 : index
    %1 = vector.load %arg3[%c0_1, %c0_2, %c0_3] : memref<1x9x32xbf16, #tpu.memory_space<vmem>>, vector<1x9x32xbf16>
    %2 = vector.shape_cast %1 : vector<1x9x32xbf16> to vector<9x32xbf16>
    %cst = arith.constant dense<0.000000e+00> : vector<8x32xf32>
    %3 = tpu.matmul %0, %2, %cst {dimension_numbers = #tpu.dot_dimension_numbers<[1], [0], [0], [1], [0, 0, 1, 1], [], []>} : vector<8x9xbf16>, vector<9x32xbf16>, vector<8x32xf32> -> vector<8x32xf32>
    %4 = arith.truncf %3 : vector<8x32xf32> to vector<8x32xbf16>
    %c0_4 = arith.constant 0 : index
    %c0_5 = arith.constant 0 : index
    %c0_6 = arith.constant 0 : index
    %5 = vector.load %arg4[%c0_4, %c0_5, %c0_6] : memref<1x8x32xbf16, #tpu.memory_space<vmem>>, vector<1x8x32xbf16>
    %6 = vector.shape_cast %5 : vector<1x8x32xbf16> to vector<8x32xbf16>
    %7 = vector.shape_cast %4 : vector<8x32xbf16> to vector<1x8x32xbf16>
    tpu.vector_store %arg4[%c0_4, %c0_5, %c0_6], %7 {strides = array<i32>} : memref<1x8x32xbf16, #tpu.memory_space<vmem>>, vector<1x8x32xbf16>,
    %cst_7 = arith.constant dense<0.000000e+00> : vector<32xf32>
    %8 = vector.multi_reduction <add>, %3, %cst_7 [0] : vector<8x32xf32> to vector<32xf32>
    %9 = vector.shape_cast %8 : vector<32xf32> to vector<1x32xf32>
    %10 = arith.mulf %3, %3 : vector<8x32xf32>
    %cst_8 = arith.constant dense<0.000000e+00> : vector<32xf32>
    %11 = vector.multi_reduction <add>, %10, %cst_8 [0] : vector<8x32xf32> to vector<32xf32>
    %12 = vector.shape_cast %11 : vector<32xf32> to vector<1x32xf32>
    %13 = vector.shape_cast %9 : vector<1x32xf32> to vector<1x32xf32>
    %14 = vector.broadcast %13 : vector<1x32xf32> to vector<8x32xf32>
    %c0_9 = arith.constant 0 : index
    %c0_10 = arith.constant 0 : index
    %c0_11 = arith.constant 0 : index
    %c0_12 = arith.constant 0 : index
    %15 = vector.load %arg5[%c0_9, %c0_10, %c0_11, %c0_12] : memref<1x1x8x32xf32, #tpu.memory_space<vmem>>, vector<1x1x8x32xf32>
    %16 = vector.shape_cast %15 : vector<1x1x8x32xf32> to vector<8x32xf32>
    %17 = vector.shape_cast %14 : vector<8x32xf32> to vector<1x1x8x32xf32>
    tpu.vector_store %arg5[%c0_9, %c0_10, %c0_11, %c0_12], %17 {strides = array<i32>} : memref<1x1x8x32xf32, #tpu.memory_space<vmem>>, vector<1x1x8x32xf32>,
    %18 = vector.shape_cast %12 : vector<1x32xf32> to vector<1x32xf32>
    %19 = vector.broadcast %18 : vector<1x32xf32> to vector<8x32xf32>
    %c0_13 = arith.constant 0 : index
    %c0_14 = arith.constant 0 : index
    %c0_15 = arith.constant 0 : index
    %c0_16 = arith.constant 0 : index
    %20 = vector.load %arg6[%c0_13, %c0_14, %c0_15, %c0_16] : memref<1x1x8x32xf32, #tpu.memory_space<vmem>>, vector<1x1x8x32xf32>
    %21 = vector.shape_cast %20 : vector<1x1x8x32xf32> to vector<8x32xf32>
    %22 = vector.shape_cast %19 : vector<8x32xf32> to vector<1x1x8x32xf32>
    tpu.vector_store %arg6[%c0_13, %c0_14, %c0_15, %c0_16], %22 {strides = array<i32>} : memref<1x1x8x32xf32, #tpu.memory_space<vmem>>, vector<1x1x8x32xf32>,
    return
  }
  func.func @transform_0(%arg0: i32, %arg1: i32) -> (i32, i32) {
    %c0_i32 = arith.constant 0 : i32
    %c0_i32_0 = arith.constant 0 : i32
    return %arg1, %c0_i32 : i32, i32
  }
  func.func @transform_1(%arg0: i32, %arg1: i32) -> (i32, i32, i32) {
    %c0_i32 = arith.constant 0 : i32
    %c0_i32_0 = arith.constant 0 : i32
    %c0_i32_1 = arith.constant 0 : i32
    return %arg0, %c0_i32, %c0_i32_0 : i32, i32, i32
  }
  func.func @transform_2(%arg0: i32, %arg1: i32) -> (i32, i32, i32) {
    %c0_i32 = arith.constant 0 : i32
    %c0_i32_0 = arith.constant 0 : i32
    return %arg0, %arg1, %c0_i32 : i32, i32, i32
  }
  func.func @transform_3(%arg0: i32, %arg1: i32) -> (i32, i32, i32, i32) {
    %c0_i32 = arith.constant 0 : i32
    %c0_i32_0 = arith.constant 0 : i32
    %c0_i32_1 = arith.constant 0 : i32
    return %arg0, %arg1, %c0_i32, %c0_i32_0 : i32, i32, i32, i32
  }
  func.func @transform_4(%arg0: i32, %arg1: i32) -> (i32, i32, i32, i32) {
    %c0_i32 = arith.constant 0 : i32
    %c0_i32_0 = arith.constant 0 : i32
    %c0_i32_1 = arith.constant 0 : i32
    return %arg0, %arg1, %c0_i32, %c0_i32_0 : i32, i32, i32, i32
  }
}

module attributes {stable_mosaic.version = 11 : i64} {
  func.func @_bn_relu_kernel(%arg0: i32, %arg1: i32, %arg2: memref<1x8x32xbf16, #tpu.memory_space<vmem>>, %arg3: memref<1x32xf32, #tpu.memory_space<vmem>>, %arg4: memref<1x32xf32, #tpu.memory_space<vmem>>, %arg5: memref<1x8x32xbf16, #tpu.memory_space<vmem>>) attributes {dimension_semantics = [#tpu.dimension_semantics<parallel>, #tpu.dimension_semantics<parallel>], iteration_bounds = array<i64: 16, 1>, scalar_prefetch = 0 : i64, scratch_operands = 0 : i64, tpu.core_type = #tpu.core_type<tc>, window_params = [{transform_indices = @transform_0, window_bounds = array<i64: 1, 8, 32>}, {pipeline_mode = #tpu.pipeline_mode<synchronous>, transform_indices = @transform_1, window_bounds = array<i64: 1, 32>}, {pipeline_mode = #tpu.pipeline_mode<synchronous>, transform_indices = @transform_2, window_bounds = array<i64: 1, 32>}, {transform_indices = @transform_3, window_bounds = array<i64: 1, 8, 32>}]} {
    %c0 = arith.constant 0 : index
    %c0_0 = arith.constant 0 : index
    %c0_1 = arith.constant 0 : index
    %0 = vector.load %arg2[%c0, %c0_0, %c0_1] : memref<1x8x32xbf16, #tpu.memory_space<vmem>>, vector<1x8x32xbf16>
    %1 = vector.shape_cast %0 : vector<1x8x32xbf16> to vector<8x32xbf16>
    %2 = arith.extf %1 : vector<8x32xbf16> to vector<8x32xf32>
    %c0_2 = arith.constant 0 : index
    %c0_3 = arith.constant 0 : index
    %3 = vector.load %arg3[%c0_2, %c0_3] : memref<1x32xf32, #tpu.memory_space<vmem>>, vector<1x32xf32>
    %4 = vector.broadcast %3 : vector<1x32xf32> to vector<8x32xf32>
    %5 = arith.mulf %2, %4 : vector<8x32xf32>
    %c0_4 = arith.constant 0 : index
    %c0_5 = arith.constant 0 : index
    %6 = vector.load %arg4[%c0_4, %c0_5] : memref<1x32xf32, #tpu.memory_space<vmem>>, vector<1x32xf32>
    %7 = vector.broadcast %6 : vector<1x32xf32> to vector<8x32xf32>
    %8 = arith.addf %5, %7 : vector<8x32xf32>
    %cst = arith.constant 0.000000e+00 : f32
    %9 = vector.broadcast %cst : f32 to vector<8x32xf32>
    %10 = arith.maximumf %8, %9 : vector<8x32xf32>
    %11 = arith.truncf %10 : vector<8x32xf32> to vector<8x32xbf16>
    %c0_6 = arith.constant 0 : index
    %c0_7 = arith.constant 0 : index
    %c0_8 = arith.constant 0 : index
    %12 = vector.load %arg5[%c0_6, %c0_7, %c0_8] : memref<1x8x32xbf16, #tpu.memory_space<vmem>>, vector<1x8x32xbf16>
    %13 = vector.shape_cast %12 : vector<1x8x32xbf16> to vector<8x32xbf16>
    %14 = vector.shape_cast %11 : vector<8x32xbf16> to vector<1x8x32xbf16>
    tpu.vector_store %arg5[%c0_6, %c0_7, %c0_8], %14 {strides = array<i32>} : memref<1x8x32xbf16, #tpu.memory_space<vmem>>, vector<1x8x32xbf16>,
    return
  }
  func.func @transform_0(%arg0: i32, %arg1: i32) -> (i32, i32, i32) {
    %c0_i32 = arith.constant 0 : i32
    %c0_i32_0 = arith.constant 0 : i32
    return %arg0, %arg1, %c0_i32 : i32, i32, i32
  }
  func.func @transform_1(%arg0: i32, %arg1: i32) -> (i32, i32) {
    %c0_i32 = arith.constant 0 : i32
    %c0_i32_0 = arith.constant 0 : i32
    %c0_i32_1 = arith.constant 0 : i32
    return %c0_i32, %c0_i32_0 : i32, i32
  }
  func.func @transform_2(%arg0: i32, %arg1: i32) -> (i32, i32) {
    %c0_i32 = arith.constant 0 : i32
    %c0_i32_0 = arith.constant 0 : i32
    %c0_i32_1 = arith.constant 0 : i32
    return %c0_i32, %c0_i32_0 : i32, i32
  }
  func.func @transform_3(%arg0: i32, %arg1: i32) -> (i32, i32, i32) {
    %c0_i32 = arith.constant 0 : i32
    %c0_i32_0 = arith.constant 0 : i32
    return %arg0, %arg1, %c0_i32 : i32, i32, i32
  }
}

module attributes {stable_mosaic.version = 11 : i64} {
  func.func @_gemm_stats_kernel(%arg0: i32, %arg1: i32, %arg2: memref<1x32x128xbf16, #tpu.memory_space<vmem>>, %arg3: memref<1x128x16xbf16, #tpu.memory_space<vmem>>, %arg4: memref<1x32x16xbf16, #tpu.memory_space<vmem>>, %arg5: memref<1x1x8x16xf32, #tpu.memory_space<vmem>>, %arg6: memref<1x1x8x16xf32, #tpu.memory_space<vmem>>) attributes {dimension_semantics = [#tpu.dimension_semantics<parallel>, #tpu.dimension_semantics<parallel>], iteration_bounds = array<i64: 4, 1>, scalar_prefetch = 0 : i64, scratch_operands = 0 : i64, tpu.core_type = #tpu.core_type<tc>, window_params = [{transform_indices = @transform_0, window_bounds = array<i64: 1, 32, 128>}, {transform_indices = @transform_1, window_bounds = array<i64: 1, 128, 16>}, {transform_indices = @transform_2, window_bounds = array<i64: 1, 32, 16>}, {transform_indices = @transform_3, window_bounds = array<i64: 1, 1, 8, 16>}, {transform_indices = @transform_4, window_bounds = array<i64: 1, 1, 8, 16>}]} {
    %c0 = arith.constant 0 : index
    %c0_0 = arith.constant 0 : index
    %c0_1 = arith.constant 0 : index
    %0 = vector.load %arg2[%c0, %c0_0, %c0_1] : memref<1x32x128xbf16, #tpu.memory_space<vmem>>, vector<1x32x128xbf16>
    %1 = vector.shape_cast %0 : vector<1x32x128xbf16> to vector<32x128xbf16>
    %c0_2 = arith.constant 0 : index
    %c0_3 = arith.constant 0 : index
    %c0_4 = arith.constant 0 : index
    %2 = vector.load %arg3[%c0_2, %c0_3, %c0_4] : memref<1x128x16xbf16, #tpu.memory_space<vmem>>, vector<1x128x16xbf16>
    %3 = vector.shape_cast %2 : vector<1x128x16xbf16> to vector<128x16xbf16>
    %cst = arith.constant dense<0.000000e+00> : vector<32x16xf32>
    %4 = tpu.matmul %1, %3, %cst {dimension_numbers = #tpu.dot_dimension_numbers<[1], [0], [0], [1], [0, 0, 1, 1], [], []>} : vector<32x128xbf16>, vector<128x16xbf16>, vector<32x16xf32> -> vector<32x16xf32>
    %5 = arith.truncf %4 : vector<32x16xf32> to vector<32x16xbf16>
    %c0_5 = arith.constant 0 : index
    %c0_6 = arith.constant 0 : index
    %c0_7 = arith.constant 0 : index
    %6 = vector.load %arg4[%c0_5, %c0_6, %c0_7] : memref<1x32x16xbf16, #tpu.memory_space<vmem>>, vector<1x32x16xbf16>
    %7 = vector.shape_cast %6 : vector<1x32x16xbf16> to vector<32x16xbf16>
    %8 = vector.shape_cast %5 : vector<32x16xbf16> to vector<1x32x16xbf16>
    tpu.vector_store %arg4[%c0_5, %c0_6, %c0_7], %8 {strides = array<i32>} : memref<1x32x16xbf16, #tpu.memory_space<vmem>>, vector<1x32x16xbf16>,
    %cst_8 = arith.constant dense<0.000000e+00> : vector<16xf32>
    %9 = vector.multi_reduction <add>, %4, %cst_8 [0] : vector<32x16xf32> to vector<16xf32>
    %10 = vector.shape_cast %9 : vector<16xf32> to vector<1x16xf32>
    %11 = arith.mulf %4, %4 : vector<32x16xf32>
    %cst_9 = arith.constant dense<0.000000e+00> : vector<16xf32>
    %12 = vector.multi_reduction <add>, %11, %cst_9 [0] : vector<32x16xf32> to vector<16xf32>
    %13 = vector.shape_cast %12 : vector<16xf32> to vector<1x16xf32>
    %14 = vector.shape_cast %10 : vector<1x16xf32> to vector<1x16xf32>
    %15 = vector.broadcast %14 : vector<1x16xf32> to vector<8x16xf32>
    %c0_10 = arith.constant 0 : index
    %c0_11 = arith.constant 0 : index
    %c0_12 = arith.constant 0 : index
    %c0_13 = arith.constant 0 : index
    %16 = vector.load %arg5[%c0_10, %c0_11, %c0_12, %c0_13] : memref<1x1x8x16xf32, #tpu.memory_space<vmem>>, vector<1x1x8x16xf32>
    %17 = vector.shape_cast %16 : vector<1x1x8x16xf32> to vector<8x16xf32>
    %18 = vector.shape_cast %15 : vector<8x16xf32> to vector<1x1x8x16xf32>
    tpu.vector_store %arg5[%c0_10, %c0_11, %c0_12, %c0_13], %18 {strides = array<i32>} : memref<1x1x8x16xf32, #tpu.memory_space<vmem>>, vector<1x1x8x16xf32>,
    %19 = vector.shape_cast %13 : vector<1x16xf32> to vector<1x16xf32>
    %20 = vector.broadcast %19 : vector<1x16xf32> to vector<8x16xf32>
    %c0_14 = arith.constant 0 : index
    %c0_15 = arith.constant 0 : index
    %c0_16 = arith.constant 0 : index
    %c0_17 = arith.constant 0 : index
    %21 = vector.load %arg6[%c0_14, %c0_15, %c0_16, %c0_17] : memref<1x1x8x16xf32, #tpu.memory_space<vmem>>, vector<1x1x8x16xf32>
    %22 = vector.shape_cast %21 : vector<1x1x8x16xf32> to vector<8x16xf32>
    %23 = vector.shape_cast %20 : vector<8x16xf32> to vector<1x1x8x16xf32>
    tpu.vector_store %arg6[%c0_14, %c0_15, %c0_16, %c0_17], %23 {strides = array<i32>} : memref<1x1x8x16xf32, #tpu.memory_space<vmem>>, vector<1x1x8x16xf32>,
    return
  }
  func.func @transform_0(%arg0: i32, %arg1: i32) -> (i32, i32, i32) {
    %c0_i32 = arith.constant 0 : i32
    %c0_i32_0 = arith.constant 0 : i32
    return %arg0, %arg1, %c0_i32 : i32, i32, i32
  }
  func.func @transform_1(%arg0: i32, %arg1: i32) -> (i32, i32, i32) {
    %c0_i32 = arith.constant 0 : i32
    %c0_i32_0 = arith.constant 0 : i32
    %c0_i32_1 = arith.constant 0 : i32
    return %arg0, %c0_i32, %c0_i32_0 : i32, i32, i32
  }
  func.func @transform_2(%arg0: i32, %arg1: i32) -> (i32, i32, i32) {
    %c0_i32 = arith.constant 0 : i32
    %c0_i32_0 = arith.constant 0 : i32
    return %arg0, %arg1, %c0_i32 : i32, i32, i32
  }
  func.func @transform_3(%arg0: i32, %arg1: i32) -> (i32, i32, i32, i32) {
    %c0_i32 = arith.constant 0 : i32
    %c0_i32_0 = arith.constant 0 : i32
    %c0_i32_1 = arith.constant 0 : i32
    return %arg0, %arg1, %c0_i32, %c0_i32_0 : i32, i32, i32, i32
  }
  func.func @transform_4(%arg0: i32, %arg1: i32) -> (i32, i32, i32, i32) {
    %c0_i32 = arith.constant 0 : i32
    %c0_i32_0 = arith.constant 0 : i32
    %c0_i32_1 = arith.constant 0 : i32
    return %arg0, %arg1, %c0_i32, %c0_i32_0 : i32, i32, i32, i32
  }
}

module attributes {stable_mosaic.version = 11 : i64} {
  func.func @_bn_relu_kernel(%arg0: i32, %arg1: i32, %arg2: memref<1x32x16xbf16, #tpu.memory_space<vmem>>, %arg3: memref<1x16xf32, #tpu.memory_space<vmem>>, %arg4: memref<1x16xf32, #tpu.memory_space<vmem>>, %arg5: memref<1x32x16xbf16, #tpu.memory_space<vmem>>) attributes {dimension_semantics = [#tpu.dimension_semantics<parallel>, #tpu.dimension_semantics<parallel>], iteration_bounds = array<i64: 4, 1>, scalar_prefetch = 0 : i64, scratch_operands = 0 : i64, tpu.core_type = #tpu.core_type<tc>, window_params = [{transform_indices = @transform_0, window_bounds = array<i64: 1, 32, 16>}, {pipeline_mode = #tpu.pipeline_mode<synchronous>, transform_indices = @transform_1, window_bounds = array<i64: 1, 16>}, {pipeline_mode = #tpu.pipeline_mode<synchronous>, transform_indices = @transform_2, window_bounds = array<i64: 1, 16>}, {transform_indices = @transform_3, window_bounds = array<i64: 1, 32, 16>}]} {
    %c0 = arith.constant 0 : index
    %c0_0 = arith.constant 0 : index
    %c0_1 = arith.constant 0 : index
    %0 = vector.load %arg2[%c0, %c0_0, %c0_1] : memref<1x32x16xbf16, #tpu.memory_space<vmem>>, vector<1x32x16xbf16>
    %1 = vector.shape_cast %0 : vector<1x32x16xbf16> to vector<32x16xbf16>
    %2 = arith.extf %1 : vector<32x16xbf16> to vector<32x16xf32>
    %c0_2 = arith.constant 0 : index
    %c0_3 = arith.constant 0 : index
    %3 = vector.load %arg3[%c0_2, %c0_3] : memref<1x16xf32, #tpu.memory_space<vmem>>, vector<1x16xf32>
    %4 = vector.broadcast %3 : vector<1x16xf32> to vector<32x16xf32>
    %5 = arith.mulf %2, %4 : vector<32x16xf32>
    %c0_4 = arith.constant 0 : index
    %c0_5 = arith.constant 0 : index
    %6 = vector.load %arg4[%c0_4, %c0_5] : memref<1x16xf32, #tpu.memory_space<vmem>>, vector<1x16xf32>
    %7 = vector.broadcast %6 : vector<1x16xf32> to vector<32x16xf32>
    %8 = arith.addf %5, %7 : vector<32x16xf32>
    %cst = arith.constant 0.000000e+00 : f32
    %9 = vector.broadcast %cst : f32 to vector<32x16xf32>
    %10 = arith.maximumf %8, %9 : vector<32x16xf32>
    %11 = arith.truncf %10 : vector<32x16xf32> to vector<32x16xbf16>
    %c0_6 = arith.constant 0 : index
    %c0_7 = arith.constant 0 : index
    %c0_8 = arith.constant 0 : index
    %12 = vector.load %arg5[%c0_6, %c0_7, %c0_8] : memref<1x32x16xbf16, #tpu.memory_space<vmem>>, vector<1x32x16xbf16>
    %13 = vector.shape_cast %12 : vector<1x32x16xbf16> to vector<32x16xbf16>
    %14 = vector.shape_cast %11 : vector<32x16xbf16> to vector<1x32x16xbf16>
    tpu.vector_store %arg5[%c0_6, %c0_7, %c0_8], %14 {strides = array<i32>} : memref<1x32x16xbf16, #tpu.memory_space<vmem>>, vector<1x32x16xbf16>,
    return
  }
  func.func @transform_0(%arg0: i32, %arg1: i32) -> (i32, i32, i32) {
    %c0_i32 = arith.constant 0 : i32
    %c0_i32_0 = arith.constant 0 : i32
    return %arg0, %arg1, %c0_i32 : i32, i32, i32
  }
  func.func @transform_1(%arg0: i32, %arg1: i32) -> (i32, i32) {
    %c0_i32 = arith.constant 0 : i32
    %c0_i32_0 = arith.constant 0 : i32
    %c0_i32_1 = arith.constant 0 : i32
    return %c0_i32, %c0_i32_0 : i32, i32
  }
  func.func @transform_2(%arg0: i32, %arg1: i32) -> (i32, i32) {
    %c0_i32 = arith.constant 0 : i32
    %c0_i32_0 = arith.constant 0 : i32
    %c0_i32_1 = arith.constant 0 : i32
    return %c0_i32, %c0_i32_0 : i32, i32
  }
  func.func @transform_3(%arg0: i32, %arg1: i32) -> (i32, i32, i32) {
    %c0_i32 = arith.constant 0 : i32
    %c0_i32_0 = arith.constant 0 : i32
    return %arg0, %arg1, %c0_i32 : i32, i32, i32
  }
}

module attributes {stable_mosaic.version = 11 : i64} {
  func.func @_gemm_stats_kernel(%arg0: i32, %arg1: i32, %arg2: memref<1x128x64xbf16, #tpu.memory_space<vmem>>, %arg3: memref<1x64x8xbf16, #tpu.memory_space<vmem>>, %arg4: memref<1x128x8xbf16, #tpu.memory_space<vmem>>, %arg5: memref<1x1x8x8xf32, #tpu.memory_space<vmem>>, %arg6: memref<1x1x8x8xf32, #tpu.memory_space<vmem>>) attributes {dimension_semantics = [#tpu.dimension_semantics<parallel>, #tpu.dimension_semantics<parallel>], iteration_bounds = array<i64: 4, 1>, scalar_prefetch = 0 : i64, scratch_operands = 0 : i64, tpu.core_type = #tpu.core_type<tc>, window_params = [{transform_indices = @transform_0, window_bounds = array<i64: 1, 128, 64>}, {transform_indices = @transform_1, window_bounds = array<i64: 1, 64, 8>}, {transform_indices = @transform_2, window_bounds = array<i64: 1, 128, 8>}, {transform_indices = @transform_3, window_bounds = array<i64: 1, 1, 8, 8>}, {transform_indices = @transform_4, window_bounds = array<i64: 1, 1, 8, 8>}]} {
    %c0 = arith.constant 0 : index
    %c0_0 = arith.constant 0 : index
    %c0_1 = arith.constant 0 : index
    %0 = vector.load %arg2[%c0, %c0_0, %c0_1] : memref<1x128x64xbf16, #tpu.memory_space<vmem>>, vector<1x128x64xbf16>
    %1 = vector.shape_cast %0 : vector<1x128x64xbf16> to vector<128x64xbf16>
    %c0_2 = arith.constant 0 : index
    %c0_3 = arith.constant 0 : index
    %c0_4 = arith.constant 0 : index
    %2 = vector.load %arg3[%c0_2, %c0_3, %c0_4] : memref<1x64x8xbf16, #tpu.memory_space<vmem>>, vector<1x64x8xbf16>
    %3 = vector.shape_cast %2 : vector<1x64x8xbf16> to vector<64x8xbf16>
    %cst = arith.constant dense<0.000000e+00> : vector<128x8xf32>
    %4 = tpu.matmul %1, %3, %cst {dimension_numbers = #tpu.dot_dimension_numbers<[1], [0], [0], [1], [0, 0, 1, 1], [], []>} : vector<128x64xbf16>, vector<64x8xbf16>, vector<128x8xf32> -> vector<128x8xf32>
    %5 = arith.truncf %4 : vector<128x8xf32> to vector<128x8xbf16>
    %c0_5 = arith.constant 0 : index
    %c0_6 = arith.constant 0 : index
    %c0_7 = arith.constant 0 : index
    %6 = vector.load %arg4[%c0_5, %c0_6, %c0_7] : memref<1x128x8xbf16, #tpu.memory_space<vmem>>, vector<1x128x8xbf16>
    %7 = vector.shape_cast %6 : vector<1x128x8xbf16> to vector<128x8xbf16>
    %8 = vector.shape_cast %5 : vector<128x8xbf16> to vector<1x128x8xbf16>
    tpu.vector_store %arg4[%c0_5, %c0_6, %c0_7], %8 {strides = array<i32>} : memref<1x128x8xbf16, #tpu.memory_space<vmem>>, vector<1x128x8xbf16>,
    %cst_8 = arith.constant dense<0.000000e+00> : vector<8xf32>
    %9 = vector.multi_reduction <add>, %4, %cst_8 [0] : vector<128x8xf32> to vector<8xf32>
    %10 = vector.shape_cast %9 : vector<8xf32> to vector<1x8xf32>
    %11 = arith.mulf %4, %4 : vector<128x8xf32>
    %cst_9 = arith.constant dense<0.000000e+00> : vector<8xf32>
    %12 = vector.multi_reduction <add>, %11, %cst_9 [0] : vector<128x8xf32> to vector<8xf32>
    %13 = vector.shape_cast %12 : vector<8xf32> to vector<1x8xf32>
    %14 = vector.shape_cast %10 : vector<1x8xf32> to vector<1x8xf32>
    %15 = vector.broadcast %14 : vector<1x8xf32> to vector<8x8xf32>
    %c0_10 = arith.constant 0 : index
    %c0_11 = arith.constant 0 : index
    %c0_12 = arith.constant 0 : index
    %c0_13 = arith.constant 0 : index
    %16 = vector.load %arg5[%c0_10, %c0_11, %c0_12, %c0_13] : memref<1x1x8x8xf32, #tpu.memory_space<vmem>>, vector<1x1x8x8xf32>
    %17 = vector.shape_cast %16 : vector<1x1x8x8xf32> to vector<8x8xf32>
    %18 = vector.shape_cast %15 : vector<8x8xf32> to vector<1x1x8x8xf32>
    tpu.vector_store %arg5[%c0_10, %c0_11, %c0_12, %c0_13], %18 {strides = array<i32>} : memref<1x1x8x8xf32, #tpu.memory_space<vmem>>, vector<1x1x8x8xf32>,
    %19 = vector.shape_cast %13 : vector<1x8xf32> to vector<1x8xf32>
    %20 = vector.broadcast %19 : vector<1x8xf32> to vector<8x8xf32>
    %c0_14 = arith.constant 0 : index
    %c0_15 = arith.constant 0 : index
    %c0_16 = arith.constant 0 : index
    %c0_17 = arith.constant 0 : index
    %21 = vector.load %arg6[%c0_14, %c0_15, %c0_16, %c0_17] : memref<1x1x8x8xf32, #tpu.memory_space<vmem>>, vector<1x1x8x8xf32>
    %22 = vector.shape_cast %21 : vector<1x1x8x8xf32> to vector<8x8xf32>
    %23 = vector.shape_cast %20 : vector<8x8xf32> to vector<1x1x8x8xf32>
    tpu.vector_store %arg6[%c0_14, %c0_15, %c0_16, %c0_17], %23 {strides = array<i32>} : memref<1x1x8x8xf32, #tpu.memory_space<vmem>>, vector<1x1x8x8xf32>,
    return
  }
  func.func @transform_0(%arg0: i32, %arg1: i32) -> (i32, i32, i32) {
    %c0_i32 = arith.constant 0 : i32
    %c0_i32_0 = arith.constant 0 : i32
    return %arg0, %arg1, %c0_i32 : i32, i32, i32
  }
  func.func @transform_1(%arg0: i32, %arg1: i32) -> (i32, i32, i32) {
    %c0_i32 = arith.constant 0 : i32
    %c0_i32_0 = arith.constant 0 : i32
    %c0_i32_1 = arith.constant 0 : i32
    return %arg0, %c0_i32, %c0_i32_0 : i32, i32, i32
  }
  func.func @transform_2(%arg0: i32, %arg1: i32) -> (i32, i32, i32) {
    %c0_i32 = arith.constant 0 : i32
    %c0_i32_0 = arith.constant 0 : i32
    return %arg0, %arg1, %c0_i32 : i32, i32, i32
  }
  func.func @transform_3(%arg0: i32, %arg1: i32) -> (i32, i32, i32, i32) {
    %c0_i32 = arith.constant 0 : i32
    %c0_i32_0 = arith.constant 0 : i32
    %c0_i32_1 = arith.constant 0 : i32
    return %arg0, %arg1, %c0_i32, %c0_i32_0 : i32, i32, i32, i32
  }
  func.func @transform_4(%arg0: i32, %arg1: i32) -> (i32, i32, i32, i32) {
    %c0_i32 = arith.constant 0 : i32
    %c0_i32_0 = arith.constant 0 : i32
    %c0_i32_1 = arith.constant 0 : i32
    return %arg0, %arg1, %c0_i32, %c0_i32_0 : i32, i32, i32, i32
  }
}

module attributes {stable_mosaic.version = 11 : i64} {
  func.func @_bn_relu_kernel(%arg0: i32, %arg1: i32, %arg2: memref<1x128x8xbf16, #tpu.memory_space<vmem>>, %arg3: memref<1x8xf32, #tpu.memory_space<vmem>>, %arg4: memref<1x8xf32, #tpu.memory_space<vmem>>, %arg5: memref<1x128x8xbf16, #tpu.memory_space<vmem>>) attributes {dimension_semantics = [#tpu.dimension_semantics<parallel>, #tpu.dimension_semantics<parallel>], iteration_bounds = array<i64: 4, 1>, scalar_prefetch = 0 : i64, scratch_operands = 0 : i64, tpu.core_type = #tpu.core_type<tc>, window_params = [{transform_indices = @transform_0, window_bounds = array<i64: 1, 128, 8>}, {pipeline_mode = #tpu.pipeline_mode<synchronous>, transform_indices = @transform_1, window_bounds = array<i64: 1, 8>}, {pipeline_mode = #tpu.pipeline_mode<synchronous>, transform_indices = @transform_2, window_bounds = array<i64: 1, 8>}, {transform_indices = @transform_3, window_bounds = array<i64: 1, 128, 8>}]} {
    %c0 = arith.constant 0 : index
    %c0_0 = arith.constant 0 : index
    %c0_1 = arith.constant 0 : index
    %0 = vector.load %arg2[%c0, %c0_0, %c0_1] : memref<1x128x8xbf16, #tpu.memory_space<vmem>>, vector<1x128x8xbf16>
    %1 = vector.shape_cast %0 : vector<1x128x8xbf16> to vector<128x8xbf16>
    %2 = arith.extf %1 : vector<128x8xbf16> to vector<128x8xf32>
    %c0_2 = arith.constant 0 : index
    %c0_3 = arith.constant 0 : index
    %3 = vector.load %arg3[%c0_2, %c0_3] : memref<1x8xf32, #tpu.memory_space<vmem>>, vector<1x8xf32>
    %4 = vector.broadcast %3 : vector<1x8xf32> to vector<128x8xf32>
    %5 = arith.mulf %2, %4 : vector<128x8xf32>
    %c0_4 = arith.constant 0 : index
    %c0_5 = arith.constant 0 : index
    %6 = vector.load %arg4[%c0_4, %c0_5] : memref<1x8xf32, #tpu.memory_space<vmem>>, vector<1x8xf32>
    %7 = vector.broadcast %6 : vector<1x8xf32> to vector<128x8xf32>
    %8 = arith.addf %5, %7 : vector<128x8xf32>
    %cst = arith.constant 0.000000e+00 : f32
    %9 = vector.broadcast %cst : f32 to vector<128x8xf32>
    %10 = arith.maximumf %8, %9 : vector<128x8xf32>
    %11 = arith.truncf %10 : vector<128x8xf32> to vector<128x8xbf16>
    %c0_6 = arith.constant 0 : index
    %c0_7 = arith.constant 0 : index
    %c0_8 = arith.constant 0 : index
    %12 = vector.load %arg5[%c0_6, %c0_7, %c0_8] : memref<1x128x8xbf16, #tpu.memory_space<vmem>>, vector<1x128x8xbf16>
    %13 = vector.shape_cast %12 : vector<1x128x8xbf16> to vector<128x8xbf16>
    %14 = vector.shape_cast %11 : vector<128x8xbf16> to vector<1x128x8xbf16>
    tpu.vector_store %arg5[%c0_6, %c0_7, %c0_8], %14 {strides = array<i32>} : memref<1x128x8xbf16, #tpu.memory_space<vmem>>, vector<1x128x8xbf16>,
    return
  }
  func.func @transform_0(%arg0: i32, %arg1: i32) -> (i32, i32, i32) {
    %c0_i32 = arith.constant 0 : i32
    %c0_i32_0 = arith.constant 0 : i32
    return %arg0, %arg1, %c0_i32 : i32, i32, i32
  }
  func.func @transform_1(%arg0: i32, %arg1: i32) -> (i32, i32) {
    %c0_i32 = arith.constant 0 : i32
    %c0_i32_0 = arith.constant 0 : i32
    %c0_i32_1 = arith.constant 0 : i32
    return %c0_i32, %c0_i32_0 : i32, i32
  }
  func.func @transform_2(%arg0: i32, %arg1: i32) -> (i32, i32) {
    %c0_i32 = arith.constant 0 : i32
    %c0_i32_0 = arith.constant 0 : i32
    %c0_i32_1 = arith.constant 0 : i32
    return %c0_i32, %c0_i32_0 : i32, i32
  }
  func.func @transform_3(%arg0: i32, %arg1: i32) -> (i32, i32, i32) {
    %c0_i32 = arith.constant 0 : i32
    %c0_i32_0 = arith.constant 0 : i32
    return %arg0, %arg1, %c0_i32 : i32, i32, i32
  }
}

module attributes {stable_mosaic.version = 11 : i64} {
  func.func @_gemm_stats_kernel(%arg0: i32, %arg1: i32, %arg2: memref<1x512x32xbf16, #tpu.memory_space<vmem>>, %arg3: memref<1x32x4xbf16, #tpu.memory_space<vmem>>, %arg4: memref<1x512x4xbf16, #tpu.memory_space<vmem>>, %arg5: memref<1x1x8x4xf32, #tpu.memory_space<vmem>>, %arg6: memref<1x1x8x4xf32, #tpu.memory_space<vmem>>) attributes {dimension_semantics = [#tpu.dimension_semantics<parallel>, #tpu.dimension_semantics<parallel>], iteration_bounds = array<i64: 4, 1>, scalar_prefetch = 0 : i64, scratch_operands = 0 : i64, tpu.core_type = #tpu.core_type<tc>, window_params = [{transform_indices = @transform_0, window_bounds = array<i64: 1, 512, 32>}, {transform_indices = @transform_1, window_bounds = array<i64: 1, 32, 4>}, {transform_indices = @transform_2, window_bounds = array<i64: 1, 512, 4>}, {transform_indices = @transform_3, window_bounds = array<i64: 1, 1, 8, 4>}, {transform_indices = @transform_4, window_bounds = array<i64: 1, 1, 8, 4>}]} {
    %c0 = arith.constant 0 : index
    %c0_0 = arith.constant 0 : index
    %c0_1 = arith.constant 0 : index
    %0 = vector.load %arg2[%c0, %c0_0, %c0_1] : memref<1x512x32xbf16, #tpu.memory_space<vmem>>, vector<1x512x32xbf16>
    %1 = vector.shape_cast %0 : vector<1x512x32xbf16> to vector<512x32xbf16>
    %c0_2 = arith.constant 0 : index
    %c0_3 = arith.constant 0 : index
    %c0_4 = arith.constant 0 : index
    %2 = vector.load %arg3[%c0_2, %c0_3, %c0_4] : memref<1x32x4xbf16, #tpu.memory_space<vmem>>, vector<1x32x4xbf16>
    %3 = vector.shape_cast %2 : vector<1x32x4xbf16> to vector<32x4xbf16>
    %cst = arith.constant dense<0.000000e+00> : vector<512x4xf32>
    %4 = tpu.matmul %1, %3, %cst {dimension_numbers = #tpu.dot_dimension_numbers<[1], [0], [0], [1], [0, 0, 1, 1], [], []>} : vector<512x32xbf16>, vector<32x4xbf16>, vector<512x4xf32> -> vector<512x4xf32>
    %5 = arith.truncf %4 : vector<512x4xf32> to vector<512x4xbf16>
    %c0_5 = arith.constant 0 : index
    %c0_6 = arith.constant 0 : index
    %c0_7 = arith.constant 0 : index
    %6 = vector.load %arg4[%c0_5, %c0_6, %c0_7] : memref<1x512x4xbf16, #tpu.memory_space<vmem>>, vector<1x512x4xbf16>
    %7 = vector.shape_cast %6 : vector<1x512x4xbf16> to vector<512x4xbf16>
    %8 = vector.shape_cast %5 : vector<512x4xbf16> to vector<1x512x4xbf16>
    tpu.vector_store %arg4[%c0_5, %c0_6, %c0_7], %8 {strides = array<i32>} : memref<1x512x4xbf16, #tpu.memory_space<vmem>>, vector<1x512x4xbf16>,
    %cst_8 = arith.constant dense<0.000000e+00> : vector<4xf32>
    %9 = vector.multi_reduction <add>, %4, %cst_8 [0] : vector<512x4xf32> to vector<4xf32>
    %10 = vector.shape_cast %9 : vector<4xf32> to vector<1x4xf32>
    %11 = arith.mulf %4, %4 : vector<512x4xf32>
    %cst_9 = arith.constant dense<0.000000e+00> : vector<4xf32>
    %12 = vector.multi_reduction <add>, %11, %cst_9 [0] : vector<512x4xf32> to vector<4xf32>
    %13 = vector.shape_cast %12 : vector<4xf32> to vector<1x4xf32>
    %14 = vector.shape_cast %10 : vector<1x4xf32> to vector<1x4xf32>
    %15 = vector.broadcast %14 : vector<1x4xf32> to vector<8x4xf32>
    %c0_10 = arith.constant 0 : index
    %c0_11 = arith.constant 0 : index
    %c0_12 = arith.constant 0 : index
    %c0_13 = arith.constant 0 : index
    %16 = vector.load %arg5[%c0_10, %c0_11, %c0_12, %c0_13] : memref<1x1x8x4xf32, #tpu.memory_space<vmem>>, vector<1x1x8x4xf32>
    %17 = vector.shape_cast %16 : vector<1x1x8x4xf32> to vector<8x4xf32>
    %18 = vector.shape_cast %15 : vector<8x4xf32> to vector<1x1x8x4xf32>
    tpu.vector_store %arg5[%c0_10, %c0_11, %c0_12, %c0_13], %18 {strides = array<i32>} : memref<1x1x8x4xf32, #tpu.memory_space<vmem>>, vector<1x1x8x4xf32>,
    %19 = vector.shape_cast %13 : vector<1x4xf32> to vector<1x4xf32>
    %20 = vector.broadcast %19 : vector<1x4xf32> to vector<8x4xf32>
    %c0_14 = arith.constant 0 : index
    %c0_15 = arith.constant 0 : index
    %c0_16 = arith.constant 0 : index
    %c0_17 = arith.constant 0 : index
    %21 = vector.load %arg6[%c0_14, %c0_15, %c0_16, %c0_17] : memref<1x1x8x4xf32, #tpu.memory_space<vmem>>, vector<1x1x8x4xf32>
    %22 = vector.shape_cast %21 : vector<1x1x8x4xf32> to vector<8x4xf32>
    %23 = vector.shape_cast %20 : vector<8x4xf32> to vector<1x1x8x4xf32>
    tpu.vector_store %arg6[%c0_14, %c0_15, %c0_16, %c0_17], %23 {strides = array<i32>} : memref<1x1x8x4xf32, #tpu.memory_space<vmem>>, vector<1x1x8x4xf32>,
    return
  }
  func.func @transform_0(%arg0: i32, %arg1: i32) -> (i32, i32, i32) {
    %c0_i32 = arith.constant 0 : i32
    %c0_i32_0 = arith.constant 0 : i32
    return %arg0, %arg1, %c0_i32 : i32, i32, i32
  }
  func.func @transform_1(%arg0: i32, %arg1: i32) -> (i32, i32, i32) {
    %c0_i32 = arith.constant 0 : i32
    %c0_i32_0 = arith.constant 0 : i32
    %c0_i32_1 = arith.constant 0 : i32
    return %arg0, %c0_i32, %c0_i32_0 : i32, i32, i32
  }
  func.func @transform_2(%arg0: i32, %arg1: i32) -> (i32, i32, i32) {
    %c0_i32 = arith.constant 0 : i32
    %c0_i32_0 = arith.constant 0 : i32
    return %arg0, %arg1, %c0_i32 : i32, i32, i32
  }
  func.func @transform_3(%arg0: i32, %arg1: i32) -> (i32, i32, i32, i32) {
    %c0_i32 = arith.constant 0 : i32
    %c0_i32_0 = arith.constant 0 : i32
    %c0_i32_1 = arith.constant 0 : i32
    return %arg0, %arg1, %c0_i32, %c0_i32_0 : i32, i32, i32, i32
  }
  func.func @transform_4(%arg0: i32, %arg1: i32) -> (i32, i32, i32, i32) {
    %c0_i32 = arith.constant 0 : i32
    %c0_i32_0 = arith.constant 0 : i32
    %c0_i32_1 = arith.constant 0 : i32
    return %arg0, %arg1, %c0_i32, %c0_i32_0 : i32, i32, i32, i32
  }
}

module attributes {stable_mosaic.version = 11 : i64} {
  func.func @_bn_relu_kernel(%arg0: i32, %arg1: i32, %arg2: memref<1x512x4xbf16, #tpu.memory_space<vmem>>, %arg3: memref<1x4xf32, #tpu.memory_space<vmem>>, %arg4: memref<1x4xf32, #tpu.memory_space<vmem>>, %arg5: memref<1x512x4xbf16, #tpu.memory_space<vmem>>) attributes {dimension_semantics = [#tpu.dimension_semantics<parallel>, #tpu.dimension_semantics<parallel>], iteration_bounds = array<i64: 4, 1>, scalar_prefetch = 0 : i64, scratch_operands = 0 : i64, tpu.core_type = #tpu.core_type<tc>, window_params = [{transform_indices = @transform_0, window_bounds = array<i64: 1, 512, 4>}, {pipeline_mode = #tpu.pipeline_mode<synchronous>, transform_indices = @transform_1, window_bounds = array<i64: 1, 4>}, {pipeline_mode = #tpu.pipeline_mode<synchronous>, transform_indices = @transform_2, window_bounds = array<i64: 1, 4>}, {transform_indices = @transform_3, window_bounds = array<i64: 1, 512, 4>}]} {
    %c0 = arith.constant 0 : index
    %c0_0 = arith.constant 0 : index
    %c0_1 = arith.constant 0 : index
    %0 = vector.load %arg2[%c0, %c0_0, %c0_1] : memref<1x512x4xbf16, #tpu.memory_space<vmem>>, vector<1x512x4xbf16>
    %1 = vector.shape_cast %0 : vector<1x512x4xbf16> to vector<512x4xbf16>
    %2 = arith.extf %1 : vector<512x4xbf16> to vector<512x4xf32>
    %c0_2 = arith.constant 0 : index
    %c0_3 = arith.constant 0 : index
    %3 = vector.load %arg3[%c0_2, %c0_3] : memref<1x4xf32, #tpu.memory_space<vmem>>, vector<1x4xf32>
    %4 = vector.broadcast %3 : vector<1x4xf32> to vector<512x4xf32>
    %5 = arith.mulf %2, %4 : vector<512x4xf32>
    %c0_4 = arith.constant 0 : index
    %c0_5 = arith.constant 0 : index
    %6 = vector.load %arg4[%c0_4, %c0_5] : memref<1x4xf32, #tpu.memory_space<vmem>>, vector<1x4xf32>
    %7 = vector.broadcast %6 : vector<1x4xf32> to vector<512x4xf32>
    %8 = arith.addf %5, %7 : vector<512x4xf32>
    %cst = arith.constant 0.000000e+00 : f32
    %9 = vector.broadcast %cst : f32 to vector<512x4xf32>
    %10 = arith.maximumf %8, %9 : vector<512x4xf32>
    %11 = arith.truncf %10 : vector<512x4xf32> to vector<512x4xbf16>
    %c0_6 = arith.constant 0 : index
    %c0_7 = arith.constant 0 : index
    %c0_8 = arith.constant 0 : index
    %12 = vector.load %arg5[%c0_6, %c0_7, %c0_8] : memref<1x512x4xbf16, #tpu.memory_space<vmem>>, vector<1x512x4xbf16>
    %13 = vector.shape_cast %12 : vector<1x512x4xbf16> to vector<512x4xbf16>
    %14 = vector.shape_cast %11 : vector<512x4xbf16> to vector<1x512x4xbf16>
    tpu.vector_store %arg5[%c0_6, %c0_7, %c0_8], %14 {strides = array<i32>} : memref<1x512x4xbf16, #tpu.memory_space<vmem>>, vector<1x512x4xbf16>,
    return
  }
  func.func @transform_0(%arg0: i32, %arg1: i32) -> (i32, i32, i32) {
    %c0_i32 = arith.constant 0 : i32
    %c0_i32_0 = arith.constant 0 : i32
    return %arg0, %arg1, %c0_i32 : i32, i32, i32
  }
  func.func @transform_1(%arg0: i32, %arg1: i32) -> (i32, i32) {
    %c0_i32 = arith.constant 0 : i32
    %c0_i32_0 = arith.constant 0 : i32
    %c0_i32_1 = arith.constant 0 : i32
    return %c0_i32, %c0_i32_0 : i32, i32
  }
  func.func @transform_2(%arg0: i32, %arg1: i32) -> (i32, i32) {
    %c0_i32 = arith.constant 0 : i32
    %c0_i32_0 = arith.constant 0 : i32
    %c0_i32_1 = arith.constant 0 : i32
    return %c0_i32, %c0_i32_0 : i32, i32
  }
  func.func @transform_3(%arg0: i32, %arg1: i32) -> (i32, i32, i32) {
    %c0_i32 = arith.constant 0 : i32
    %c0_i32_0 = arith.constant 0 : i32
    return %arg0, %arg1, %c0_i32 : i32, i32, i32
  }
}

module attributes {stable_mosaic.version = 11 : i64} {
  func.func @_gemm_tanh_kernel(%arg0: i32, %arg1: i32, %arg2: memref<1x1024x16xbf16, #tpu.memory_space<vmem>>, %arg3: memref<1x16x128xbf16, #tpu.memory_space<vmem>>, %arg4: memref<1x1024x128xf32, #tpu.memory_space<vmem>>) attributes {dimension_semantics = [#tpu.dimension_semantics<parallel>, #tpu.dimension_semantics<parallel>], iteration_bounds = array<i64: 4, 2>, scalar_prefetch = 0 : i64, scratch_operands = 0 : i64, tpu.core_type = #tpu.core_type<tc>, window_params = [{transform_indices = @transform_0, window_bounds = array<i64: 1, 1024, 16>}, {transform_indices = @transform_1, window_bounds = array<i64: 1, 16, 128>}, {transform_indices = @transform_2, window_bounds = array<i64: 1, 1024, 128>}]} {
    %c0 = arith.constant 0 : index
    %c0_0 = arith.constant 0 : index
    %c0_1 = arith.constant 0 : index
    %0 = vector.load %arg2[%c0, %c0_0, %c0_1] : memref<1x1024x16xbf16, #tpu.memory_space<vmem>>, vector<1x1024x16xbf16>
    %1 = vector.shape_cast %0 : vector<1x1024x16xbf16> to vector<1024x16xbf16>
    %c0_2 = arith.constant 0 : index
    %c0_3 = arith.constant 0 : index
    %c0_4 = arith.constant 0 : index
    %2 = vector.load %arg3[%c0_2, %c0_3, %c0_4] : memref<1x16x128xbf16, #tpu.memory_space<vmem>>, vector<1x16x128xbf16>
    %3 = vector.shape_cast %2 : vector<1x16x128xbf16> to vector<16x128xbf16>
    %cst = arith.constant dense<0.000000e+00> : vector<1024x128xf32>
    %4 = tpu.matmul %1, %3, %cst {dimension_numbers = #tpu.dot_dimension_numbers<[1], [0], [0], [1], [0, 0, 1, 1], [], []>} : vector<1024x16xbf16>, vector<16x128xbf16>, vector<1024x128xf32> -> vector<1024x128xf32>
    %5 = math.tanh %4 : vector<1024x128xf32>
    %c0_5 = arith.constant 0 : index
    %c0_6 = arith.constant 0 : index
    %c0_7 = arith.constant 0 : index
    %6 = vector.load %arg4[%c0_5, %c0_6, %c0_7] : memref<1x1024x128xf32, #tpu.memory_space<vmem>>, vector<1x1024x128xf32>
    %7 = vector.shape_cast %6 : vector<1x1024x128xf32> to vector<1024x128xf32>
    %8 = vector.shape_cast %5 : vector<1024x128xf32> to vector<1x1024x128xf32>
    tpu.vector_store %arg4[%c0_5, %c0_6, %c0_7], %8 {strides = array<i32>} : memref<1x1024x128xf32, #tpu.memory_space<vmem>>, vector<1x1024x128xf32>,
    return
  }
  func.func @transform_0(%arg0: i32, %arg1: i32) -> (i32, i32, i32) {
    %c0_i32 = arith.constant 0 : i32
    %c0_i32_0 = arith.constant 0 : i32
    return %arg0, %arg1, %c0_i32 : i32, i32, i32
  }
  func.func @transform_1(%arg0: i32, %arg1: i32) -> (i32, i32, i32) {
    %c0_i32 = arith.constant 0 : i32
    %c0_i32_0 = arith.constant 0 : i32
    %c0_i32_1 = arith.constant 0 : i32
    return %arg0, %c0_i32, %c0_i32_0 : i32, i32, i32
  }
  func.func @transform_2(%arg0: i32, %arg1: i32) -> (i32, i32, i32) {
    %c0_i32 = arith.constant 0 : i32
    %c0_i32_0 = arith.constant 0 : i32
    return %arg0, %arg1, %c0_i32 : i32, i32, i32
  }
}

</mosaic_0001>

<llo_original>
// kernel: acgan_generator_forward.10
$region0: #{acgan_generator_forward.10}
  #allocation0 [shape = 'u32[]', space=smem, size = 0x4, offset = 0x4, fixed_abs, tag = 'smem constant byte address 0x4 - core index']
  #allocation1 [shape = 'u32[144,128]{1,0:T(1,128)}', space=vmem, size = 0x12000, scoped, tag = 'internal scratch']
  %s0 = inlined_call_operand.vmem [shape: bf16[16,8,32], index: 0, kind: input, shape index: {}]
  %s1 = inlined_call_operand.vmem [shape: f32[1,32], index: 1, kind: input, shape index: {}]
  %s2 = inlined_call_operand.vmem [shape: f32[1,32], index: 2, kind: input, shape index: {}]
  %s3 = inlined_call_operand.vmem [shape: bf16[16,8,32], index: 3, kind: output, shape index: {}]
  %s4 = sld [smem:[#allocation0]]
  $region45: #{acgan_generator_forward.10} parent=0
    _
  %s6 = ssub.s32 1, %s4
  %s7 = scalar_select 0, %s6, %s4
  loop: start=0, step=1, limit=18
  $region2: #{acgan_generator_forward.10} parent=0 // loop_pre_header
    _
  $region3: #{acgan_generator_forward.10} parent=0 // loop_header
    %s9 = sphi 0, %s13
    %p10 = scmp.ge.s32.totalorder %s9, 18
    %s16 = sphi 0, %s28
    %s17 = sphi 0, %s24
    %s18 = sphi 0, %s16
    %s19 = sphi 0, %s17
    %s20 = sphi 0, %s18
    %s21 = sphi 0, %s19
    %s33 = sphi 0, %s35
    %s36 = sphi 0, %s33
    %s37 = sphi 0, %s36
    %s53 = sphi 0, %s37
    %s57 = sphi 0, %s57
    %s59 = sphi 0, %s57
    %s60 = sphi 0, %s59
    %s74 = sphi 0, %s60
    %s78 = sphi 0, %s78
    %s80 = sphi 0, %s78
    %s81 = sphi 0, %s80
    %s95 = sphi 0, %s81
    %s103 = sphi 0, %s105
    %s106 = sphi 0, %s103
    %s107 = sphi 0, %s106
    %s123 = sphi 0, %s107
  $region4: #{acgan_generator_forward.10} parent=0 // loop_header_branch
    %12 = sbr.rel (%p10) target = $region8
  $region5: #{acgan_generator_forward.10} parent=0 // loop_body
    %s14 = ssub.s32 %s9, 1
    %s15 = ssub.s32 %s9, 2
    %s22 = sadd.s32 1, %s17
    %p23 = scmp.ge.s32.totalorder %s22, 1
    %s24 = scalar_select %p23, 0, %s22
    %s25 = sadd.s32 1, %s16
    %s26 = scalar_select %p23, %s25, %s16
    %p27 = scmp.ge.s32.totalorder %s26, 16
    %s28 = scalar_select %p27, 0, %s26
    %s29 = ssub.s32 %s16, %s28
    %s30 = ssub.s32 %s17, %s24
    %s31 = sor.u32 %s29, %s30
    %p32 = scmp.eq.s32.totalorder %s31, 0
    %s34 = sadd.s32 %s33, 1
    %s35 = scalar_select %p32, %s33, %s34
    %p38 = pneg %p32
    %p39 = scmp.eq.s32.totalorder %s9, 15
    %p40 = por %p38, %p39
    %p41 = scmp.ne.s32.totalorder %s33, %s36
    %p42 = scmp.eq.s32.totalorder %s9, 0
    %p43 = por %p41, %p42
    %p44 = scmp.ne.s32.totalorder %s33, %s36
    %p45 = scmp.eq.s32.totalorder %s14, 15
    %p46 = por %p44, %p45
    %p47 = scmp.ne.s32.totalorder %s36, %s37
    %p48 = scmp.eq.s32.totalorder %s14, 0
    %p49 = por %p47, %p48
    %p50 = scmp.ne.s32.totalorder %s36, %s37
    %p51 = scmp.eq.s32.totalorder %s15, 15
    %p52 = por %p50, %p51
    %p54 = scmp.ne.s32.totalorder %s37, %s53
    %p55 = scmp.eq.s32.totalorder %s15, 0
    %p56 = por %p54, %p55
    %s58 = sadd.s32 %s57, 1
    %p61 = scmp.eq.s32.totalorder %s9, 15
    %p62 = scmp.ne.s32.totalorder %s57, %s59
    %p63 = scmp.eq.s32.totalorder %s9, 0
    %p64 = por %p62, %p63
    %p65 = scmp.ne.s32.totalorder %s57, %s59
    %p66 = scmp.eq.s32.totalorder %s14, 15
    %p67 = por %p65, %p66
    %p68 = scmp.ne.s32.totalorder %s59, %s60
    %p69 = scmp.eq.s32.totalorder %s14, 0
    %p70 = por %p68, %p69
    %p71 = scmp.ne.s32.totalorder %s59, %s60
    %p72 = scmp.eq.s32.totalorder %s15, 15
    %p73 = por %p71, %p72
    %p75 = scmp.ne.s32.totalorder %s60, %s74
    %p76 = scmp.eq.s32.totalorder %s15, 0
    %p77 = por %p75, %p76
    %s79 = sadd.s32 %s78, 1
    %p82 = scmp.eq.s32.totalorder %s9, 15
    %p83 = scmp.ne.s32.totalorder %s78, %s80
    %p84 = scmp.eq.s32.totalorder %s9, 0
    %p85 = por %p83, %p84
    %p86 = scmp.ne.s32.totalorder %s78, %s80
    %p87 = scmp.eq.s32.totalorder %s14, 15
    %p88 = por %p86, %p87
    %p89 = scmp.ne.s32.totalorder %s80, %s81
    %p90 = scmp.eq.s32.totalorder %s14, 0
    %p91 = por %p89, %p90
    %p92 = scmp.ne.s32.totalorder %s80, %s81
    %p93 = scmp.eq.s32.totalorder %s15, 15
    %p94 = por %p92, %p93
    %p96 = scmp.ne.s32.totalorder %s81, %s95
    %p97 = scmp.eq.s32.totalorder %s15, 0
    %p98 = por %p96, %p97
    %s99 = ssub.s32 %s16, %s28
    %s100 = ssub.s32 %s17, %s24
    %s101 = sor.u32 %s99, %s100
    %p102 = scmp.eq.s32.totalorder %s101, 0
    %s104 = sadd.s32 %s103, 1
    %s105 = scalar_select %p102, %s103, %s104
    %p108 = pneg %p102
    %p109 = scmp.eq.s32.totalorder %s9, 15
    %p110 = por %p108, %p109
    %p111 = scmp.ne.s32.totalorder %s103, %s106
    %p112 = scmp.eq.s32.totalorder %s9, 0
    %p113 = por %p111, %p112
    %p114 = scmp.ne.s32.totalorder %s103, %s106
    %p115 = scmp.eq.s32.totalorder %s14, 15
    %p116 = por %p114, %p115
    %p117 = scmp.ne.s32.totalorder %s106, %s107
    %p118 = scmp.eq.s32.totalorder %s14, 0
    %p119 = por %p117, %p118
    %p120 = scmp.ne.s32.totalorder %s106, %s107
    %p121 = scmp.eq.s32.totalorder %s15, 15
    %p122 = por %p120, %p121
    %p124 = scmp.ne.s32.totalorder %s107, %s123
    %p125 = scmp.eq.s32.totalorder %s15, 0
    %p126 = por %p124, %p125
    %p127 = scmp.le.s32.totalorder 1, %s9
    %p128 = scmp.lt.s32.totalorder %s9, 17
    %p129 = pnand %p127, %p128
    %p130 = pneg %p129
    // Predicated region
    $region9: #{acgan_generator_forward.10} parent=5 // pred_check
      _
    $region10: #{acgan_generator_forward.10} parent=5 // pred_check_branch
      %132 = sbr.rel (%p129) target = $region12
    $region11: #{acgan_generator_forward.10} parent=5 // pred_region
      %s133 = ssub.s32 %s9, 1
      // Predicated region
      $region13: #{acgan_generator_forward.10} parent=11 // pred_check
        %p134 = pneg %p70
      $region14: #{acgan_generator_forward.10} parent=11 // pred_check_branch
        %136 = sbr.rel (%p134) target = $region16
      $region15: #{acgan_generator_forward.10} parent=11 // pred_region
        _
      $region16: #{acgan_generator_forward.10} parent=11 // pred_fallthru
        _
      // Predicated region
      $region17: #{acgan_generator_forward.10} parent=11 // pred_check
        %p137 = pneg %p91
      $region18: #{acgan_generator_forward.10} parent=11 // pred_check_branch
        %139 = sbr.rel (%p137) target = $region20
      $region19: #{acgan_generator_forward.10} parent=11 // pred_region
        _
      $region20: #{acgan_generator_forward.10} parent=11 // pred_fallthru
        _
    $region12: #{acgan_generator_forward.10} parent=5 // pred_fallthru
      _
    %p140 = scmp.lt.s32.totalorder %s9, 16
    // Predicated region
    $region21: #{acgan_generator_forward.10} parent=5 // pred_check
      %p141 = pneg %p140
    $region22: #{acgan_generator_forward.10} parent=5 // pred_check_branch
      %143 = sbr.rel (%p141) target = $region24
    $region23: #{acgan_generator_forward.10} parent=5 // pred_region
      // Predicated region
      $region25: #{acgan_generator_forward.10} parent=23 // pred_check
        %p144 = pneg %p43
      $region26: #{acgan_generator_forward.10} parent=23 // pred_check_branch
        %146 = sbr.rel (%p144) target = $region28
      $region27: #{acgan_generator_forward.10} parent=23 // pred_region
        %p147 = scmp.lt.s32.totalorder %s16, 15
        %s148 = scalar_select %p147, %s16, 15
        %p149 = scmp.lt.s32.totalorder %s17, 0
        %s150 = scalar_select %p149, %s17, 0
        %s151 = sadd.s32 %s150, %s148
        %s152 = smul.addr %s151, 4
        %s153 = scalar_lea.vmem %s0, %s152
      $region28: #{acgan_generator_forward.10} parent=23 // pred_fallthru
        _
    $region24: #{acgan_generator_forward.10} parent=5 // pred_fallthru
      _
    %p154 = scmp.le.s32.totalorder 1, %s9
    %p155 = scmp.lt.s32.totalorder %s9, 17
    %p156 = pnand %p154, %p155
    %p157 = pneg %p156
    // Predicated region
    $region29: #{acgan_generator_forward.10} parent=5 // pred_check
      _
    $region30: #{acgan_generator_forward.10} parent=5 // pred_check_branch
      %159 = sbr.rel (%p156) target = $region32
    $region31: #{acgan_generator_forward.10} parent=5 // pred_region
      %s160 = ssub.s32 %s9, 1
      %p161 = scmp.lt.s32.totalorder %s18, 15
      %s162 = scalar_select %p161, %s18, 15
      %p163 = scmp.lt.s32.totalorder %s19, 0
      %s164 = scalar_select %p163, %s19, 0
      %s165 = sadd.s32 %s164, %s162
      %s166 = smul.addr %s165, 4
      %s167 = scalar_lea.vmem %s0, %s166
      %p168 = pneg %p49
      %p169 = pneg %p46
      %p170 = pneg %p70
      %p171 = pneg %p67
      %p172 = pneg %p91
      %p173 = pneg %p88
      %p174 = pneg %p119
      %p175 = pneg %p116
      %p176 = scmp.lt.s32.totalorder %s18, 15
      %s177 = scalar_select %p176, %s18, 15
      %p178 = scmp.lt.s32.totalorder %s19, 0
      %s179 = scalar_select %p178, %s19, 0
      %s180 = sadd.s32 %s179, %s177
      %s181 = smul.addr %s180, 4
      %s182 = scalar_lea.vmem %s3, %s181
      %p183 = scmp.lt.s32.totalorder %s18, 15
      %s184 = scalar_select %p183, %s18, 15
      %p185 = scmp.lt.s32.totalorder %s19, 0
      %s186 = scalar_select %p185, %s19, 0
      %s187 = sadd.s32 %s186, %s184
      %s188 = smul.addr %s187, 4
      %s189 = scalar_lea.vmem %s0, %s188
      %p190 = scmp.lt.s32.totalorder %s18, 15
      %s191 = scalar_select %p190, %s18, 15
      %p192 = scmp.lt.s32.totalorder %s19, 0
      %s193 = scalar_select %p192, %s19, 0
      %s194 = sadd.s32 %s193, %s191
      %s195 = smul.addr %s194, 4
      %s196 = scalar_lea.vmem %s3, %s195
      %v197 = vld [vmem:[%s189] sm:$0xf]
      %v198 = vunpack.c.l.bf16 %v197
      %v199 = vld [vmem:[%s1] sm:$0x1]
      %v201 = vlaneseq
      %v202 = vshrl.u32 %v201, 7
      %v203 = vsub.s32 0, %v202
      %v204 = vrot.slane %v199, %v203
      %v206 = vmul.f32 %v198, %v204
      %v207 = vld [vmem:[%s2] sm:$0x1]
      %v209 = vlaneseq
      %v210 = vshrl.u32 %v209, 7
      %v211 = vsub.s32 0, %v210
      %v212 = vrot.slane %v207, %v211
      %v214 = vadd.f32 %v206, %v212
      %v215 = vmax.f32 %v214, 0.0
      %v216 = vpack.c.bf16 %v215, %v215
      %vm217 = vcmask 257024
      %218 = vst.msk [vmem:[%s196] sm:$0xf] %vm217, %v216
      %p219 = scmp.lt.s32.totalorder %s18, 15
      %s220 = scalar_select %p219, %s18, 15
      %p221 = scmp.lt.s32.totalorder %s19, 0
      %s222 = scalar_select %p221, %s19, 0
      %s223 = sadd.s32 %s222, %s220
      %s224 = smul.addr %s223, 4
      %s225 = scalar_lea.vmem %s3, %s224
      // Predicated region
      $region33: #{acgan_generator_forward.10} parent=31 // pred_check
        %p226 = pneg %p116
      $region34: #{acgan_generator_forward.10} parent=31 // pred_check_branch
        %228 = sbr.rel (%p226) target = $region36
      $region35: #{acgan_generator_forward.10} parent=31 // pred_region
        _
      $region36: #{acgan_generator_forward.10} parent=31 // pred_fallthru
        _
    $region32: #{acgan_generator_forward.10} parent=5 // pred_fallthru
      _
    %p229 = scmp.le.s32.totalorder 2, %s9
    // Predicated region
    $region37: #{acgan_generator_forward.10} parent=5 // pred_check
      %p230 = pneg %p229
    $region38: #{acgan_generator_forward.10} parent=5 // pred_check_branch
      %232 = sbr.rel (%p230) target = $region40
    $region39: #{acgan_generator_forward.10} parent=5 // pred_region
      %s233 = ssub.s32 %s9, 2
      // Predicated region
      $region41: #{acgan_generator_forward.10} parent=39 // pred_check
        %p234 = pneg %p122
      $region42: #{acgan_generator_forward.10} parent=39 // pred_check_branch
        %236 = sbr.rel (%p234) target = $region44
      $region43: #{acgan_generator_forward.10} parent=39 // pred_region
        %p237 = scmp.lt.s32.totalorder %s20, 15
        %s238 = scalar_select %p237, %s20, 15
        %p239 = scmp.lt.s32.totalorder %s21, 0
        %s240 = scalar_select %p239, %s21, 0
        %s241 = sadd.s32 %s240, %s238
        %s242 = smul.addr %s241, 4
        %s243 = scalar_lea.vmem %s3, %s242
      $region44: #{acgan_generator_forward.10} parent=39 // pred_fallthru
        _
    $region40: #{acgan_generator_forward.10} parent=5 // pred_fallthru
      _
  $region6: #{acgan_generator_forward.10} parent=0 // loop_footer
    %s13 = sadd.s32 1, %s9
  $region7: #{acgan_generator_forward.10} parent=0 // loop_footer_branch
    %8 = sbr.rel target = $region3
  $region8: #{acgan_generator_forward.10} parent=0 // loop_exit
    _

// kernel: acgan_generator_forward.9
$region0: #{acgan_generator_forward.9}
  #allocation0 [shape = 'u32[]', space=smem, size = 0x4, offset = 0x4, fixed_abs, tag = 'smem constant byte address 0x4 - core index']
  #allocation1 [shape = 'u32[144,128]{1,0:T(1,128)}', space=vmem, size = 0x12000, scoped, tag = 'internal scratch']
  %s0 = inlined_call_operand.vmem [shape: bf16[8,9], index: 0, kind: input, shape index: {}]
  %s1 = inlined_call_operand.vmem [shape: bf16[16,9,32], index: 1, kind: input, shape index: {}]
  %s2 = inlined_call_operand.vmem [shape: bf16[16,8,32], index: 2, kind: output, shape index: {0}]
  %s3 = inlined_call_operand.vmem [shape: f32[16,1,8,32], index: 3, kind: output, shape index: {1}]
  %s4 = inlined_call_operand.vmem [shape: f32[16,1,8,32], index: 4, kind: output, shape index: {2}]
  %5 = xla_tuple %s2, %s3, %s4
  %s6 = sld [smem:[#allocation0]]
  $region57: #{acgan_generator_forward.9} parent=0
    _
  %s8 = ssub.s32 1, %s6
  %s9 = scalar_select 0, %s8, %s6
  loop: start=0, step=1, limit=18
  $region2: #{acgan_generator_forward.9} parent=0 // loop_pre_header
    _
  $region3: #{acgan_generator_forward.9} parent=0 // loop_header
    %s11 = sphi 0, %s15
    %p12 = scmp.ge.s32.totalorder %s11, 18
    %s18 = sphi 0, %s30
    %s19 = sphi 0, %s26
    %s20 = sphi 0, %s18
    %s21 = sphi 0, %s19
    %s22 = sphi 0, %s20
    %s23 = sphi 0, %s21
    %s33 = sphi 0, %s35
    %s36 = sphi 0, %s33
    %s37 = sphi 0, %s36
    %s53 = sphi 0, %s37
    %s59 = sphi 0, %s61
    %s62 = sphi 0, %s59
    %s63 = sphi 0, %s62
    %s79 = sphi 0, %s63
    %s87 = sphi 0, %s89
    %s90 = sphi 0, %s87
    %s91 = sphi 0, %s90
    %s107 = sphi 0, %s91
    %s115 = sphi 0, %s117
    %s118 = sphi 0, %s115
    %s119 = sphi 0, %s118
    %s135 = sphi 0, %s119
    %s143 = sphi 0, %s145
    %s146 = sphi 0, %s143
    %s147 = sphi 0, %s146
    %s163 = sphi 0, %s147
  $region4: #{acgan_generator_forward.9} parent=0 // loop_header_branch
    %14 = sbr.rel (%p12) target = $region8
  $region5: #{acgan_generator_forward.9} parent=0 // loop_body
    %s16 = ssub.s32 %s11, 1
    %s17 = ssub.s32 %s11, 2
    %s24 = sadd.s32 1, %s19
    %p25 = scmp.ge.s32.totalorder %s24, 1
    %s26 = scalar_select %p25, 0, %s24
    %s27 = sadd.s32 1, %s18
    %s28 = scalar_select %p25, %s27, %s18
    %p29 = scmp.ge.s32.totalorder %s28, 16
    %s30 = scalar_select %p29, 0, %s28
    %s31 = ssub.s32 %s19, %s26
    %p32 = scmp.eq.s32.totalorder %s31, 0
    %s34 = sadd.s32 %s33, 1
    %s35 = scalar_select %p32, %s33, %s34
    %p38 = pneg %p32
    %p39 = scmp.eq.s32.totalorder %s11, 15
    %p40 = por %p38, %p39
    %p41 = scmp.ne.s32.totalorder %s33, %s36
    %p42 = scmp.eq.s32.totalorder %s11, 0
    %p43 = por %p41, %p42
    %p44 = scmp.ne.s32.totalorder %s33, %s36
    %p45 = scmp.eq.s32.totalorder %s16, 15
    %p46 = por %p44, %p45
    %p47 = scmp.ne.s32.totalorder %s36, %s37
    %p48 = scmp.eq.s32.totalorder %s16, 0
    %p49 = por %p47, %p48
    %p50 = scmp.ne.s32.totalorder %s36, %s37
    %p51 = scmp.eq.s32.totalorder %s17, 15
    %p52 = por %p50, %p51
    %p54 = scmp.ne.s32.totalorder %s37, %s53
    %p55 = scmp.eq.s32.totalorder %s17, 0
    %p56 = por %p54, %p55
    %s57 = ssub.s32 %s18, %s30
    %p58 = scmp.eq.s32.totalorder %s57, 0
    %s60 = sadd.s32 %s59, 1
    %s61 = scalar_select %p58, %s59, %s60
    %p64 = pneg %p58
    %p65 = scmp.eq.s32.totalorder %s11, 15
    %p66 = por %p64, %p65
    %p67 = scmp.ne.s32.totalorder %s59, %s62
    %p68 = scmp.eq.s32.totalorder %s11, 0
    %p69 = por %p67, %p68
    %p70 = scmp.ne.s32.totalorder %s59, %s62
    %p71 = scmp.eq.s32.totalorder %s16, 15
    %p72 = por %p70, %p71
    %p73 = scmp.ne.s32.totalorder %s62, %s63
    %p74 = scmp.eq.s32.totalorder %s16, 0
    %p75 = por %p73, %p74
    %p76 = scmp.ne.s32.totalorder %s62, %s63
    %p77 = scmp.eq.s32.totalorder %s17, 15
    %p78 = por %p76, %p77
    %p80 = scmp.ne.s32.totalorder %s63, %s79
    %p81 = scmp.eq.s32.totalorder %s17, 0
    %p82 = por %p80, %p81
    %s83 = ssub.s32 %s18, %s30
    %s84 = ssub.s32 %s19, %s26
    %s85 = sor.u32 %s83, %s84
    %p86 = scmp.eq.s32.totalorder %s85, 0
    %s88 = sadd.s32 %s87, 1
    %s89 = scalar_select %p86, %s87, %s88
    %p92 = pneg %p86
    %p93 = scmp.eq.s32.totalorder %s11, 15
    %p94 = por %p92, %p93
    %p95 = scmp.ne.s32.totalorder %s87, %s90
    %p96 = scmp.eq.s32.totalorder %s11, 0
    %p97 = por %p95, %p96
    %p98 = scmp.ne.s32.totalorder %s87, %s90
    %p99 = scmp.eq.s32.totalorder %s16, 15
    %p100 = por %p98, %p99
    %p101 = scmp.ne.s32.totalorder %s90, %s91
    %p102 = scmp.eq.s32.totalorder %s16, 0
    %p103 = por %p101, %p102
    %p104 = scmp.ne.s32.totalorder %s90, %s91
    %p105 = scmp.eq.s32.totalorder %s17, 15
    %p106 = por %p104, %p105
    %p108 = scmp.ne.s32.totalorder %s91, %s107
    %p109 = scmp.eq.s32.totalorder %s17, 0
    %p110 = por %p108, %p109
    %s111 = ssub.s32 %s18, %s30
    %s112 = ssub.s32 %s19, %s26
    %s113 = sor.u32 %s111, %s112
    %p114 = scmp.eq.s32.totalorder %s113, 0
    %s116 = sadd.s32 %s115, 1
    %s117 = scalar_select %p114, %s115, %s116
    %p120 = pneg %p114
    %p121 = scmp.eq.s32.totalorder %s11, 15
    %p122 = por %p120, %p121
    %p123 = scmp.ne.s32.totalorder %s115, %s118
    %p124 = scmp.eq.s32.totalorder %s11, 0
    %p125 = por %p123, %p124
    %p126 = scmp.ne.s32.totalorder %s115, %s118
    %p127 = scmp.eq.s32.totalorder %s16, 15
    %p128 = por %p126, %p127
    %p129 = scmp.ne.s32.totalorder %s118, %s119
    %p130 = scmp.eq.s32.totalorder %s16, 0
    %p131 = por %p129, %p130
    %p132 = scmp.ne.s32.totalorder %s118, %s119
    %p133 = scmp.eq.s32.totalorder %s17, 15
    %p134 = por %p132, %p133
    %p136 = scmp.ne.s32.totalorder %s119, %s135
    %p137 = scmp.eq.s32.totalorder %s17, 0
    %p138 = por %p136, %p137
    %s139 = ssub.s32 %s18, %s30
    %s140 = ssub.s32 %s19, %s26
    %s141 = sor.u32 %s139, %s140
    %p142 = scmp.eq.s32.totalorder %s141, 0
    %s144 = sadd.s32 %s143, 1
    %s145 = scalar_select %p142, %s143, %s144
    %p148 = pneg %p142
    %p149 = scmp.eq.s32.totalorder %s11, 15
    %p150 = por %p148, %p149
    %p151 = scmp.ne.s32.totalorder %s143, %s146
    %p152 = scmp.eq.s32.totalorder %s11, 0
    %p153 = por %p151, %p152
    %p154 = scmp.ne.s32.totalorder %s143, %s146
    %p155 = scmp.eq.s32.totalorder %s16, 15
    %p156 = por %p154, %p155
    %p157 = scmp.ne.s32.totalorder %s146, %s147
    %p158 = scmp.eq.s32.totalorder %s16, 0
    %p159 = por %p157, %p158
    %p160 = scmp.ne.s32.totalorder %s146, %s147
    %p161 = scmp.eq.s32.totalorder %s17, 15
    %p162 = por %p160, %p161
    %p164 = scmp.ne.s32.totalorder %s147, %s163
    %p165 = scmp.eq.s32.totalorder %s17, 0
    %p166 = por %p164, %p165
    %p167 = scmp.le.s32.totalorder 1, %s11
    %p168 = scmp.lt.s32.totalorder %s11, 17
    %p169 = pnand %p167, %p168
    %p170 = pneg %p169
    // Predicated region
    $region9: #{acgan_generator_forward.9} parent=5 // pred_check
      _
    $region10: #{acgan_generator_forward.9} parent=5 // pred_check_branch
      %172 = sbr.rel (%p169) target = $region12
    $region11: #{acgan_generator_forward.9} parent=5 // pred_region
      %s173 = ssub.s32 %s11, 1
      // Predicated region
      $region13: #{acgan_generator_forward.9} parent=11 // pred_check
        %p174 = pneg %p49
      $region14: #{acgan_generator_forward.9} parent=11 // pred_check_branch
        %176 = sbr.rel (%p174) target = $region16
      $region15: #{acgan_generator_forward.9} parent=11 // pred_region
        %p177 = scmp.lt.s32.totalorder %s21, 0
        %s178 = scalar_select %p177, %s21, 0
        %s179 = smul.addr %s178, 4
        %s180 = scalar_lea.vmem %s0, %s179
      $region16: #{acgan_generator_forward.9} parent=11 // pred_fallthru
        _
    $region12: #{acgan_generator_forward.9} parent=5 // pred_fallthru
      _
    %p181 = scmp.lt.s32.totalorder %s11, 16
    // Predicated region
    $region17: #{acgan_generator_forward.9} parent=5 // pred_check
      %p182 = pneg %p181
    $region18: #{acgan_generator_forward.9} parent=5 // pred_check_branch
      %184 = sbr.rel (%p182) target = $region20
    $region19: #{acgan_generator_forward.9} parent=5 // pred_region
      // Predicated region
      $region21: #{acgan_generator_forward.9} parent=19 // pred_check
        %p185 = pneg %p69
      $region22: #{acgan_generator_forward.9} parent=19 // pred_check_branch
        %187 = sbr.rel (%p185) target = $region24
      $region23: #{acgan_generator_forward.9} parent=19 // pred_region
        %p188 = scmp.lt.s32.totalorder %s18, 15
        %s189 = scalar_select %p188, %s18, 15
        %s190 = smul.addr %s189, 2
        %s191 = smul.addr %s190, 4
        %s192 = scalar_lea.vmem %s1, %s191
      $region24: #{acgan_generator_forward.9} parent=19 // pred_fallthru
        _
    $region20: #{acgan_generator_forward.9} parent=5 // pred_fallthru
      _
    %p193 = scmp.le.s32.totalorder 1, %s11
    %p194 = scmp.lt.s32.totalorder %s11, 17
    %p195 = pnand %p193, %p194
    %p196 = pneg %p195
    // Predicated region
    $region25: #{acgan_generator_forward.9} parent=5 // pred_check
      _
    $region26: #{acgan_generator_forward.9} parent=5 // pred_check_branch
      %198 = sbr.rel (%p195) target = $region28
    $region27: #{acgan_generator_forward.9} parent=5 // pred_region
      %s199 = ssub.s32 %s11, 1
      %p200 = scmp.lt.s32.totalorder %s21, 0
      %s201 = scalar_select %p200, %s21, 0
      %s202 = smul.addr %s201, 4
      %s203 = scalar_lea.vmem %s0, %s202
      %p204 = pneg %p49
      %p205 = pneg %p46
      %p206 = scmp.lt.s32.totalorder %s20, 15
      %s207 = scalar_select %p206, %s20, 15
      %s208 = smul.addr %s207, 2
      %s209 = smul.addr %s208, 4
      %s210 = scalar_lea.vmem %s1, %s209
      %p211 = pneg %p75
      %p212 = pneg %p72
      %p213 = pneg %p103
      %p214 = pneg %p100
      %p215 = scmp.lt.s32.totalorder %s20, 15
      %s216 = scalar_select %p215, %s20, 15
      %p217 = scmp.lt.s32.totalorder %s21, 0
      %s218 = scalar_select %p217, %s21, 0
      %s219 = sadd.s32 %s218, %s216
      %s220 = smul.addr %s219, 4
      %s221 = scalar_lea.vmem %s2, %s220
      %p222 = pneg %p131
      %p223 = pneg %p128
      %p224 = scmp.lt.s32.totalorder %s20, 15
      %s225 = scalar_select %p224, %s20, 15
      %p226 = scmp.lt.s32.totalorder %s21, 0
      %s227 = scalar_select %p226, %s21, 0
      %s228 = sadd.s32 %s227, %s225
      %s229 = smul.addr %s228, 8
      %s230 = scalar_lea.vmem %s3, %s229
      %p231 = pneg %p159
      %p232 = pneg %p156
      %p233 = scmp.lt.s32.totalorder %s20, 15
      %s234 = scalar_select %p233, %s20, 15
      %p235 = scmp.lt.s32.totalorder %s21, 0
      %s236 = scalar_select %p235, %s21, 0
      %s237 = sadd.s32 %s236, %s234
      %s238 = smul.addr %s237, 8
      %s239 = scalar_lea.vmem %s4, %s238
      %p240 = scmp.lt.s32.totalorder %s21, 0
      %s241 = scalar_select %p240, %s21, 0
      %s242 = smul.addr %s241, 4
      %s243 = scalar_lea.vmem %s0, %s242
      %p244 = scmp.lt.s32.totalorder %s20, 15
      %s245 = scalar_select %p244, %s20, 15
      %s246 = smul.addr %s245, 2
      %s247 = smul.addr %s246, 4
      %s248 = scalar_lea.vmem %s1, %s247
      %p249 = scmp.lt.s32.totalorder %s20, 15
      %s250 = scalar_select %p249, %s20, 15
      %p251 = scmp.lt.s32.totalorder %s21, 0
      %s252 = scalar_select %p251, %s21, 0
      %s253 = sadd.s32 %s252, %s250
      %s254 = smul.addr %s253, 4
      %s255 = scalar_lea.vmem %s2, %s254
      %p256 = scmp.lt.s32.totalorder %s20, 15
      %s257 = scalar_select %p256, %s20, 15
      %p258 = scmp.lt.s32.totalorder %s21, 0
      %s259 = scalar_select %p258, %s21, 0
      %s260 = sadd.s32 %s259, %s257
      %s261 = smul.addr %s260, 8
      %s262 = scalar_lea.vmem %s3, %s261
      %p263 = scmp.lt.s32.totalorder %s20, 15
      %s264 = scalar_select %p263, %s20, 15
      %p265 = scmp.lt.s32.totalorder %s21, 0
      %s266 = scalar_select %p265, %s21, 0
      %s267 = sadd.s32 %s266, %s264
      %s268 = smul.addr %s267, 8
      %s269 = scalar_lea.vmem %s4, %s268
      %v271 = vld [vmem:[%s243] sm:$0xf]
      %v272 = vld [vmem:[%s248] sm:$0xf]
      %v273 = vld [vmem:[%s248 + $0x4] sm:$0x1]
      %v276 = vunpack.c.l.b16 %v272
      %v277 = vunpack.c.l.b16 %v273
      %v278 = vpack.c.b16 %v277, %v276
      %vm279 = vcmask 72704
      %v281 = vsel %vm279, %v271, 0
      %vm283 = vcmask 1043456
      %vm284 = vcmask 1044480
      %v285 = vsel %vm283, 4294967295, 65535
      %v286 = vsel %vm284, %v285, 0
      %v288 = vand.u32 %v278, %v286
      %290 = vmatprep.subr.bf16.mxu0 0
      %291 = vmatpush1.bf16.msra.mxu0 %v288
      %292 = vmatprep.subr.bf16.mxu0 0
      %293 = vmatpush1.bf16.msra.mxu0 0
      %294 = vmatprep.subr.bf16.mxu0 0
      %295 = vmatpush1.bf16.msra.mxu0 0
      %296 = vmatprep.subr.bf16.mxu0 0
      %297 = vmatpush1.bf16.msra.mxu0 0
      %298 = vmatprep.subr.bf16.mxu0 0
      %299 = vmatpush1.bf16.msra.mxu0 0
      %300 = vmatprep.subr.bf16.mxu0 0
      %301 = vmatpush1.bf16.msra.mxu0 0
      %302 = vmatprep.subr.bf16.mxu0 0
      %303 = vmatpush1.bf16.msra.mxu0 0
      %304 = vmatprep.subr.bf16.mxu0 0
      %305 = vmatpush1.bf16.msra.mxu0 0
      %306 = vmatprep.subr.bf16.mxu0 0
      %307 = vmatpush1.bf16.msra.mxu0 0
      %308 = vmatprep.subr.bf16.mxu0 0
      %309 = vmatpush1.bf16.msra.mxu0 0
      %310 = vmatprep.subr.bf16.mxu0 0
      %311 = vmatpush1.bf16.msra.mxu0 0
      %312 = vmatprep.subr.bf16.mxu0 0
      %313 = vmatpush1.bf16.msra.mxu0 0
      %314 = vmatprep.subr.bf16.mxu0 0
      %315 = vmatpush1.bf16.msra.mxu0 0
      %316 = vmatprep.subr.bf16.mxu0 0
      %317 = vmatpush1.bf16.msra.mxu0 0
      %318 = vmatprep.subr.bf16.mxu0 0
      %319 = vmatpush1.bf16.msra.mxu0 0
      %320 = vmatprep.subr.bf16.mxu0 0
      %321 = vmatpush1.bf16.msra.mxu0 0
      %322 = vmatprep.mubr.bf16.mxu0 0
      %323 = vmatmul.mubr.bf16.gmra.mrb[0].mxu0 %v281
      %v324 = vpop.f32.mrb[0].mxu0
      %v325 = vadd.f32 0.0, %v324
      %v326 = vpop.f32.mrb[0].mxu0
      %v327 = vpop.f32.mrb[0].mxu0
      %v328 = vpop.f32.mrb[0].mxu0
      %329 = vdwg.mxu0
      %v330 = vpack.c.bf16 %v325, %v325
      %vm331 = vcmask 257024
      %332 = vst.msk [vmem:[%s255] sm:$0xf] %vm331, %v330
      %vm333 = vcmask 261120
      %v334 = vsel %vm333, %v325, 0.0
      %v335 = vrot.slane %v334, 4
      %v336 = vadd.f32 %v334, %v335
      %v337 = vrot.slane %v336, 2
      %v338 = vadd.f32 %v336, %v337
      %v339 = vrot.slane %v338, 1
      %v340 = vadd.f32 %v338, %v339
      %v341 = vmul.f32 %v325, %v325
      %v342 = vsel %vm333, %v341, 0.0
      %v343 = vrot.slane %v342, 4
      %v344 = vadd.f32 %v342, %v343
      %v345 = vrot.slane %v344, 2
      %v346 = vadd.f32 %v344, %v345
      %v347 = vrot.slane %v346, 1
      %v348 = vadd.f32 %v346, %v347
      %349 = vst.msk [vmem:[%s262] sm:$0xff] %vm333, %v340
      %350 = vst.msk [vmem:[%s269] sm:$0xff] %vm333, %v348
      %p351 = scmp.lt.s32.totalorder %s20, 15
      %s352 = scalar_select %p351, %s20, 15
      %p353 = scmp.lt.s32.totalorder %s21, 0
      %s354 = scalar_select %p353, %s21, 0
      %s355 = sadd.s32 %s354, %s352
      %s356 = smul.addr %s355, 4
      %s357 = scalar_lea.vmem %s2, %s356
      %p358 = scmp.lt.s32.totalorder %s20, 15
      %s359 = scalar_select %p358, %s20, 15
      %p360 = scmp.lt.s32.totalorder %s21, 0
      %s361 = scalar_select %p360, %s21, 0
      %s362 = sadd.s32 %s361, %s359
      %s363 = smul.addr %s362, 8
      %s364 = scalar_lea.vmem %s3, %s363
      %p365 = scmp.lt.s32.totalorder %s20, 15
      %s366 = scalar_select %p365, %s20, 15
      %p367 = scmp.lt.s32.totalorder %s21, 0
      %s368 = scalar_select %p367, %s21, 0
      %s369 = sadd.s32 %s368, %s366
      %s370 = smul.addr %s369, 8
      %s371 = scalar_lea.vmem %s4, %s370
      // Predicated region
      $region29: #{acgan_generator_forward.9} parent=27 // pred_check
        %p372 = pneg %p100
      $region30: #{acgan_generator_forward.9} parent=27 // pred_check_branch
        %374 = sbr.rel (%p372) target = $region32
      $region31: #{acgan_generator_forward.9} parent=27 // pred_region
        _
      $region32: #{acgan_generator_forward.9} parent=27 // pred_fallthru
        _
      // Predicated region
      $region33: #{acgan_generator_forward.9} parent=27 // pred_check
        %p375 = pneg %p128
      $region34: #{acgan_generator_forward.9} parent=27 // pred_check_branch
        %377 = sbr.rel (%p375) target = $region36
      $region35: #{acgan_generator_forward.9} parent=27 // pred_region
        _
      $region36: #{acgan_generator_forward.9} parent=27 // pred_fallthru
        _
      // Predicated region
      $region37: #{acgan_generator_forward.9} parent=27 // pred_check
        %p378 = pneg %p156
      $region38: #{acgan_generator_forward.9} parent=27 // pred_check_branch
        %380 = sbr.rel (%p378) target = $region40
      $region39: #{acgan_generator_forward.9} parent=27 // pred_region
        _
      $region40: #{acgan_generator_forward.9} parent=27 // pred_fallthru
        _
    $region28: #{acgan_generator_forward.9} parent=5 // pred_fallthru
      _
    %p381 = scmp.le.s32.totalorder 2, %s11
    // Predicated region
    $region41: #{acgan_generator_forward.9} parent=5 // pred_check
      %p382 = pneg %p381
    $region42: #{acgan_generator_forward.9} parent=5 // pred_check_branch
      %384 = sbr.rel (%p382) target = $region44
    $region43: #{acgan_generator_forward.9} parent=5 // pred_region
      %s385 = ssub.s32 %s11, 2
      // Predicated region
      $region45: #{acgan_generator_forward.9} parent=43 // pred_check
        %p386 = pneg %p106
      $region46: #{acgan_generator_forward.9} parent=43 // pred_check_branch
        %388 = sbr.rel (%p386) target = $region48
      $region47: #{acgan_generator_forward.9} parent=43 // pred_region
        %p389 = scmp.lt.s32.totalorder %s22, 15
        %s390 = scalar_select %p389, %s22, 15
        %p391 = scmp.lt.s32.totalorder %s23, 0
        %s392 = scalar_select %p391, %s23, 0
        %s393 = sadd.s32 %s392, %s390
        %s394 = smul.addr %s393, 4
        %s395 = scalar_lea.vmem %s2, %s394
      $region48: #{acgan_generator_forward.9} parent=43 // pred_fallthru
        _
      // Predicated region
      $region49: #{acgan_generator_forward.9} parent=43 // pred_check
        %p396 = pneg %p134
      $region50: #{acgan_generator_forward.9} parent=43 // pred_check_branch
        %398 = sbr.rel (%p396) target = $region52
      $region51: #{acgan_generator_forward.9} parent=43 // pred_region
        %p399 = scmp.lt.s32.totalorder %s22, 15
        %s400 = scalar_select %p399, %s22, 15
        %p401 = scmp.lt.s32.totalorder %s23, 0
        %s402 = scalar_select %p401, %s23, 0
        %s403 = sadd.s32 %s402, %s400
        %s404 = smul.addr %s403, 8
        %s405 = scalar_lea.vmem %s3, %s404
      $region52: #{acgan_generator_forward.9} parent=43 // pred_fallthru
        _
      // Predicated region
      $region53: #{acgan_generator_forward.9} parent=43 // pred_check
        %p406 = pneg %p162
      $region54: #{acgan_generator_forward.9} parent=43 // pred_check_branch
        %408 = sbr.rel (%p406) target = $region56
      $region55: #{acgan_generator_forward.9} parent=43 // pred_region
        %p409 = scmp.lt.s32.totalorder %s22, 15
        %s410 = scalar_select %p409, %s22, 15
        %p411 = scmp.lt.s32.totalorder %s23, 0
        %s412 = scalar_select %p411, %s23, 0
        %s413 = sadd.s32 %s412, %s410
        %s414 = smul.addr %s413, 8
        %s415 = scalar_lea.vmem %s4, %s414
      $region56: #{acgan_generator_forward.9} parent=43 // pred_fallthru
        _
    $region44: #{acgan_generator_forward.9} parent=5 // pred_fallthru
      _
  $region6: #{acgan_generator_forward.9} parent=0 // loop_footer
    %s15 = sadd.s32 1, %s11
  $region7: #{acgan_generator_forward.9} parent=0 // loop_footer_branch
    %10 = sbr.rel target = $region3
  $region8: #{acgan_generator_forward.9} parent=0 // loop_exit
    _

// kernel: acgan_generator_forward.11
$region0: #{acgan_generator_forward.11}
  #allocation0 [shape = 'u32[]', space=smem, size = 0x4, offset = 0x4, fixed_abs, tag = 'smem constant byte address 0x4 - core index']
  #allocation1 [shape = 'u32[144,128]{1,0:T(1,128)}', space=vmem, size = 0x12000, scoped, tag = 'internal scratch']
  %s0 = inlined_call_operand.vmem [shape: bf16[4,32,128], index: 0, kind: input, shape index: {}]
  %s1 = inlined_call_operand.vmem [shape: bf16[4,128,16], index: 1, kind: input, shape index: {}]
  %s2 = inlined_call_operand.vmem [shape: bf16[4,32,16], index: 2, kind: output, shape index: {0}]
  %s3 = inlined_call_operand.vmem [shape: f32[4,1,8,16], index: 3, kind: output, shape index: {1}]
  %s4 = inlined_call_operand.vmem [shape: f32[4,1,8,16], index: 4, kind: output, shape index: {2}]
  %5 = xla_tuple %s2, %s3, %s4
  %s6 = sld [smem:[#allocation0]]
  $region57: #{acgan_generator_forward.11} parent=0
    _
  %s8 = ssub.s32 1, %s6
  %s9 = scalar_select 0, %s8, %s6
  loop: start=0, step=1, limit=6
  $region2: #{acgan_generator_forward.11} parent=0 // loop_pre_header
    _
  $region3: #{acgan_generator_forward.11} parent=0 // loop_header
    %s11 = sphi 0, %s15
    %p12 = scmp.ge.s32.totalorder %s11, 6
    %s18 = sphi 0, %s30
    %s19 = sphi 0, %s26
    %s20 = sphi 0, %s18
    %s21 = sphi 0, %s19
    %s22 = sphi 0, %s20
    %s23 = sphi 0, %s21
    %s35 = sphi 0, %s37
    %s38 = sphi 0, %s35
    %s39 = sphi 0, %s38
    %s55 = sphi 0, %s39
    %s61 = sphi 0, %s63
    %s64 = sphi 0, %s61
    %s65 = sphi 0, %s64
    %s81 = sphi 0, %s65
    %s89 = sphi 0, %s91
    %s92 = sphi 0, %s89
    %s93 = sphi 0, %s92
    %s109 = sphi 0, %s93
    %s117 = sphi 0, %s119
    %s120 = sphi 0, %s117
    %s121 = sphi 0, %s120
    %s137 = sphi 0, %s121
    %s145 = sphi 0, %s147
    %s148 = sphi 0, %s145
    %s149 = sphi 0, %s148
    %s165 = sphi 0, %s149
  $region4: #{acgan_generator_forward.11} parent=0 // loop_header_branch
    %14 = sbr.rel (%p12) target = $region8
  $region5: #{acgan_generator_forward.11} parent=0 // loop_body
    %s16 = ssub.s32 %s11, 1
    %s17 = ssub.s32 %s11, 2
    %s24 = sadd.s32 1, %s19
    %p25 = scmp.ge.s32.totalorder %s24, 1
    %s26 = scalar_select %p25, 0, %s24
    %s27 = sadd.s32 1, %s18
    %s28 = scalar_select %p25, %s27, %s18
    %p29 = scmp.ge.s32.totalorder %s28, 4
    %s30 = scalar_select %p29, 0, %s28
    %s31 = ssub.s32 %s18, %s30
    %s32 = ssub.s32 %s19, %s26
    %s33 = sor.u32 %s31, %s32
    %p34 = scmp.eq.s32.totalorder %s33, 0
    %s36 = sadd.s32 %s35, 1
    %s37 = scalar_select %p34, %s35, %s36
    %p40 = pneg %p34
    %p41 = scmp.eq.s32.totalorder %s11, 3
    %p42 = por %p40, %p41
    %p43 = scmp.ne.s32.totalorder %s35, %s38
    %p44 = scmp.eq.s32.totalorder %s11, 0
    %p45 = por %p43, %p44
    %p46 = scmp.ne.s32.totalorder %s35, %s38
    %p47 = scmp.eq.s32.totalorder %s16, 3
    %p48 = por %p46, %p47
    %p49 = scmp.ne.s32.totalorder %s38, %s39
    %p50 = scmp.eq.s32.totalorder %s16, 0
    %p51 = por %p49, %p50
    %p52 = scmp.ne.s32.totalorder %s38, %s39
    %p53 = scmp.eq.s32.totalorder %s17, 3
    %p54 = por %p52, %p53
    %p56 = scmp.ne.s32.totalorder %s39, %s55
    %p57 = scmp.eq.s32.totalorder %s17, 0
    %p58 = por %p56, %p57
    %s59 = ssub.s32 %s18, %s30
    %p60 = scmp.eq.s32.totalorder %s59, 0
    %s62 = sadd.s32 %s61, 1
    %s63 = scalar_select %p60, %s61, %s62
    %p66 = pneg %p60
    %p67 = scmp.eq.s32.totalorder %s11, 3
    %p68 = por %p66, %p67
    %p69 = scmp.ne.s32.totalorder %s61, %s64
    %p70 = scmp.eq.s32.totalorder %s11, 0
    %p71 = por %p69, %p70
    %p72 = scmp.ne.s32.totalorder %s61, %s64
    %p73 = scmp.eq.s32.totalorder %s16, 3
    %p74 = por %p72, %p73
    %p75 = scmp.ne.s32.totalorder %s64, %s65
    %p76 = scmp.eq.s32.totalorder %s16, 0
    %p77 = por %p75, %p76
    %p78 = scmp.ne.s32.totalorder %s64, %s65
    %p79 = scmp.eq.s32.totalorder %s17, 3
    %p80 = por %p78, %p79
    %p82 = scmp.ne.s32.totalorder %s65, %s81
    %p83 = scmp.eq.s32.totalorder %s17, 0
    %p84 = por %p82, %p83
    %s85 = ssub.s32 %s18, %s30
    %s86 = ssub.s32 %s19, %s26
    %s87 = sor.u32 %s85, %s86
    %p88 = scmp.eq.s32.totalorder %s87, 0
    %s90 = sadd.s32 %s89, 1
    %s91 = scalar_select %p88, %s89, %s90
    %p94 = pneg %p88
    %p95 = scmp.eq.s32.totalorder %s11, 3
    %p96 = por %p94, %p95
    %p97 = scmp.ne.s32.totalorder %s89, %s92
    %p98 = scmp.eq.s32.totalorder %s11, 0
    %p99 = por %p97, %p98
    %p100 = scmp.ne.s32.totalorder %s89, %s92
    %p101 = scmp.eq.s32.totalorder %s16, 3
    %p102 = por %p100, %p101
    %p103 = scmp.ne.s32.totalorder %s92, %s93
    %p104 = scmp.eq.s32.totalorder %s16, 0
    %p105 = por %p103, %p104
    %p106 = scmp.ne.s32.totalorder %s92, %s93
    %p107 = scmp.eq.s32.totalorder %s17, 3
    %p108 = por %p106, %p107
    %p110 = scmp.ne.s32.totalorder %s93, %s109
    %p111 = scmp.eq.s32.totalorder %s17, 0
    %p112 = por %p110, %p111
    %s113 = ssub.s32 %s18, %s30
    %s114 = ssub.s32 %s19, %s26
    %s115 = sor.u32 %s113, %s114
    %p116 = scmp.eq.s32.totalorder %s115, 0
    %s118 = sadd.s32 %s117, 1
    %s119 = scalar_select %p116, %s117, %s118
    %p122 = pneg %p116
    %p123 = scmp.eq.s32.totalorder %s11, 3
    %p124 = por %p122, %p123
    %p125 = scmp.ne.s32.totalorder %s117, %s120
    %p126 = scmp.eq.s32.totalorder %s11, 0
    %p127 = por %p125, %p126
    %p128 = scmp.ne.s32.totalorder %s117, %s120
    %p129 = scmp.eq.s32.totalorder %s16, 3
    %p130 = por %p128, %p129
    %p131 = scmp.ne.s32.totalorder %s120, %s121
    %p132 = scmp.eq.s32.totalorder %s16, 0
    %p133 = por %p131, %p132
    %p134 = scmp.ne.s32.totalorder %s120, %s121
    %p135 = scmp.eq.s32.totalorder %s17, 3
    %p136 = por %p134, %p135
    %p138 = scmp.ne.s32.totalorder %s121, %s137
    %p139 = scmp.eq.s32.totalorder %s17, 0
    %p140 = por %p138, %p139
    %s141 = ssub.s32 %s18, %s30
    %s142 = ssub.s32 %s19, %s26
    %s143 = sor.u32 %s141, %s142
    %p144 = scmp.eq.s32.totalorder %s143, 0
    %s146 = sadd.s32 %s145, 1
    %s147 = scalar_select %p144, %s145, %s146
    %p150 = pneg %p144
    %p151 = scmp.eq.s32.totalorder %s11, 3
    %p152 = por %p150, %p151
    %p153 = scmp.ne.s32.totalorder %s145, %s148
    %p154 = scmp.eq.s32.totalorder %s11, 0
    %p155 = por %p153, %p154
    %p156 = scmp.ne.s32.totalorder %s145, %s148
    %p157 = scmp.eq.s32.totalorder %s16, 3
    %p158 = por %p156, %p157
    %p159 = scmp.ne.s32.totalorder %s148, %s149
    %p160 = scmp.eq.s32.totalorder %s16, 0
    %p161 = por %p159, %p160
    %p162 = scmp.ne.s32.totalorder %s148, %s149
    %p163 = scmp.eq.s32.totalorder %s17, 3
    %p164 = por %p162, %p163
    %p166 = scmp.ne.s32.totalorder %s149, %s165
    %p167 = scmp.eq.s32.totalorder %s17, 0
    %p168 = por %p166, %p167
    %p169 = scmp.le.s32.totalorder 1, %s11
    %p170 = scmp.lt.s32.totalorder %s11, 5
    %p171 = pnand %p169, %p170
    %p172 = pneg %p171
    // Predicated region
    $region9: #{acgan_generator_forward.11} parent=5 // pred_check
      _
    $region10: #{acgan_generator_forward.11} parent=5 // pred_check_branch
      %174 = sbr.rel (%p171) target = $region12
    $region11: #{acgan_generator_forward.11} parent=5 // pred_region
      %s175 = ssub.s32 %s11, 1
    $region12: #{acgan_generator_forward.11} parent=5 // pred_fallthru
      _
    %p176 = scmp.lt.s32.totalorder %s11, 4
    // Predicated region
    $region13: #{acgan_generator_forward.11} parent=5 // pred_check
      %p177 = pneg %p176
    $region14: #{acgan_generator_forward.11} parent=5 // pred_check_branch
      %179 = sbr.rel (%p177) target = $region16
    $region15: #{acgan_generator_forward.11} parent=5 // pred_region
      // Predicated region
      $region17: #{acgan_generator_forward.11} parent=15 // pred_check
        %p180 = pneg %p45
      $region18: #{acgan_generator_forward.11} parent=15 // pred_check_branch
        %182 = sbr.rel (%p180) target = $region20
      $region19: #{acgan_generator_forward.11} parent=15 // pred_region
        %s183 = smul.u32 4, %s19
        %p184 = scmp.lt.s32.totalorder %s18, 3
        %s185 = scalar_select %p184, %s18, 3
        %p186 = scmp.lt.s32.totalorder %s183, 3
        %s187 = scalar_select %p186, %s183, 3
        %s188 = smul.addr %s185, 4
        %s189 = sadd.s32 %s187, %s188
        %s190 = smul.addr %s189, 4
        %s191 = scalar_lea.vmem %s0, %s190
        %s192 = smul.u32 4, %s19
      $region20: #{acgan_generator_forward.11} parent=15 // pred_fallthru
        _
      // Predicated region
      $region21: #{acgan_generator_forward.11} parent=15 // pred_check
        %p193 = pneg %p71
      $region22: #{acgan_generator_forward.11} parent=15 // pred_check_branch
        %195 = sbr.rel (%p193) target = $region24
      $region23: #{acgan_generator_forward.11} parent=15 // pred_region
        %p196 = scmp.lt.s32.totalorder %s18, 3
        %s197 = scalar_select %p196, %s18, 3
        %s198 = smul.addr %s197, 16
        %s199 = smul.addr %s198, 4
        %s200 = scalar_lea.vmem %s1, %s199
      $region24: #{acgan_generator_forward.11} parent=15 // pred_fallthru
        _
    $region16: #{acgan_generator_forward.11} parent=5 // pred_fallthru
      _
    %p201 = scmp.le.s32.totalorder 1, %s11
    %p202 = scmp.lt.s32.totalorder %s11, 5
    %p203 = pnand %p201, %p202
    %p204 = pneg %p203
    // Predicated region
    $region25: #{acgan_generator_forward.11} parent=5 // pred_check
      _
    $region26: #{acgan_generator_forward.11} parent=5 // pred_check_branch
      %206 = sbr.rel (%p203) target = $region28
    $region27: #{acgan_generator_forward.11} parent=5 // pred_region
      %s207 = ssub.s32 %s11, 1
      %s208 = smul.u32 4, %s21
      %p209 = scmp.lt.s32.totalorder %s20, 3
      %s210 = scalar_select %p209, %s20, 3
      %p211 = scmp.lt.s32.totalorder %s208, 3
      %s212 = scalar_select %p211, %s208, 3
      %s213 = smul.addr %s210, 4
      %s214 = sadd.s32 %s212, %s213
      %s215 = smul.addr %s214, 4
      %s216 = scalar_lea.vmem %s0, %s215
      %p217 = pneg %p51
      %p218 = pneg %p48
      %p219 = scmp.lt.s32.totalorder %s20, 3
      %s220 = scalar_select %p219, %s20, 3
      %s221 = smul.addr %s220, 16
      %s222 = smul.addr %s221, 4
      %s223 = scalar_lea.vmem %s1, %s222
      %p224 = pneg %p77
      %p225 = pneg %p74
      %p226 = pneg %p105
      %p227 = pneg %p102
      %s228 = smul.u32 4, %s21
      %p229 = scmp.lt.s32.totalorder %s20, 3
      %s230 = scalar_select %p229, %s20, 3
      %p231 = scmp.lt.s32.totalorder %s228, 3
      %s232 = scalar_select %p231, %s228, 3
      %s233 = smul.addr %s230, 4
      %s234 = sadd.s32 %s232, %s233
      %s235 = smul.addr %s234, 4
      %s236 = scalar_lea.vmem %s2, %s235
      %p237 = pneg %p133
      %p238 = pneg %p130
      %p239 = scmp.lt.s32.totalorder %s20, 3
      %s240 = scalar_select %p239, %s20, 3
      %p241 = scmp.lt.s32.totalorder %s21, 0
      %s242 = scalar_select %p241, %s21, 0
      %s243 = sadd.s32 %s242, %s240
      %s244 = smul.addr %s243, 8
      %s245 = scalar_lea.vmem %s3, %s244
      %p246 = pneg %p161
      %p247 = pneg %p158
      %p248 = scmp.lt.s32.totalorder %s20, 3
      %s249 = scalar_select %p248, %s20, 3
      %p250 = scmp.lt.s32.totalorder %s21, 0
      %s251 = scalar_select %p250, %s21, 0
      %s252 = sadd.s32 %s251, %s249
      %s253 = smul.addr %s252, 8
      %s254 = scalar_lea.vmem %s4, %s253
      %s255 = smul.u32 4, %s21
      %p256 = scmp.lt.s32.totalorder %s20, 3
      %s257 = scalar_select %p256, %s20, 3
      %p258 = scmp.lt.s32.totalorder %s255, 3
      %s259 = scalar_select %p258, %s255, 3
      %s260 = smul.addr %s257, 4
      %s261 = sadd.s32 %s259, %s260
      %s262 = smul.addr %s261, 4
      %s263 = scalar_lea.vmem %s0, %s262
      %s264 = smul.u32 4, %s21
      %p265 = scmp.lt.s32.totalorder %s20, 3
      %s266 = scalar_select %p265, %s20, 3
      %s267 = smul.addr %s266, 16
      %s268 = smul.addr %s267, 4
      %s269 = scalar_lea.vmem %s1, %s268
      %s270 = smul.u32 4, %s21
      %p271 = scmp.lt.s32.totalorder %s20, 3
      %s272 = scalar_select %p271, %s20, 3
      %p273 = scmp.lt.s32.totalorder %s270, 3
      %s274 = scalar_select %p273, %s270, 3
      %s275 = smul.addr %s272, 4
      %s276 = sadd.s32 %s274, %s275
      %s277 = smul.addr %s276, 4
      %s278 = scalar_lea.vmem %s2, %s277
      %s279 = smul.u32 4, %s21
      %p280 = scmp.lt.s32.totalorder %s20, 3
      %s281 = scalar_select %p280, %s20, 3
      %p282 = scmp.lt.s32.totalorder %s21, 0
      %s283 = scalar_select %p282, %s21, 0
      %s284 = sadd.s32 %s283, %s281
      %s285 = smul.addr %s284, 8
      %s286 = scalar_lea.vmem %s3, %s285
      %p287 = scmp.lt.s32.totalorder %s20, 3
      %s288 = scalar_select %p287, %s20, 3
      %p289 = scmp.lt.s32.totalorder %s21, 0
      %s290 = scalar_select %p289, %s21, 0
      %s291 = sadd.s32 %s290, %s288
      %s292 = smul.addr %s291, 8
      %s293 = scalar_lea.vmem %s4, %s292
      %v295 = vld [vmem:[%s263] sm:$0xf]
      %v296 = vld [vmem:[%s263 + $0x4] sm:$0xf]
      %v297 = vld [vmem:[%s263 + $0x8] sm:$0xf]
      %v298 = vld [vmem:[%s263 + $0xc] sm:$0xf]
      %v299 = vld [vmem:[%s269] sm:$0xf]
      %v300 = vld [vmem:[%s269 + $0x4] sm:$0xf]
      %v301 = vld [vmem:[%s269 + $0x8] sm:$0xf]
      %v302 = vld [vmem:[%s269 + $0xc] sm:$0xf]
      %v303 = vld [vmem:[%s269 + $0x10] sm:$0xf]
      %v304 = vld [vmem:[%s269 + $0x14] sm:$0xf]
      %v305 = vld [vmem:[%s269 + $0x18] sm:$0xf]
      %v306 = vld [vmem:[%s269 + $0x1c] sm:$0xf]
      %v307 = vld [vmem:[%s269 + $0x20] sm:$0xf]
      %v308 = vld [vmem:[%s269 + $0x24] sm:$0xf]
      %v309 = vld [vmem:[%s269 + $0x28] sm:$0xf]
      %v310 = vld [vmem:[%s269 + $0x2c] sm:$0xf]
      %v311 = vld [vmem:[%s269 + $0x30] sm:$0xf]
      %v312 = vld [vmem:[%s269 + $0x34] sm:$0xf]
      %v313 = vld [vmem:[%s269 + $0x38] sm:$0xf]
      %v314 = vld [vmem:[%s269 + $0x3c] sm:$0xf]
      %v319 = vunpack.c.l.b16 %v295
      %v320 = vunpack.c.l.b16 %v296
      %v321 = vunpack.c.l.b16 %v297
      %v322 = vunpack.c.l.b16 %v298
      %v323 = vpack.c.b16 %v320, %v319
      %v324 = vpack.c.b16 %v322, %v321
      %v343 = vunpack.c.l.b16 %v299
      %v344 = vunpack.c.l.b16 %v300
      %v345 = vunpack.c.l.b16 %v301
      %v346 = vunpack.c.l.b16 %v302
      %v347 = vunpack.c.l.b16 %v303
      %v348 = vunpack.c.l.b16 %v304
      %v349 = vunpack.c.l.b16 %v305
      %v350 = vunpack.c.l.b16 %v306
      %v351 = vunpack.c.l.b16 %v307
      %v352 = vunpack.c.l.b16 %v308
      %v353 = vunpack.c.l.b16 %v309
      %v354 = vunpack.c.l.b16 %v310
      %v355 = vunpack.c.l.b16 %v311
      %v356 = vunpack.c.l.b16 %v312
      %v357 = vunpack.c.l.b16 %v313
      %v358 = vunpack.c.l.b16 %v314
      %v359 = vpack.c.b16 %v344, %v343
      %v360 = vpack.c.b16 %v346, %v345
      %v361 = vpack.c.b16 %v348, %v347
      %v362 = vpack.c.b16 %v350, %v349
      %v363 = vpack.c.b16 %v352, %v351
      %v364 = vpack.c.b16 %v354, %v353
      %v365 = vpack.c.b16 %v356, %v355
      %v366 = vpack.c.b16 %v358, %v357
      %375 = vmatprep.subr.bf16.mxu0 0
      %376 = vmatpush1.bf16.msra.mxu0 %v359
      %377 = vmatprep.subr.bf16.mxu0 0
      %378 = vmatpush1.bf16.msra.mxu0 %v360
      %379 = vmatprep.subr.bf16.mxu0 0
      %380 = vmatpush1.bf16.msra.mxu0 %v361
      %381 = vmatprep.subr.bf16.mxu0 0
      %382 = vmatpush1.bf16.msra.mxu0 %v362
      %383 = vmatprep.subr.bf16.mxu0 0
      %384 = vmatpush1.bf16.msra.mxu0 %v363
      %385 = vmatprep.subr.bf16.mxu0 0
      %386 = vmatpush1.bf16.msra.mxu0 %v364
      %387 = vmatprep.subr.bf16.mxu0 0
      %388 = vmatpush1.bf16.msra.mxu0 %v365
      %389 = vmatprep.subr.bf16.mxu0 0
      %390 = vmatpush1.bf16.msra.mxu0 %v366
      %391 = vmatprep.subr.bf16.mxu0 0
      %392 = vmatpush1.bf16.msra.mxu0 0
      %393 = vmatprep.subr.bf16.mxu0 0
      %394 = vmatpush1.bf16.msra.mxu0 0
      %395 = vmatprep.subr.bf16.mxu0 0
      %396 = vmatpush1.bf16.msra.mxu0 0
      %397 = vmatprep.subr.bf16.mxu0 0
      %398 = vmatpush1.bf16.msra.mxu0 0
      %399 = vmatprep.subr.bf16.mxu0 0
      %400 = vmatpush1.bf16.msra.mxu0 0
      %401 = vmatprep.subr.bf16.mxu0 0
      %402 = vmatpush1.bf16.msra.mxu0 0
      %403 = vmatprep.subr.bf16.mxu0 0
      %404 = vmatpush1.bf16.msra.mxu0 0
      %405 = vmatprep.subr.bf16.mxu0 0
      %406 = vmatpush1.bf16.msra.mxu0 0
      %407 = vmatprep.mubr.bf16.mxu0 0
      %408 = vmatmul.mubr.bf16.gmra.mrb[0].mxu0 %v323
      %v409 = vpop.f32.mrb[0].mxu0
      %v410 = vadd.f32 0.0, %v409
      %v411 = vpop.f32.mrb[0].mxu0
      %v412 = vpop.f32.mrb[0].mxu0
      %v413 = vadd.f32 0.0, %v412
      %v414 = vpop.f32.mrb[0].mxu0
      %415 = vmatprep.mubr.bf16.mxu0 0
      %416 = vmatmul.mubr.bf16.gmra.mrb[0].mxu0 %v324
      %v417 = vpop.f32.mrb[0].mxu0
      %v418 = vadd.f32 0.0, %v417
      %v419 = vpop.f32.mrb[0].mxu0
      %v420 = vpop.f32.mrb[0].mxu0
      %v421 = vadd.f32 0.0, %v420
      %v422 = vpop.f32.mrb[0].mxu0
      %423 = vdwg.mxu0
      %v424 = vpack.c.bf16 %v413, %v410
      %v425 = vpack.c.bf16 %v421, %v418
      %v428 = vunpack.c.l.b16 %v424
      %v429 = vunpack.c.h.b16 %v424
      %v430 = vunpack.c.l.b16 %v425
      %v431 = vunpack.c.h.b16 %v425
      %v432 = vpack.c.b16 %v428, %v428
      %v433 = vpack.c.b16 %v429, %v429
      %v434 = vpack.c.b16 %v430, %v430
      %v435 = vpack.c.b16 %v431, %v431
      %vm440 = vcmask 125952
      %441 = vst.msk [vmem:[%s278] sm:$0xf] %vm440, %v432
      %442 = vst.msk [vmem:[%s278 + $0x4] sm:$0xf] %vm440, %v433
      %443 = vst.msk [vmem:[%s278 + $0x8] sm:$0xf] %vm440, %v434
      %444 = vst.msk [vmem:[%s278 + $0xc] sm:$0xf] %vm440, %v435
      %vm445 = vcmask 130048
      %v446 = vsel %vm445, %v410, 0.0
      %v447 = vsel %vm445, %v413, 0.0
      %v448 = vadd.f32 %v446, %v447
      %v449 = vsel %vm445, %v418, 0.0
      %v450 = vadd.f32 %v448, %v449
      %v451 = vsel %vm445, %v421, 0.0
      %v452 = vadd.f32 %v450, %v451
      %v453 = vrot.slane %v452, 4
      %v454 = vadd.f32 %v452, %v453
      %v455 = vrot.slane %v454, 2
      %v456 = vadd.f32 %v454, %v455
      %v457 = vrot.slane %v456, 1
      %v458 = vadd.f32 %v456, %v457
      %v459 = vmul.f32 %v410, %v410
      %v460 = vmul.f32 %v413, %v413
      %v461 = vmul.f32 %v418, %v418
      %v462 = vmul.f32 %v421, %v421
      %v463 = vsel %vm445, %v459, 0.0
      %v464 = vsel %vm445, %v460, 0.0
      %v465 = vadd.f32 %v463, %v464
      %v466 = vsel %vm445, %v461, 0.0
      %v467 = vadd.f32 %v465, %v466
      %v468 = vsel %vm445, %v462, 0.0
      %v469 = vadd.f32 %v467, %v468
      %v470 = vrot.slane %v469, 4
      %v471 = vadd.f32 %v469, %v470
      %v472 = vrot.slane %v471, 2
      %v473 = vadd.f32 %v471, %v472
      %v474 = vrot.slane %v473, 1
      %v475 = vadd.f32 %v473, %v474
      %476 = vst.msk [vmem:[%s286] sm:$0xff] %vm445, %v458
      %477 = vst.msk [vmem:[%s293] sm:$0xff] %vm445, %v475
      %s478 = smul.u32 4, %s21
      %p479 = scmp.lt.s32.totalorder %s20, 3
      %s480 = scalar_select %p479, %s20, 3
      %p481 = scmp.lt.s32.totalorder %s478, 3
      %s482 = scalar_select %p481, %s478, 3
      %s483 = smul.addr %s480, 4
      %s484 = sadd.s32 %s482, %s483
      %s485 = smul.addr %s484, 4
      %s486 = scalar_lea.vmem %s2, %s485
      %p487 = scmp.lt.s32.totalorder %s20, 3
      %s488 = scalar_select %p487, %s20, 3
      %p489 = scmp.lt.s32.totalorder %s21, 0
      %s490 = scalar_select %p489, %s21, 0
      %s491 = sadd.s32 %s490, %s488
      %s492 = smul.addr %s491, 8
      %s493 = scalar_lea.vmem %s3, %s492
      %p494 = scmp.lt.s32.totalorder %s20, 3
      %s495 = scalar_select %p494, %s20, 3
      %p496 = scmp.lt.s32.totalorder %s21, 0
      %s497 = scalar_select %p496, %s21, 0
      %s498 = sadd.s32 %s497, %s495
      %s499 = smul.addr %s498, 8
      %s500 = scalar_lea.vmem %s4, %s499
      // Predicated region
      $region29: #{acgan_generator_forward.11} parent=27 // pred_check
        %p501 = pneg %p102
      $region30: #{acgan_generator_forward.11} parent=27 // pred_check_branch
        %503 = sbr.rel (%p501) target = $region32
      $region31: #{acgan_generator_forward.11} parent=27 // pred_region
        %s504 = smul.u32 4, %s21
      $region32: #{acgan_generator_forward.11} parent=27 // pred_fallthru
        _
      // Predicated region
      $region33: #{acgan_generator_forward.11} parent=27 // pred_check
        %p505 = pneg %p130
      $region34: #{acgan_generator_forward.11} parent=27 // pred_check_branch
        %507 = sbr.rel (%p505) target = $region36
      $region35: #{acgan_generator_forward.11} parent=27 // pred_region
        _
      $region36: #{acgan_generator_forward.11} parent=27 // pred_fallthru
        _
      // Predicated region
      $region37: #{acgan_generator_forward.11} parent=27 // pred_check
        %p508 = pneg %p158
      $region38: #{acgan_generator_forward.11} parent=27 // pred_check_branch
        %510 = sbr.rel (%p508) target = $region40
      $region39: #{acgan_generator_forward.11} parent=27 // pred_region
        _
      $region40: #{acgan_generator_forward.11} parent=27 // pred_fallthru
        _
    $region28: #{acgan_generator_forward.11} parent=5 // pred_fallthru
      _
    %p511 = scmp.le.s32.totalorder 2, %s11
    // Predicated region
    $region41: #{acgan_generator_forward.11} parent=5 // pred_check
      %p512 = pneg %p511
    $region42: #{acgan_generator_forward.11} parent=5 // pred_check_branch
      %514 = sbr.rel (%p512) target = $region44
    $region43: #{acgan_generator_forward.11} parent=5 // pred_region
      %s515 = ssub.s32 %s11, 2
      // Predicated region
      $region45: #{acgan_generator_forward.11} parent=43 // pred_check
        %p516 = pneg %p108
      $region46: #{acgan_generator_forward.11} parent=43 // pred_check_branch
        %518 = sbr.rel (%p516) target = $region48
      $region47: #{acgan_generator_forward.11} parent=43 // pred_region
        %s519 = smul.u32 4, %s23
        %p520 = scmp.lt.s32.totalorder %s22, 3
        %s521 = scalar_select %p520, %s22, 3
        %p522 = scmp.lt.s32.totalorder %s519, 3
        %s523 = scalar_select %p522, %s519, 3
        %s524 = smul.addr %s521, 4
        %s525 = sadd.s32 %s523, %s524
        %s526 = smul.addr %s525, 4
        %s527 = scalar_lea.vmem %s2, %s526
      $region48: #{acgan_generator_forward.11} parent=43 // pred_fallthru
        _
      // Predicated region
      $region49: #{acgan_generator_forward.11} parent=43 // pred_check
        %p528 = pneg %p136
      $region50: #{acgan_generator_forward.11} parent=43 // pred_check_branch
        %530 = sbr.rel (%p528) target = $region52
      $region51: #{acgan_generator_forward.11} parent=43 // pred_region
        %p531 = scmp.lt.s32.totalorder %s22, 3
        %s532 = scalar_select %p531, %s22, 3
        %p533 = scmp.lt.s32.totalorder %s23, 0
        %s534 = scalar_select %p533, %s23, 0
        %s535 = sadd.s32 %s534, %s532
        %s536 = smul.addr %s535, 8
        %s537 = scalar_lea.vmem %s3, %s536
      $region52: #{acgan_generator_forward.11} parent=43 // pred_fallthru
        _
      // Predicated region
      $region53: #{acgan_generator_forward.11} parent=43 // pred_check
        %p538 = pneg %p164
      $region54: #{acgan_generator_forward.11} parent=43 // pred_check_branch
        %540 = sbr.rel (%p538) target = $region56
      $region55: #{acgan_generator_forward.11} parent=43 // pred_region
        %p541 = scmp.lt.s32.totalorder %s22, 3
        %s542 = scalar_select %p541, %s22, 3
        %p543 = scmp.lt.s32.totalorder %s23, 0
        %s544 = scalar_select %p543, %s23, 0
        %s545 = sadd.s32 %s544, %s542
        %s546 = smul.addr %s545, 8
        %s547 = scalar_lea.vmem %s4, %s546
      $region56: #{acgan_generator_forward.11} parent=43 // pred_fallthru
        _
    $region44: #{acgan_generator_forward.11} parent=5 // pred_fallthru
      _
  $region6: #{acgan_generator_forward.11} parent=0 // loop_footer
    %s15 = sadd.s32 1, %s11
  $region7: #{acgan_generator_forward.11} parent=0 // loop_footer_branch
    %10 = sbr.rel target = $region3
  $region8: #{acgan_generator_forward.11} parent=0 // loop_exit
    _

// kernel: acgan_generator_forward.12
$region0: #{acgan_generator_forward.12}
  #allocation0 [shape = 'u32[]', space=smem, size = 0x4, offset = 0x4, fixed_abs, tag = 'smem constant byte address 0x4 - core index']
  #allocation1 [shape = 'u32[144,128]{1,0:T(1,128)}', space=vmem, size = 0x12000, scoped, tag = 'internal scratch']
  %s0 = inlined_call_operand.vmem [shape: bf16[4,32,16], index: 0, kind: input, shape index: {}]
  %s1 = inlined_call_operand.vmem [shape: f32[1,16], index: 1, kind: input, shape index: {}]
  %s2 = inlined_call_operand.vmem [shape: f32[1,16], index: 2, kind: input, shape index: {}]
  %s3 = inlined_call_operand.vmem [shape: bf16[4,32,16], index: 3, kind: output, shape index: {}]
  %s4 = sld [smem:[#allocation0]]
  $region45: #{acgan_generator_forward.12} parent=0
    _
  %s6 = ssub.s32 1, %s4
  %s7 = scalar_select 0, %s6, %s4
  loop: start=0, step=1, limit=6
  $region2: #{acgan_generator_forward.12} parent=0 // loop_pre_header
    _
  $region3: #{acgan_generator_forward.12} parent=0 // loop_header
    %s9 = sphi 0, %s13
    %p10 = scmp.ge.s32.totalorder %s9, 6
    %s16 = sphi 0, %s28
    %s17 = sphi 0, %s24
    %s18 = sphi 0, %s16
    %s19 = sphi 0, %s17
    %s20 = sphi 0, %s18
    %s21 = sphi 0, %s19
    %s33 = sphi 0, %s35
    %s36 = sphi 0, %s33
    %s37 = sphi 0, %s36
    %s53 = sphi 0, %s37
    %s57 = sphi 0, %s57
    %s59 = sphi 0, %s57
    %s60 = sphi 0, %s59
    %s74 = sphi 0, %s60
    %s78 = sphi 0, %s78
    %s80 = sphi 0, %s78
    %s81 = sphi 0, %s80
    %s95 = sphi 0, %s81
    %s103 = sphi 0, %s105
    %s106 = sphi 0, %s103
    %s107 = sphi 0, %s106
    %s123 = sphi 0, %s107
  $region4: #{acgan_generator_forward.12} parent=0 // loop_header_branch
    %12 = sbr.rel (%p10) target = $region8
  $region5: #{acgan_generator_forward.12} parent=0 // loop_body
    %s14 = ssub.s32 %s9, 1
    %s15 = ssub.s32 %s9, 2
    %s22 = sadd.s32 1, %s17
    %p23 = scmp.ge.s32.totalorder %s22, 1
    %s24 = scalar_select %p23, 0, %s22
    %s25 = sadd.s32 1, %s16
    %s26 = scalar_select %p23, %s25, %s16
    %p27 = scmp.ge.s32.totalorder %s26, 4
    %s28 = scalar_select %p27, 0, %s26
    %s29 = ssub.s32 %s16, %s28
    %s30 = ssub.s32 %s17, %s24
    %s31 = sor.u32 %s29, %s30
    %p32 = scmp.eq.s32.totalorder %s31, 0
    %s34 = sadd.s32 %s33, 1
    %s35 = scalar_select %p32, %s33, %s34
    %p38 = pneg %p32
    %p39 = scmp.eq.s32.totalorder %s9, 3
    %p40 = por %p38, %p39
    %p41 = scmp.ne.s32.totalorder %s33, %s36
    %p42 = scmp.eq.s32.totalorder %s9, 0
    %p43 = por %p41, %p42
    %p44 = scmp.ne.s32.totalorder %s33, %s36
    %p45 = scmp.eq.s32.totalorder %s14, 3
    %p46 = por %p44, %p45
    %p47 = scmp.ne.s32.totalorder %s36, %s37
    %p48 = scmp.eq.s32.totalorder %s14, 0
    %p49 = por %p47, %p48
    %p50 = scmp.ne.s32.totalorder %s36, %s37
    %p51 = scmp.eq.s32.totalorder %s15, 3
    %p52 = por %p50, %p51
    %p54 = scmp.ne.s32.totalorder %s37, %s53
    %p55 = scmp.eq.s32.totalorder %s15, 0
    %p56 = por %p54, %p55
    %s58 = sadd.s32 %s57, 1
    %p61 = scmp.eq.s32.totalorder %s9, 3
    %p62 = scmp.ne.s32.totalorder %s57, %s59
    %p63 = scmp.eq.s32.totalorder %s9, 0
    %p64 = por %p62, %p63
    %p65 = scmp.ne.s32.totalorder %s57, %s59
    %p66 = scmp.eq.s32.totalorder %s14, 3
    %p67 = por %p65, %p66
    %p68 = scmp.ne.s32.totalorder %s59, %s60
    %p69 = scmp.eq.s32.totalorder %s14, 0
    %p70 = por %p68, %p69
    %p71 = scmp.ne.s32.totalorder %s59, %s60
    %p72 = scmp.eq.s32.totalorder %s15, 3
    %p73 = por %p71, %p72
    %p75 = scmp.ne.s32.totalorder %s60, %s74
    %p76 = scmp.eq.s32.totalorder %s15, 0
    %p77 = por %p75, %p76
    %s79 = sadd.s32 %s78, 1
    %p82 = scmp.eq.s32.totalorder %s9, 3
    %p83 = scmp.ne.s32.totalorder %s78, %s80
    %p84 = scmp.eq.s32.totalorder %s9, 0
    %p85 = por %p83, %p84
    %p86 = scmp.ne.s32.totalorder %s78, %s80
    %p87 = scmp.eq.s32.totalorder %s14, 3
    %p88 = por %p86, %p87
    %p89 = scmp.ne.s32.totalorder %s80, %s81
    %p90 = scmp.eq.s32.totalorder %s14, 0
    %p91 = por %p89, %p90
    %p92 = scmp.ne.s32.totalorder %s80, %s81
    %p93 = scmp.eq.s32.totalorder %s15, 3
    %p94 = por %p92, %p93
    %p96 = scmp.ne.s32.totalorder %s81, %s95
    %p97 = scmp.eq.s32.totalorder %s15, 0
    %p98 = por %p96, %p97
    %s99 = ssub.s32 %s16, %s28
    %s100 = ssub.s32 %s17, %s24
    %s101 = sor.u32 %s99, %s100
    %p102 = scmp.eq.s32.totalorder %s101, 0
    %s104 = sadd.s32 %s103, 1
    %s105 = scalar_select %p102, %s103, %s104
    %p108 = pneg %p102
    %p109 = scmp.eq.s32.totalorder %s9, 3
    %p110 = por %p108, %p109
    %p111 = scmp.ne.s32.totalorder %s103, %s106
    %p112 = scmp.eq.s32.totalorder %s9, 0
    %p113 = por %p111, %p112
    %p114 = scmp.ne.s32.totalorder %s103, %s106
    %p115 = scmp.eq.s32.totalorder %s14, 3
    %p116 = por %p114, %p115
    %p117 = scmp.ne.s32.totalorder %s106, %s107
    %p118 = scmp.eq.s32.totalorder %s14, 0
    %p119 = por %p117, %p118
    %p120 = scmp.ne.s32.totalorder %s106, %s107
    %p121 = scmp.eq.s32.totalorder %s15, 3
    %p122 = por %p120, %p121
    %p124 = scmp.ne.s32.totalorder %s107, %s123
    %p125 = scmp.eq.s32.totalorder %s15, 0
    %p126 = por %p124, %p125
    %p127 = scmp.le.s32.totalorder 1, %s9
    %p128 = scmp.lt.s32.totalorder %s9, 5
    %p129 = pnand %p127, %p128
    %p130 = pneg %p129
    // Predicated region
    $region9: #{acgan_generator_forward.12} parent=5 // pred_check
      _
    $region10: #{acgan_generator_forward.12} parent=5 // pred_check_branch
      %132 = sbr.rel (%p129) target = $region12
    $region11: #{acgan_generator_forward.12} parent=5 // pred_region
      %s133 = ssub.s32 %s9, 1
      // Predicated region
      $region13: #{acgan_generator_forward.12} parent=11 // pred_check
        %p134 = pneg %p70
      $region14: #{acgan_generator_forward.12} parent=11 // pred_check_branch
        %136 = sbr.rel (%p134) target = $region16
      $region15: #{acgan_generator_forward.12} parent=11 // pred_region
        _
      $region16: #{acgan_generator_forward.12} parent=11 // pred_fallthru
        _
      // Predicated region
      $region17: #{acgan_generator_forward.12} parent=11 // pred_check
        %p137 = pneg %p91
      $region18: #{acgan_generator_forward.12} parent=11 // pred_check_branch
        %139 = sbr.rel (%p137) target = $region20
      $region19: #{acgan_generator_forward.12} parent=11 // pred_region
        _
      $region20: #{acgan_generator_forward.12} parent=11 // pred_fallthru
        _
    $region12: #{acgan_generator_forward.12} parent=5 // pred_fallthru
      _
    %p140 = scmp.lt.s32.totalorder %s9, 4
    // Predicated region
    $region21: #{acgan_generator_forward.12} parent=5 // pred_check
      %p141 = pneg %p140
    $region22: #{acgan_generator_forward.12} parent=5 // pred_check_branch
      %143 = sbr.rel (%p141) target = $region24
    $region23: #{acgan_generator_forward.12} parent=5 // pred_region
      // Predicated region
      $region25: #{acgan_generator_forward.12} parent=23 // pred_check
        %p144 = pneg %p43
      $region26: #{acgan_generator_forward.12} parent=23 // pred_check_branch
        %146 = sbr.rel (%p144) target = $region28
      $region27: #{acgan_generator_forward.12} parent=23 // pred_region
        %s147 = smul.u32 4, %s17
        %p148 = scmp.lt.s32.totalorder %s16, 3
        %s149 = scalar_select %p148, %s16, 3
        %p150 = scmp.lt.s32.totalorder %s147, 3
        %s151 = scalar_select %p150, %s147, 3
        %s152 = smul.addr %s149, 4
        %s153 = sadd.s32 %s151, %s152
        %s154 = smul.addr %s153, 4
        %s155 = scalar_lea.vmem %s0, %s154
        %s156 = smul.u32 4, %s17
      $region28: #{acgan_generator_forward.12} parent=23 // pred_fallthru
        _
    $region24: #{acgan_generator_forward.12} parent=5 // pred_fallthru
      _
    %p157 = scmp.le.s32.totalorder 1, %s9
    %p158 = scmp.lt.s32.totalorder %s9, 5
    %p159 = pnand %p157, %p158
    %p160 = pneg %p159
    // Predicated region
    $region29: #{acgan_generator_forward.12} parent=5 // pred_check
      _
    $region30: #{acgan_generator_forward.12} parent=5 // pred_check_branch
      %162 = sbr.rel (%p159) target = $region32
    $region31: #{acgan_generator_forward.12} parent=5 // pred_region
      %s163 = ssub.s32 %s9, 1
      %s164 = smul.u32 4, %s19
      %p165 = scmp.lt.s32.totalorder %s18, 3
      %s166 = scalar_select %p165, %s18, 3
      %p167 = scmp.lt.s32.totalorder %s164, 3
      %s168 = scalar_select %p167, %s164, 3
      %s169 = smul.addr %s166, 4
      %s170 = sadd.s32 %s168, %s169
      %s171 = smul.addr %s170, 4
      %s172 = scalar_lea.vmem %s0, %s171
      %p173 = pneg %p49
      %p174 = pneg %p46
      %p175 = pneg %p70
      %p176 = pneg %p67
      %p177 = pneg %p91
      %p178 = pneg %p88
      %p179 = pneg %p119
      %p180 = pneg %p116
      %s181 = smul.u32 4, %s19
      %p182 = scmp.lt.s32.totalorder %s18, 3
      %s183 = scalar_select %p182, %s18, 3
      %p184 = scmp.lt.s32.totalorder %s181, 3
      %s185 = scalar_select %p184, %s181, 3
      %s186 = smul.addr %s183, 4
      %s187 = sadd.s32 %s185, %s186
      %s188 = smul.addr %s187, 4
      %s189 = scalar_lea.vmem %s3, %s188
      %s190 = smul.u32 4, %s19
      %p191 = scmp.lt.s32.totalorder %s18, 3
      %s192 = scalar_select %p191, %s18, 3
      %p193 = scmp.lt.s32.totalorder %s190, 3
      %s194 = scalar_select %p193, %s190, 3
      %s195 = smul.addr %s192, 4
      %s196 = sadd.s32 %s194, %s195
      %s197 = smul.addr %s196, 4
      %s198 = scalar_lea.vmem %s0, %s197
      %s199 = smul.u32 4, %s19
      %s200 = smul.u32 4, %s19
      %p201 = scmp.lt.s32.totalorder %s18, 3
      %s202 = scalar_select %p201, %s18, 3
      %p203 = scmp.lt.s32.totalorder %s200, 3
      %s204 = scalar_select %p203, %s200, 3
      %s205 = smul.addr %s202, 4
      %s206 = sadd.s32 %s204, %s205
      %s207 = smul.addr %s206, 4
      %s208 = scalar_lea.vmem %s3, %s207
      %s209 = smul.u32 4, %s19
      %v210 = vld [vmem:[%s198] sm:$0xf]
      %v211 = vld [vmem:[%s198 + $0x4] sm:$0xf]
      %v212 = vld [vmem:[%s198 + $0x8] sm:$0xf]
      %v213 = vld [vmem:[%s198 + $0xc] sm:$0xf]
      %v214 = vunpack.c.l.bf16 %v210
      %v215 = vunpack.c.l.bf16 %v211
      %v216 = vunpack.c.l.bf16 %v212
      %v217 = vunpack.c.l.bf16 %v213
      %v218 = vld [vmem:[%s1] sm:$0x1]
      %v220 = vlaneseq
      %v221 = vshrl.u32 %v220, 7
      %v222 = vsub.s32 0, %v221
      %v223 = vrot.slane %v218, %v222
      %v225 = vmul.f32 %v214, %v223
      %v226 = vmul.f32 %v215, %v223
      %v227 = vmul.f32 %v216, %v223
      %v228 = vmul.f32 %v217, %v223
      %v229 = vld [vmem:[%s2] sm:$0x1]
      %v231 = vlaneseq
      %v232 = vshrl.u32 %v231, 7
      %v233 = vsub.s32 0, %v232
      %v234 = vrot.slane %v229, %v233
      %v236 = vadd.f32 %v225, %v234
      %v237 = vadd.f32 %v226, %v234
      %v238 = vadd.f32 %v227, %v234
      %v239 = vadd.f32 %v228, %v234
      %v240 = vmax.f32 %v236, 0.0
      %v241 = vmax.f32 %v237, 0.0
      %v242 = vmax.f32 %v238, 0.0
      %v243 = vmax.f32 %v239, 0.0
      %v244 = vpack.c.bf16 %v241, %v240
      %v245 = vpack.c.bf16 %v243, %v242
      %v248 = vunpack.c.l.b16 %v244
      %v249 = vunpack.c.h.b16 %v244
      %v250 = vunpack.c.l.b16 %v245
      %v251 = vunpack.c.h.b16 %v245
      %v252 = vpack.c.b16 %v248, %v248
      %v253 = vpack.c.b16 %v249, %v249
      %v254 = vpack.c.b16 %v250, %v250
      %v255 = vpack.c.b16 %v251, %v251
      %vm260 = vcmask 125952
      %261 = vst.msk [vmem:[%s208] sm:$0xf] %vm260, %v252
      %262 = vst.msk [vmem:[%s208 + $0x4] sm:$0xf] %vm260, %v253
      %263 = vst.msk [vmem:[%s208 + $0x8] sm:$0xf] %vm260, %v254
      %264 = vst.msk [vmem:[%s208 + $0xc] sm:$0xf] %vm260, %v255
      %s265 = smul.u32 4, %s19
      %p266 = scmp.lt.s32.totalorder %s18, 3
      %s267 = scalar_select %p266, %s18, 3
      %p268 = scmp.lt.s32.totalorder %s265, 3
      %s269 = scalar_select %p268, %s265, 3
      %s270 = smul.addr %s267, 4
      %s271 = sadd.s32 %s269, %s270
      %s272 = smul.addr %s271, 4
      %s273 = scalar_lea.vmem %s3, %s272
      // Predicated region
      $region33: #{acgan_generator_forward.12} parent=31 // pred_check
        %p274 = pneg %p116
      $region34: #{acgan_generator_forward.12} parent=31 // pred_check_branch
        %276 = sbr.rel (%p274) target = $region36
      $region35: #{acgan_generator_forward.12} parent=31 // pred_region
        %s277 = smul.u32 4, %s19
      $region36: #{acgan_generator_forward.12} parent=31 // pred_fallthru
        _
    $region32: #{acgan_generator_forward.12} parent=5 // pred_fallthru
      _
    %p278 = scmp.le.s32.totalorder 2, %s9
    // Predicated region
    $region37: #{acgan_generator_forward.12} parent=5 // pred_check
      %p279 = pneg %p278
    $region38: #{acgan_generator_forward.12} parent=5 // pred_check_branch
      %281 = sbr.rel (%p279) target = $region40
    $region39: #{acgan_generator_forward.12} parent=5 // pred_region
      %s282 = ssub.s32 %s9, 2
      // Predicated region
      $region41: #{acgan_generator_forward.12} parent=39 // pred_check
        %p283 = pneg %p122
      $region42: #{acgan_generator_forward.12} parent=39 // pred_check_branch
        %285 = sbr.rel (%p283) target = $region44
      $region43: #{acgan_generator_forward.12} parent=39 // pred_region
        %s286 = smul.u32 4, %s21
        %p287 = scmp.lt.s32.totalorder %s20, 3
        %s288 = scalar_select %p287, %s20, 3
        %p289 = scmp.lt.s32.totalorder %s286, 3
        %s290 = scalar_select %p289, %s286, 3
        %s291 = smul.addr %s288, 4
        %s292 = sadd.s32 %s290, %s291
        %s293 = smul.addr %s292, 4
        %s294 = scalar_lea.vmem %s3, %s293
      $region44: #{acgan_generator_forward.12} parent=39 // pred_fallthru
        _
    $region40: #{acgan_generator_forward.12} parent=5 // pred_fallthru
      _
  $region6: #{acgan_generator_forward.12} parent=0 // loop_footer
    %s13 = sadd.s32 1, %s9
  $region7: #{acgan_generator_forward.12} parent=0 // loop_footer_branch
    %8 = sbr.rel target = $region3
  $region8: #{acgan_generator_forward.12} parent=0 // loop_exit
    _

// kernel: acgan_generator_forward.13
$region0: #{acgan_generator_forward.13}
  #allocation0 [shape = 'u32[]', space=smem, size = 0x4, offset = 0x4, fixed_abs, tag = 'smem constant byte address 0x4 - core index']
  #allocation1 [shape = 'u32[144,128]{1,0:T(1,128)}', space=vmem, size = 0x12000, scoped, tag = 'internal scratch']
  %s0 = inlined_call_operand.vmem [shape: bf16[4,128,64], index: 0, kind: input, shape index: {}]
  %s1 = inlined_call_operand.vmem [shape: bf16[4,64,8], index: 1, kind: input, shape index: {}]
  %s2 = inlined_call_operand.vmem [shape: bf16[4,128,8], index: 2, kind: output, shape index: {0}]
  %s3 = inlined_call_operand.vmem [shape: f32[4,1,8,8], index: 3, kind: output, shape index: {1}]
  %s4 = inlined_call_operand.vmem [shape: f32[4,1,8,8], index: 4, kind: output, shape index: {2}]
  %5 = xla_tuple %s2, %s3, %s4
  %s6 = sld [smem:[#allocation0]]
  $region57: #{acgan_generator_forward.13} parent=0
    _
  %s8 = ssub.s32 1, %s6
  %s9 = scalar_select 0, %s8, %s6
  loop: start=0, step=1, limit=6
  $region2: #{acgan_generator_forward.13} parent=0 // loop_pre_header
    _
  $region3: #{acgan_generator_forward.13} parent=0 // loop_header
    %s11 = sphi 0, %s15
    %p12 = scmp.ge.s32.totalorder %s11, 6
    %s18 = sphi 0, %s30
    %s19 = sphi 0, %s26
    %s20 = sphi 0, %s18
    %s21 = sphi 0, %s19
    %s22 = sphi 0, %s20
    %s23 = sphi 0, %s21
    %s35 = sphi 0, %s37
    %s38 = sphi 0, %s35
    %s39 = sphi 0, %s38
    %s55 = sphi 0, %s39
    %s61 = sphi 0, %s63
    %s64 = sphi 0, %s61
    %s65 = sphi 0, %s64
    %s81 = sphi 0, %s65
    %s89 = sphi 0, %s91
    %s92 = sphi 0, %s89
    %s93 = sphi 0, %s92
    %s109 = sphi 0, %s93
    %s117 = sphi 0, %s119
    %s120 = sphi 0, %s117
    %s121 = sphi 0, %s120
    %s137 = sphi 0, %s121
    %s145 = sphi 0, %s147
    %s148 = sphi 0, %s145
    %s149 = sphi 0, %s148
    %s165 = sphi 0, %s149
  $region4: #{acgan_generator_forward.13} parent=0 // loop_header_branch
    %14 = sbr.rel (%p12) target = $region8
  $region5: #{acgan_generator_forward.13} parent=0 // loop_body
    %s16 = ssub.s32 %s11, 1
    %s17 = ssub.s32 %s11, 2
    %s24 = sadd.s32 1, %s19
    %p25 = scmp.ge.s32.totalorder %s24, 1
    %s26 = scalar_select %p25, 0, %s24
    %s27 = sadd.s32 1, %s18
    %s28 = scalar_select %p25, %s27, %s18
    %p29 = scmp.ge.s32.totalorder %s28, 4
    %s30 = scalar_select %p29, 0, %s28
    %s31 = ssub.s32 %s18, %s30
    %s32 = ssub.s32 %s19, %s26
    %s33 = sor.u32 %s31, %s32
    %p34 = scmp.eq.s32.totalorder %s33, 0
    %s36 = sadd.s32 %s35, 1
    %s37 = scalar_select %p34, %s35, %s36
    %p40 = pneg %p34
    %p41 = scmp.eq.s32.totalorder %s11, 3
    %p42 = por %p40, %p41
    %p43 = scmp.ne.s32.totalorder %s35, %s38
    %p44 = scmp.eq.s32.totalorder %s11, 0
    %p45 = por %p43, %p44
    %p46 = scmp.ne.s32.totalorder %s35, %s38
    %p47 = scmp.eq.s32.totalorder %s16, 3
    %p48 = por %p46, %p47
    %p49 = scmp.ne.s32.totalorder %s38, %s39
    %p50 = scmp.eq.s32.totalorder %s16, 0
    %p51 = por %p49, %p50
    %p52 = scmp.ne.s32.totalorder %s38, %s39
    %p53 = scmp.eq.s32.totalorder %s17, 3
    %p54 = por %p52, %p53
    %p56 = scmp.ne.s32.totalorder %s39, %s55
    %p57 = scmp.eq.s32.totalorder %s17, 0
    %p58 = por %p56, %p57
    %s59 = ssub.s32 %s18, %s30
    %p60 = scmp.eq.s32.totalorder %s59, 0
    %s62 = sadd.s32 %s61, 1
    %s63 = scalar_select %p60, %s61, %s62
    %p66 = pneg %p60
    %p67 = scmp.eq.s32.totalorder %s11, 3
    %p68 = por %p66, %p67
    %p69 = scmp.ne.s32.totalorder %s61, %s64
    %p70 = scmp.eq.s32.totalorder %s11, 0
    %p71 = por %p69, %p70
    %p72 = scmp.ne.s32.totalorder %s61, %s64
    %p73 = scmp.eq.s32.totalorder %s16, 3
    %p74 = por %p72, %p73
    %p75 = scmp.ne.s32.totalorder %s64, %s65
    %p76 = scmp.eq.s32.totalorder %s16, 0
    %p77 = por %p75, %p76
    %p78 = scmp.ne.s32.totalorder %s64, %s65
    %p79 = scmp.eq.s32.totalorder %s17, 3
    %p80 = por %p78, %p79
    %p82 = scmp.ne.s32.totalorder %s65, %s81
    %p83 = scmp.eq.s32.totalorder %s17, 0
    %p84 = por %p82, %p83
    %s85 = ssub.s32 %s18, %s30
    %s86 = ssub.s32 %s19, %s26
    %s87 = sor.u32 %s85, %s86
    %p88 = scmp.eq.s32.totalorder %s87, 0
    %s90 = sadd.s32 %s89, 1
    %s91 = scalar_select %p88, %s89, %s90
    %p94 = pneg %p88
    %p95 = scmp.eq.s32.totalorder %s11, 3
    %p96 = por %p94, %p95
    %p97 = scmp.ne.s32.totalorder %s89, %s92
    %p98 = scmp.eq.s32.totalorder %s11, 0
    %p99 = por %p97, %p98
    %p100 = scmp.ne.s32.totalorder %s89, %s92
    %p101 = scmp.eq.s32.totalorder %s16, 3
    %p102 = por %p100, %p101
    %p103 = scmp.ne.s32.totalorder %s92, %s93
    %p104 = scmp.eq.s32.totalorder %s16, 0
    %p105 = por %p103, %p104
    %p106 = scmp.ne.s32.totalorder %s92, %s93
    %p107 = scmp.eq.s32.totalorder %s17, 3
    %p108 = por %p106, %p107
    %p110 = scmp.ne.s32.totalorder %s93, %s109
    %p111 = scmp.eq.s32.totalorder %s17, 0
    %p112 = por %p110, %p111
    %s113 = ssub.s32 %s18, %s30
    %s114 = ssub.s32 %s19, %s26
    %s115 = sor.u32 %s113, %s114
    %p116 = scmp.eq.s32.totalorder %s115, 0
    %s118 = sadd.s32 %s117, 1
    %s119 = scalar_select %p116, %s117, %s118
    %p122 = pneg %p116
    %p123 = scmp.eq.s32.totalorder %s11, 3
    %p124 = por %p122, %p123
    %p125 = scmp.ne.s32.totalorder %s117, %s120
    %p126 = scmp.eq.s32.totalorder %s11, 0
    %p127 = por %p125, %p126
    %p128 = scmp.ne.s32.totalorder %s117, %s120
    %p129 = scmp.eq.s32.totalorder %s16, 3
    %p130 = por %p128, %p129
    %p131 = scmp.ne.s32.totalorder %s120, %s121
    %p132 = scmp.eq.s32.totalorder %s16, 0
    %p133 = por %p131, %p132
    %p134 = scmp.ne.s32.totalorder %s120, %s121
    %p135 = scmp.eq.s32.totalorder %s17, 3
    %p136 = por %p134, %p135
    %p138 = scmp.ne.s32.totalorder %s121, %s137
    %p139 = scmp.eq.s32.totalorder %s17, 0
    %p140 = por %p138, %p139
    %s141 = ssub.s32 %s18, %s30
    %s142 = ssub.s32 %s19, %s26
    %s143 = sor.u32 %s141, %s142
    %p144 = scmp.eq.s32.totalorder %s143, 0
    %s146 = sadd.s32 %s145, 1
    %s147 = scalar_select %p144, %s145, %s146
    %p150 = pneg %p144
    %p151 = scmp.eq.s32.totalorder %s11, 3
    %p152 = por %p150, %p151
    %p153 = scmp.ne.s32.totalorder %s145, %s148
    %p154 = scmp.eq.s32.totalorder %s11, 0
    %p155 = por %p153, %p154
    %p156 = scmp.ne.s32.totalorder %s145, %s148
    %p157 = scmp.eq.s32.totalorder %s16, 3
    %p158 = por %p156, %p157
    %p159 = scmp.ne.s32.totalorder %s148, %s149
    %p160 = scmp.eq.s32.totalorder %s16, 0
    %p161 = por %p159, %p160
    %p162 = scmp.ne.s32.totalorder %s148, %s149
    %p163 = scmp.eq.s32.totalorder %s17, 3
    %p164 = por %p162, %p163
    %p166 = scmp.ne.s32.totalorder %s149, %s165
    %p167 = scmp.eq.s32.totalorder %s17, 0
    %p168 = por %p166, %p167
    %p169 = scmp.le.s32.totalorder 1, %s11
    %p170 = scmp.lt.s32.totalorder %s11, 5
    %p171 = pnand %p169, %p170
    %p172 = pneg %p171
    // Predicated region
    $region9: #{acgan_generator_forward.13} parent=5 // pred_check
      _
    $region10: #{acgan_generator_forward.13} parent=5 // pred_check_branch
      %174 = sbr.rel (%p171) target = $region12
    $region11: #{acgan_generator_forward.13} parent=5 // pred_region
      %s175 = ssub.s32 %s11, 1
    $region12: #{acgan_generator_forward.13} parent=5 // pred_fallthru
      _
    %p176 = scmp.lt.s32.totalorder %s11, 4
    // Predicated region
    $region13: #{acgan_generator_forward.13} parent=5 // pred_check
      %p177 = pneg %p176
    $region14: #{acgan_generator_forward.13} parent=5 // pred_check_branch
      %179 = sbr.rel (%p177) target = $region16
    $region15: #{acgan_generator_forward.13} parent=5 // pred_region
      // Predicated region
      $region17: #{acgan_generator_forward.13} parent=15 // pred_check
        %p180 = pneg %p45
      $region18: #{acgan_generator_forward.13} parent=15 // pred_check_branch
        %182 = sbr.rel (%p180) target = $region20
      $region19: #{acgan_generator_forward.13} parent=15 // pred_region
        %s183 = smul.u32 16, %s19
        %p184 = scmp.lt.s32.totalorder %s18, 3
        %s185 = scalar_select %p184, %s18, 3
        %p186 = scmp.lt.s32.totalorder %s183, 15
        %s187 = scalar_select %p186, %s183, 15
        %s188 = smul.addr %s185, 16
        %s189 = sadd.s32 %s187, %s188
        %s190 = smul.addr %s189, 4
        %s191 = scalar_lea.vmem %s0, %s190
        %s192 = smul.u32 16, %s19
      $region20: #{acgan_generator_forward.13} parent=15 // pred_fallthru
        _
      // Predicated region
      $region21: #{acgan_generator_forward.13} parent=15 // pred_check
        %p193 = pneg %p71
      $region22: #{acgan_generator_forward.13} parent=15 // pred_check_branch
        %195 = sbr.rel (%p193) target = $region24
      $region23: #{acgan_generator_forward.13} parent=15 // pred_region
        %p196 = scmp.lt.s32.totalorder %s18, 3
        %s197 = scalar_select %p196, %s18, 3
        %s198 = smul.addr %s197, 8
        %s199 = smul.addr %s198, 4
        %s200 = scalar_lea.vmem %s1, %s199
      $region24: #{acgan_generator_forward.13} parent=15 // pred_fallthru
        _
    $region16: #{acgan_generator_forward.13} parent=5 // pred_fallthru
      _
    %p201 = scmp.le.s32.totalorder 1, %s11
    %p202 = scmp.lt.s32.totalorder %s11, 5
    %p203 = pnand %p201, %p202
    %p204 = pneg %p203
    // Predicated region
    $region25: #{acgan_generator_forward.13} parent=5 // pred_check
      _
    $region26: #{acgan_generator_forward.13} parent=5 // pred_check_branch
      %206 = sbr.rel (%p203) target = $region28
    $region27: #{acgan_generator_forward.13} parent=5 // pred_region
      %s207 = ssub.s32 %s11, 1
      %s208 = smul.u32 16, %s21
      %p209 = scmp.lt.s32.totalorder %s20, 3
      %s210 = scalar_select %p209, %s20, 3
      %p211 = scmp.lt.s32.totalorder %s208, 15
      %s212 = scalar_select %p211, %s208, 15
      %s213 = smul.addr %s210, 16
      %s214 = sadd.s32 %s212, %s213
      %s215 = smul.addr %s214, 4
      %s216 = scalar_lea.vmem %s0, %s215
      %p217 = pneg %p51
      %p218 = pneg %p48
      %p219 = scmp.lt.s32.totalorder %s20, 3
      %s220 = scalar_select %p219, %s20, 3
      %s221 = smul.addr %s220, 8
      %s222 = smul.addr %s221, 4
      %s223 = scalar_lea.vmem %s1, %s222
      %p224 = pneg %p77
      %p225 = pneg %p74
      %p226 = pneg %p105
      %p227 = pneg %p102
      %s228 = smul.u32 16, %s21
      %p229 = scmp.lt.s32.totalorder %s20, 3
      %s230 = scalar_select %p229, %s20, 3
      %p231 = scmp.lt.s32.totalorder %s228, 15
      %s232 = scalar_select %p231, %s228, 15
      %s233 = smul.addr %s230, 16
      %s234 = sadd.s32 %s232, %s233
      %s235 = smul.addr %s234, 4
      %s236 = scalar_lea.vmem %s2, %s235
      %p237 = pneg %p133
      %p238 = pneg %p130
      %p239 = scmp.lt.s32.totalorder %s20, 3
      %s240 = scalar_select %p239, %s20, 3
      %p241 = scmp.lt.s32.totalorder %s21, 0
      %s242 = scalar_select %p241, %s21, 0
      %s243 = sadd.s32 %s242, %s240
      %s244 = smul.addr %s243, 8
      %s245 = scalar_lea.vmem %s3, %s244
      %p246 = pneg %p161
      %p247 = pneg %p158
      %p248 = scmp.lt.s32.totalorder %s20, 3
      %s249 = scalar_select %p248, %s20, 3
      %p250 = scmp.lt.s32.totalorder %s21, 0
      %s251 = scalar_select %p250, %s21, 0
      %s252 = sadd.s32 %s251, %s249
      %s253 = smul.addr %s252, 8
      %s254 = scalar_lea.vmem %s4, %s253
      %s255 = smul.u32 16, %s21
      %p256 = scmp.lt.s32.totalorder %s20, 3
      %s257 = scalar_select %p256, %s20, 3
      %p258 = scmp.lt.s32.totalorder %s255, 15
      %s259 = scalar_select %p258, %s255, 15
      %s260 = smul.addr %s257, 16
      %s261 = sadd.s32 %s259, %s260
      %s262 = smul.addr %s261, 4
      %s263 = scalar_lea.vmem %s0, %s262
      %s264 = smul.u32 16, %s21
      %p265 = scmp.lt.s32.totalorder %s20, 3
      %s266 = scalar_select %p265, %s20, 3
      %s267 = smul.addr %s266, 8
      %s268 = smul.addr %s267, 4
      %s269 = scalar_lea.vmem %s1, %s268
      %s270 = smul.u32 16, %s21
      %p271 = scmp.lt.s32.totalorder %s20, 3
      %s272 = scalar_select %p271, %s20, 3
      %p273 = scmp.lt.s32.totalorder %s270, 15
      %s274 = scalar_select %p273, %s270, 15
      %s275 = smul.addr %s272, 16
      %s276 = sadd.s32 %s274, %s275
      %s277 = smul.addr %s276, 4
      %s278 = scalar_lea.vmem %s2, %s277
      %s279 = smul.u32 16, %s21
      %p280 = scmp.lt.s32.totalorder %s20, 3
      %s281 = scalar_select %p280, %s20, 3
      %p282 = scmp.lt.s32.totalorder %s21, 0
      %s283 = scalar_select %p282, %s21, 0
      %s284 = sadd.s32 %s283, %s281
      %s285 = smul.addr %s284, 8
      %s286 = scalar_lea.vmem %s3, %s285
      %p287 = scmp.lt.s32.totalorder %s20, 3
      %s288 = scalar_select %p287, %s20, 3
      %p289 = scmp.lt.s32.totalorder %s21, 0
      %s290 = scalar_select %p289, %s21, 0
      %s291 = sadd.s32 %s290, %s288
      %s292 = smul.addr %s291, 8
      %s293 = scalar_lea.vmem %s4, %s292
      %v295 = vld [vmem:[%s263] sm:$0xf]
      %v296 = vld [vmem:[%s263 + $0x4] sm:$0xf]
      %v297 = vld [vmem:[%s263 + $0x8] sm:$0xf]
      %v298 = vld [vmem:[%s263 + $0xc] sm:$0xf]
      %v299 = vld [vmem:[%s263 + $0x10] sm:$0xf]
      %v300 = vld [vmem:[%s263 + $0x14] sm:$0xf]
      %v301 = vld [vmem:[%s263 + $0x18] sm:$0xf]
      %v302 = vld [vmem:[%s263 + $0x1c] sm:$0xf]
      %v303 = vld [vmem:[%s263 + $0x20] sm:$0xf]
      %v304 = vld [vmem:[%s263 + $0x24] sm:$0xf]
      %v305 = vld [vmem:[%s263 + $0x28] sm:$0xf]
      %v306 = vld [vmem:[%s263 + $0x2c] sm:$0xf]
      %v307 = vld [vmem:[%s263 + $0x30] sm:$0xf]
      %v308 = vld [vmem:[%s263 + $0x34] sm:$0xf]
      %v309 = vld [vmem:[%s263 + $0x38] sm:$0xf]
      %v310 = vld [vmem:[%s263 + $0x3c] sm:$0xf]
      %v311 = vld [vmem:[%s269] sm:$0xf]
      %v312 = vld [vmem:[%s269 + $0x4] sm:$0xf]
      %v313 = vld [vmem:[%s269 + $0x8] sm:$0xf]
      %v314 = vld [vmem:[%s269 + $0xc] sm:$0xf]
      %v315 = vld [vmem:[%s269 + $0x10] sm:$0xf]
      %v316 = vld [vmem:[%s269 + $0x14] sm:$0xf]
      %v317 = vld [vmem:[%s269 + $0x18] sm:$0xf]
      %v318 = vld [vmem:[%s269 + $0x1c] sm:$0xf]
      %v335 = vunpack.c.l.b16 %v295
      %v336 = vunpack.c.l.b16 %v296
      %v337 = vunpack.c.l.b16 %v297
      %v338 = vunpack.c.l.b16 %v298
      %v339 = vunpack.c.l.b16 %v299
      %v340 = vunpack.c.l.b16 %v300
      %v341 = vunpack.c.l.b16 %v301
      %v342 = vunpack.c.l.b16 %v302
      %v343 = vunpack.c.l.b16 %v303
      %v344 = vunpack.c.l.b16 %v304
      %v345 = vunpack.c.l.b16 %v305
      %v346 = vunpack.c.l.b16 %v306
      %v347 = vunpack.c.l.b16 %v307
      %v348 = vunpack.c.l.b16 %v308
      %v349 = vunpack.c.l.b16 %v309
      %v350 = vunpack.c.l.b16 %v310
      %v351 = vpack.c.b16 %v336, %v335
      %v352 = vpack.c.b16 %v338, %v337
      %v353 = vpack.c.b16 %v340, %v339
      %v354 = vpack.c.b16 %v342, %v341
      %v355 = vpack.c.b16 %v344, %v343
      %v356 = vpack.c.b16 %v346, %v345
      %v357 = vpack.c.b16 %v348, %v347
      %v358 = vpack.c.b16 %v350, %v349
      %v367 = vunpack.c.l.b16 %v311
      %v368 = vunpack.c.l.b16 %v312
      %v369 = vunpack.c.l.b16 %v313
      %v370 = vunpack.c.l.b16 %v314
      %v371 = vunpack.c.l.b16 %v315
      %v372 = vunpack.c.l.b16 %v316
      %v373 = vunpack.c.l.b16 %v317
      %v374 = vunpack.c.l.b16 %v318
      %v375 = vpack.c.b16 %v368, %v367
      %v376 = vpack.c.b16 %v370, %v369
      %v377 = vpack.c.b16 %v372, %v371
      %v378 = vpack.c.b16 %v374, %v373
      %vm383 = vcmask 523264
      %v385 = vsel %vm383, %v351, 0
      %v388 = vsel %vm383, %v352, 0
      %v391 = vsel %vm383, %v353, 0
      %v394 = vsel %vm383, %v354, 0
      %v397 = vsel %vm383, %v355, 0
      %v400 = vsel %vm383, %v356, 0
      %v403 = vsel %vm383, %v357, 0
      %v406 = vsel %vm383, %v358, 0
      %408 = vmatprep.subr.bf16.mxu0 0
      %409 = vmatpush1.bf16.msra.mxu0 %v375
      %410 = vmatprep.subr.bf16.mxu0 0
      %411 = vmatpush1.bf16.msra.mxu0 %v376
      %412 = vmatprep.subr.bf16.mxu0 0
      %413 = vmatpush1.bf16.msra.mxu0 %v377
      %414 = vmatprep.subr.bf16.mxu0 0
      %415 = vmatpush1.bf16.msra.mxu0 %v378
      %416 = vmatprep.subr.bf16.mxu0 0
      %417 = vmatpush1.bf16.msra.mxu0 0
      %418 = vmatprep.subr.bf16.mxu0 0
      %419 = vmatpush1.bf16.msra.mxu0 0
      %420 = vmatprep.subr.bf16.mxu0 0
      %421 = vmatpush1.bf16.msra.mxu0 0
      %422 = vmatprep.subr.bf16.mxu0 0
      %423 = vmatpush1.bf16.msra.mxu0 0
      %424 = vmatprep.subr.bf16.mxu0 0
      %425 = vmatpush1.bf16.msra.mxu0 0
      %426 = vmatprep.subr.bf16.mxu0 0
      %427 = vmatpush1.bf16.msra.mxu0 0
      %428 = vmatprep.subr.bf16.mxu0 0
      %429 = vmatpush1.bf16.msra.mxu0 0
      %430 = vmatprep.subr.bf16.mxu0 0
      %431 = vmatpush1.bf16.msra.mxu0 0
      %432 = vmatprep.subr.bf16.mxu0 0
      %433 = vmatpush1.bf16.msra.mxu0 0
      %434 = vmatprep.subr.bf16.mxu0 0
      %435 = vmatpush1.bf16.msra.mxu0 0
      %436 = vmatprep.subr.bf16.mxu0 0
      %437 = vmatpush1.bf16.msra.mxu0 0
      %438 = vmatprep.subr.bf16.mxu0 0
      %439 = vmatpush1.bf16.msra.mxu0 0
      %440 = vmatprep.mubr.bf16.mxu0 0
      %441 = vmatmul.mubr.bf16.gmra.mrb[0].mxu0 %v385
      %v442 = vpop.f32.mrb[0].mxu0
      %v443 = vadd.f32 0.0, %v442
      %v444 = vpop.f32.mrb[0].mxu0
      %v445 = vpop.f32.mrb[0].mxu0
      %v446 = vadd.f32 0.0, %v445
      %v447 = vpop.f32.mrb[0].mxu0
      %448 = vmatprep.mubr.bf16.mxu0 0
      %449 = vmatmul.mubr.bf16.gmra.mrb[0].mxu0 %v388
      %v450 = vpop.f32.mrb[0].mxu0
      %v451 = vadd.f32 0.0, %v450
      %v452 = vpop.f32.mrb[0].mxu0
      %v453 = vpop.f32.mrb[0].mxu0
      %v454 = vadd.f32 0.0, %v453
      %v455 = vpop.f32.mrb[0].mxu0
      %456 = vmatprep.mubr.bf16.mxu0 0
      %457 = vmatmul.mubr.bf16.gmra.mrb[0].mxu0 %v391
      %v458 = vpop.f32.mrb[0].mxu0
      %v459 = vadd.f32 0.0, %v458
      %v460 = vpop.f32.mrb[0].mxu0
      %v461 = vpop.f32.mrb[0].mxu0
      %v462 = vadd.f32 0.0, %v461
      %v463 = vpop.f32.mrb[0].mxu0
      %464 = vmatprep.mubr.bf16.mxu0 0
      %465 = vmatmul.mubr.bf16.gmra.mrb[0].mxu0 %v394
      %v466 = vpop.f32.mrb[0].mxu0
      %v467 = vadd.f32 0.0, %v466
      %v468 = vpop.f32.mrb[0].mxu0
      %v469 = vpop.f32.mrb[0].mxu0
      %v470 = vadd.f32 0.0, %v469
      %v471 = vpop.f32.mrb[0].mxu0
      %472 = vmatprep.mubr.bf16.mxu0 0
      %473 = vmatmul.mubr.bf16.gmra.mrb[0].mxu0 %v397
      %v474 = vpop.f32.mrb[0].mxu0
      %v475 = vadd.f32 0.0, %v474
      %v476 = vpop.f32.mrb[0].mxu0
      %v477 = vpop.f32.mrb[0].mxu0
      %v478 = vadd.f32 0.0, %v477
      %v479 = vpop.f32.mrb[0].mxu0
      %480 = vmatprep.mubr.bf16.mxu0 0
      %481 = vmatmul.mubr.bf16.gmra.mrb[0].mxu0 %v400
      %v482 = vpop.f32.mrb[0].mxu0
      %v483 = vadd.f32 0.0, %v482
      %v484 = vpop.f32.mrb[0].mxu0
      %v485 = vpop.f32.mrb[0].mxu0
      %v486 = vadd.f32 0.0, %v485
      %v487 = vpop.f32.mrb[0].mxu0
      %488 = vmatprep.mubr.bf16.mxu0 0
      %489 = vmatmul.mubr.bf16.gmra.mrb[0].mxu0 %v403
      %v490 = vpop.f32.mrb[0].mxu0
      %v491 = vadd.f32 0.0, %v490
      %v492 = vpop.f32.mrb[0].mxu0
      %v493 = vpop.f32.mrb[0].mxu0
      %v494 = vadd.f32 0.0, %v493
      %v495 = vpop.f32.mrb[0].mxu0
      %496 = vmatprep.mubr.bf16.mxu0 0
      %497 = vmatmul.mubr.bf16.gmra.mrb[0].mxu0 %v406
      %v498 = vpop.f32.mrb[0].mxu0
      %v499 = vadd.f32 0.0, %v498
      %v500 = vpop.f32.mrb[0].mxu0
      %v501 = vpop.f32.mrb[0].mxu0
      %v502 = vadd.f32 0.0, %v501
      %v503 = vpop.f32.mrb[0].mxu0
      %504 = vdwg.mxu0
      %v505 = vpack.c.bf16 %v446, %v443
      %v506 = vpack.c.bf16 %v454, %v451
      %v507 = vpack.c.bf16 %v462, %v459
      %v508 = vpack.c.bf16 %v470, %v467
      %v509 = vpack.c.bf16 %v478, %v475
      %v510 = vpack.c.bf16 %v486, %v483
      %v511 = vpack.c.bf16 %v494, %v491
      %v512 = vpack.c.bf16 %v502, %v499
      %v521 = vunpack.c.l.b16 %v505
      %v522 = vunpack.c.h.b16 %v505
      %v523 = vunpack.c.l.b16 %v506
      %v524 = vunpack.c.h.b16 %v506
      %v525 = vunpack.c.l.b16 %v507
      %v526 = vunpack.c.h.b16 %v507
      %v527 = vunpack.c.l.b16 %v508
      %v528 = vunpack.c.h.b16 %v508
      %v529 = vunpack.c.l.b16 %v509
      %v530 = vunpack.c.h.b16 %v509
      %v531 = vunpack.c.l.b16 %v510
      %v532 = vunpack.c.h.b16 %v510
      %v533 = vunpack.c.l.b16 %v511
      %v534 = vunpack.c.h.b16 %v511
      %v535 = vunpack.c.l.b16 %v512
      %v536 = vunpack.c.h.b16 %v512
      %v537 = vpack.c.b16 %v521, %v521
      %v538 = vpack.c.b16 %v522, %v522
      %v539 = vpack.c.b16 %v523, %v523
      %v540 = vpack.c.b16 %v524, %v524
      %v541 = vpack.c.b16 %v525, %v525
      %v542 = vpack.c.b16 %v526, %v526
      %v543 = vpack.c.b16 %v527, %v527
      %v544 = vpack.c.b16 %v528, %v528
      %v545 = vpack.c.b16 %v529, %v529
      %v546 = vpack.c.b16 %v530, %v530
      %v547 = vpack.c.b16 %v531, %v531
      %v548 = vpack.c.b16 %v532, %v532
      %v549 = vpack.c.b16 %v533, %v533
      %v550 = vpack.c.b16 %v534, %v534
      %v551 = vpack.c.b16 %v535, %v535
      %v552 = vpack.c.b16 %v536, %v536
      %vm569 = vcmask 60416
      %570 = vst.msk [vmem:[%s278] sm:$0xf] %vm569, %v537
      %571 = vst.msk [vmem:[%s278 + $0x4] sm:$0xf] %vm569, %v538
      %572 = vst.msk [vmem:[%s278 + $0x8] sm:$0xf] %vm569, %v539
      %573 = vst.msk [vmem:[%s278 + $0xc] sm:$0xf] %vm569, %v540
      %574 = vst.msk [vmem:[%s278 + $0x10] sm:$0xf] %vm569, %v541
      %575 = vst.msk [vmem:[%s278 + $0x14] sm:$0xf] %vm569, %v542
      %576 = vst.msk [vmem:[%s278 + $0x18] sm:$0xf] %vm569, %v543
      %577 = vst.msk [vmem:[%s278 + $0x1c] sm:$0xf] %vm569, %v544
      %578 = vst.msk [vmem:[%s278 + $0x20] sm:$0xf] %vm569, %v545
      %579 = vst.msk [vmem:[%s278 + $0x24] sm:$0xf] %vm569, %v546
      %580 = vst.msk [vmem:[%s278 + $0x28] sm:$0xf] %vm569, %v547
      %581 = vst.msk [vmem:[%s278 + $0x2c] sm:$0xf] %vm569, %v548
      %582 = vst.msk [vmem:[%s278 + $0x30] sm:$0xf] %vm569, %v549
      %583 = vst.msk [vmem:[%s278 + $0x34] sm:$0xf] %vm569, %v550
      %584 = vst.msk [vmem:[%s278 + $0x38] sm:$0xf] %vm569, %v551
      %585 = vst.msk [vmem:[%s278 + $0x3c] sm:$0xf] %vm569, %v552
      %vm586 = vcmask 64512
      %v587 = vsel %vm586, %v443, 0.0
      %v588 = vsel %vm586, %v446, 0.0
      %v589 = vadd.f32 %v587, %v588
      %v590 = vsel %vm586, %v451, 0.0
      %v591 = vadd.f32 %v589, %v590
      %v592 = vsel %vm586, %v454, 0.0
      %v593 = vadd.f32 %v591, %v592
      %v594 = vsel %vm586, %v459, 0.0
      %v595 = vadd.f32 %v593, %v594
      %v596 = vsel %vm586, %v462, 0.0
      %v597 = vadd.f32 %v595, %v596
      %v598 = vsel %vm586, %v467, 0.0
      %v599 = vadd.f32 %v597, %v598
      %v600 = vsel %vm586, %v470, 0.0
      %v601 = vadd.f32 %v599, %v600
      %v602 = vsel %vm586, %v475, 0.0
      %v603 = vadd.f32 %v601, %v602
      %v604 = vsel %vm586, %v478, 0.0
      %v605 = vadd.f32 %v603, %v604
      %v606 = vsel %vm586, %v483, 0.0
      %v607 = vadd.f32 %v605, %v606
      %v608 = vsel %vm586, %v486, 0.0
      %v609 = vadd.f32 %v607, %v608
      %v610 = vsel %vm586, %v491, 0.0
      %v611 = vadd.f32 %v609, %v610
      %v612 = vsel %vm586, %v494, 0.0
      %v613 = vadd.f32 %v611, %v612
      %v614 = vsel %vm586, %v499, 0.0
      %v615 = vadd.f32 %v613, %v614
      %v616 = vsel %vm586, %v502, 0.0
      %v617 = vadd.f32 %v615, %v616
      %v618 = vrot.slane %v617, 4
      %v619 = vadd.f32 %v617, %v618
      %v620 = vrot.slane %v619, 2
      %v621 = vadd.f32 %v619, %v620
      %v622 = vrot.slane %v621, 1
      %v623 = vadd.f32 %v621, %v622
      %v624 = vmul.f32 %v443, %v443
      %v625 = vmul.f32 %v446, %v446
      %v626 = vmul.f32 %v451, %v451
      %v627 = vmul.f32 %v454, %v454
      %v628 = vmul.f32 %v459, %v459
      %v629 = vmul.f32 %v462, %v462
      %v630 = vmul.f32 %v467, %v467
      %v631 = vmul.f32 %v470, %v470
      %v632 = vmul.f32 %v475, %v475
      %v633 = vmul.f32 %v478, %v478
      %v634 = vmul.f32 %v483, %v483
      %v635 = vmul.f32 %v486, %v486
      %v636 = vmul.f32 %v491, %v491
      %v637 = vmul.f32 %v494, %v494
      %v638 = vmul.f32 %v499, %v499
      %v639 = vmul.f32 %v502, %v502
      %v640 = vsel %vm586, %v624, 0.0
      %v641 = vsel %vm586, %v625, 0.0
      %v642 = vadd.f32 %v640, %v641
      %v643 = vsel %vm586, %v626, 0.0
      %v644 = vadd.f32 %v642, %v643
      %v645 = vsel %vm586, %v627, 0.0
      %v646 = vadd.f32 %v644, %v645
      %v647 = vsel %vm586, %v628, 0.0
      %v648 = vadd.f32 %v646, %v647
      %v649 = vsel %vm586, %v629, 0.0
      %v650 = vadd.f32 %v648, %v649
      %v651 = vsel %vm586, %v630, 0.0
      %v652 = vadd.f32 %v650, %v651
      %v653 = vsel %vm586, %v631, 0.0
      %v654 = vadd.f32 %v652, %v653
      %v655 = vsel %vm586, %v632, 0.0
      %v656 = vadd.f32 %v654, %v655
      %v657 = vsel %vm586, %v633, 0.0
      %v658 = vadd.f32 %v656, %v657
      %v659 = vsel %vm586, %v634, 0.0
      %v660 = vadd.f32 %v658, %v659
      %v661 = vsel %vm586, %v635, 0.0
      %v662 = vadd.f32 %v660, %v661
      %v663 = vsel %vm586, %v636, 0.0
      %v664 = vadd.f32 %v662, %v663
      %v665 = vsel %vm586, %v637, 0.0
      %v666 = vadd.f32 %v664, %v665
      %v667 = vsel %vm586, %v638, 0.0
      %v668 = vadd.f32 %v666, %v667
      %v669 = vsel %vm586, %v639, 0.0
      %v670 = vadd.f32 %v668, %v669
      %v671 = vrot.slane %v670, 4
      %v672 = vadd.f32 %v670, %v671
      %v673 = vrot.slane %v672, 2
      %v674 = vadd.f32 %v672, %v673
      %v675 = vrot.slane %v674, 1
      %v676 = vadd.f32 %v674, %v675
      %677 = vst.msk [vmem:[%s286] sm:$0xff] %vm586, %v623
      %678 = vst.msk [vmem:[%s293] sm:$0xff] %vm586, %v676
      %s679 = smul.u32 16, %s21
      %p680 = scmp.lt.s32.totalorder %s20, 3
      %s681 = scalar_select %p680, %s20, 3
      %p682 = scmp.lt.s32.totalorder %s679, 15
      %s683 = scalar_select %p682, %s679, 15
      %s684 = smul.addr %s681, 16
      %s685 = sadd.s32 %s683, %s684
      %s686 = smul.addr %s685, 4
      %s687 = scalar_lea.vmem %s2, %s686
      %p688 = scmp.lt.s32.totalorder %s20, 3
      %s689 = scalar_select %p688, %s20, 3
      %p690 = scmp.lt.s32.totalorder %s21, 0
      %s691 = scalar_select %p690, %s21, 0
      %s692 = sadd.s32 %s691, %s689
      %s693 = smul.addr %s692, 8
      %s694 = scalar_lea.vmem %s3, %s693
      %p695 = scmp.lt.s32.totalorder %s20, 3
      %s696 = scalar_select %p695, %s20, 3
      %p697 = scmp.lt.s32.totalorder %s21, 0
      %s698 = scalar_select %p697, %s21, 0
      %s699 = sadd.s32 %s698, %s696
      %s700 = smul.addr %s699, 8
      %s701 = scalar_lea.vmem %s4, %s700
      // Predicated region
      $region29: #{acgan_generator_forward.13} parent=27 // pred_check
        %p702 = pneg %p102
      $region30: #{acgan_generator_forward.13} parent=27 // pred_check_branch
        %704 = sbr.rel (%p702) target = $region32
      $region31: #{acgan_generator_forward.13} parent=27 // pred_region
        %s705 = smul.u32 16, %s21
      $region32: #{acgan_generator_forward.13} parent=27 // pred_fallthru
        _
      // Predicated region
      $region33: #{acgan_generator_forward.13} parent=27 // pred_check
        %p706 = pneg %p130
      $region34: #{acgan_generator_forward.13} parent=27 // pred_check_branch
        %708 = sbr.rel (%p706) target = $region36
      $region35: #{acgan_generator_forward.13} parent=27 // pred_region
        _
      $region36: #{acgan_generator_forward.13} parent=27 // pred_fallthru
        _
      // Predicated region
      $region37: #{acgan_generator_forward.13} parent=27 // pred_check
        %p709 = pneg %p158
      $region38: #{acgan_generator_forward.13} parent=27 // pred_check_branch
        %711 = sbr.rel (%p709) target = $region40
      $region39: #{acgan_generator_forward.13} parent=27 // pred_region
        _
      $region40: #{acgan_generator_forward.13} parent=27 // pred_fallthru
        _
    $region28: #{acgan_generator_forward.13} parent=5 // pred_fallthru
      _
    %p712 = scmp.le.s32.totalorder 2, %s11
    // Predicated region
    $region41: #{acgan_generator_forward.13} parent=5 // pred_check
      %p713 = pneg %p712
    $region42: #{acgan_generator_forward.13} parent=5 // pred_check_branch
      %715 = sbr.rel (%p713) target = $region44
    $region43: #{acgan_generator_forward.13} parent=5 // pred_region
      %s716 = ssub.s32 %s11, 2
      // Predicated region
      $region45: #{acgan_generator_forward.13} parent=43 // pred_check
        %p717 = pneg %p108
      $region46: #{acgan_generator_forward.13} parent=43 // pred_check_branch
        %719 = sbr.rel (%p717) target = $region48
      $region47: #{acgan_generator_forward.13} parent=43 // pred_region
        %s720 = smul.u32 16, %s23
        %p721 = scmp.lt.s32.totalorder %s22, 3
        %s722 = scalar_select %p721, %s22, 3
        %p723 = scmp.lt.s32.totalorder %s720, 15
        %s724 = scalar_select %p723, %s720, 15
        %s725 = smul.addr %s722, 16
        %s726 = sadd.s32 %s724, %s725
        %s727 = smul.addr %s726, 4
        %s728 = scalar_lea.vmem %s2, %s727
      $region48: #{acgan_generator_forward.13} parent=43 // pred_fallthru
        _
      // Predicated region
      $region49: #{acgan_generator_forward.13} parent=43 // pred_check
        %p729 = pneg %p136
      $region50: #{acgan_generator_forward.13} parent=43 // pred_check_branch
        %731 = sbr.rel (%p729) target = $region52
      $region51: #{acgan_generator_forward.13} parent=43 // pred_region
        %p732 = scmp.lt.s32.totalorder %s22, 3
        %s733 = scalar_select %p732, %s22, 3
        %p734 = scmp.lt.s32.totalorder %s23, 0
        %s735 = scalar_select %p734, %s23, 0
        %s736 = sadd.s32 %s735, %s733
        %s737 = smul.addr %s736, 8
        %s738 = scalar_lea.vmem %s3, %s737
      $region52: #{acgan_generator_forward.13} parent=43 // pred_fallthru
        _
      // Predicated region
      $region53: #{acgan_generator_forward.13} parent=43 // pred_check
        %p739 = pneg %p164
      $region54: #{acgan_generator_forward.13} parent=43 // pred_check_branch
        %741 = sbr.rel (%p739) target = $region56
      $region55: #{acgan_generator_forward.13} parent=43 // pred_region
        %p742 = scmp.lt.s32.totalorder %s22, 3
        %s743 = scalar_select %p742, %s22, 3
        %p744 = scmp.lt.s32.totalorder %s23, 0
        %s745 = scalar_select %p744, %s23, 0
        %s746 = sadd.s32 %s745, %s743
        %s747 = smul.addr %s746, 8
        %s748 = scalar_lea.vmem %s4, %s747
      $region56: #{acgan_generator_forward.13} parent=43 // pred_fallthru
        _
    $region44: #{acgan_generator_forward.13} parent=5 // pred_fallthru
      _
  $region6: #{acgan_generator_forward.13} parent=0 // loop_footer
    %s15 = sadd.s32 1, %s11
  $region7: #{acgan_generator_forward.13} parent=0 // loop_footer_branch
    %10 = sbr.rel target = $region3
  $region8: #{acgan_generator_forward.13} parent=0 // loop_exit
    _

// kernel: acgan_generator_forward.14
$region0: #{acgan_generator_forward.14}
  #allocation0 [shape = 'u32[]', space=smem, size = 0x4, offset = 0x4, fixed_abs, tag = 'smem constant byte address 0x4 - core index']
  #allocation1 [shape = 'u32[144,128]{1,0:T(1,128)}', space=vmem, size = 0x12000, scoped, tag = 'internal scratch']
  %s0 = inlined_call_operand.vmem [shape: bf16[4,128,8], index: 0, kind: input, shape index: {}]
  %s1 = inlined_call_operand.vmem [shape: f32[1,8], index: 1, kind: input, shape index: {}]
  %s2 = inlined_call_operand.vmem [shape: f32[1,8], index: 2, kind: input, shape index: {}]
  %s3 = inlined_call_operand.vmem [shape: bf16[4,128,8], index: 3, kind: output, shape index: {}]
  %s4 = sld [smem:[#allocation0]]
  $region45: #{acgan_generator_forward.14} parent=0
    _
  %s6 = ssub.s32 1, %s4
  %s7 = scalar_select 0, %s6, %s4
  loop: start=0, step=1, limit=6
  $region2: #{acgan_generator_forward.14} parent=0 // loop_pre_header
    _
  $region3: #{acgan_generator_forward.14} parent=0 // loop_header
    %s9 = sphi 0, %s13
    %p10 = scmp.ge.s32.totalorder %s9, 6
    %s16 = sphi 0, %s28
    %s17 = sphi 0, %s24
    %s18 = sphi 0, %s16
    %s19 = sphi 0, %s17
    %s20 = sphi 0, %s18
    %s21 = sphi 0, %s19
    %s33 = sphi 0, %s35
    %s36 = sphi 0, %s33
    %s37 = sphi 0, %s36
    %s53 = sphi 0, %s37
    %s57 = sphi 0, %s57
    %s59 = sphi 0, %s57
    %s60 = sphi 0, %s59
    %s74 = sphi 0, %s60
    %s78 = sphi 0, %s78
    %s80 = sphi 0, %s78
    %s81 = sphi 0, %s80
    %s95 = sphi 0, %s81
    %s103 = sphi 0, %s105
    %s106 = sphi 0, %s103
    %s107 = sphi 0, %s106
    %s123 = sphi 0, %s107
  $region4: #{acgan_generator_forward.14} parent=0 // loop_header_branch
    %12 = sbr.rel (%p10) target = $region8
  $region5: #{acgan_generator_forward.14} parent=0 // loop_body
    %s14 = ssub.s32 %s9, 1
    %s15 = ssub.s32 %s9, 2
    %s22 = sadd.s32 1, %s17
    %p23 = scmp.ge.s32.totalorder %s22, 1
    %s24 = scalar_select %p23, 0, %s22
    %s25 = sadd.s32 1, %s16
    %s26 = scalar_select %p23, %s25, %s16
    %p27 = scmp.ge.s32.totalorder %s26, 4
    %s28 = scalar_select %p27, 0, %s26
    %s29 = ssub.s32 %s16, %s28
    %s30 = ssub.s32 %s17, %s24
    %s31 = sor.u32 %s29, %s30
    %p32 = scmp.eq.s32.totalorder %s31, 0
    %s34 = sadd.s32 %s33, 1
    %s35 = scalar_select %p32, %s33, %s34
    %p38 = pneg %p32
    %p39 = scmp.eq.s32.totalorder %s9, 3
    %p40 = por %p38, %p39
    %p41 = scmp.ne.s32.totalorder %s33, %s36
    %p42 = scmp.eq.s32.totalorder %s9, 0
    %p43 = por %p41, %p42
    %p44 = scmp.ne.s32.totalorder %s33, %s36
    %p45 = scmp.eq.s32.totalorder %s14, 3
    %p46 = por %p44, %p45
    %p47 = scmp.ne.s32.totalorder %s36, %s37
    %p48 = scmp.eq.s32.totalorder %s14, 0
    %p49 = por %p47, %p48
    %p50 = scmp.ne.s32.totalorder %s36, %s37
    %p51 = scmp.eq.s32.totalorder %s15, 3
    %p52 = por %p50, %p51
    %p54 = scmp.ne.s32.totalorder %s37, %s53
    %p55 = scmp.eq.s32.totalorder %s15, 0
    %p56 = por %p54, %p55
    %s58 = sadd.s32 %s57, 1
    %p61 = scmp.eq.s32.totalorder %s9, 3
    %p62 = scmp.ne.s32.totalorder %s57, %s59
    %p63 = scmp.eq.s32.totalorder %s9, 0
    %p64 = por %p62, %p63
    %p65 = scmp.ne.s32.totalorder %s57, %s59
    %p66 = scmp.eq.s32.totalorder %s14, 3
    %p67 = por %p65, %p66
    %p68 = scmp.ne.s32.totalorder %s59, %s60
    %p69 = scmp.eq.s32.totalorder %s14, 0
    %p70 = por %p68, %p69
    %p71 = scmp.ne.s32.totalorder %s59, %s60
    %p72 = scmp.eq.s32.totalorder %s15, 3
    %p73 = por %p71, %p72
    %p75 = scmp.ne.s32.totalorder %s60, %s74
    %p76 = scmp.eq.s32.totalorder %s15, 0
    %p77 = por %p75, %p76
    %s79 = sadd.s32 %s78, 1
    %p82 = scmp.eq.s32.totalorder %s9, 3
    %p83 = scmp.ne.s32.totalorder %s78, %s80
    %p84 = scmp.eq.s32.totalorder %s9, 0
    %p85 = por %p83, %p84
    %p86 = scmp.ne.s32.totalorder %s78, %s80
    %p87 = scmp.eq.s32.totalorder %s14, 3
    %p88 = por %p86, %p87
    %p89 = scmp.ne.s32.totalorder %s80, %s81
    %p90 = scmp.eq.s32.totalorder %s14, 0
    %p91 = por %p89, %p90
    %p92 = scmp.ne.s32.totalorder %s80, %s81
    %p93 = scmp.eq.s32.totalorder %s15, 3
    %p94 = por %p92, %p93
    %p96 = scmp.ne.s32.totalorder %s81, %s95
    %p97 = scmp.eq.s32.totalorder %s15, 0
    %p98 = por %p96, %p97
    %s99 = ssub.s32 %s16, %s28
    %s100 = ssub.s32 %s17, %s24
    %s101 = sor.u32 %s99, %s100
    %p102 = scmp.eq.s32.totalorder %s101, 0
    %s104 = sadd.s32 %s103, 1
    %s105 = scalar_select %p102, %s103, %s104
    %p108 = pneg %p102
    %p109 = scmp.eq.s32.totalorder %s9, 3
    %p110 = por %p108, %p109
    %p111 = scmp.ne.s32.totalorder %s103, %s106
    %p112 = scmp.eq.s32.totalorder %s9, 0
    %p113 = por %p111, %p112
    %p114 = scmp.ne.s32.totalorder %s103, %s106
    %p115 = scmp.eq.s32.totalorder %s14, 3
    %p116 = por %p114, %p115
    %p117 = scmp.ne.s32.totalorder %s106, %s107
    %p118 = scmp.eq.s32.totalorder %s14, 0
    %p119 = por %p117, %p118
    %p120 = scmp.ne.s32.totalorder %s106, %s107
    %p121 = scmp.eq.s32.totalorder %s15, 3
    %p122 = por %p120, %p121
    %p124 = scmp.ne.s32.totalorder %s107, %s123
    %p125 = scmp.eq.s32.totalorder %s15, 0
    %p126 = por %p124, %p125
    %p127 = scmp.le.s32.totalorder 1, %s9
    %p128 = scmp.lt.s32.totalorder %s9, 5
    %p129 = pnand %p127, %p128
    %p130 = pneg %p129
    // Predicated region
    $region9: #{acgan_generator_forward.14} parent=5 // pred_check
      _
    $region10: #{acgan_generator_forward.14} parent=5 // pred_check_branch
      %132 = sbr.rel (%p129) target = $region12
    $region11: #{acgan_generator_forward.14} parent=5 // pred_region
      %s133 = ssub.s32 %s9, 1
      // Predicated region
      $region13: #{acgan_generator_forward.14} parent=11 // pred_check
        %p134 = pneg %p70
      $region14: #{acgan_generator_forward.14} parent=11 // pred_check_branch
        %136 = sbr.rel (%p134) target = $region16
      $region15: #{acgan_generator_forward.14} parent=11 // pred_region
        _
      $region16: #{acgan_generator_forward.14} parent=11 // pred_fallthru
        _
      // Predicated region
      $region17: #{acgan_generator_forward.14} parent=11 // pred_check
        %p137 = pneg %p91
      $region18: #{acgan_generator_forward.14} parent=11 // pred_check_branch
        %139 = sbr.rel (%p137) target = $region20
      $region19: #{acgan_generator_forward.14} parent=11 // pred_region
        _
      $region20: #{acgan_generator_forward.14} parent=11 // pred_fallthru
        _
    $region12: #{acgan_generator_forward.14} parent=5 // pred_fallthru
      _
    %p140 = scmp.lt.s32.totalorder %s9, 4
    // Predicated region
    $region21: #{acgan_generator_forward.14} parent=5 // pred_check
      %p141 = pneg %p140
    $region22: #{acgan_generator_forward.14} parent=5 // pred_check_branch
      %143 = sbr.rel (%p141) target = $region24
    $region23: #{acgan_generator_forward.14} parent=5 // pred_region
      // Predicated region
      $region25: #{acgan_generator_forward.14} parent=23 // pred_check
        %p144 = pneg %p43
      $region26: #{acgan_generator_forward.14} parent=23 // pred_check_branch
        %146 = sbr.rel (%p144) target = $region28
      $region27: #{acgan_generator_forward.14} parent=23 // pred_region
        %s147 = smul.u32 16, %s17
        %p148 = scmp.lt.s32.totalorder %s16, 3
        %s149 = scalar_select %p148, %s16, 3
        %p150 = scmp.lt.s32.totalorder %s147, 15
        %s151 = scalar_select %p150, %s147, 15
        %s152 = smul.addr %s149, 16
        %s153 = sadd.s32 %s151, %s152
        %s154 = smul.addr %s153, 4
        %s155 = scalar_lea.vmem %s0, %s154
        %s156 = smul.u32 16, %s17
      $region28: #{acgan_generator_forward.14} parent=23 // pred_fallthru
        _
    $region24: #{acgan_generator_forward.14} parent=5 // pred_fallthru
      _
    %p157 = scmp.le.s32.totalorder 1, %s9
    %p158 = scmp.lt.s32.totalorder %s9, 5
    %p159 = pnand %p157, %p158
    %p160 = pneg %p159
    // Predicated region
    $region29: #{acgan_generator_forward.14} parent=5 // pred_check
      _
    $region30: #{acgan_generator_forward.14} parent=5 // pred_check_branch
      %162 = sbr.rel (%p159) target = $region32
    $region31: #{acgan_generator_forward.14} parent=5 // pred_region
      %s163 = ssub.s32 %s9, 1
      %s164 = smul.u32 16, %s19
      %p165 = scmp.lt.s32.totalorder %s18, 3
      %s166 = scalar_select %p165, %s18, 3
      %p167 = scmp.lt.s32.totalorder %s164, 15
      %s168 = scalar_select %p167, %s164, 15
      %s169 = smul.addr %s166, 16
      %s170 = sadd.s32 %s168, %s169
      %s171 = smul.addr %s170, 4
      %s172 = scalar_lea.vmem %s0, %s171
      %p173 = pneg %p49
      %p174 = pneg %p46
      %p175 = pneg %p70
      %p176 = pneg %p67
      %p177 = pneg %p91
      %p178 = pneg %p88
      %p179 = pneg %p119
      %p180 = pneg %p116
      %s181 = smul.u32 16, %s19
      %p182 = scmp.lt.s32.totalorder %s18, 3
      %s183 = scalar_select %p182, %s18, 3
      %p184 = scmp.lt.s32.totalorder %s181, 15
      %s185 = scalar_select %p184, %s181, 15
      %s186 = smul.addr %s183, 16
      %s187 = sadd.s32 %s185, %s186
      %s188 = smul.addr %s187, 4
      %s189 = scalar_lea.vmem %s3, %s188
      %s190 = smul.u32 16, %s19
      %p191 = scmp.lt.s32.totalorder %s18, 3
      %s192 = scalar_select %p191, %s18, 3
      %p193 = scmp.lt.s32.totalorder %s190, 15
      %s194 = scalar_select %p193, %s190, 15
      %s195 = smul.addr %s192, 16
      %s196 = sadd.s32 %s194, %s195
      %s197 = smul.addr %s196, 4
      %s198 = scalar_lea.vmem %s0, %s197
      %s199 = smul.u32 16, %s19
      %s200 = smul.u32 16, %s19
      %p201 = scmp.lt.s32.totalorder %s18, 3
      %s202 = scalar_select %p201, %s18, 3
      %p203 = scmp.lt.s32.totalorder %s200, 15
      %s204 = scalar_select %p203, %s200, 15
      %s205 = smul.addr %s202, 16
      %s206 = sadd.s32 %s204, %s205
      %s207 = smul.addr %s206, 4
      %s208 = scalar_lea.vmem %s3, %s207
      %s209 = smul.u32 16, %s19
      %v210 = vld [vmem:[%s198] sm:$0xf]
      %v211 = vld [vmem:[%s198 + $0x4] sm:$0xf]
      %v212 = vld [vmem:[%s198 + $0x8] sm:$0xf]
      %v213 = vld [vmem:[%s198 + $0xc] sm:$0xf]
      %v214 = vld [vmem:[%s198 + $0x10] sm:$0xf]
      %v215 = vld [vmem:[%s198 + $0x14] sm:$0xf]
      %v216 = vld [vmem:[%s198 + $0x18] sm:$0xf]
      %v217 = vld [vmem:[%s198 + $0x1c] sm:$0xf]
      %v218 = vld [vmem:[%s198 + $0x20] sm:$0xf]
      %v219 = vld [vmem:[%s198 + $0x24] sm:$0xf]
      %v220 = vld [vmem:[%s198 + $0x28] sm:$0xf]
      %v221 = vld [vmem:[%s198 + $0x2c] sm:$0xf]
      %v222 = vld [vmem:[%s198 + $0x30] sm:$0xf]
      %v223 = vld [vmem:[%s198 + $0x34] sm:$0xf]
      %v224 = vld [vmem:[%s198 + $0x38] sm:$0xf]
      %v225 = vld [vmem:[%s198 + $0x3c] sm:$0xf]
      %v226 = vunpack.c.l.bf16 %v210
      %v227 = vunpack.c.l.bf16 %v211
      %v228 = vunpack.c.l.bf16 %v212
      %v229 = vunpack.c.l.bf16 %v213
      %v230 = vunpack.c.l.bf16 %v214
      %v231 = vunpack.c.l.bf16 %v215
      %v232 = vunpack.c.l.bf16 %v216
      %v233 = vunpack.c.l.bf16 %v217
      %v234 = vunpack.c.l.bf16 %v218
      %v235 = vunpack.c.l.bf16 %v219
      %v236 = vunpack.c.l.bf16 %v220
      %v237 = vunpack.c.l.bf16 %v221
      %v238 = vunpack.c.l.bf16 %v222
      %v239 = vunpack.c.l.bf16 %v223
      %v240 = vunpack.c.l.bf16 %v224
      %v241 = vunpack.c.l.bf16 %v225
      %v242 = vld [vmem:[%s1] sm:$0x1]
      %v244 = vlaneseq
      %v245 = vshrl.u32 %v244, 7
      %v246 = vsub.s32 0, %v245
      %v247 = vrot.slane %v242, %v246
      %v249 = vmul.f32 %v226, %v247
      %v250 = vmul.f32 %v227, %v247
      %v251 = vmul.f32 %v228, %v247
      %v252 = vmul.f32 %v229, %v247
      %v253 = vmul.f32 %v230, %v247
      %v254 = vmul.f32 %v231, %v247
      %v255 = vmul.f32 %v232, %v247
      %v256 = vmul.f32 %v233, %v247
      %v257 = vmul.f32 %v234, %v247
      %v258 = vmul.f32 %v235, %v247
      %v259 = vmul.f32 %v236, %v247
      %v260 = vmul.f32 %v237, %v247
      %v261 = vmul.f32 %v238, %v247
      %v262 = vmul.f32 %v239, %v247
      %v263 = vmul.f32 %v240, %v247
      %v264 = vmul.f32 %v241, %v247
      %v265 = vld [vmem:[%s2] sm:$0x1]
      %v267 = vlaneseq
      %v268 = vshrl.u32 %v267, 7
      %v269 = vsub.s32 0, %v268
      %v270 = vrot.slane %v265, %v269
      %v272 = vadd.f32 %v249, %v270
      %v273 = vadd.f32 %v250, %v270
      %v274 = vadd.f32 %v251, %v270
      %v275 = vadd.f32 %v252, %v270
      %v276 = vadd.f32 %v253, %v270
      %v277 = vadd.f32 %v254, %v270
      %v278 = vadd.f32 %v255, %v270
      %v279 = vadd.f32 %v256, %v270
      %v280 = vadd.f32 %v257, %v270
      %v281 = vadd.f32 %v258, %v270
      %v282 = vadd.f32 %v259, %v270
      %v283 = vadd.f32 %v260, %v270
      %v284 = vadd.f32 %v261, %v270
      %v285 = vadd.f32 %v262, %v270
      %v286 = vadd.f32 %v263, %v270
      %v287 = vadd.f32 %v264, %v270
      %v288 = vmax.f32 %v272, 0.0
      %v289 = vmax.f32 %v273, 0.0
      %v290 = vmax.f32 %v274, 0.0
      %v291 = vmax.f32 %v275, 0.0
      %v292 = vmax.f32 %v276, 0.0
      %v293 = vmax.f32 %v277, 0.0
      %v294 = vmax.f32 %v278, 0.0
      %v295 = vmax.f32 %v279, 0.0
      %v296 = vmax.f32 %v280, 0.0
      %v297 = vmax.f32 %v281, 0.0
      %v298 = vmax.f32 %v282, 0.0
      %v299 = vmax.f32 %v283, 0.0
      %v300 = vmax.f32 %v284, 0.0
      %v301 = vmax.f32 %v285, 0.0
      %v302 = vmax.f32 %v286, 0.0
      %v303 = vmax.f32 %v287, 0.0
      %v304 = vpack.c.bf16 %v289, %v288
      %v305 = vpack.c.bf16 %v291, %v290
      %v306 = vpack.c.bf16 %v293, %v292
      %v307 = vpack.c.bf16 %v295, %v294
      %v308 = vpack.c.bf16 %v297, %v296
      %v309 = vpack.c.bf16 %v299, %v298
      %v310 = vpack.c.bf16 %v301, %v300
      %v311 = vpack.c.bf16 %v303, %v302
      %v320 = vunpack.c.l.b16 %v304
      %v321 = vunpack.c.h.b16 %v304
      %v322 = vunpack.c.l.b16 %v305
      %v323 = vunpack.c.h.b16 %v305
      %v324 = vunpack.c.l.b16 %v306
      %v325 = vunpack.c.h.b16 %v306
      %v326 = vunpack.c.l.b16 %v307
      %v327 = vunpack.c.h.b16 %v307
      %v328 = vunpack.c.l.b16 %v308
      %v329 = vunpack.c.h.b16 %v308
      %v330 = vunpack.c.l.b16 %v309
      %v331 = vunpack.c.h.b16 %v309
      %v332 = vunpack.c.l.b16 %v310
      %v333 = vunpack.c.h.b16 %v310
      %v334 = vunpack.c.l.b16 %v311
      %v335 = vunpack.c.h.b16 %v311
      %v336 = vpack.c.b16 %v320, %v320
      %v337 = vpack.c.b16 %v321, %v321
      %v338 = vpack.c.b16 %v322, %v322
      %v339 = vpack.c.b16 %v323, %v323
      %v340 = vpack.c.b16 %v324, %v324
      %v341 = vpack.c.b16 %v325, %v325
      %v342 = vpack.c.b16 %v326, %v326
      %v343 = vpack.c.b16 %v327, %v327
      %v344 = vpack.c.b16 %v328, %v328
      %v345 = vpack.c.b16 %v329, %v329
      %v346 = vpack.c.b16 %v330, %v330
      %v347 = vpack.c.b16 %v331, %v331
      %v348 = vpack.c.b16 %v332, %v332
      %v349 = vpack.c.b16 %v333, %v333
      %v350 = vpack.c.b16 %v334, %v334
      %v351 = vpack.c.b16 %v335, %v335
      %vm368 = vcmask 60416
      %369 = vst.msk [vmem:[%s208] sm:$0xf] %vm368, %v336
      %370 = vst.msk [vmem:[%s208 + $0x4] sm:$0xf] %vm368, %v337
      %371 = vst.msk [vmem:[%s208 + $0x8] sm:$0xf] %vm368, %v338
      %372 = vst.msk [vmem:[%s208 + $0xc] sm:$0xf] %vm368, %v339
      %373 = vst.msk [vmem:[%s208 + $0x10] sm:$0xf] %vm368, %v340
      %374 = vst.msk [vmem:[%s208 + $0x14] sm:$0xf] %vm368, %v341
      %375 = vst.msk [vmem:[%s208 + $0x18] sm:$0xf] %vm368, %v342
      %376 = vst.msk [vmem:[%s208 + $0x1c] sm:$0xf] %vm368, %v343
      %377 = vst.msk [vmem:[%s208 + $0x20] sm:$0xf] %vm368, %v344
      %378 = vst.msk [vmem:[%s208 + $0x24] sm:$0xf] %vm368, %v345
      %379 = vst.msk [vmem:[%s208 + $0x28] sm:$0xf] %vm368, %v346
      %380 = vst.msk [vmem:[%s208 + $0x2c] sm:$0xf] %vm368, %v347
      %381 = vst.msk [vmem:[%s208 + $0x30] sm:$0xf] %vm368, %v348
      %382 = vst.msk [vmem:[%s208 + $0x34] sm:$0xf] %vm368, %v349
      %383 = vst.msk [vmem:[%s208 + $0x38] sm:$0xf] %vm368, %v350
      %384 = vst.msk [vmem:[%s208 + $0x3c] sm:$0xf] %vm368, %v351
      %s385 = smul.u32 16, %s19
      %p386 = scmp.lt.s32.totalorder %s18, 3
      %s387 = scalar_select %p386, %s18, 3
      %p388 = scmp.lt.s32.totalorder %s385, 15
      %s389 = scalar_select %p388, %s385, 15
      %s390 = smul.addr %s387, 16
      %s391 = sadd.s32 %s389, %s390
      %s392 = smul.addr %s391, 4
      %s393 = scalar_lea.vmem %s3, %s392
      // Predicated region
      $region33: #{acgan_generator_forward.14} parent=31 // pred_check
        %p394 = pneg %p116
      $region34: #{acgan_generator_forward.14} parent=31 // pred_check_branch
        %396 = sbr.rel (%p394) target = $region36
      $region35: #{acgan_generator_forward.14} parent=31 // pred_region
        %s397 = smul.u32 16, %s19
      $region36: #{acgan_generator_forward.14} parent=31 // pred_fallthru
        _
    $region32: #{acgan_generator_forward.14} parent=5 // pred_fallthru
      _
    %p398 = scmp.le.s32.totalorder 2, %s9
    // Predicated region
    $region37: #{acgan_generator_forward.14} parent=5 // pred_check
      %p399 = pneg %p398
    $region38: #{acgan_generator_forward.14} parent=5 // pred_check_branch
      %401 = sbr.rel (%p399) target = $region40
    $region39: #{acgan_generator_forward.14} parent=5 // pred_region
      %s402 = ssub.s32 %s9, 2
      // Predicated region
      $region41: #{acgan_generator_forward.14} parent=39 // pred_check
        %p403 = pneg %p122
      $region42: #{acgan_generator_forward.14} parent=39 // pred_check_branch
        %405 = sbr.rel (%p403) target = $region44
      $region43: #{acgan_generator_forward.14} parent=39 // pred_region
        %s406 = smul.u32 16, %s21
        %p407 = scmp.lt.s32.totalorder %s20, 3
        %s408 = scalar_select %p407, %s20, 3
        %p409 = scmp.lt.s32.totalorder %s406, 15
        %s410 = scalar_select %p409, %s406, 15
        %s411 = smul.addr %s408, 16
        %s412 = sadd.s32 %s410, %s411
        %s413 = smul.addr %s412, 4
        %s414 = scalar_lea.vmem %s3, %s413
      $region44: #{acgan_generator_forward.14} parent=39 // pred_fallthru
        _
    $region40: #{acgan_generator_forward.14} parent=5 // pred_fallthru
      _
  $region6: #{acgan_generator_forward.14} parent=0 // loop_footer
    %s13 = sadd.s32 1, %s9
  $region7: #{acgan_generator_forward.14} parent=0 // loop_footer_branch
    %8 = sbr.rel target = $region3
  $region8: #{acgan_generator_forward.14} parent=0 // loop_exit
    _

// kernel: acgan_generator_forward.16
$region0: #{acgan_generator_forward.16}
  #allocation0 [shape = 'u32[]', space=smem, size = 0x4, offset = 0x4, fixed_abs, tag = 'smem constant byte address 0x4 - core index']
  #allocation1 [shape = 'u32[144,128]{1,0:T(1,128)}', space=vmem, size = 0x12000, scoped, tag = 'internal scratch']
  %s0 = inlined_call_operand.vmem [shape: bf16[4,512,4], index: 0, kind: input, shape index: {}]
  %s1 = inlined_call_operand.vmem [shape: f32[1,4], index: 1, kind: input, shape index: {}]
  %s2 = inlined_call_operand.vmem [shape: f32[1,4], index: 2, kind: input, shape index: {}]
  %s3 = inlined_call_operand.vmem [shape: bf16[4,512,4], index: 3, kind: output, shape index: {}]
  %s4 = sld [smem:[#allocation0]]
  $region45: #{acgan_generator_forward.16} parent=0
    _
  %s6 = ssub.s32 1, %s4
  %s7 = scalar_select 0, %s6, %s4
  loop: start=0, step=1, limit=6
  $region2: #{acgan_generator_forward.16} parent=0 // loop_pre_header
    _
  $region3: #{acgan_generator_forward.16} parent=0 // loop_header
    %s9 = sphi 0, %s13
    %p10 = scmp.ge.s32.totalorder %s9, 6
    %s16 = sphi 0, %s28
    %s17 = sphi 0, %s24
    %s18 = sphi 0, %s16
    %s19 = sphi 0, %s17
    %s20 = sphi 0, %s18
    %s21 = sphi 0, %s19
    %s33 = sphi 0, %s35
    %s36 = sphi 0, %s33
    %s37 = sphi 0, %s36
    %s53 = sphi 0, %s37
    %s57 = sphi 0, %s57
    %s59 = sphi 0, %s57
    %s60 = sphi 0, %s59
    %s74 = sphi 0, %s60
    %s78 = sphi 0, %s78
    %s80 = sphi 0, %s78
    %s81 = sphi 0, %s80
    %s95 = sphi 0, %s81
    %s103 = sphi 0, %s105
    %s106 = sphi 0, %s103
    %s107 = sphi 0, %s106
    %s123 = sphi 0, %s107
  $region4: #{acgan_generator_forward.16} parent=0 // loop_header_branch
    %12 = sbr.rel (%p10) target = $region8
  $region5: #{acgan_generator_forward.16} parent=0 // loop_body
    %s14 = ssub.s32 %s9, 1
    %s15 = ssub.s32 %s9, 2
    %s22 = sadd.s32 1, %s17
    %p23 = scmp.ge.s32.totalorder %s22, 1
    %s24 = scalar_select %p23, 0, %s22
    %s25 = sadd.s32 1, %s16
    %s26 = scalar_select %p23, %s25, %s16
    %p27 = scmp.ge.s32.totalorder %s26, 4
    %s28 = scalar_select %p27, 0, %s26
    %s29 = ssub.s32 %s16, %s28
    %s30 = ssub.s32 %s17, %s24
    %s31 = sor.u32 %s29, %s30
    %p32 = scmp.eq.s32.totalorder %s31, 0
    %s34 = sadd.s32 %s33, 1
    %s35 = scalar_select %p32, %s33, %s34
    %p38 = pneg %p32
    %p39 = scmp.eq.s32.totalorder %s9, 3
    %p40 = por %p38, %p39
    %p41 = scmp.ne.s32.totalorder %s33, %s36
    %p42 = scmp.eq.s32.totalorder %s9, 0
    %p43 = por %p41, %p42
    %p44 = scmp.ne.s32.totalorder %s33, %s36
    %p45 = scmp.eq.s32.totalorder %s14, 3
    %p46 = por %p44, %p45
    %p47 = scmp.ne.s32.totalorder %s36, %s37
    %p48 = scmp.eq.s32.totalorder %s14, 0
    %p49 = por %p47, %p48
    %p50 = scmp.ne.s32.totalorder %s36, %s37
    %p51 = scmp.eq.s32.totalorder %s15, 3
    %p52 = por %p50, %p51
    %p54 = scmp.ne.s32.totalorder %s37, %s53
    %p55 = scmp.eq.s32.totalorder %s15, 0
    %p56 = por %p54, %p55
    %s58 = sadd.s32 %s57, 1
    %p61 = scmp.eq.s32.totalorder %s9, 3
    %p62 = scmp.ne.s32.totalorder %s57, %s59
    %p63 = scmp.eq.s32.totalorder %s9, 0
    %p64 = por %p62, %p63
    %p65 = scmp.ne.s32.totalorder %s57, %s59
    %p66 = scmp.eq.s32.totalorder %s14, 3
    %p67 = por %p65, %p66
    %p68 = scmp.ne.s32.totalorder %s59, %s60
    %p69 = scmp.eq.s32.totalorder %s14, 0
    %p70 = por %p68, %p69
    %p71 = scmp.ne.s32.totalorder %s59, %s60
    %p72 = scmp.eq.s32.totalorder %s15, 3
    %p73 = por %p71, %p72
    %p75 = scmp.ne.s32.totalorder %s60, %s74
    %p76 = scmp.eq.s32.totalorder %s15, 0
    %p77 = por %p75, %p76
    %s79 = sadd.s32 %s78, 1
    %p82 = scmp.eq.s32.totalorder %s9, 3
    %p83 = scmp.ne.s32.totalorder %s78, %s80
    %p84 = scmp.eq.s32.totalorder %s9, 0
    %p85 = por %p83, %p84
    %p86 = scmp.ne.s32.totalorder %s78, %s80
    %p87 = scmp.eq.s32.totalorder %s14, 3
    %p88 = por %p86, %p87
    %p89 = scmp.ne.s32.totalorder %s80, %s81
    %p90 = scmp.eq.s32.totalorder %s14, 0
    %p91 = por %p89, %p90
    %p92 = scmp.ne.s32.totalorder %s80, %s81
    %p93 = scmp.eq.s32.totalorder %s15, 3
    %p94 = por %p92, %p93
    %p96 = scmp.ne.s32.totalorder %s81, %s95
    %p97 = scmp.eq.s32.totalorder %s15, 0
    %p98 = por %p96, %p97
    %s99 = ssub.s32 %s16, %s28
    %s100 = ssub.s32 %s17, %s24
    %s101 = sor.u32 %s99, %s100
    %p102 = scmp.eq.s32.totalorder %s101, 0
    %s104 = sadd.s32 %s103, 1
    %s105 = scalar_select %p102, %s103, %s104
    %p108 = pneg %p102
    %p109 = scmp.eq.s32.totalorder %s9, 3
    %p110 = por %p108, %p109
    %p111 = scmp.ne.s32.totalorder %s103, %s106
    %p112 = scmp.eq.s32.totalorder %s9, 0
    %p113 = por %p111, %p112
    %p114 = scmp.ne.s32.totalorder %s103, %s106
    %p115 = scmp.eq.s32.totalorder %s14, 3
    %p116 = por %p114, %p115
    %p117 = scmp.ne.s32.totalorder %s106, %s107
    %p118 = scmp.eq.s32.totalorder %s14, 0
    %p119 = por %p117, %p118
    %p120 = scmp.ne.s32.totalorder %s106, %s107
    %p121 = scmp.eq.s32.totalorder %s15, 3
    %p122 = por %p120, %p121
    %p124 = scmp.ne.s32.totalorder %s107, %s123
    %p125 = scmp.eq.s32.totalorder %s15, 0
    %p126 = por %p124, %p125
    %p127 = scmp.le.s32.totalorder 1, %s9
    %p128 = scmp.lt.s32.totalorder %s9, 5
    %p129 = pnand %p127, %p128
    %p130 = pneg %p129
    // Predicated region
    $region9: #{acgan_generator_forward.16} parent=5 // pred_check
      _
    $region10: #{acgan_generator_forward.16} parent=5 // pred_check_branch
      %132 = sbr.rel (%p129) target = $region12
    $region11: #{acgan_generator_forward.16} parent=5 // pred_region
      %s133 = ssub.s32 %s9, 1
      // Predicated region
      $region13: #{acgan_generator_forward.16} parent=11 // pred_check
        %p134 = pneg %p70
      $region14: #{acgan_generator_forward.16} parent=11 // pred_check_branch
        %136 = sbr.rel (%p134) target = $region16
      $region15: #{acgan_generator_forward.16} parent=11 // pred_region
        _
      $region16: #{acgan_generator_forward.16} parent=11 // pred_fallthru
        _
      // Predicated region
      $region17: #{acgan_generator_forward.16} parent=11 // pred_check
        %p137 = pneg %p91
      $region18: #{acgan_generator_forward.16} parent=11 // pred_check_branch
        %139 = sbr.rel (%p137) target = $region20
      $region19: #{acgan_generator_forward.16} parent=11 // pred_region
        _
      $region20: #{acgan_generator_forward.16} parent=11 // pred_fallthru
        _
    $region12: #{acgan_generator_forward.16} parent=5 // pred_fallthru
      _
    %p140 = scmp.lt.s32.totalorder %s9, 4
    // Predicated region
    $region21: #{acgan_generator_forward.16} parent=5 // pred_check
      %p141 = pneg %p140
    $region22: #{acgan_generator_forward.16} parent=5 // pred_check_branch
      %143 = sbr.rel (%p141) target = $region24
    $region23: #{acgan_generator_forward.16} parent=5 // pred_region
      // Predicated region
      $region25: #{acgan_generator_forward.16} parent=23 // pred_check
        %p144 = pneg %p43
      $region26: #{acgan_generator_forward.16} parent=23 // pred_check_branch
        %146 = sbr.rel (%p144) target = $region28
      $region27: #{acgan_generator_forward.16} parent=23 // pred_region
        %s147 = smul.u32 64, %s17
        %p148 = scmp.lt.s32.totalorder %s16, 3
        %s149 = scalar_select %p148, %s16, 3
        %p150 = scmp.lt.s32.totalorder %s147, 63
        %s151 = scalar_select %p150, %s147, 63
        %s152 = smul.addr %s149, 64
        %s153 = sadd.s32 %s151, %s152
        %s154 = smul.addr %s153, 4
        %s155 = scalar_lea.vmem %s0, %s154
        %s156 = smul.u32 64, %s17
      $region28: #{acgan_generator_forward.16} parent=23 // pred_fallthru
        _
    $region24: #{acgan_generator_forward.16} parent=5 // pred_fallthru
      _
    %p157 = scmp.le.s32.totalorder 1, %s9
    %p158 = scmp.lt.s32.totalorder %s9, 5
    %p159 = pnand %p157, %p158
    %p160 = pneg %p159
    // Predicated region
    $region29: #{acgan_generator_forward.16} parent=5 // pred_check
      _
    $region30: #{acgan_generator_forward.16} parent=5 // pred_check_branch
      %162 = sbr.rel (%p159) target = $region32
    $region31: #{acgan_generator_forward.16} parent=5 // pred_region
      %s163 = ssub.s32 %s9, 1
      %s164 = smul.u32 64, %s19
      %p165 = scmp.lt.s32.totalorder %s18, 3
      %s166 = scalar_select %p165, %s18, 3
      %p167 = scmp.lt.s32.totalorder %s164, 63
      %s168 = scalar_select %p167, %s164, 63
      %s169 = smul.addr %s166, 64
      %s170 = sadd.s32 %s168, %s169
      %s171 = smul.addr %s170, 4
      %s172 = scalar_lea.vmem %s0, %s171
      %p173 = pneg %p49
      %p174 = pneg %p46
      %p175 = pneg %p70
      %p176 = pneg %p67
      %p177 = pneg %p91
      %p178 = pneg %p88
      %p179 = pneg %p119
      %p180 = pneg %p116
      %s181 = smul.u32 64, %s19
      %p182 = scmp.lt.s32.totalorder %s18, 3
      %s183 = scalar_select %p182, %s18, 3
      %p184 = scmp.lt.s32.totalorder %s181, 63
      %s185 = scalar_select %p184, %s181, 63
      %s186 = smul.addr %s183, 64
      %s187 = sadd.s32 %s185, %s186
      %s188 = smul.addr %s187, 4
      %s189 = scalar_lea.vmem %s3, %s188
      %s190 = smul.u32 64, %s19
      %p191 = scmp.lt.s32.totalorder %s18, 3
      %s192 = scalar_select %p191, %s18, 3
      %p193 = scmp.lt.s32.totalorder %s190, 63
      %s194 = scalar_select %p193, %s190, 63
      %s195 = smul.addr %s192, 64
      %s196 = sadd.s32 %s194, %s195
      %s197 = smul.addr %s196, 4
      %s198 = scalar_lea.vmem %s0, %s197
      %s199 = smul.u32 64, %s19
      %s200 = smul.u32 64, %s19
      %p201 = scmp.lt.s32.totalorder %s18, 3
      %s202 = scalar_select %p201, %s18, 3
      %p203 = scmp.lt.s32.totalorder %s200, 63
      %s204 = scalar_select %p203, %s200, 63
      %s205 = smul.addr %s202, 64
      %s206 = sadd.s32 %s204, %s205
      %s207 = smul.addr %s206, 4
      %s208 = scalar_lea.vmem %s3, %s207
      %s209 = smul.u32 64, %s19
      %v210 = vld [vmem:[%s198] sm:$0xf]
      %v211 = vld [vmem:[%s198 + $0x4] sm:$0xf]
      %v212 = vld [vmem:[%s198 + $0x8] sm:$0xf]
      %v213 = vld [vmem:[%s198 + $0xc] sm:$0xf]
      %v214 = vld [vmem:[%s198 + $0x10] sm:$0xf]
      %v215 = vld [vmem:[%s198 + $0x14] sm:$0xf]
      %v216 = vld [vmem:[%s198 + $0x18] sm:$0xf]
      %v217 = vld [vmem:[%s198 + $0x1c] sm:$0xf]
      %v218 = vld [vmem:[%s198 + $0x20] sm:$0xf]
      %v219 = vld [vmem:[%s198 + $0x24] sm:$0xf]
      %v220 = vld [vmem:[%s198 + $0x28] sm:$0xf]
      %v221 = vld [vmem:[%s198 + $0x2c] sm:$0xf]
      %v222 = vld [vmem:[%s198 + $0x30] sm:$0xf]
      %v223 = vld [vmem:[%s198 + $0x34] sm:$0xf]
      %v224 = vld [vmem:[%s198 + $0x38] sm:$0xf]
      %v225 = vld [vmem:[%s198 + $0x3c] sm:$0xf]
      %v226 = vld [vmem:[%s198 + $0x40] sm:$0xf]
      %v227 = vld [vmem:[%s198 + $0x44] sm:$0xf]
      %v228 = vld [vmem:[%s198 + $0x48] sm:$0xf]
      %v229 = vld [vmem:[%s198 + $0x4c] sm:$0xf]
      %v230 = vld [vmem:[%s198 + $0x50] sm:$0xf]
      %v231 = vld [vmem:[%s198 + $0x54] sm:$0xf]
      %v232 = vld [vmem:[%s198 + $0x58] sm:$0xf]
      %v233 = vld [vmem:[%s198 + $0x5c] sm:$0xf]
      %v234 = vld [vmem:[%s198 + $0x60] sm:$0xf]
      %v235 = vld [vmem:[%s198 + $0x64] sm:$0xf]
      %v236 = vld [vmem:[%s198 + $0x68] sm:$0xf]
      %v237 = vld [vmem:[%s198 + $0x6c] sm:$0xf]
      %v238 = vld [vmem:[%s198 + $0x70] sm:$0xf]
      %v239 = vld [vmem:[%s198 + $0x74] sm:$0xf]
      %v240 = vld [vmem:[%s198 + $0x78] sm:$0xf]
      %v241 = vld [vmem:[%s198 + $0x7c] sm:$0xf]
      %v242 = vld [vmem:[%s198 + $0x80] sm:$0xf]
      %v243 = vld [vmem:[%s198 + $0x84] sm:$0xf]
      %v244 = vld [vmem:[%s198 + $0x88] sm:$0xf]
      %v245 = vld [vmem:[%s198 + $0x8c] sm:$0xf]
      %v246 = vld [vmem:[%s198 + $0x90] sm:$0xf]
      %v247 = vld [vmem:[%s198 + $0x94] sm:$0xf]
      %v248 = vld [vmem:[%s198 + $0x98] sm:$0xf]
      %v249 = vld [vmem:[%s198 + $0x9c] sm:$0xf]
      %v250 = vld [vmem:[%s198 + $0xa0] sm:$0xf]
      %v251 = vld [vmem:[%s198 + $0xa4] sm:$0xf]
      %v252 = vld [vmem:[%s198 + $0xa8] sm:$0xf]
      %v253 = vld [vmem:[%s198 + $0xac] sm:$0xf]
      %v254 = vld [vmem:[%s198 + $0xb0] sm:$0xf]
      %v255 = vld [vmem:[%s198 + $0xb4] sm:$0xf]
      %v256 = vld [vmem:[%s198 + $0xb8] sm:$0xf]
      %v257 = vld [vmem:[%s198 + $0xbc] sm:$0xf]
      %v258 = vld [vmem:[%s198 + $0xc0] sm:$0xf]
      %v259 = vld [vmem:[%s198 + $0xc4] sm:$0xf]
      %v260 = vld [vmem:[%s198 + $0xc8] sm:$0xf]
      %v261 = vld [vmem:[%s198 + $0xcc] sm:$0xf]
      %v262 = vld [vmem:[%s198 + $0xd0] sm:$0xf]
      %v263 = vld [vmem:[%s198 + $0xd4] sm:$0xf]
      %v264 = vld [vmem:[%s198 + $0xd8] sm:$0xf]
      %v265 = vld [vmem:[%s198 + $0xdc] sm:$0xf]
      %v266 = vld [vmem:[%s198 + $0xe0] sm:$0xf]
      %v267 = vld [vmem:[%s198 + $0xe4] sm:$0xf]
      %v268 = vld [vmem:[%s198 + $0xe8] sm:$0xf]
      %v269 = vld [vmem:[%s198 + $0xec] sm:$0xf]
      %v270 = vld [vmem:[%s198 + $0xf0] sm:$0xf]
      %v271 = vld [vmem:[%s198 + $0xf4] sm:$0xf]
      %v272 = vld [vmem:[%s198 + $0xf8] sm:$0xf]
      %v273 = vld [vmem:[%s198 + $0xfc] sm:$0xf]
      %v274 = vunpack.c.l.bf16 %v210
      %v275 = vunpack.c.l.bf16 %v211
      %v276 = vunpack.c.l.bf16 %v212
      %v277 = vunpack.c.l.bf16 %v213
      %v278 = vunpack.c.l.bf16 %v214
      %v279 = vunpack.c.l.bf16 %v215
      %v280 = vunpack.c.l.bf16 %v216
      %v281 = vunpack.c.l.bf16 %v217
      %v282 = vunpack.c.l.bf16 %v218
      %v283 = vunpack.c.l.bf16 %v219
      %v284 = vunpack.c.l.bf16 %v220
      %v285 = vunpack.c.l.bf16 %v221
      %v286 = vunpack.c.l.bf16 %v222
      %v287 = vunpack.c.l.bf16 %v223
      %v288 = vunpack.c.l.bf16 %v224
      %v289 = vunpack.c.l.bf16 %v225
      %v290 = vunpack.c.l.bf16 %v226
      %v291 = vunpack.c.l.bf16 %v227
      %v292 = vunpack.c.l.bf16 %v228
      %v293 = vunpack.c.l.bf16 %v229
      %v294 = vunpack.c.l.bf16 %v230
      %v295 = vunpack.c.l.bf16 %v231
      %v296 = vunpack.c.l.bf16 %v232
      %v297 = vunpack.c.l.bf16 %v233
      %v298 = vunpack.c.l.bf16 %v234
      %v299 = vunpack.c.l.bf16 %v235
      %v300 = vunpack.c.l.bf16 %v236
      %v301 = vunpack.c.l.bf16 %v237
      %v302 = vunpack.c.l.bf16 %v238
      %v303 = vunpack.c.l.bf16 %v239
      %v304 = vunpack.c.l.bf16 %v240
      %v305 = vunpack.c.l.bf16 %v241
      %v306 = vunpack.c.l.bf16 %v242
      %v307 = vunpack.c.l.bf16 %v243
      %v308 = vunpack.c.l.bf16 %v244
      %v309 = vunpack.c.l.bf16 %v245
      %v310 = vunpack.c.l.bf16 %v246
      %v311 = vunpack.c.l.bf16 %v247
      %v312 = vunpack.c.l.bf16 %v248
      %v313 = vunpack.c.l.bf16 %v249
      %v314 = vunpack.c.l.bf16 %v250
      %v315 = vunpack.c.l.bf16 %v251
      %v316 = vunpack.c.l.bf16 %v252
      %v317 = vunpack.c.l.bf16 %v253
      %v318 = vunpack.c.l.bf16 %v254
      %v319 = vunpack.c.l.bf16 %v255
      %v320 = vunpack.c.l.bf16 %v256
      %v321 = vunpack.c.l.bf16 %v257
      %v322 = vunpack.c.l.bf16 %v258
      %v323 = vunpack.c.l.bf16 %v259
      %v324 = vunpack.c.l.bf16 %v260
      %v325 = vunpack.c.l.bf16 %v261
      %v326 = vunpack.c.l.bf16 %v262
      %v327 = vunpack.c.l.bf16 %v263
      %v328 = vunpack.c.l.bf16 %v264
      %v329 = vunpack.c.l.bf16 %v265
      %v330 = vunpack.c.l.bf16 %v266
      %v331 = vunpack.c.l.bf16 %v267
      %v332 = vunpack.c.l.bf16 %v268
      %v333 = vunpack.c.l.bf16 %v269
      %v334 = vunpack.c.l.bf16 %v270
      %v335 = vunpack.c.l.bf16 %v271
      %v336 = vunpack.c.l.bf16 %v272
      %v337 = vunpack.c.l.bf16 %v273
      %v338 = vld [vmem:[%s1] sm:$0x1]
      %v340 = vlaneseq
      %v341 = vshrl.u32 %v340, 7
      %v342 = vsub.s32 0, %v341
      %v343 = vrot.slane %v338, %v342
      %v345 = vmul.f32 %v274, %v343
      %v346 = vmul.f32 %v275, %v343
      %v347 = vmul.f32 %v276, %v343
      %v348 = vmul.f32 %v277, %v343
      %v349 = vmul.f32 %v278, %v343
      %v350 = vmul.f32 %v279, %v343
      %v351 = vmul.f32 %v280, %v343
      %v352 = vmul.f32 %v281, %v343
      %v353 = vmul.f32 %v282, %v343
      %v354 = vmul.f32 %v283, %v343
      %v355 = vmul.f32 %v284, %v343
      %v356 = vmul.f32 %v285, %v343
      %v357 = vmul.f32 %v286, %v343
      %v358 = vmul.f32 %v287, %v343
      %v359 = vmul.f32 %v288, %v343
      %v360 = vmul.f32 %v289, %v343
      %v361 = vmul.f32 %v290, %v343
      %v362 = vmul.f32 %v291, %v343
      %v363 = vmul.f32 %v292, %v343
      %v364 = vmul.f32 %v293, %v343
      %v365 = vmul.f32 %v294, %v343
      %v366 = vmul.f32 %v295, %v343
      %v367 = vmul.f32 %v296, %v343
      %v368 = vmul.f32 %v297, %v343
      %v369 = vmul.f32 %v298, %v343
      %v370 = vmul.f32 %v299, %v343
      %v371 = vmul.f32 %v300, %v343
      %v372 = vmul.f32 %v301, %v343
      %v373 = vmul.f32 %v302, %v343
      %v374 = vmul.f32 %v303, %v343
      %v375 = vmul.f32 %v304, %v343
      %v376 = vmul.f32 %v305, %v343
      %v377 = vmul.f32 %v306, %v343
      %v378 = vmul.f32 %v307, %v343
      %v379 = vmul.f32 %v308, %v343
      %v380 = vmul.f32 %v309, %v343
      %v381 = vmul.f32 %v310, %v343
      %v382 = vmul.f32 %v311, %v343
      %v383 = vmul.f32 %v312, %v343
      %v384 = vmul.f32 %v313, %v343
      %v385 = vmul.f32 %v314, %v343
      %v386 = vmul.f32 %v315, %v343
      %v387 = vmul.f32 %v316, %v343
      %v388 = vmul.f32 %v317, %v343
      %v389 = vmul.f32 %v318, %v343
      %v390 = vmul.f32 %v319, %v343
      %v391 = vmul.f32 %v320, %v343
      %v392 = vmul.f32 %v321, %v343
      %v393 = vmul.f32 %v322, %v343
      %v394 = vmul.f32 %v323, %v343
      %v395 = vmul.f32 %v324, %v343
      %v396 = vmul.f32 %v325, %v343
      %v397 = vmul.f32 %v326, %v343
      %v398 = vmul.f32 %v327, %v343
      %v399 = vmul.f32 %v328, %v343
      %v400 = vmul.f32 %v329, %v343
      %v401 = vmul.f32 %v330, %v343
      %v402 = vmul.f32 %v331, %v343
      %v403 = vmul.f32 %v332, %v343
      %v404 = vmul.f32 %v333, %v343
      %v405 = vmul.f32 %v334, %v343
      %v406 = vmul.f32 %v335, %v343
      %v407 = vmul.f32 %v336, %v343
      %v408 = vmul.f32 %v337, %v343
      %v409 = vld [vmem:[%s2] sm:$0x1]
      %v411 = vlaneseq
      %v412 = vshrl.u32 %v411, 7
      %v413 = vsub.s32 0, %v412
      %v414 = vrot.slane %v409, %v413
      %v416 = vadd.f32 %v345, %v414
      %v417 = vadd.f32 %v346, %v414
      %v418 = vadd.f32 %v347, %v414
      %v419 = vadd.f32 %v348, %v414
      %v420 = vadd.f32 %v349, %v414
      %v421 = vadd.f32 %v350, %v414
      %v422 = vadd.f32 %v351, %v414
      %v423 = vadd.f32 %v352, %v414
      %v424 = vadd.f32 %v353, %v414
      %v425 = vadd.f32 %v354, %v414
      %v426 = vadd.f32 %v355, %v414
      %v427 = vadd.f32 %v356, %v414
      %v428 = vadd.f32 %v357, %v414
      %v429 = vadd.f32 %v358, %v414
      %v430 = vadd.f32 %v359, %v414
      %v431 = vadd.f32 %v360, %v414
      %v432 = vadd.f32 %v361, %v414
      %v433 = vadd.f32 %v362, %v414
      %v434 = vadd.f32 %v363, %v414
      %v435 = vadd.f32 %v364, %v414
      %v436 = vadd.f32 %v365, %v414
      %v437 = vadd.f32 %v366, %v414
      %v438 = vadd.f32 %v367, %v414
      %v439 = vadd.f32 %v368, %v414
      %v440 = vadd.f32 %v369, %v414
      %v441 = vadd.f32 %v370, %v414
      %v442 = vadd.f32 %v371, %v414
      %v443 = vadd.f32 %v372, %v414
      %v444 = vadd.f32 %v373, %v414
      %v445 = vadd.f32 %v374, %v414
      %v446 = vadd.f32 %v375, %v414
      %v447 = vadd.f32 %v376, %v414
      %v448 = vadd.f32 %v377, %v414
      %v449 = vadd.f32 %v378, %v414
      %v450 = vadd.f32 %v379, %v414
      %v451 = vadd.f32 %v380, %v414
      %v452 = vadd.f32 %v381, %v414
      %v453 = vadd.f32 %v382, %v414
      %v454 = vadd.f32 %v383, %v414
      %v455 = vadd.f32 %v384, %v414
      %v456 = vadd.f32 %v385, %v414
      %v457 = vadd.f32 %v386, %v414
      %v458 = vadd.f32 %v387, %v414
      %v459 = vadd.f32 %v388, %v414
      %v460 = vadd.f32 %v389, %v414
      %v461 = vadd.f32 %v390, %v414
      %v462 = vadd.f32 %v391, %v414
      %v463 = vadd.f32 %v392, %v414
      %v464 = vadd.f32 %v393, %v414
      %v465 = vadd.f32 %v394, %v414
      %v466 = vadd.f32 %v395, %v414
      %v467 = vadd.f32 %v396, %v414
      %v468 = vadd.f32 %v397, %v414
      %v469 = vadd.f32 %v398, %v414
      %v470 = vadd.f32 %v399, %v414
      %v471 = vadd.f32 %v400, %v414
      %v472 = vadd.f32 %v401, %v414
      %v473 = vadd.f32 %v402, %v414
      %v474 = vadd.f32 %v403, %v414
      %v475 = vadd.f32 %v404, %v414
      %v476 = vadd.f32 %v405, %v414
      %v477 = vadd.f32 %v406, %v414
      %v478 = vadd.f32 %v407, %v414
      %v479 = vadd.f32 %v408, %v414
      %v480 = vmax.f32 %v416, 0.0
      %v481 = vmax.f32 %v417, 0.0
      %v482 = vmax.f32 %v418, 0.0
      %v483 = vmax.f32 %v419, 0.0
      %v484 = vmax.f32 %v420, 0.0
      %v485 = vmax.f32 %v421, 0.0
      %v486 = vmax.f32 %v422, 0.0
      %v487 = vmax.f32 %v423, 0.0
      %v488 = vmax.f32 %v424, 0.0
      %v489 = vmax.f32 %v425, 0.0
      %v490 = vmax.f32 %v426, 0.0
      %v491 = vmax.f32 %v427, 0.0
      %v492 = vmax.f32 %v428, 0.0
      %v493 = vmax.f32 %v429, 0.0
      %v494 = vmax.f32 %v430, 0.0
      %v495 = vmax.f32 %v431, 0.0
      %v496 = vmax.f32 %v432, 0.0
      %v497 = vmax.f32 %v433, 0.0
      %v498 = vmax.f32 %v434, 0.0
      %v499 = vmax.f32 %v435, 0.0
      %v500 = vmax.f32 %v436, 0.0
      %v501 = vmax.f32 %v437, 0.0
      %v502 = vmax.f32 %v438, 0.0
      %v503 = vmax.f32 %v439, 0.0
      %v504 = vmax.f32 %v440, 0.0
      %v505 = vmax.f32 %v441, 0.0
      %v506 = vmax.f32 %v442, 0.0
      %v507 = vmax.f32 %v443, 0.0
      %v508 = vmax.f32 %v444, 0.0
      %v509 = vmax.f32 %v445, 0.0
      %v510 = vmax.f32 %v446, 0.0
      %v511 = vmax.f32 %v447, 0.0
      %v512 = vmax.f32 %v448, 0.0
      %v513 = vmax.f32 %v449, 0.0
      %v514 = vmax.f32 %v450, 0.0
      %v515 = vmax.f32 %v451, 0.0
      %v516 = vmax.f32 %v452, 0.0
      %v517 = vmax.f32 %v453, 0.0
      %v518 = vmax.f32 %v454, 0.0
      %v519 = vmax.f32 %v455, 0.0
      %v520 = vmax.f32 %v456, 0.0
      %v521 = vmax.f32 %v457, 0.0
      %v522 = vmax.f32 %v458, 0.0
      %v523 = vmax.f32 %v459, 0.0
      %v524 = vmax.f32 %v460, 0.0
      %v525 = vmax.f32 %v461, 0.0
      %v526 = vmax.f32 %v462, 0.0
      %v527 = vmax.f32 %v463, 0.0
      %v528 = vmax.f32 %v464, 0.0
      %v529 = vmax.f32 %v465, 0.0
      %v530 = vmax.f32 %v466, 0.0
      %v531 = vmax.f32 %v467, 0.0
      %v532 = vmax.f32 %v468, 0.0
      %v533 = vmax.f32 %v469, 0.0
      %v534 = vmax.f32 %v470, 0.0
      %v535 = vmax.f32 %v471, 0.0
      %v536 = vmax.f32 %v472, 0.0
      %v537 = vmax.f32 %v473, 0.0
      %v538 = vmax.f32 %v474, 0.0
      %v539 = vmax.f32 %v475, 0.0
      %v540 = vmax.f32 %v476, 0.0
      %v541 = vmax.f32 %v477, 0.0
      %v542 = vmax.f32 %v478, 0.0
      %v543 = vmax.f32 %v479, 0.0
      %v544 = vpack.c.bf16 %v481, %v480
      %v545 = vpack.c.bf16 %v483, %v482
      %v546 = vpack.c.bf16 %v485, %v484
      %v547 = vpack.c.bf16 %v487, %v486
      %v548 = vpack.c.bf16 %v489, %v488
      %v549 = vpack.c.bf16 %v491, %v490
      %v550 = vpack.c.bf16 %v493, %v492
      %v551 = vpack.c.bf16 %v495, %v494
      %v552 = vpack.c.bf16 %v497, %v496
      %v553 = vpack.c.bf16 %v499, %v498
      %v554 = vpack.c.bf16 %v501, %v500
      %v555 = vpack.c.bf16 %v503, %v502
      %v556 = vpack.c.bf16 %v505, %v504
      %v557 = vpack.c.bf16 %v507, %v506
      %v558 = vpack.c.bf16 %v509, %v508
      %v559 = vpack.c.bf16 %v511, %v510
      %v560 = vpack.c.bf16 %v513, %v512
      %v561 = vpack.c.bf16 %v515, %v514
      %v562 = vpack.c.bf16 %v517, %v516
      %v563 = vpack.c.bf16 %v519, %v518
      %v564 = vpack.c.bf16 %v521, %v520
      %v565 = vpack.c.bf16 %v523, %v522
      %v566 = vpack.c.bf16 %v525, %v524
      %v567 = vpack.c.bf16 %v527, %v526
      %v568 = vpack.c.bf16 %v529, %v528
      %v569 = vpack.c.bf16 %v531, %v530
      %v570 = vpack.c.bf16 %v533, %v532
      %v571 = vpack.c.bf16 %v535, %v534
      %v572 = vpack.c.bf16 %v537, %v536
      %v573 = vpack.c.bf16 %v539, %v538
      %v574 = vpack.c.bf16 %v541, %v540
      %v575 = vpack.c.bf16 %v543, %v542
      %v608 = vunpack.c.l.b16 %v544
      %v609 = vunpack.c.h.b16 %v544
      %v610 = vunpack.c.l.b16 %v545
      %v611 = vunpack.c.h.b16 %v545
      %v612 = vunpack.c.l.b16 %v546
      %v613 = vunpack.c.h.b16 %v546
      %v614 = vunpack.c.l.b16 %v547
      %v615 = vunpack.c.h.b16 %v547
      %v616 = vunpack.c.l.b16 %v548
      %v617 = vunpack.c.h.b16 %v548
      %v618 = vunpack.c.l.b16 %v549
      %v619 = vunpack.c.h.b16 %v549
      %v620 = vunpack.c.l.b16 %v550
      %v621 = vunpack.c.h.b16 %v550
      %v622 = vunpack.c.l.b16 %v551
      %v623 = vunpack.c.h.b16 %v551
      %v624 = vunpack.c.l.b16 %v552
      %v625 = vunpack.c.h.b16 %v552
      %v626 = vunpack.c.l.b16 %v553
      %v627 = vunpack.c.h.b16 %v553
      %v628 = vunpack.c.l.b16 %v554
      %v629 = vunpack.c.h.b16 %v554
      %v630 = vunpack.c.l.b16 %v555
      %v631 = vunpack.c.h.b16 %v555
      %v632 = vunpack.c.l.b16 %v556
      %v633 = vunpack.c.h.b16 %v556
      %v634 = vunpack.c.l.b16 %v557
      %v635 = vunpack.c.h.b16 %v557
      %v636 = vunpack.c.l.b16 %v558
      %v637 = vunpack.c.h.b16 %v558
      %v638 = vunpack.c.l.b16 %v559
      %v639 = vunpack.c.h.b16 %v559
      %v640 = vunpack.c.l.b16 %v560
      %v641 = vunpack.c.h.b16 %v560
      %v642 = vunpack.c.l.b16 %v561
      %v643 = vunpack.c.h.b16 %v561
      %v644 = vunpack.c.l.b16 %v562
      %v645 = vunpack.c.h.b16 %v562
      %v646 = vunpack.c.l.b16 %v563
      %v647 = vunpack.c.h.b16 %v563
      %v648 = vunpack.c.l.b16 %v564
      %v649 = vunpack.c.h.b16 %v564
      %v650 = vunpack.c.l.b16 %v565
      %v651 = vunpack.c.h.b16 %v565
      %v652 = vunpack.c.l.b16 %v566
      %v653 = vunpack.c.h.b16 %v566
      %v654 = vunpack.c.l.b16 %v567
      %v655 = vunpack.c.h.b16 %v567
      %v656 = vunpack.c.l.b16 %v568
      %v657 = vunpack.c.h.b16 %v568
      %v658 = vunpack.c.l.b16 %v569
      %v659 = vunpack.c.h.b16 %v569
      %v660 = vunpack.c.l.b16 %v570
      %v661 = vunpack.c.h.b16 %v570
      %v662 = vunpack.c.l.b16 %v571
      %v663 = vunpack.c.h.b16 %v571
      %v664 = vunpack.c.l.b16 %v572
      %v665 = vunpack.c.h.b16 %v572
      %v666 = vunpack.c.l.b16 %v573
      %v667 = vunpack.c.h.b16 %v573
      %v668 = vunpack.c.l.b16 %v574
      %v669 = vunpack.c.h.b16 %v574
      %v670 = vunpack.c.l.b16 %v575
      %v671 = vunpack.c.h.b16 %v575
      %v672 = vpack.c.b16 %v608, %v608
      %v673 = vpack.c.b16 %v609, %v609
      %v674 = vpack.c.b16 %v610, %v610
      %v675 = vpack.c.b16 %v611, %v611
      %v676 = vpack.c.b16 %v612, %v612
      %v677 = vpack.c.b16 %v613, %v613
      %v678 = vpack.c.b16 %v614, %v614
      %v679 = vpack.c.b16 %v615, %v615
      %v680 = vpack.c.b16 %v616, %v616
      %v681 = vpack.c.b16 %v617, %v617
      %v682 = vpack.c.b16 %v618, %v618
      %v683 = vpack.c.b16 %v619, %v619
      %v684 = vpack.c.b16 %v620, %v620
      %v685 = vpack.c.b16 %v621, %v621
      %v686 = vpack.c.b16 %v622, %v622
      %v687 = vpack.c.b16 %v623, %v623
      %v688 = vpack.c.b16 %v624, %v624
      %v689 = vpack.c.b16 %v625, %v625
      %v690 = vpack.c.b16 %v626, %v626
      %v691 = vpack.c.b16 %v627, %v627
      %v692 = vpack.c.b16 %v628, %v628
      %v693 = vpack.c.b16 %v629, %v629
      %v694 = vpack.c.b16 %v630, %v630
      %v695 = vpack.c.b16 %v631, %v631
      %v696 = vpack.c.b16 %v632, %v632
      %v697 = vpack.c.b16 %v633, %v633
      %v698 = vpack.c.b16 %v634, %v634
      %v699 = vpack.c.b16 %v635, %v635
      %v700 = vpack.c.b16 %v636, %v636
      %v701 = vpack.c.b16 %v637, %v637
      %v702 = vpack.c.b16 %v638, %v638
      %v703 = vpack.c.b16 %v639, %v639
      %v704 = vpack.c.b16 %v640, %v640
      %v705 = vpack.c.b16 %v641, %v641
      %v706 = vpack.c.b16 %v642, %v642
      %v707 = vpack.c.b16 %v643, %v643
      %v708 = vpack.c.b16 %v644, %v644
      %v709 = vpack.c.b16 %v645, %v645
      %v710 = vpack.c.b16 %v646, %v646
      %v711 = vpack.c.b16 %v647, %v647
      %v712 = vpack.c.b16 %v648, %v648
      %v713 = vpack.c.b16 %v649, %v649
      %v714 = vpack.c.b16 %v650, %v650
      %v715 = vpack.c.b16 %v651, %v651
      %v716 = vpack.c.b16 %v652, %v652
      %v717 = vpack.c.b16 %v653, %v653
      %v718 = vpack.c.b16 %v654, %v654
      %v719 = vpack.c.b16 %v655, %v655
      %v720 = vpack.c.b16 %v656, %v656
      %v721 = vpack.c.b16 %v657, %v657
      %v722 = vpack.c.b16 %v658, %v658
      %v723 = vpack.c.b16 %v659, %v659
      %v724 = vpack.c.b16 %v660, %v660
      %v725 = vpack.c.b16 %v661, %v661
      %v726 = vpack.c.b16 %v662, %v662
      %v727 = vpack.c.b16 %v663, %v663
      %v728 = vpack.c.b16 %v664, %v664
      %v729 = vpack.c.b16 %v665, %v665
      %v730 = vpack.c.b16 %v666, %v666
      %v731 = vpack.c.b16 %v667, %v667
      %v732 = vpack.c.b16 %v668, %v668
      %v733 = vpack.c.b16 %v669, %v669
      %v734 = vpack.c.b16 %v670, %v670
      %v735 = vpack.c.b16 %v671, %v671
      %vm800 = vcmask 27648
      %801 = vst.msk [vmem:[%s208] sm:$0xf] %vm800, %v672
      %802 = vst.msk [vmem:[%s208 + $0x4] sm:$0xf] %vm800, %v673
      %803 = vst.msk [vmem:[%s208 + $0x8] sm:$0xf] %vm800, %v674
      %804 = vst.msk [vmem:[%s208 + $0xc] sm:$0xf] %vm800, %v675
      %805 = vst.msk [vmem:[%s208 + $0x10] sm:$0xf] %vm800, %v676
      %806 = vst.msk [vmem:[%s208 + $0x14] sm:$0xf] %vm800, %v677
      %807 = vst.msk [vmem:[%s208 + $0x18] sm:$0xf] %vm800, %v678
      %808 = vst.msk [vmem:[%s208 + $0x1c] sm:$0xf] %vm800, %v679
      %809 = vst.msk [vmem:[%s208 + $0x20] sm:$0xf] %vm800, %v680
      %810 = vst.msk [vmem:[%s208 + $0x24] sm:$0xf] %vm800, %v681
      %811 = vst.msk [vmem:[%s208 + $0x28] sm:$0xf] %vm800, %v682
      %812 = vst.msk [vmem:[%s208 + $0x2c] sm:$0xf] %vm800, %v683
      %813 = vst.msk [vmem:[%s208 + $0x30] sm:$0xf] %vm800, %v684
      %814 = vst.msk [vmem:[%s208 + $0x34] sm:$0xf] %vm800, %v685
      %815 = vst.msk [vmem:[%s208 + $0x38] sm:$0xf] %vm800, %v686
      %816 = vst.msk [vmem:[%s208 + $0x3c] sm:$0xf] %vm800, %v687
      %817 = vst.msk [vmem:[%s208 + $0x40] sm:$0xf] %vm800, %v688
      %818 = vst.msk [vmem:[%s208 + $0x44] sm:$0xf] %vm800, %v689
      %819 = vst.msk [vmem:[%s208 + $0x48] sm:$0xf] %vm800, %v690
      %820 = vst.msk [vmem:[%s208 + $0x4c] sm:$0xf] %vm800, %v691
      %821 = vst.msk [vmem:[%s208 + $0x50] sm:$0xf] %vm800, %v692
      %822 = vst.msk [vmem:[%s208 + $0x54] sm:$0xf] %vm800, %v693
      %823 = vst.msk [vmem:[%s208 + $0x58] sm:$0xf] %vm800, %v694
      %824 = vst.msk [vmem:[%s208 + $0x5c] sm:$0xf] %vm800, %v695
      %825 = vst.msk [vmem:[%s208 + $0x60] sm:$0xf] %vm800, %v696
      %826 = vst.msk [vmem:[%s208 + $0x64] sm:$0xf] %vm800, %v697
      %827 = vst.msk [vmem:[%s208 + $0x68] sm:$0xf] %vm800, %v698
      %828 = vst.msk [vmem:[%s208 + $0x6c] sm:$0xf] %vm800, %v699
      %829 = vst.msk [vmem:[%s208 + $0x70] sm:$0xf] %vm800, %v700
      %830 = vst.msk [vmem:[%s208 + $0x74] sm:$0xf] %vm800, %v701
      %831 = vst.msk [vmem:[%s208 + $0x78] sm:$0xf] %vm800, %v702
      %832 = vst.msk [vmem:[%s208 + $0x7c] sm:$0xf] %vm800, %v703
      %833 = vst.msk [vmem:[%s208 + $0x80] sm:$0xf] %vm800, %v704
      %834 = vst.msk [vmem:[%s208 + $0x84] sm:$0xf] %vm800, %v705
      %835 = vst.msk [vmem:[%s208 + $0x88] sm:$0xf] %vm800, %v706
      %836 = vst.msk [vmem:[%s208 + $0x8c] sm:$0xf] %vm800, %v707
      %837 = vst.msk [vmem:[%s208 + $0x90] sm:$0xf] %vm800, %v708
      %838 = vst.msk [vmem:[%s208 + $0x94] sm:$0xf] %vm800, %v709
      %839 = vst.msk [vmem:[%s208 + $0x98] sm:$0xf] %vm800, %v710
      %840 = vst.msk [vmem:[%s208 + $0x9c] sm:$0xf] %vm800, %v711
      %841 = vst.msk [vmem:[%s208 + $0xa0] sm:$0xf] %vm800, %v712
      %842 = vst.msk [vmem:[%s208 + $0xa4] sm:$0xf] %vm800, %v713
      %843 = vst.msk [vmem:[%s208 + $0xa8] sm:$0xf] %vm800, %v714
      %844 = vst.msk [vmem:[%s208 + $0xac] sm:$0xf] %vm800, %v715
      %845 = vst.msk [vmem:[%s208 + $0xb0] sm:$0xf] %vm800, %v716
      %846 = vst.msk [vmem:[%s208 + $0xb4] sm:$0xf] %vm800, %v717
      %847 = vst.msk [vmem:[%s208 + $0xb8] sm:$0xf] %vm800, %v718
      %848 = vst.msk [vmem:[%s208 + $0xbc] sm:$0xf] %vm800, %v719
      %849 = vst.msk [vmem:[%s208 + $0xc0] sm:$0xf] %vm800, %v720
      %850 = vst.msk [vmem:[%s208 + $0xc4] sm:$0xf] %vm800, %v721
      %851 = vst.msk [vmem:[%s208 + $0xc8] sm:$0xf] %vm800, %v722
      %852 = vst.msk [vmem:[%s208 + $0xcc] sm:$0xf] %vm800, %v723
      %853 = vst.msk [vmem:[%s208 + $0xd0] sm:$0xf] %vm800, %v724
      %854 = vst.msk [vmem:[%s208 + $0xd4] sm:$0xf] %vm800, %v725
      %855 = vst.msk [vmem:[%s208 + $0xd8] sm:$0xf] %vm800, %v726
      %856 = vst.msk [vmem:[%s208 + $0xdc] sm:$0xf] %vm800, %v727
      %857 = vst.msk [vmem:[%s208 + $0xe0] sm:$0xf] %vm800, %v728
      %858 = vst.msk [vmem:[%s208 + $0xe4] sm:$0xf] %vm800, %v729
      %859 = vst.msk [vmem:[%s208 + $0xe8] sm:$0xf] %vm800, %v730
      %860 = vst.msk [vmem:[%s208 + $0xec] sm:$0xf] %vm800, %v731
      %861 = vst.msk [vmem:[%s208 + $0xf0] sm:$0xf] %vm800, %v732
      %862 = vst.msk [vmem:[%s208 + $0xf4] sm:$0xf] %vm800, %v733
      %863 = vst.msk [vmem:[%s208 + $0xf8] sm:$0xf] %vm800, %v734
      %864 = vst.msk [vmem:[%s208 + $0xfc] sm:$0xf] %vm800, %v735
      %s865 = smul.u32 64, %s19
      %p866 = scmp.lt.s32.totalorder %s18, 3
      %s867 = scalar_select %p866, %s18, 3
      %p868 = scmp.lt.s32.totalorder %s865, 63
      %s869 = scalar_select %p868, %s865, 63
      %s870 = smul.addr %s867, 64
      %s871 = sadd.s32 %s869, %s870
      %s872 = smul.addr %s871, 4
      %s873 = scalar_lea.vmem %s3, %s872
      // Predicated region
      $region33: #{acgan_generator_forward.16} parent=31 // pred_check
        %p874 = pneg %p116
      $region34: #{acgan_generator_forward.16} parent=31 // pred_check_branch
        %876 = sbr.rel (%p874) target = $region36
      $region35: #{acgan_generator_forward.16} parent=31 // pred_region
        %s877 = smul.u32 64, %s19
      $region36: #{acgan_generator_forward.16} parent=31 // pred_fallthru
        _
    $region32: #{acgan_generator_forward.16} parent=5 // pred_fallthru
      _
    %p878 = scmp.le.s32.totalorder 2, %s9
    // Predicated region
    $region37: #{acgan_generator_forward.16} parent=5 // pred_check
      %p879 = pneg %p878
    $region38: #{acgan_generator_forward.16} parent=5 // pred_check_branch
      %881 = sbr.rel (%p879) target = $region40
    $region39: #{acgan_generator_forward.16} parent=5 // pred_region
      %s882 = ssub.s32 %s9, 2
      // Predicated region
      $region41: #{acgan_generator_forward.16} parent=39 // pred_check
        %p883 = pneg %p122
      $region42: #{acgan_generator_forward.16} parent=39 // pred_check_branch
        %885 = sbr.rel (%p883) target = $region44
      $region43: #{acgan_generator_forward.16} parent=39 // pred_region
        %s886 = smul.u32 64, %s21
        %p887 = scmp.lt.s32.totalorder %s20, 3
        %s888 = scalar_select %p887, %s20, 3
        %p889 = scmp.lt.s32.totalorder %s886, 63
        %s890 = scalar_select %p889, %s886, 63
        %s891 = smul.addr %s888, 64
        %s892 = sadd.s32 %s890, %s891
        %s893 = smul.addr %s892, 4
        %s894 = scalar_lea.vmem %s3, %s893
      $region44: #{acgan_generator_forward.16} parent=39 // pred_fallthru
        _
    $region40: #{acgan_generator_forward.16} parent=5 // pred_fallthru
      _
  $region6: #{acgan_generator_forward.16} parent=0 // loop_footer
    %s13 = sadd.s32 1, %s9
  $region7: #{acgan_generator_forward.16} parent=0 // loop_footer_branch
    %8 = sbr.rel target = $region3
  $region8: #{acgan_generator_forward.16} parent=0 // loop_exit
    _

// kernel: acgan_generator_forward.15
$region0: #{acgan_generator_forward.15}
  #allocation0 [shape = 'u32[]', space=smem, size = 0x4, offset = 0x4, fixed_abs, tag = 'smem constant byte address 0x4 - core index']
  #allocation1 [shape = 'u32[144,128]{1,0:T(1,128)}', space=vmem, size = 0x12000, scoped, tag = 'internal scratch']
  %s0 = inlined_call_operand.vmem [shape: bf16[4,512,32], index: 0, kind: input, shape index: {}]
  %s1 = inlined_call_operand.vmem [shape: bf16[4,32,4], index: 1, kind: input, shape index: {}]
  %s2 = inlined_call_operand.vmem [shape: bf16[4,512,4], index: 2, kind: output, shape index: {0}]
  %s3 = inlined_call_operand.vmem [shape: f32[4,1,8,4], index: 3, kind: output, shape index: {1}]
  %s4 = inlined_call_operand.vmem [shape: f32[4,1,8,4], index: 4, kind: output, shape index: {2}]
  %5 = xla_tuple %s2, %s3, %s4
  %s6 = sld [smem:[#allocation0]]
  $region57: #{acgan_generator_forward.15} parent=0
    _
  %s8 = ssub.s32 1, %s6
  %s9 = scalar_select 0, %s8, %s6
  loop: start=0, step=1, limit=6
  $region2: #{acgan_generator_forward.15} parent=0 // loop_pre_header
    _
  $region3: #{acgan_generator_forward.15} parent=0 // loop_header
    %s11 = sphi 0, %s15
    %p12 = scmp.ge.s32.totalorder %s11, 6
    %s18 = sphi 0, %s30
    %s19 = sphi 0, %s26
    %s20 = sphi 0, %s18
    %s21 = sphi 0, %s19
    %s22 = sphi 0, %s20
    %s23 = sphi 0, %s21
    %s35 = sphi 0, %s37
    %s38 = sphi 0, %s35
    %s39 = sphi 0, %s38
    %s55 = sphi 0, %s39
    %s61 = sphi 0, %s63
    %s64 = sphi 0, %s61
    %s65 = sphi 0, %s64
    %s81 = sphi 0, %s65
    %s89 = sphi 0, %s91
    %s92 = sphi 0, %s89
    %s93 = sphi 0, %s92
    %s109 = sphi 0, %s93
    %s117 = sphi 0, %s119
    %s120 = sphi 0, %s117
    %s121 = sphi 0, %s120
    %s137 = sphi 0, %s121
    %s145 = sphi 0, %s147
    %s148 = sphi 0, %s145
    %s149 = sphi 0, %s148
    %s165 = sphi 0, %s149
  $region4: #{acgan_generator_forward.15} parent=0 // loop_header_branch
    %14 = sbr.rel (%p12) target = $region8
  $region5: #{acgan_generator_forward.15} parent=0 // loop_body
    %s16 = ssub.s32 %s11, 1
    %s17 = ssub.s32 %s11, 2
    %s24 = sadd.s32 1, %s19
    %p25 = scmp.ge.s32.totalorder %s24, 1
    %s26 = scalar_select %p25, 0, %s24
    %s27 = sadd.s32 1, %s18
    %s28 = scalar_select %p25, %s27, %s18
    %p29 = scmp.ge.s32.totalorder %s28, 4
    %s30 = scalar_select %p29, 0, %s28
    %s31 = ssub.s32 %s18, %s30
    %s32 = ssub.s32 %s19, %s26
    %s33 = sor.u32 %s31, %s32
    %p34 = scmp.eq.s32.totalorder %s33, 0
    %s36 = sadd.s32 %s35, 1
    %s37 = scalar_select %p34, %s35, %s36
    %p40 = pneg %p34
    %p41 = scmp.eq.s32.totalorder %s11, 3
    %p42 = por %p40, %p41
    %p43 = scmp.ne.s32.totalorder %s35, %s38
    %p44 = scmp.eq.s32.totalorder %s11, 0
    %p45 = por %p43, %p44
    %p46 = scmp.ne.s32.totalorder %s35, %s38
    %p47 = scmp.eq.s32.totalorder %s16, 3
    %p48 = por %p46, %p47
    %p49 = scmp.ne.s32.totalorder %s38, %s39
    %p50 = scmp.eq.s32.totalorder %s16, 0
    %p51 = por %p49, %p50
    %p52 = scmp.ne.s32.totalorder %s38, %s39
    %p53 = scmp.eq.s32.totalorder %s17, 3
    %p54 = por %p52, %p53
    %p56 = scmp.ne.s32.totalorder %s39, %s55
    %p57 = scmp.eq.s32.totalorder %s17, 0
    %p58 = por %p56, %p57
    %s59 = ssub.s32 %s18, %s30
    %p60 = scmp.eq.s32.totalorder %s59, 0
    %s62 = sadd.s32 %s61, 1
    %s63 = scalar_select %p60, %s61, %s62
    %p66 = pneg %p60
    %p67 = scmp.eq.s32.totalorder %s11, 3
    %p68 = por %p66, %p67
    %p69 = scmp.ne.s32.totalorder %s61, %s64
    %p70 = scmp.eq.s32.totalorder %s11, 0
    %p71 = por %p69, %p70
    %p72 = scmp.ne.s32.totalorder %s61, %s64
    %p73 = scmp.eq.s32.totalorder %s16, 3
    %p74 = por %p72, %p73
    %p75 = scmp.ne.s32.totalorder %s64, %s65
    %p76 = scmp.eq.s32.totalorder %s16, 0
    %p77 = por %p75, %p76
    %p78 = scmp.ne.s32.totalorder %s64, %s65
    %p79 = scmp.eq.s32.totalorder %s17, 3
    %p80 = por %p78, %p79
    %p82 = scmp.ne.s32.totalorder %s65, %s81
    %p83 = scmp.eq.s32.totalorder %s17, 0
    %p84 = por %p82, %p83
    %s85 = ssub.s32 %s18, %s30
    %s86 = ssub.s32 %s19, %s26
    %s87 = sor.u32 %s85, %s86
    %p88 = scmp.eq.s32.totalorder %s87, 0
    %s90 = sadd.s32 %s89, 1
    %s91 = scalar_select %p88, %s89, %s90
    %p94 = pneg %p88
    %p95 = scmp.eq.s32.totalorder %s11, 3
    %p96 = por %p94, %p95
    %p97 = scmp.ne.s32.totalorder %s89, %s92
    %p98 = scmp.eq.s32.totalorder %s11, 0
    %p99 = por %p97, %p98
    %p100 = scmp.ne.s32.totalorder %s89, %s92
    %p101 = scmp.eq.s32.totalorder %s16, 3
    %p102 = por %p100, %p101
    %p103 = scmp.ne.s32.totalorder %s92, %s93
    %p104 = scmp.eq.s32.totalorder %s16, 0
    %p105 = por %p103, %p104
    %p106 = scmp.ne.s32.totalorder %s92, %s93
    %p107 = scmp.eq.s32.totalorder %s17, 3
    %p108 = por %p106, %p107
    %p110 = scmp.ne.s32.totalorder %s93, %s109
    %p111 = scmp.eq.s32.totalorder %s17, 0
    %p112 = por %p110, %p111
    %s113 = ssub.s32 %s18, %s30
    %s114 = ssub.s32 %s19, %s26
    %s115 = sor.u32 %s113, %s114
    %p116 = scmp.eq.s32.totalorder %s115, 0
    %s118 = sadd.s32 %s117, 1
    %s119 = scalar_select %p116, %s117, %s118
    %p122 = pneg %p116
    %p123 = scmp.eq.s32.totalorder %s11, 3
    %p124 = por %p122, %p123
    %p125 = scmp.ne.s32.totalorder %s117, %s120
    %p126 = scmp.eq.s32.totalorder %s11, 0
    %p127 = por %p125, %p126
    %p128 = scmp.ne.s32.totalorder %s117, %s120
    %p129 = scmp.eq.s32.totalorder %s16, 3
    %p130 = por %p128, %p129
    %p131 = scmp.ne.s32.totalorder %s120, %s121
    %p132 = scmp.eq.s32.totalorder %s16, 0
    %p133 = por %p131, %p132
    %p134 = scmp.ne.s32.totalorder %s120, %s121
    %p135 = scmp.eq.s32.totalorder %s17, 3
    %p136 = por %p134, %p135
    %p138 = scmp.ne.s32.totalorder %s121, %s137
    %p139 = scmp.eq.s32.totalorder %s17, 0
    %p140 = por %p138, %p139
    %s141 = ssub.s32 %s18, %s30
    %s142 = ssub.s32 %s19, %s26
    %s143 = sor.u32 %s141, %s142
    %p144 = scmp.eq.s32.totalorder %s143, 0
    %s146 = sadd.s32 %s145, 1
    %s147 = scalar_select %p144, %s145, %s146
    %p150 = pneg %p144
    %p151 = scmp.eq.s32.totalorder %s11, 3
    %p152 = por %p150, %p151
    %p153 = scmp.ne.s32.totalorder %s145, %s148
    %p154 = scmp.eq.s32.totalorder %s11, 0
    %p155 = por %p153, %p154
    %p156 = scmp.ne.s32.totalorder %s145, %s148
    %p157 = scmp.eq.s32.totalorder %s16, 3
    %p158 = por %p156, %p157
    %p159 = scmp.ne.s32.totalorder %s148, %s149
    %p160 = scmp.eq.s32.totalorder %s16, 0
    %p161 = por %p159, %p160
    %p162 = scmp.ne.s32.totalorder %s148, %s149
    %p163 = scmp.eq.s32.totalorder %s17, 3
    %p164 = por %p162, %p163
    %p166 = scmp.ne.s32.totalorder %s149, %s165
    %p167 = scmp.eq.s32.totalorder %s17, 0
    %p168 = por %p166, %p167
    %p169 = scmp.le.s32.totalorder 1, %s11
    %p170 = scmp.lt.s32.totalorder %s11, 5
    %p171 = pnand %p169, %p170
    %p172 = pneg %p171
    // Predicated region
    $region9: #{acgan_generator_forward.15} parent=5 // pred_check
      _
    $region10: #{acgan_generator_forward.15} parent=5 // pred_check_branch
      %174 = sbr.rel (%p171) target = $region12
    $region11: #{acgan_generator_forward.15} parent=5 // pred_region
      %s175 = ssub.s32 %s11, 1
    $region12: #{acgan_generator_forward.15} parent=5 // pred_fallthru
      _
    %p176 = scmp.lt.s32.totalorder %s11, 4
    // Predicated region
    $region13: #{acgan_generator_forward.15} parent=5 // pred_check
      %p177 = pneg %p176
    $region14: #{acgan_generator_forward.15} parent=5 // pred_check_branch
      %179 = sbr.rel (%p177) target = $region16
    $region15: #{acgan_generator_forward.15} parent=5 // pred_region
      // Predicated region
      $region17: #{acgan_generator_forward.15} parent=15 // pred_check
        %p180 = pneg %p45
      $region18: #{acgan_generator_forward.15} parent=15 // pred_check_branch
        %182 = sbr.rel (%p180) target = $region20
      $region19: #{acgan_generator_forward.15} parent=15 // pred_region
        %s183 = smul.u32 64, %s19
        %p184 = scmp.lt.s32.totalorder %s18, 3
        %s185 = scalar_select %p184, %s18, 3
        %p186 = scmp.lt.s32.totalorder %s183, 63
        %s187 = scalar_select %p186, %s183, 63
        %s188 = smul.addr %s185, 64
        %s189 = sadd.s32 %s187, %s188
        %s190 = smul.addr %s189, 4
        %s191 = scalar_lea.vmem %s0, %s190
        %s192 = smul.u32 64, %s19
      $region20: #{acgan_generator_forward.15} parent=15 // pred_fallthru
        _
      // Predicated region
      $region21: #{acgan_generator_forward.15} parent=15 // pred_check
        %p193 = pneg %p71
      $region22: #{acgan_generator_forward.15} parent=15 // pred_check_branch
        %195 = sbr.rel (%p193) target = $region24
      $region23: #{acgan_generator_forward.15} parent=15 // pred_region
        %p196 = scmp.lt.s32.totalorder %s18, 3
        %s197 = scalar_select %p196, %s18, 3
        %s198 = smul.addr %s197, 4
        %s199 = smul.addr %s198, 4
        %s200 = scalar_lea.vmem %s1, %s199
      $region24: #{acgan_generator_forward.15} parent=15 // pred_fallthru
        _
    $region16: #{acgan_generator_forward.15} parent=5 // pred_fallthru
      _
    %p201 = scmp.le.s32.totalorder 1, %s11
    %p202 = scmp.lt.s32.totalorder %s11, 5
    %p203 = pnand %p201, %p202
    %p204 = pneg %p203
    // Predicated region
    $region25: #{acgan_generator_forward.15} parent=5 // pred_check
      _
    $region26: #{acgan_generator_forward.15} parent=5 // pred_check_branch
      %206 = sbr.rel (%p203) target = $region28
    $region27: #{acgan_generator_forward.15} parent=5 // pred_region
      %s207 = ssub.s32 %s11, 1
      %s208 = smul.u32 64, %s21
      %p209 = scmp.lt.s32.totalorder %s20, 3
      %s210 = scalar_select %p209, %s20, 3
      %p211 = scmp.lt.s32.totalorder %s208, 63
      %s212 = scalar_select %p211, %s208, 63
      %s213 = smul.addr %s210, 64
      %s214 = sadd.s32 %s212, %s213
      %s215 = smul.addr %s214, 4
      %s216 = scalar_lea.vmem %s0, %s215
      %p217 = pneg %p51
      %p218 = pneg %p48
      %p219 = scmp.lt.s32.totalorder %s20, 3
      %s220 = scalar_select %p219, %s20, 3
      %s221 = smul.addr %s220, 4
      %s222 = smul.addr %s221, 4
      %s223 = scalar_lea.vmem %s1, %s222
      %p224 = pneg %p77
      %p225 = pneg %p74
      %p226 = pneg %p105
      %p227 = pneg %p102
      %s228 = smul.u32 64, %s21
      %p229 = scmp.lt.s32.totalorder %s20, 3
      %s230 = scalar_select %p229, %s20, 3
      %p231 = scmp.lt.s32.totalorder %s228, 63
      %s232 = scalar_select %p231, %s228, 63
      %s233 = smul.addr %s230, 64
      %s234 = sadd.s32 %s232, %s233
      %s235 = smul.addr %s234, 4
      %s236 = scalar_lea.vmem %s2, %s235
      %p237 = pneg %p133
      %p238 = pneg %p130
      %p239 = scmp.lt.s32.totalorder %s20, 3
      %s240 = scalar_select %p239, %s20, 3
      %p241 = scmp.lt.s32.totalorder %s21, 0
      %s242 = scalar_select %p241, %s21, 0
      %s243 = sadd.s32 %s242, %s240
      %s244 = smul.addr %s243, 8
      %s245 = scalar_lea.vmem %s3, %s244
      %p246 = pneg %p161
      %p247 = pneg %p158
      %p248 = scmp.lt.s32.totalorder %s20, 3
      %s249 = scalar_select %p248, %s20, 3
      %p250 = scmp.lt.s32.totalorder %s21, 0
      %s251 = scalar_select %p250, %s21, 0
      %s252 = sadd.s32 %s251, %s249
      %s253 = smul.addr %s252, 8
      %s254 = scalar_lea.vmem %s4, %s253
      %s255 = smul.u32 64, %s21
      %p256 = scmp.lt.s32.totalorder %s20, 3
      %s257 = scalar_select %p256, %s20, 3
      %p258 = scmp.lt.s32.totalorder %s255, 63
      %s259 = scalar_select %p258, %s255, 63
      %s260 = smul.addr %s257, 64
      %s261 = sadd.s32 %s259, %s260
      %s262 = smul.addr %s261, 4
      %s263 = scalar_lea.vmem %s0, %s262
      %s264 = smul.u32 64, %s21
      %p265 = scmp.lt.s32.totalorder %s20, 3
      %s266 = scalar_select %p265, %s20, 3
      %s267 = smul.addr %s266, 4
      %s268 = smul.addr %s267, 4
      %s269 = scalar_lea.vmem %s1, %s268
      %s270 = smul.u32 64, %s21
      %p271 = scmp.lt.s32.totalorder %s20, 3
      %s272 = scalar_select %p271, %s20, 3
      %p273 = scmp.lt.s32.totalorder %s270, 63
      %s274 = scalar_select %p273, %s270, 63
      %s275 = smul.addr %s272, 64
      %s276 = sadd.s32 %s274, %s275
      %s277 = smul.addr %s276, 4
      %s278 = scalar_lea.vmem %s2, %s277
      %s279 = smul.u32 64, %s21
      %p280 = scmp.lt.s32.totalorder %s20, 3
      %s281 = scalar_select %p280, %s20, 3
      %p282 = scmp.lt.s32.totalorder %s21, 0
      %s283 = scalar_select %p282, %s21, 0
      %s284 = sadd.s32 %s283, %s281
      %s285 = smul.addr %s284, 8
      %s286 = scalar_lea.vmem %s3, %s285
      %p287 = scmp.lt.s32.totalorder %s20, 3
      %s288 = scalar_select %p287, %s20, 3
      %p289 = scmp.lt.s32.totalorder %s21, 0
      %s290 = scalar_select %p289, %s21, 0
      %s291 = sadd.s32 %s290, %s288
      %s292 = smul.addr %s291, 8
      %s293 = scalar_lea.vmem %s4, %s292
      %v295 = vld [vmem:[%s263] sm:$0xf]
      %v296 = vld [vmem:[%s263 + $0x4] sm:$0xf]
      %v297 = vld [vmem:[%s263 + $0x8] sm:$0xf]
      %v298 = vld [vmem:[%s263 + $0xc] sm:$0xf]
      %v299 = vld [vmem:[%s263 + $0x10] sm:$0xf]
      %v300 = vld [vmem:[%s263 + $0x14] sm:$0xf]
      %v301 = vld [vmem:[%s263 + $0x18] sm:$0xf]
      %v302 = vld [vmem:[%s263 + $0x1c] sm:$0xf]
      %v303 = vld [vmem:[%s263 + $0x20] sm:$0xf]
      %v304 = vld [vmem:[%s263 + $0x24] sm:$0xf]
      %v305 = vld [vmem:[%s263 + $0x28] sm:$0xf]
      %v306 = vld [vmem:[%s263 + $0x2c] sm:$0xf]
      %v307 = vld [vmem:[%s263 + $0x30] sm:$0xf]
      %v308 = vld [vmem:[%s263 + $0x34] sm:$0xf]
      %v309 = vld [vmem:[%s263 + $0x38] sm:$0xf]
      %v310 = vld [vmem:[%s263 + $0x3c] sm:$0xf]
      %v311 = vld [vmem:[%s263 + $0x40] sm:$0xf]
      %v312 = vld [vmem:[%s263 + $0x44] sm:$0xf]
      %v313 = vld [vmem:[%s263 + $0x48] sm:$0xf]
      %v314 = vld [vmem:[%s263 + $0x4c] sm:$0xf]
      %v315 = vld [vmem:[%s263 + $0x50] sm:$0xf]
      %v316 = vld [vmem:[%s263 + $0x54] sm:$0xf]
      %v317 = vld [vmem:[%s263 + $0x58] sm:$0xf]
      %v318 = vld [vmem:[%s263 + $0x5c] sm:$0xf]
      %v319 = vld [vmem:[%s263 + $0x60] sm:$0xf]
      %v320 = vld [vmem:[%s263 + $0x64] sm:$0xf]
      %v321 = vld [vmem:[%s263 + $0x68] sm:$0xf]
      %v322 = vld [vmem:[%s263 + $0x6c] sm:$0xf]
      %v323 = vld [vmem:[%s263 + $0x70] sm:$0xf]
      %v324 = vld [vmem:[%s263 + $0x74] sm:$0xf]
      %v325 = vld [vmem:[%s263 + $0x78] sm:$0xf]
      %v326 = vld [vmem:[%s263 + $0x7c] sm:$0xf]
      %v327 = vld [vmem:[%s263 + $0x80] sm:$0xf]
      %v328 = vld [vmem:[%s263 + $0x84] sm:$0xf]
      %v329 = vld [vmem:[%s263 + $0x88] sm:$0xf]
      %v330 = vld [vmem:[%s263 + $0x8c] sm:$0xf]
      %v331 = vld [vmem:[%s263 + $0x90] sm:$0xf]
      %v332 = vld [vmem:[%s263 + $0x94] sm:$0xf]
      %v333 = vld [vmem:[%s263 + $0x98] sm:$0xf]
      %v334 = vld [vmem:[%s263 + $0x9c] sm:$0xf]
      %v335 = vld [vmem:[%s263 + $0xa0] sm:$0xf]
      %v336 = vld [vmem:[%s263 + $0xa4] sm:$0xf]
      %v337 = vld [vmem:[%s263 + $0xa8] sm:$0xf]
      %v338 = vld [vmem:[%s263 + $0xac] sm:$0xf]
      %v339 = vld [vmem:[%s263 + $0xb0] sm:$0xf]
      %v340 = vld [vmem:[%s263 + $0xb4] sm:$0xf]
      %v341 = vld [vmem:[%s263 + $0xb8] sm:$0xf]
      %v342 = vld [vmem:[%s263 + $0xbc] sm:$0xf]
      %v343 = vld [vmem:[%s263 + $0xc0] sm:$0xf]
      %v344 = vld [vmem:[%s263 + $0xc4] sm:$0xf]
      %v345 = vld [vmem:[%s263 + $0xc8] sm:$0xf]
      %v346 = vld [vmem:[%s263 + $0xcc] sm:$0xf]
      %v347 = vld [vmem:[%s263 + $0xd0] sm:$0xf]
      %v348 = vld [vmem:[%s263 + $0xd4] sm:$0xf]
      %v349 = vld [vmem:[%s263 + $0xd8] sm:$0xf]
      %v350 = vld [vmem:[%s263 + $0xdc] sm:$0xf]
      %v351 = vld [vmem:[%s263 + $0xe0] sm:$0xf]
      %v352 = vld [vmem:[%s263 + $0xe4] sm:$0xf]
      %v353 = vld [vmem:[%s263 + $0xe8] sm:$0xf]
      %v354 = vld [vmem:[%s263 + $0xec] sm:$0xf]
      %v355 = vld [vmem:[%s263 + $0xf0] sm:$0xf]
      %v356 = vld [vmem:[%s263 + $0xf4] sm:$0xf]
      %v357 = vld [vmem:[%s263 + $0xf8] sm:$0xf]
      %v358 = vld [vmem:[%s263 + $0xfc] sm:$0xf]
      %v359 = vld [vmem:[%s269] sm:$0xf]
      %v360 = vld [vmem:[%s269 + $0x4] sm:$0xf]
      %v361 = vld [vmem:[%s269 + $0x8] sm:$0xf]
      %v362 = vld [vmem:[%s269 + $0xc] sm:$0xf]
      %v427 = vunpack.c.l.b16 %v295
      %v428 = vunpack.c.l.b16 %v296
      %v429 = vunpack.c.l.b16 %v297
      %v430 = vunpack.c.l.b16 %v298
      %v431 = vunpack.c.l.b16 %v299
      %v432 = vunpack.c.l.b16 %v300
      %v433 = vunpack.c.l.b16 %v301
      %v434 = vunpack.c.l.b16 %v302
      %v435 = vunpack.c.l.b16 %v303
      %v436 = vunpack.c.l.b16 %v304
      %v437 = vunpack.c.l.b16 %v305
      %v438 = vunpack.c.l.b16 %v306
      %v439 = vunpack.c.l.b16 %v307
      %v440 = vunpack.c.l.b16 %v308
      %v441 = vunpack.c.l.b16 %v309
      %v442 = vunpack.c.l.b16 %v310
      %v443 = vunpack.c.l.b16 %v311
      %v444 = vunpack.c.l.b16 %v312
      %v445 = vunpack.c.l.b16 %v313
      %v446 = vunpack.c.l.b16 %v314
      %v447 = vunpack.c.l.b16 %v315
      %v448 = vunpack.c.l.b16 %v316
      %v449 = vunpack.c.l.b16 %v317
      %v450 = vunpack.c.l.b16 %v318
      %v451 = vunpack.c.l.b16 %v319
      %v452 = vunpack.c.l.b16 %v320
      %v453 = vunpack.c.l.b16 %v321
      %v454 = vunpack.c.l.b16 %v322
      %v455 = vunpack.c.l.b16 %v323
      %v456 = vunpack.c.l.b16 %v324
      %v457 = vunpack.c.l.b16 %v325
      %v458 = vunpack.c.l.b16 %v326
      %v459 = vunpack.c.l.b16 %v327
      %v460 = vunpack.c.l.b16 %v328
      %v461 = vunpack.c.l.b16 %v329
      %v462 = vunpack.c.l.b16 %v330
      %v463 = vunpack.c.l.b16 %v331
      %v464 = vunpack.c.l.b16 %v332
      %v465 = vunpack.c.l.b16 %v333
      %v466 = vunpack.c.l.b16 %v334
      %v467 = vunpack.c.l.b16 %v335
      %v468 = vunpack.c.l.b16 %v336
      %v469 = vunpack.c.l.b16 %v337
      %v470 = vunpack.c.l.b16 %v338
      %v471 = vunpack.c.l.b16 %v339
      %v472 = vunpack.c.l.b16 %v340
      %v473 = vunpack.c.l.b16 %v341
      %v474 = vunpack.c.l.b16 %v342
      %v475 = vunpack.c.l.b16 %v343
      %v476 = vunpack.c.l.b16 %v344
      %v477 = vunpack.c.l.b16 %v345
      %v478 = vunpack.c.l.b16 %v346
      %v479 = vunpack.c.l.b16 %v347
      %v480 = vunpack.c.l.b16 %v348
      %v481 = vunpack.c.l.b16 %v349
      %v482 = vunpack.c.l.b16 %v350
      %v483 = vunpack.c.l.b16 %v351
      %v484 = vunpack.c.l.b16 %v352
      %v485 = vunpack.c.l.b16 %v353
      %v486 = vunpack.c.l.b16 %v354
      %v487 = vunpack.c.l.b16 %v355
      %v488 = vunpack.c.l.b16 %v356
      %v489 = vunpack.c.l.b16 %v357
      %v490 = vunpack.c.l.b16 %v358
      %v491 = vpack.c.b16 %v428, %v427
      %v492 = vpack.c.b16 %v430, %v429
      %v493 = vpack.c.b16 %v432, %v431
      %v494 = vpack.c.b16 %v434, %v433
      %v495 = vpack.c.b16 %v436, %v435
      %v496 = vpack.c.b16 %v438, %v437
      %v497 = vpack.c.b16 %v440, %v439
      %v498 = vpack.c.b16 %v442, %v441
      %v499 = vpack.c.b16 %v444, %v443
      %v500 = vpack.c.b16 %v446, %v445
      %v501 = vpack.c.b16 %v448, %v447
      %v502 = vpack.c.b16 %v450, %v449
      %v503 = vpack.c.b16 %v452, %v451
      %v504 = vpack.c.b16 %v454, %v453
      %v505 = vpack.c.b16 %v456, %v455
      %v506 = vpack.c.b16 %v458, %v457
      %v507 = vpack.c.b16 %v460, %v459
      %v508 = vpack.c.b16 %v462, %v461
      %v509 = vpack.c.b16 %v464, %v463
      %v510 = vpack.c.b16 %v466, %v465
      %v511 = vpack.c.b16 %v468, %v467
      %v512 = vpack.c.b16 %v470, %v469
      %v513 = vpack.c.b16 %v472, %v471
      %v514 = vpack.c.b16 %v474, %v473
      %v515 = vpack.c.b16 %v476, %v475
      %v516 = vpack.c.b16 %v478, %v477
      %v517 = vpack.c.b16 %v480, %v479
      %v518 = vpack.c.b16 %v482, %v481
      %v519 = vpack.c.b16 %v484, %v483
      %v520 = vpack.c.b16 %v486, %v485
      %v521 = vpack.c.b16 %v488, %v487
      %v522 = vpack.c.b16 %v490, %v489
      %v527 = vunpack.c.l.b16 %v359
      %v528 = vunpack.c.l.b16 %v360
      %v529 = vunpack.c.l.b16 %v361
      %v530 = vunpack.c.l.b16 %v362
      %v531 = vpack.c.b16 %v528, %v527
      %v532 = vpack.c.b16 %v530, %v529
      %vm535 = vcmask 261120
      %v537 = vsel %vm535, %v491, 0
      %v540 = vsel %vm535, %v492, 0
      %v543 = vsel %vm535, %v493, 0
      %v546 = vsel %vm535, %v494, 0
      %v549 = vsel %vm535, %v495, 0
      %v552 = vsel %vm535, %v496, 0
      %v555 = vsel %vm535, %v497, 0
      %v558 = vsel %vm535, %v498, 0
      %v561 = vsel %vm535, %v499, 0
      %v564 = vsel %vm535, %v500, 0
      %v567 = vsel %vm535, %v501, 0
      %v570 = vsel %vm535, %v502, 0
      %v573 = vsel %vm535, %v503, 0
      %v576 = vsel %vm535, %v504, 0
      %v579 = vsel %vm535, %v505, 0
      %v582 = vsel %vm535, %v506, 0
      %v585 = vsel %vm535, %v507, 0
      %v588 = vsel %vm535, %v508, 0
      %v591 = vsel %vm535, %v509, 0
      %v594 = vsel %vm535, %v510, 0
      %v597 = vsel %vm535, %v511, 0
      %v600 = vsel %vm535, %v512, 0
      %v603 = vsel %vm535, %v513, 0
      %v606 = vsel %vm535, %v514, 0
      %v609 = vsel %vm535, %v515, 0
      %v612 = vsel %vm535, %v516, 0
      %v615 = vsel %vm535, %v517, 0
      %v618 = vsel %vm535, %v518, 0
      %v621 = vsel %vm535, %v519, 0
      %v624 = vsel %vm535, %v520, 0
      %v627 = vsel %vm535, %v521, 0
      %v630 = vsel %vm535, %v522, 0
      %632 = vmatprep.subr.bf16.mxu0 0
      %633 = vmatpush1.bf16.msra.mxu0 %v531
      %634 = vmatprep.subr.bf16.mxu0 0
      %635 = vmatpush1.bf16.msra.mxu0 %v532
      %636 = vmatprep.subr.bf16.mxu0 0
      %637 = vmatpush1.bf16.msra.mxu0 0
      %638 = vmatprep.subr.bf16.mxu0 0
      %639 = vmatpush1.bf16.msra.mxu0 0
      %640 = vmatprep.subr.bf16.mxu0 0
      %641 = vmatpush1.bf16.msra.mxu0 0
      %642 = vmatprep.subr.bf16.mxu0 0
      %643 = vmatpush1.bf16.msra.mxu0 0
      %644 = vmatprep.subr.bf16.mxu0 0
      %645 = vmatpush1.bf16.msra.mxu0 0
      %646 = vmatprep.subr.bf16.mxu0 0
      %647 = vmatpush1.bf16.msra.mxu0 0
      %648 = vmatprep.subr.bf16.mxu0 0
      %649 = vmatpush1.bf16.msra.mxu0 0
      %650 = vmatprep.subr.bf16.mxu0 0
      %651 = vmatpush1.bf16.msra.mxu0 0
      %652 = vmatprep.subr.bf16.mxu0 0
      %653 = vmatpush1.bf16.msra.mxu0 0
      %654 = vmatprep.subr.bf16.mxu0 0
      %655 = vmatpush1.bf16.msra.mxu0 0
      %656 = vmatprep.subr.bf16.mxu0 0
      %657 = vmatpush1.bf16.msra.mxu0 0
      %658 = vmatprep.subr.bf16.mxu0 0
      %659 = vmatpush1.bf16.msra.mxu0 0
      %660 = vmatprep.subr.bf16.mxu0 0
      %661 = vmatpush1.bf16.msra.mxu0 0
      %662 = vmatprep.subr.bf16.mxu0 0
      %663 = vmatpush1.bf16.msra.mxu0 0
      %664 = vmatprep.mubr.bf16.mxu0 0
      %665 = vmatmul.mubr.bf16.gmra.mrb[0].mxu0 %v537
      %v666 = vpop.f32.mrb[0].mxu0
      %v667 = vadd.f32 0.0, %v666
      %v668 = vpop.f32.mrb[0].mxu0
      %v669 = vpop.f32.mrb[0].mxu0
      %v670 = vadd.f32 0.0, %v669
      %v671 = vpop.f32.mrb[0].mxu0
      %672 = vmatprep.mubr.bf16.mxu0 0
      %673 = vmatmul.mubr.bf16.gmra.mrb[0].mxu0 %v540
      %v674 = vpop.f32.mrb[0].mxu0
      %v675 = vadd.f32 0.0, %v674
      %v676 = vpop.f32.mrb[0].mxu0
      %v677 = vpop.f32.mrb[0].mxu0
      %v678 = vadd.f32 0.0, %v677
      %v679 = vpop.f32.mrb[0].mxu0
      %680 = vmatprep.mubr.bf16.mxu0 0
      %681 = vmatmul.mubr.bf16.gmra.mrb[0].mxu0 %v543
      %v682 = vpop.f32.mrb[0].mxu0
      %v683 = vadd.f32 0.0, %v682
      %v684 = vpop.f32.mrb[0].mxu0
      %v685 = vpop.f32.mrb[0].mxu0
      %v686 = vadd.f32 0.0, %v685
      %v687 = vpop.f32.mrb[0].mxu0
      %688 = vmatprep.mubr.bf16.mxu0 0
      %689 = vmatmul.mubr.bf16.gmra.mrb[0].mxu0 %v546
      %v690 = vpop.f32.mrb[0].mxu0
      %v691 = vadd.f32 0.0, %v690
      %v692 = vpop.f32.mrb[0].mxu0
      %v693 = vpop.f32.mrb[0].mxu0
      %v694 = vadd.f32 0.0, %v693
      %v695 = vpop.f32.mrb[0].mxu0
      %696 = vmatprep.mubr.bf16.mxu0 0
      %697 = vmatmul.mubr.bf16.gmra.mrb[0].mxu0 %v549
      %v698 = vpop.f32.mrb[0].mxu0
      %v699 = vadd.f32 0.0, %v698
      %v700 = vpop.f32.mrb[0].mxu0
      %v701 = vpop.f32.mrb[0].mxu0
      %v702 = vadd.f32 0.0, %v701
      %v703 = vpop.f32.mrb[0].mxu0
      %704 = vmatprep.mubr.bf16.mxu0 0
      %705 = vmatmul.mubr.bf16.gmra.mrb[0].mxu0 %v552
      %v706 = vpop.f32.mrb[0].mxu0
      %v707 = vadd.f32 0.0, %v706
      %v708 = vpop.f32.mrb[0].mxu0
      %v709 = vpop.f32.mrb[0].mxu0
      %v710 = vadd.f32 0.0, %v709
      %v711 = vpop.f32.mrb[0].mxu0
      %712 = vmatprep.mubr.bf16.mxu0 0
      %713 = vmatmul.mubr.bf16.gmra.mrb[0].mxu0 %v555
      %v714 = vpop.f32.mrb[0].mxu0
      %v715 = vadd.f32 0.0, %v714
      %v716 = vpop.f32.mrb[0].mxu0
      %v717 = vpop.f32.mrb[0].mxu0
      %v718 = vadd.f32 0.0, %v717
      %v719 = vpop.f32.mrb[0].mxu0
      %720 = vmatprep.mubr.bf16.mxu0 0
      %721 = vmatmul.mubr.bf16.gmra.mrb[0].mxu0 %v558
      %v722 = vpop.f32.mrb[0].mxu0
      %v723 = vadd.f32 0.0, %v722
      %v724 = vpop.f32.mrb[0].mxu0
      %v725 = vpop.f32.mrb[0].mxu0
      %v726 = vadd.f32 0.0, %v725
      %v727 = vpop.f32.mrb[0].mxu0
      %728 = vmatprep.mubr.bf16.mxu0 0
      %729 = vmatmul.mubr.bf16.gmra.mrb[0].mxu0 %v561
      %v730 = vpop.f32.mrb[0].mxu0
      %v731 = vadd.f32 0.0, %v730
      %v732 = vpop.f32.mrb[0].mxu0
      %v733 = vpop.f32.mrb[0].mxu0
      %v734 = vadd.f32 0.0, %v733
      %v735 = vpop.f32.mrb[0].mxu0
      %736 = vmatprep.mubr.bf16.mxu0 0
      %737 = vmatmul.mubr.bf16.gmra.mrb[0].mxu0 %v564
      %v738 = vpop.f32.mrb[0].mxu0
      %v739 = vadd.f32 0.0, %v738
      %v740 = vpop.f32.mrb[0].mxu0
      %v741 = vpop.f32.mrb[0].mxu0
      %v742 = vadd.f32 0.0, %v741
      %v743 = vpop.f32.mrb[0].mxu0
      %744 = vmatprep.mubr.bf16.mxu0 0
      %745 = vmatmul.mubr.bf16.gmra.mrb[0].mxu0 %v567
      %v746 = vpop.f32.mrb[0].mxu0
      %v747 = vadd.f32 0.0, %v746
      %v748 = vpop.f32.mrb[0].mxu0
      %v749 = vpop.f32.mrb[0].mxu0
      %v750 = vadd.f32 0.0, %v749
      %v751 = vpop.f32.mrb[0].mxu0
      %752 = vmatprep.mubr.bf16.mxu0 0
      %753 = vmatmul.mubr.bf16.gmra.mrb[0].mxu0 %v570
      %v754 = vpop.f32.mrb[0].mxu0
      %v755 = vadd.f32 0.0, %v754
      %v756 = vpop.f32.mrb[0].mxu0
      %v757 = vpop.f32.mrb[0].mxu0
      %v758 = vadd.f32 0.0, %v757
      %v759 = vpop.f32.mrb[0].mxu0
      %760 = vmatprep.mubr.bf16.mxu0 0
      %761 = vmatmul.mubr.bf16.gmra.mrb[0].mxu0 %v573
      %v762 = vpop.f32.mrb[0].mxu0
      %v763 = vadd.f32 0.0, %v762
      %v764 = vpop.f32.mrb[0].mxu0
      %v765 = vpop.f32.mrb[0].mxu0
      %v766 = vadd.f32 0.0, %v765
      %v767 = vpop.f32.mrb[0].mxu0
      %768 = vmatprep.mubr.bf16.mxu0 0
      %769 = vmatmul.mubr.bf16.gmra.mrb[0].mxu0 %v576
      %v770 = vpop.f32.mrb[0].mxu0
      %v771 = vadd.f32 0.0, %v770
      %v772 = vpop.f32.mrb[0].mxu0
      %v773 = vpop.f32.mrb[0].mxu0
      %v774 = vadd.f32 0.0, %v773
      %v775 = vpop.f32.mrb[0].mxu0
      %776 = vmatprep.mubr.bf16.mxu0 0
      %777 = vmatmul.mubr.bf16.gmra.mrb[0].mxu0 %v579
      %v778 = vpop.f32.mrb[0].mxu0
      %v779 = vadd.f32 0.0, %v778
      %v780 = vpop.f32.mrb[0].mxu0
      %v781 = vpop.f32.mrb[0].mxu0
      %v782 = vadd.f32 0.0, %v781
      %v783 = vpop.f32.mrb[0].mxu0
      %784 = vmatprep.mubr.bf16.mxu0 0
      %785 = vmatmul.mubr.bf16.gmra.mrb[0].mxu0 %v582
      %v786 = vpop.f32.mrb[0].mxu0
      %v787 = vadd.f32 0.0, %v786
      %v788 = vpop.f32.mrb[0].mxu0
      %v789 = vpop.f32.mrb[0].mxu0
      %v790 = vadd.f32 0.0, %v789
      %v791 = vpop.f32.mrb[0].mxu0
      %792 = vmatprep.mubr.bf16.mxu0 0
      %793 = vmatmul.mubr.bf16.gmra.mrb[0].mxu0 %v585
      %v794 = vpop.f32.mrb[0].mxu0
      %v795 = vadd.f32 0.0, %v794
      %v796 = vpop.f32.mrb[0].mxu0
      %v797 = vpop.f32.mrb[0].mxu0
      %v798 = vadd.f32 0.0, %v797
      %v799 = vpop.f32.mrb[0].mxu0
      %800 = vmatprep.mubr.bf16.mxu0 0
      %801 = vmatmul.mubr.bf16.gmra.mrb[0].mxu0 %v588
      %v802 = vpop.f32.mrb[0].mxu0
      %v803 = vadd.f32 0.0, %v802
      %v804 = vpop.f32.mrb[0].mxu0
      %v805 = vpop.f32.mrb[0].mxu0
      %v806 = vadd.f32 0.0, %v805
      %v807 = vpop.f32.mrb[0].mxu0
      %808 = vmatprep.mubr.bf16.mxu0 0
      %809 = vmatmul.mubr.bf16.gmra.mrb[0].mxu0 %v591
      %v810 = vpop.f32.mrb[0].mxu0
      %v811 = vadd.f32 0.0, %v810
      %v812 = vpop.f32.mrb[0].mxu0
      %v813 = vpop.f32.mrb[0].mxu0
      %v814 = vadd.f32 0.0, %v813
      %v815 = vpop.f32.mrb[0].mxu0
      %816 = vmatprep.mubr.bf16.mxu0 0
      %817 = vmatmul.mubr.bf16.gmra.mrb[0].mxu0 %v594
      %v818 = vpop.f32.mrb[0].mxu0
      %v819 = vadd.f32 0.0, %v818
      %v820 = vpop.f32.mrb[0].mxu0
      %v821 = vpop.f32.mrb[0].mxu0
      %v822 = vadd.f32 0.0, %v821
      %v823 = vpop.f32.mrb[0].mxu0
      %824 = vmatprep.mubr.bf16.mxu0 0
      %825 = vmatmul.mubr.bf16.gmra.mrb[0].mxu0 %v597
      %v826 = vpop.f32.mrb[0].mxu0
      %v827 = vadd.f32 0.0, %v826
      %v828 = vpop.f32.mrb[0].mxu0
      %v829 = vpop.f32.mrb[0].mxu0
      %v830 = vadd.f32 0.0, %v829
      %v831 = vpop.f32.mrb[0].mxu0
      %832 = vmatprep.mubr.bf16.mxu0 0
      %833 = vmatmul.mubr.bf16.gmra.mrb[0].mxu0 %v600
      %v834 = vpop.f32.mrb[0].mxu0
      %v835 = vadd.f32 0.0, %v834
      %v836 = vpop.f32.mrb[0].mxu0
      %v837 = vpop.f32.mrb[0].mxu0
      %v838 = vadd.f32 0.0, %v837
      %v839 = vpop.f32.mrb[0].mxu0
      %840 = vmatprep.mubr.bf16.mxu0 0
      %841 = vmatmul.mubr.bf16.gmra.mrb[0].mxu0 %v603
      %v842 = vpop.f32.mrb[0].mxu0
      %v843 = vadd.f32 0.0, %v842
      %v844 = vpop.f32.mrb[0].mxu0
      %v845 = vpop.f32.mrb[0].mxu0
      %v846 = vadd.f32 0.0, %v845
      %v847 = vpop.f32.mrb[0].mxu0
      %848 = vmatprep.mubr.bf16.mxu0 0
      %849 = vmatmul.mubr.bf16.gmra.mrb[0].mxu0 %v606
      %v850 = vpop.f32.mrb[0].mxu0
      %v851 = vadd.f32 0.0, %v850
      %v852 = vpop.f32.mrb[0].mxu0
      %v853 = vpop.f32.mrb[0].mxu0
      %v854 = vadd.f32 0.0, %v853
      %v855 = vpop.f32.mrb[0].mxu0
      %856 = vmatprep.mubr.bf16.mxu0 0
      %857 = vmatmul.mubr.bf16.gmra.mrb[0].mxu0 %v609
      %v858 = vpop.f32.mrb[0].mxu0
      %v859 = vadd.f32 0.0, %v858
      %v860 = vpop.f32.mrb[0].mxu0
      %v861 = vpop.f32.mrb[0].mxu0
      %v862 = vadd.f32 0.0, %v861
      %v863 = vpop.f32.mrb[0].mxu0
      %864 = vmatprep.mubr.bf16.mxu0 0
      %865 = vmatmul.mubr.bf16.gmra.mrb[0].mxu0 %v612
      %v866 = vpop.f32.mrb[0].mxu0
      %v867 = vadd.f32 0.0, %v866
      %v868 = vpop.f32.mrb[0].mxu0
      %v869 = vpop.f32.mrb[0].mxu0
      %v870 = vadd.f32 0.0, %v869
      %v871 = vpop.f32.mrb[0].mxu0
      %872 = vmatprep.mubr.bf16.mxu0 0
      %873 = vmatmul.mubr.bf16.gmra.mrb[0].mxu0 %v615
      %v874 = vpop.f32.mrb[0].mxu0
      %v875 = vadd.f32 0.0, %v874
      %v876 = vpop.f32.mrb[0].mxu0
      %v877 = vpop.f32.mrb[0].mxu0
      %v878 = vadd.f32 0.0, %v877
      %v879 = vpop.f32.mrb[0].mxu0
      %880 = vmatprep.mubr.bf16.mxu0 0
      %881 = vmatmul.mubr.bf16.gmra.mrb[0].mxu0 %v618
      %v882 = vpop.f32.mrb[0].mxu0
      %v883 = vadd.f32 0.0, %v882
      %v884 = vpop.f32.mrb[0].mxu0
      %v885 = vpop.f32.mrb[0].mxu0
      %v886 = vadd.f32 0.0, %v885
      %v887 = vpop.f32.mrb[0].mxu0
      %888 = vmatprep.mubr.bf16.mxu0 0
      %889 = vmatmul.mubr.bf16.gmra.mrb[0].mxu0 %v621
      %v890 = vpop.f32.mrb[0].mxu0
      %v891 = vadd.f32 0.0, %v890
      %v892 = vpop.f32.mrb[0].mxu0
      %v893 = vpop.f32.mrb[0].mxu0
      %v894 = vadd.f32 0.0, %v893
      %v895 = vpop.f32.mrb[0].mxu0
      %896 = vmatprep.mubr.bf16.mxu0 0
      %897 = vmatmul.mubr.bf16.gmra.mrb[0].mxu0 %v624
      %v898 = vpop.f32.mrb[0].mxu0
      %v899 = vadd.f32 0.0, %v898
      %v900 = vpop.f32.mrb[0].mxu0
      %v901 = vpop.f32.mrb[0].mxu0
      %v902 = vadd.f32 0.0, %v901
      %v903 = vpop.f32.mrb[0].mxu0
      %904 = vmatprep.mubr.bf16.mxu0 0
      %905 = vmatmul.mubr.bf16.gmra.mrb[0].mxu0 %v627
      %v906 = vpop.f32.mrb[0].mxu0
      %v907 = vadd.f32 0.0, %v906
      %v908 = vpop.f32.mrb[0].mxu0
      %v909 = vpop.f32.mrb[0].mxu0
      %v910 = vadd.f32 0.0, %v909
      %v911 = vpop.f32.mrb[0].mxu0
      %912 = vmatprep.mubr.bf16.mxu0 0
      %913 = vmatmul.mubr.bf16.gmra.mrb[0].mxu0 %v630
      %v914 = vpop.f32.mrb[0].mxu0
      %v915 = vadd.f32 0.0, %v914
      %v916 = vpop.f32.mrb[0].mxu0
      %v917 = vpop.f32.mrb[0].mxu0
      %v918 = vadd.f32 0.0, %v917
      %v919 = vpop.f32.mrb[0].mxu0
      %920 = vdwg.mxu0
      %v921 = vpack.c.bf16 %v670, %v667
      %v922 = vpack.c.bf16 %v678, %v675
      %v923 = vpack.c.bf16 %v686, %v683
      %v924 = vpack.c.bf16 %v694, %v691
      %v925 = vpack.c.bf16 %v702, %v699
      %v926 = vpack.c.bf16 %v710, %v707
      %v927 = vpack.c.bf16 %v718, %v715
      %v928 = vpack.c.bf16 %v726, %v723
      %v929 = vpack.c.bf16 %v734, %v731
      %v930 = vpack.c.bf16 %v742, %v739
      %v931 = vpack.c.bf16 %v750, %v747
      %v932 = vpack.c.bf16 %v758, %v755
      %v933 = vpack.c.bf16 %v766, %v763
      %v934 = vpack.c.bf16 %v774, %v771
      %v935 = vpack.c.bf16 %v782, %v779
      %v936 = vpack.c.bf16 %v790, %v787
      %v937 = vpack.c.bf16 %v798, %v795
      %v938 = vpack.c.bf16 %v806, %v803
      %v939 = vpack.c.bf16 %v814, %v811
      %v940 = vpack.c.bf16 %v822, %v819
      %v941 = vpack.c.bf16 %v830, %v827
      %v942 = vpack.c.bf16 %v838, %v835
      %v943 = vpack.c.bf16 %v846, %v843
      %v944 = vpack.c.bf16 %v854, %v851
      %v945 = vpack.c.bf16 %v862, %v859
      %v946 = vpack.c.bf16 %v870, %v867
      %v947 = vpack.c.bf16 %v878, %v875
      %v948 = vpack.c.bf16 %v886, %v883
      %v949 = vpack.c.bf16 %v894, %v891
      %v950 = vpack.c.bf16 %v902, %v899
      %v951 = vpack.c.bf16 %v910, %v907
      %v952 = vpack.c.bf16 %v918, %v915
      %v985 = vunpack.c.l.b16 %v921
      %v986 = vunpack.c.h.b16 %v921
      %v987 = vunpack.c.l.b16 %v922
      %v988 = vunpack.c.h.b16 %v922
      %v989 = vunpack.c.l.b16 %v923
      %v990 = vunpack.c.h.b16 %v923
      %v991 = vunpack.c.l.b16 %v924
      %v992 = vunpack.c.h.b16 %v924
      %v993 = vunpack.c.l.b16 %v925
      %v994 = vunpack.c.h.b16 %v925
      %v995 = vunpack.c.l.b16 %v926
      %v996 = vunpack.c.h.b16 %v926
      %v997 = vunpack.c.l.b16 %v927
      %v998 = vunpack.c.h.b16 %v927
      %v999 = vunpack.c.l.b16 %v928
      %v1000 = vunpack.c.h.b16 %v928
      %v1001 = vunpack.c.l.b16 %v929
      %v1002 = vunpack.c.h.b16 %v929
      %v1003 = vunpack.c.l.b16 %v930
      %v1004 = vunpack.c.h.b16 %v930
      %v1005 = vunpack.c.l.b16 %v931
      %v1006 = vunpack.c.h.b16 %v931
      %v1007 = vunpack.c.l.b16 %v932
      %v1008 = vunpack.c.h.b16 %v932
      %v1009 = vunpack.c.l.b16 %v933
      %v1010 = vunpack.c.h.b16 %v933
      %v1011 = vunpack.c.l.b16 %v934
      %v1012 = vunpack.c.h.b16 %v934
      %v1013 = vunpack.c.l.b16 %v935
      %v1014 = vunpack.c.h.b16 %v935
      %v1015 = vunpack.c.l.b16 %v936
      %v1016 = vunpack.c.h.b16 %v936
      %v1017 = vunpack.c.l.b16 %v937
      %v1018 = vunpack.c.h.b16 %v937
      %v1019 = vunpack.c.l.b16 %v938
      %v1020 = vunpack.c.h.b16 %v938
      %v1021 = vunpack.c.l.b16 %v939
      %v1022 = vunpack.c.h.b16 %v939
      %v1023 = vunpack.c.l.b16 %v940
      %v1024 = vunpack.c.h.b16 %v940
      %v1025 = vunpack.c.l.b16 %v941
      %v1026 = vunpack.c.h.b16 %v941
      %v1027 = vunpack.c.l.b16 %v942
      %v1028 = vunpack.c.h.b16 %v942
      %v1029 = vunpack.c.l.b16 %v943
      %v1030 = vunpack.c.h.b16 %v943
      %v1031 = vunpack.c.l.b16 %v944
      %v1032 = vunpack.c.h.b16 %v944
      %v1033 = vunpack.c.l.b16 %v945
      %v1034 = vunpack.c.h.b16 %v945
      %v1035 = vunpack.c.l.b16 %v946
      %v1036 = vunpack.c.h.b16 %v946
      %v1037 = vunpack.c.l.b16 %v947
      %v1038 = vunpack.c.h.b16 %v947
      %v1039 = vunpack.c.l.b16 %v948
      %v1040 = vunpack.c.h.b16 %v948
      %v1041 = vunpack.c.l.b16 %v949
      %v1042 = vunpack.c.h.b16 %v949
      %v1043 = vunpack.c.l.b16 %v950
      %v1044 = vunpack.c.h.b16 %v950
      %v1045 = vunpack.c.l.b16 %v951
      %v1046 = vunpack.c.h.b16 %v951
      %v1047 = vunpack.c.l.b16 %v952
      %v1048 = vunpack.c.h.b16 %v952
      %v1049 = vpack.c.b16 %v985, %v985
      %v1050 = vpack.c.b16 %v986, %v986
      %v1051 = vpack.c.b16 %v987, %v987
      %v1052 = vpack.c.b16 %v988, %v988
      %v1053 = vpack.c.b16 %v989, %v989
      %v1054 = vpack.c.b16 %v990, %v990
      %v1055 = vpack.c.b16 %v991, %v991
      %v1056 = vpack.c.b16 %v992, %v992
      %v1057 = vpack.c.b16 %v993, %v993
      %v1058 = vpack.c.b16 %v994, %v994
      %v1059 = vpack.c.b16 %v995, %v995
      %v1060 = vpack.c.b16 %v996, %v996
      %v1061 = vpack.c.b16 %v997, %v997
      %v1062 = vpack.c.b16 %v998, %v998
      %v1063 = vpack.c.b16 %v999, %v999
      %v1064 = vpack.c.b16 %v1000, %v1000
      %v1065 = vpack.c.b16 %v1001, %v1001
      %v1066 = vpack.c.b16 %v1002, %v1002
      %v1067 = vpack.c.b16 %v1003, %v1003
      %v1068 = vpack.c.b16 %v1004, %v1004
      %v1069 = vpack.c.b16 %v1005, %v1005
      %v1070 = vpack.c.b16 %v1006, %v1006
      %v1071 = vpack.c.b16 %v1007, %v1007
      %v1072 = vpack.c.b16 %v1008, %v1008
      %v1073 = vpack.c.b16 %v1009, %v1009
      %v1074 = vpack.c.b16 %v1010, %v1010
      %v1075 = vpack.c.b16 %v1011, %v1011
      %v1076 = vpack.c.b16 %v1012, %v1012
      %v1077 = vpack.c.b16 %v1013, %v1013
      %v1078 = vpack.c.b16 %v1014, %v1014
      %v1079 = vpack.c.b16 %v1015, %v1015
      %v1080 = vpack.c.b16 %v1016, %v1016
      %v1081 = vpack.c.b16 %v1017, %v1017
      %v1082 = vpack.c.b16 %v1018, %v1018
      %v1083 = vpack.c.b16 %v1019, %v1019
      %v1084 = vpack.c.b16 %v1020, %v1020
      %v1085 = vpack.c.b16 %v1021, %v1021
      %v1086 = vpack.c.b16 %v1022, %v1022
      %v1087 = vpack.c.b16 %v1023, %v1023
      %v1088 = vpack.c.b16 %v1024, %v1024
      %v1089 = vpack.c.b16 %v1025, %v1025
      %v1090 = vpack.c.b16 %v1026, %v1026
      %v1091 = vpack.c.b16 %v1027, %v1027
      %v1092 = vpack.c.b16 %v1028, %v1028
      %v1093 = vpack.c.b16 %v1029, %v1029
      %v1094 = vpack.c.b16 %v1030, %v1030
      %v1095 = vpack.c.b16 %v1031, %v1031
      %v1096 = vpack.c.b16 %v1032, %v1032
      %v1097 = vpack.c.b16 %v1033, %v1033
      %v1098 = vpack.c.b16 %v1034, %v1034
      %v1099 = vpack.c.b16 %v1035, %v1035
      %v1100 = vpack.c.b16 %v1036, %v1036
      %v1101 = vpack.c.b16 %v1037, %v1037
      %v1102 = vpack.c.b16 %v1038, %v1038
      %v1103 = vpack.c.b16 %v1039, %v1039
      %v1104 = vpack.c.b16 %v1040, %v1040
      %v1105 = vpack.c.b16 %v1041, %v1041
      %v1106 = vpack.c.b16 %v1042, %v1042
      %v1107 = vpack.c.b16 %v1043, %v1043
      %v1108 = vpack.c.b16 %v1044, %v1044
      %v1109 = vpack.c.b16 %v1045, %v1045
      %v1110 = vpack.c.b16 %v1046, %v1046
      %v1111 = vpack.c.b16 %v1047, %v1047
      %v1112 = vpack.c.b16 %v1048, %v1048
      %vm1177 = vcmask 27648
      %1178 = vst.msk [vmem:[%s278] sm:$0xf] %vm1177, %v1049
      %1179 = vst.msk [vmem:[%s278 + $0x4] sm:$0xf] %vm1177, %v1050
      %1180 = vst.msk [vmem:[%s278 + $0x8] sm:$0xf] %vm1177, %v1051
      %1181 = vst.msk [vmem:[%s278 + $0xc] sm:$0xf] %vm1177, %v1052
      %1182 = vst.msk [vmem:[%s278 + $0x10] sm:$0xf] %vm1177, %v1053
      %1183 = vst.msk [vmem:[%s278 + $0x14] sm:$0xf] %vm1177, %v1054
      %1184 = vst.msk [vmem:[%s278 + $0x18] sm:$0xf] %vm1177, %v1055
      %1185 = vst.msk [vmem:[%s278 + $0x1c] sm:$0xf] %vm1177, %v1056
      %1186 = vst.msk [vmem:[%s278 + $0x20] sm:$0xf] %vm1177, %v1057
      %1187 = vst.msk [vmem:[%s278 + $0x24] sm:$0xf] %vm1177, %v1058
      %1188 = vst.msk [vmem:[%s278 + $0x28] sm:$0xf] %vm1177, %v1059
      %1189 = vst.msk [vmem:[%s278 + $0x2c] sm:$0xf] %vm1177, %v1060
      %1190 = vst.msk [vmem:[%s278 + $0x30] sm:$0xf] %vm1177, %v1061
      %1191 = vst.msk [vmem:[%s278 + $0x34] sm:$0xf] %vm1177, %v1062
      %1192 = vst.msk [vmem:[%s278 + $0x38] sm:$0xf] %vm1177, %v1063
      %1193 = vst.msk [vmem:[%s278 + $0x3c] sm:$0xf] %vm1177, %v1064
      %1194 = vst.msk [vmem:[%s278 + $0x40] sm:$0xf] %vm1177, %v1065
      %1195 = vst.msk [vmem:[%s278 + $0x44] sm:$0xf] %vm1177, %v1066
      %1196 = vst.msk [vmem:[%s278 + $0x48] sm:$0xf] %vm1177, %v1067
      %1197 = vst.msk [vmem:[%s278 + $0x4c] sm:$0xf] %vm1177, %v1068
      %1198 = vst.msk [vmem:[%s278 + $0x50] sm:$0xf] %vm1177, %v1069
      %1199 = vst.msk [vmem:[%s278 + $0x54] sm:$0xf] %vm1177, %v1070
      %1200 = vst.msk [vmem:[%s278 + $0x58] sm:$0xf] %vm1177, %v1071
      %1201 = vst.msk [vmem:[%s278 + $0x5c] sm:$0xf] %vm1177, %v1072
      %1202 = vst.msk [vmem:[%s278 + $0x60] sm:$0xf] %vm1177, %v1073
      %1203 = vst.msk [vmem:[%s278 + $0x64] sm:$0xf] %vm1177, %v1074
      %1204 = vst.msk [vmem:[%s278 + $0x68] sm:$0xf] %vm1177, %v1075
      %1205 = vst.msk [vmem:[%s278 + $0x6c] sm:$0xf] %vm1177, %v1076
      %1206 = vst.msk [vmem:[%s278 + $0x70] sm:$0xf] %vm1177, %v1077
      %1207 = vst.msk [vmem:[%s278 + $0x74] sm:$0xf] %vm1177, %v1078
      %1208 = vst.msk [vmem:[%s278 + $0x78] sm:$0xf] %vm1177, %v1079
      %1209 = vst.msk [vmem:[%s278 + $0x7c] sm:$0xf] %vm1177, %v1080
      %1210 = vst.msk [vmem:[%s278 + $0x80] sm:$0xf] %vm1177, %v1081
      %1211 = vst.msk [vmem:[%s278 + $0x84] sm:$0xf] %vm1177, %v1082
      %1212 = vst.msk [vmem:[%s278 + $0x88] sm:$0xf] %vm1177, %v1083
      %1213 = vst.msk [vmem:[%s278 + $0x8c] sm:$0xf] %vm1177, %v1084
      %1214 = vst.msk [vmem:[%s278 + $0x90] sm:$0xf] %vm1177, %v1085
      %1215 = vst.msk [vmem:[%s278 + $0x94] sm:$0xf] %vm1177, %v1086
      %1216 = vst.msk [vmem:[%s278 + $0x98] sm:$0xf] %vm1177, %v1087
      %1217 = vst.msk [vmem:[%s278 + $0x9c] sm:$0xf] %vm1177, %v1088
      %1218 = vst.msk [vmem:[%s278 + $0xa0] sm:$0xf] %vm1177, %v1089
      %1219 = vst.msk [vmem:[%s278 + $0xa4] sm:$0xf] %vm1177, %v1090
      %1220 = vst.msk [vmem:[%s278 + $0xa8] sm:$0xf] %vm1177, %v1091
      %1221 = vst.msk [vmem:[%s278 + $0xac] sm:$0xf] %vm1177, %v1092
      %1222 = vst.msk [vmem:[%s278 + $0xb0] sm:$0xf] %vm1177, %v1093
      %1223 = vst.msk [vmem:[%s278 + $0xb4] sm:$0xf] %vm1177, %v1094
      %1224 = vst.msk [vmem:[%s278 + $0xb8] sm:$0xf] %vm1177, %v1095
      %1225 = vst.msk [vmem:[%s278 + $0xbc] sm:$0xf] %vm1177, %v1096
      %1226 = vst.msk [vmem:[%s278 + $0xc0] sm:$0xf] %vm1177, %v1097
      %1227 = vst.msk [vmem:[%s278 + $0xc4] sm:$0xf] %vm1177, %v1098
      %1228 = vst.msk [vmem:[%s278 + $0xc8] sm:$0xf] %vm1177, %v1099
      %1229 = vst.msk [vmem:[%s278 + $0xcc] sm:$0xf] %vm1177, %v1100
      %1230 = vst.msk [vmem:[%s278 + $0xd0] sm:$0xf] %vm1177, %v1101
      %1231 = vst.msk [vmem:[%s278 + $0xd4] sm:$0xf] %vm1177, %v1102
      %1232 = vst.msk [vmem:[%s278 + $0xd8] sm:$0xf] %vm1177, %v1103
      %1233 = vst.msk [vmem:[%s278 + $0xdc] sm:$0xf] %vm1177, %v1104
      %1234 = vst.msk [vmem:[%s278 + $0xe0] sm:$0xf] %vm1177, %v1105
      %1235 = vst.msk [vmem:[%s278 + $0xe4] sm:$0xf] %vm1177, %v1106
      %1236 = vst.msk [vmem:[%s278 + $0xe8] sm:$0xf] %vm1177, %v1107
      %1237 = vst.msk [vmem:[%s278 + $0xec] sm:$0xf] %vm1177, %v1108
      %1238 = vst.msk [vmem:[%s278 + $0xf0] sm:$0xf] %vm1177, %v1109
      %1239 = vst.msk [vmem:[%s278 + $0xf4] sm:$0xf] %vm1177, %v1110
      %1240 = vst.msk [vmem:[%s278 + $0xf8] sm:$0xf] %vm1177, %v1111
      %1241 = vst.msk [vmem:[%s278 + $0xfc] sm:$0xf] %vm1177, %v1112
      %vm1242 = vcmask 31744
      %v1243 = vsel %vm1242, %v667, 0.0
      %v1244 = vsel %vm1242, %v670, 0.0
      %v1245 = vadd.f32 %v1243, %v1244
      %v1246 = vsel %vm1242, %v675, 0.0
      %v1247 = vadd.f32 %v1245, %v1246
      %v1248 = vsel %vm1242, %v678, 0.0
      %v1249 = vadd.f32 %v1247, %v1248
      %v1250 = vsel %vm1242, %v683, 0.0
      %v1251 = vadd.f32 %v1249, %v1250
      %v1252 = vsel %vm1242, %v686, 0.0
      %v1253 = vadd.f32 %v1251, %v1252
      %v1254 = vsel %vm1242, %v691, 0.0
      %v1255 = vadd.f32 %v1253, %v1254
      %v1256 = vsel %vm1242, %v694, 0.0
      %v1257 = vadd.f32 %v1255, %v1256
      %v1258 = vsel %vm1242, %v699, 0.0
      %v1259 = vadd.f32 %v1257, %v1258
      %v1260 = vsel %vm1242, %v702, 0.0
      %v1261 = vadd.f32 %v1259, %v1260
      %v1262 = vsel %vm1242, %v707, 0.0
      %v1263 = vadd.f32 %v1261, %v1262
      %v1264 = vsel %vm1242, %v710, 0.0
      %v1265 = vadd.f32 %v1263, %v1264
      %v1266 = vsel %vm1242, %v715, 0.0
      %v1267 = vadd.f32 %v1265, %v1266
      %v1268 = vsel %vm1242, %v718, 0.0
      %v1269 = vadd.f32 %v1267, %v1268
      %v1270 = vsel %vm1242, %v723, 0.0
      %v1271 = vadd.f32 %v1269, %v1270
      %v1272 = vsel %vm1242, %v726, 0.0
      %v1273 = vadd.f32 %v1271, %v1272
      %v1274 = vsel %vm1242, %v731, 0.0
      %v1275 = vadd.f32 %v1273, %v1274
      %v1276 = vsel %vm1242, %v734, 0.0
      %v1277 = vadd.f32 %v1275, %v1276
      %v1278 = vsel %vm1242, %v739, 0.0
      %v1279 = vadd.f32 %v1277, %v1278
      %v1280 = vsel %vm1242, %v742, 0.0
      %v1281 = vadd.f32 %v1279, %v1280
      %v1282 = vsel %vm1242, %v747, 0.0
      %v1283 = vadd.f32 %v1281, %v1282
      %v1284 = vsel %vm1242, %v750, 0.0
      %v1285 = vadd.f32 %v1283, %v1284
      %v1286 = vsel %vm1242, %v755, 0.0
      %v1287 = vadd.f32 %v1285, %v1286
      %v1288 = vsel %vm1242, %v758, 0.0
      %v1289 = vadd.f32 %v1287, %v1288
      %v1290 = vsel %vm1242, %v763, 0.0
      %v1291 = vadd.f32 %v1289, %v1290
      %v1292 = vsel %vm1242, %v766, 0.0
      %v1293 = vadd.f32 %v1291, %v1292
      %v1294 = vsel %vm1242, %v771, 0.0
      %v1295 = vadd.f32 %v1293, %v1294
      %v1296 = vsel %vm1242, %v774, 0.0
      %v1297 = vadd.f32 %v1295, %v1296
      %v1298 = vsel %vm1242, %v779, 0.0
      %v1299 = vadd.f32 %v1297, %v1298
      %v1300 = vsel %vm1242, %v782, 0.0
      %v1301 = vadd.f32 %v1299, %v1300
      %v1302 = vsel %vm1242, %v787, 0.0
      %v1303 = vadd.f32 %v1301, %v1302
      %v1304 = vsel %vm1242, %v790, 0.0
      %v1305 = vadd.f32 %v1303, %v1304
      %v1306 = vsel %vm1242, %v795, 0.0
      %v1307 = vadd.f32 %v1305, %v1306
      %v1308 = vsel %vm1242, %v798, 0.0
      %v1309 = vadd.f32 %v1307, %v1308
      %v1310 = vsel %vm1242, %v803, 0.0
      %v1311 = vadd.f32 %v1309, %v1310
      %v1312 = vsel %vm1242, %v806, 0.0
      %v1313 = vadd.f32 %v1311, %v1312
      %v1314 = vsel %vm1242, %v811, 0.0
      %v1315 = vadd.f32 %v1313, %v1314
      %v1316 = vsel %vm1242, %v814, 0.0
      %v1317 = vadd.f32 %v1315, %v1316
      %v1318 = vsel %vm1242, %v819, 0.0
      %v1319 = vadd.f32 %v1317, %v1318
      %v1320 = vsel %vm1242, %v822, 0.0
      %v1321 = vadd.f32 %v1319, %v1320
      %v1322 = vsel %vm1242, %v827, 0.0
      %v1323 = vadd.f32 %v1321, %v1322
      %v1324 = vsel %vm1242, %v830, 0.0
      %v1325 = vadd.f32 %v1323, %v1324
      %v1326 = vsel %vm1242, %v835, 0.0
      %v1327 = vadd.f32 %v1325, %v1326
      %v1328 = vsel %vm1242, %v838, 0.0
      %v1329 = vadd.f32 %v1327, %v1328
      %v1330 = vsel %vm1242, %v843, 0.0
      %v1331 = vadd.f32 %v1329, %v1330
      %v1332 = vsel %vm1242, %v846, 0.0
      %v1333 = vadd.f32 %v1331, %v1332
      %v1334 = vsel %vm1242, %v851, 0.0
      %v1335 = vadd.f32 %v1333, %v1334
      %v1336 = vsel %vm1242, %v854, 0.0
      %v1337 = vadd.f32 %v1335, %v1336
      %v1338 = vsel %vm1242, %v859, 0.0
      %v1339 = vadd.f32 %v1337, %v1338
      %v1340 = vsel %vm1242, %v862, 0.0
      %v1341 = vadd.f32 %v1339, %v1340
      %v1342 = vsel %vm1242, %v867, 0.0
      %v1343 = vadd.f32 %v1341, %v1342
      %v1344 = vsel %vm1242, %v870, 0.0
      %v1345 = vadd.f32 %v1343, %v1344
      %v1346 = vsel %vm1242, %v875, 0.0
      %v1347 = vadd.f32 %v1345, %v1346
      %v1348 = vsel %vm1242, %v878, 0.0
      %v1349 = vadd.f32 %v1347, %v1348
      %v1350 = vsel %vm1242, %v883, 0.0
      %v1351 = vadd.f32 %v1349, %v1350
      %v1352 = vsel %vm1242, %v886, 0.0
      %v1353 = vadd.f32 %v1351, %v1352
      %v1354 = vsel %vm1242, %v891, 0.0
      %v1355 = vadd.f32 %v1353, %v1354
      %v1356 = vsel %vm1242, %v894, 0.0
      %v1357 = vadd.f32 %v1355, %v1356
      %v1358 = vsel %vm1242, %v899, 0.0
      %v1359 = vadd.f32 %v1357, %v1358
      %v1360 = vsel %vm1242, %v902, 0.0
      %v1361 = vadd.f32 %v1359, %v1360
      %v1362 = vsel %vm1242, %v907, 0.0
      %v1363 = vadd.f32 %v1361, %v1362
      %v1364 = vsel %vm1242, %v910, 0.0
      %v1365 = vadd.f32 %v1363, %v1364
      %v1366 = vsel %vm1242, %v915, 0.0
      %v1367 = vadd.f32 %v1365, %v1366
      %v1368 = vsel %vm1242, %v918, 0.0
      %v1369 = vadd.f32 %v1367, %v1368
      %v1370 = vrot.slane %v1369, 4
      %v1371 = vadd.f32 %v1369, %v1370
      %v1372 = vrot.slane %v1371, 2
      %v1373 = vadd.f32 %v1371, %v1372
      %v1374 = vrot.slane %v1373, 1
      %v1375 = vadd.f32 %v1373, %v1374
      %v1376 = vmul.f32 %v667, %v667
      %v1377 = vmul.f32 %v670, %v670
      %v1378 = vmul.f32 %v675, %v675
      %v1379 = vmul.f32 %v678, %v678
      %v1380 = vmul.f32 %v683, %v683
      %v1381 = vmul.f32 %v686, %v686
      %v1382 = vmul.f32 %v691, %v691
      %v1383 = vmul.f32 %v694, %v694
      %v1384 = vmul.f32 %v699, %v699
      %v1385 = vmul.f32 %v702, %v702
      %v1386 = vmul.f32 %v707, %v707
      %v1387 = vmul.f32 %v710, %v710
      %v1388 = vmul.f32 %v715, %v715
      %v1389 = vmul.f32 %v718, %v718
      %v1390 = vmul.f32 %v723, %v723
      %v1391 = vmul.f32 %v726, %v726
      %v1392 = vmul.f32 %v731, %v731
      %v1393 = vmul.f32 %v734, %v734
      %v1394 = vmul.f32 %v739, %v739
      %v1395 = vmul.f32 %v742, %v742
      %v1396 = vmul.f32 %v747, %v747
      %v1397 = vmul.f32 %v750, %v750
      %v1398 = vmul.f32 %v755, %v755
      %v1399 = vmul.f32 %v758, %v758
      %v1400 = vmul.f32 %v763, %v763
      %v1401 = vmul.f32 %v766, %v766
      %v1402 = vmul.f32 %v771, %v771
      %v1403 = vmul.f32 %v774, %v774
      %v1404 = vmul.f32 %v779, %v779
      %v1405 = vmul.f32 %v782, %v782
      %v1406 = vmul.f32 %v787, %v787
      %v1407 = vmul.f32 %v790, %v790
      %v1408 = vmul.f32 %v795, %v795
      %v1409 = vmul.f32 %v798, %v798
      %v1410 = vmul.f32 %v803, %v803
      %v1411 = vmul.f32 %v806, %v806
      %v1412 = vmul.f32 %v811, %v811
      %v1413 = vmul.f32 %v814, %v814
      %v1414 = vmul.f32 %v819, %v819
      %v1415 = vmul.f32 %v822, %v822
      %v1416 = vmul.f32 %v827, %v827
      %v1417 = vmul.f32 %v830, %v830
      %v1418 = vmul.f32 %v835, %v835
      %v1419 = vmul.f32 %v838, %v838
      %v1420 = vmul.f32 %v843, %v843
      %v1421 = vmul.f32 %v846, %v846
      %v1422 = vmul.f32 %v851, %v851
      %v1423 = vmul.f32 %v854, %v854
      %v1424 = vmul.f32 %v859, %v859
      %v1425 = vmul.f32 %v862, %v862
      %v1426 = vmul.f32 %v867, %v867
      %v1427 = vmul.f32 %v870, %v870
      %v1428 = vmul.f32 %v875, %v875
      %v1429 = vmul.f32 %v878, %v878
      %v1430 = vmul.f32 %v883, %v883
      %v1431 = vmul.f32 %v886, %v886
      %v1432 = vmul.f32 %v891, %v891
      %v1433 = vmul.f32 %v894, %v894
      %v1434 = vmul.f32 %v899, %v899
      %v1435 = vmul.f32 %v902, %v902
      %v1436 = vmul.f32 %v907, %v907
      %v1437 = vmul.f32 %v910, %v910
      %v1438 = vmul.f32 %v915, %v915
      %v1439 = vmul.f32 %v918, %v918
      %v1440 = vsel %vm1242, %v1376, 0.0
      %v1441 = vsel %vm1242, %v1377, 0.0
      %v1442 = vadd.f32 %v1440, %v1441
      %v1443 = vsel %vm1242, %v1378, 0.0
      %v1444 = vadd.f32 %v1442, %v1443
      %v1445 = vsel %vm1242, %v1379, 0.0
      %v1446 = vadd.f32 %v1444, %v1445
      %v1447 = vsel %vm1242, %v1380, 0.0
      %v1448 = vadd.f32 %v1446, %v1447
      %v1449 = vsel %vm1242, %v1381, 0.0
      %v1450 = vadd.f32 %v1448, %v1449
      %v1451 = vsel %vm1242, %v1382, 0.0
      %v1452 = vadd.f32 %v1450, %v1451
      %v1453 = vsel %vm1242, %v1383, 0.0
      %v1454 = vadd.f32 %v1452, %v1453
      %v1455 = vsel %vm1242, %v1384, 0.0
      %v1456 = vadd.f32 %v1454, %v1455
      %v1457 = vsel %vm1242, %v1385, 0.0
      %v1458 = vadd.f32 %v1456, %v1457
      %v1459 = vsel %vm1242, %v1386, 0.0
      %v1460 = vadd.f32 %v1458, %v1459
      %v1461 = vsel %vm1242, %v1387, 0.0
      %v1462 = vadd.f32 %v1460, %v1461
      %v1463 = vsel %vm1242, %v1388, 0.0
      %v1464 = vadd.f32 %v1462, %v1463
      %v1465 = vsel %vm1242, %v1389, 0.0
      %v1466 = vadd.f32 %v1464, %v1465
      %v1467 = vsel %vm1242, %v1390, 0.0
      %v1468 = vadd.f32 %v1466, %v1467
      %v1469 = vsel %vm1242, %v1391, 0.0
      %v1470 = vadd.f32 %v1468, %v1469
      %v1471 = vsel %vm1242, %v1392, 0.0
      %v1472 = vadd.f32 %v1470, %v1471
      %v1473 = vsel %vm1242, %v1393, 0.0
      %v1474 = vadd.f32 %v1472, %v1473
      %v1475 = vsel %vm1242, %v1394, 0.0
      %v1476 = vadd.f32 %v1474, %v1475
      %v1477 = vsel %vm1242, %v1395, 0.0
      %v1478 = vadd.f32 %v1476, %v1477
      %v1479 = vsel %vm1242, %v1396, 0.0
      %v1480 = vadd.f32 %v1478, %v1479
      %v1481 = vsel %vm1242, %v1397, 0.0
      %v1482 = vadd.f32 %v1480, %v1481
      %v1483 = vsel %vm1242, %v1398, 0.0
      %v1484 = vadd.f32 %v1482, %v1483
      %v1485 = vsel %vm1242, %v1399, 0.0
      %v1486 = vadd.f32 %v1484, %v1485
      %v1487 = vsel %vm1242, %v1400, 0.0
      %v1488 = vadd.f32 %v1486, %v1487
      %v1489 = vsel %vm1242, %v1401, 0.0
      %v1490 = vadd.f32 %v1488, %v1489
      %v1491 = vsel %vm1242, %v1402, 0.0
      %v1492 = vadd.f32 %v1490, %v1491
      %v1493 = vsel %vm1242, %v1403, 0.0
      %v1494 = vadd.f32 %v1492, %v1493
      %v1495 = vsel %vm1242, %v1404, 0.0
      %v1496 = vadd.f32 %v1494, %v1495
      %v1497 = vsel %vm1242, %v1405, 0.0
      %v1498 = vadd.f32 %v1496, %v1497
      %v1499 = vsel %vm1242, %v1406, 0.0
      %v1500 = vadd.f32 %v1498, %v1499
      %v1501 = vsel %vm1242, %v1407, 0.0
      %v1502 = vadd.f32 %v1500, %v1501
      %v1503 = vsel %vm1242, %v1408, 0.0
      %v1504 = vadd.f32 %v1502, %v1503
      %v1505 = vsel %vm1242, %v1409, 0.0
      %v1506 = vadd.f32 %v1504, %v1505
      %v1507 = vsel %vm1242, %v1410, 0.0
      %v1508 = vadd.f32 %v1506, %v1507
      %v1509 = vsel %vm1242, %v1411, 0.0
      %v1510 = vadd.f32 %v1508, %v1509
      %v1511 = vsel %vm1242, %v1412, 0.0
      %v1512 = vadd.f32 %v1510, %v1511
      %v1513 = vsel %vm1242, %v1413, 0.0
      %v1514 = vadd.f32 %v1512, %v1513
      %v1515 = vsel %vm1242, %v1414, 0.0
      %v1516 = vadd.f32 %v1514, %v1515
      %v1517 = vsel %vm1242, %v1415, 0.0
      %v1518 = vadd.f32 %v1516, %v1517
      %v1519 = vsel %vm1242, %v1416, 0.0
      %v1520 = vadd.f32 %v1518, %v1519
      %v1521 = vsel %vm1242, %v1417, 0.0
      %v1522 = vadd.f32 %v1520, %v1521
      %v1523 = vsel %vm1242, %v1418, 0.0
      %v1524 = vadd.f32 %v1522, %v1523
      %v1525 = vsel %vm1242, %v1419, 0.0
      %v1526 = vadd.f32 %v1524, %v1525
      %v1527 = vsel %vm1242, %v1420, 0.0
      %v1528 = vadd.f32 %v1526, %v1527
      %v1529 = vsel %vm1242, %v1421, 0.0
      %v1530 = vadd.f32 %v1528, %v1529
      %v1531 = vsel %vm1242, %v1422, 0.0
      %v1532 = vadd.f32 %v1530, %v1531
      %v1533 = vsel %vm1242, %v1423, 0.0
      %v1534 = vadd.f32 %v1532, %v1533
      %v1535 = vsel %vm1242, %v1424, 0.0
      %v1536 = vadd.f32 %v1534, %v1535
      %v1537 = vsel %vm1242, %v1425, 0.0
      %v1538 = vadd.f32 %v1536, %v1537
      %v1539 = vsel %vm1242, %v1426, 0.0
      %v1540 = vadd.f32 %v1538, %v1539
      %v1541 = vsel %vm1242, %v1427, 0.0
      %v1542 = vadd.f32 %v1540, %v1541
      %v1543 = vsel %vm1242, %v1428, 0.0
      %v1544 = vadd.f32 %v1542, %v1543
      %v1545 = vsel %vm1242, %v1429, 0.0
      %v1546 = vadd.f32 %v1544, %v1545
      %v1547 = vsel %vm1242, %v1430, 0.0
      %v1548 = vadd.f32 %v1546, %v1547
      %v1549 = vsel %vm1242, %v1431, 0.0
      %v1550 = vadd.f32 %v1548, %v1549
      %v1551 = vsel %vm1242, %v1432, 0.0
      %v1552 = vadd.f32 %v1550, %v1551
      %v1553 = vsel %vm1242, %v1433, 0.0
      %v1554 = vadd.f32 %v1552, %v1553
      %v1555 = vsel %vm1242, %v1434, 0.0
      %v1556 = vadd.f32 %v1554, %v1555
      %v1557 = vsel %vm1242, %v1435, 0.0
      %v1558 = vadd.f32 %v1556, %v1557
      %v1559 = vsel %vm1242, %v1436, 0.0
      %v1560 = vadd.f32 %v1558, %v1559
      %v1561 = vsel %vm1242, %v1437, 0.0
      %v1562 = vadd.f32 %v1560, %v1561
      %v1563 = vsel %vm1242, %v1438, 0.0
      %v1564 = vadd.f32 %v1562, %v1563
      %v1565 = vsel %vm1242, %v1439, 0.0
      %v1566 = vadd.f32 %v1564, %v1565
      %v1567 = vrot.slane %v1566, 4
      %v1568 = vadd.f32 %v1566, %v1567
      %v1569 = vrot.slane %v1568, 2
      %v1570 = vadd.f32 %v1568, %v1569
      %v1571 = vrot.slane %v1570, 1
      %v1572 = vadd.f32 %v1570, %v1571
      %1573 = vst.msk [vmem:[%s286] sm:$0xff] %vm1242, %v1375
      %1574 = vst.msk [vmem:[%s293] sm:$0xff] %vm1242, %v1572
      %s1575 = smul.u32 64, %s21
      %p1576 = scmp.lt.s32.totalorder %s20, 3
      %s1577 = scalar_select %p1576, %s20, 3
      %p1578 = scmp.lt.s32.totalorder %s1575, 63
      %s1579 = scalar_select %p1578, %s1575, 63
      %s1580 = smul.addr %s1577, 64
      %s1581 = sadd.s32 %s1579, %s1580
      %s1582 = smul.addr %s1581, 4
      %s1583 = scalar_lea.vmem %s2, %s1582
      %p1584 = scmp.lt.s32.totalorder %s20, 3
      %s1585 = scalar_select %p1584, %s20, 3
      %p1586 = scmp.lt.s32.totalorder %s21, 0
      %s1587 = scalar_select %p1586, %s21, 0
      %s1588 = sadd.s32 %s1587, %s1585
      %s1589 = smul.addr %s1588, 8
      %s1590 = scalar_lea.vmem %s3, %s1589
      %p1591 = scmp.lt.s32.totalorder %s20, 3
      %s1592 = scalar_select %p1591, %s20, 3
      %p1593 = scmp.lt.s32.totalorder %s21, 0
      %s1594 = scalar_select %p1593, %s21, 0
      %s1595 = sadd.s32 %s1594, %s1592
      %s1596 = smul.addr %s1595, 8
      %s1597 = scalar_lea.vmem %s4, %s1596
      // Predicated region
      $region29: #{acgan_generator_forward.15} parent=27 // pred_check
        %p1598 = pneg %p102
      $region30: #{acgan_generator_forward.15} parent=27 // pred_check_branch
        %1600 = sbr.rel (%p1598) target = $region32
      $region31: #{acgan_generator_forward.15} parent=27 // pred_region
        %s1601 = smul.u32 64, %s21
      $region32: #{acgan_generator_forward.15} parent=27 // pred_fallthru
        _
      // Predicated region
      $region33: #{acgan_generator_forward.15} parent=27 // pred_check
        %p1602 = pneg %p130
      $region34: #{acgan_generator_forward.15} parent=27 // pred_check_branch
        %1604 = sbr.rel (%p1602) target = $region36
      $region35: #{acgan_generator_forward.15} parent=27 // pred_region
        _
      $region36: #{acgan_generator_forward.15} parent=27 // pred_fallthru
        _
      // Predicated region
      $region37: #{acgan_generator_forward.15} parent=27 // pred_check
        %p1605 = pneg %p158
      $region38: #{acgan_generator_forward.15} parent=27 // pred_check_branch
        %1607 = sbr.rel (%p1605) target = $region40
      $region39: #{acgan_generator_forward.15} parent=27 // pred_region
        _
      $region40: #{acgan_generator_forward.15} parent=27 // pred_fallthru
        _
    $region28: #{acgan_generator_forward.15} parent=5 // pred_fallthru
      _
    %p1608 = scmp.le.s32.totalorder 2, %s11
    // Predicated region
    $region41: #{acgan_generator_forward.15} parent=5 // pred_check
      %p1609 = pneg %p1608
    $region42: #{acgan_generator_forward.15} parent=5 // pred_check_branch
      %1611 = sbr.rel (%p1609) target = $region44
    $region43: #{acgan_generator_forward.15} parent=5 // pred_region
      %s1612 = ssub.s32 %s11, 2
      // Predicated region
      $region45: #{acgan_generator_forward.15} parent=43 // pred_check
        %p1613 = pneg %p108
      $region46: #{acgan_generator_forward.15} parent=43 // pred_check_branch
        %1615 = sbr.rel (%p1613) target = $region48
      $region47: #{acgan_generator_forward.15} parent=43 // pred_region
        %s1616 = smul.u32 64, %s23
        %p1617 = scmp.lt.s32.totalorder %s22, 3
        %s1618 = scalar_select %p1617, %s22, 3
        %p1619 = scmp.lt.s32.totalorder %s1616, 63
        %s1620 = scalar_select %p1619, %s1616, 63
        %s1621 = smul.addr %s1618, 64
        %s1622 = sadd.s32 %s1620, %s1621
        %s1623 = smul.addr %s1622, 4
        %s1624 = scalar_lea.vmem %s2, %s1623
      $region48: #{acgan_generator_forward.15} parent=43 // pred_fallthru
        _
      // Predicated region
      $region49: #{acgan_generator_forward.15} parent=43 // pred_check
        %p1625 = pneg %p136
      $region50: #{acgan_generator_forward.15} parent=43 // pred_check_branch
        %1627 = sbr.rel (%p1625) target = $region52
      $region51: #{acgan_generator_forward.15} parent=43 // pred_region
        %p1628 = scmp.lt.s32.totalorder %s22, 3
        %s1629 = scalar_select %p1628, %s22, 3
        %p1630 = scmp.lt.s32.totalorder %s23, 0
        %s1631 = scalar_select %p1630, %s23, 0
        %s1632 = sadd.s32 %s1631, %s1629
        %s1633 = smul.addr %s1632, 8
        %s1634 = scalar_lea.vmem %s3, %s1633
      $region52: #{acgan_generator_forward.15} parent=43 // pred_fallthru
        _
      // Predicated region
      $region53: #{acgan_generator_forward.15} parent=43 // pred_check
        %p1635 = pneg %p164
      $region54: #{acgan_generator_forward.15} parent=43 // pred_check_branch
        %1637 = sbr.rel (%p1635) target = $region56
      $region55: #{acgan_generator_forward.15} parent=43 // pred_region
        %p1638 = scmp.lt.s32.totalorder %s22, 3
        %s1639 = scalar_select %p1638, %s22, 3
        %p1640 = scmp.lt.s32.totalorder %s23, 0
        %s1641 = scalar_select %p1640, %s23, 0
        %s1642 = sadd.s32 %s1641, %s1639
        %s1643 = smul.addr %s1642, 8
        %s1644 = scalar_lea.vmem %s4, %s1643
      $region56: #{acgan_generator_forward.15} parent=43 // pred_fallthru
        _
    $region44: #{acgan_generator_forward.15} parent=5 // pred_fallthru
      _
  $region6: #{acgan_generator_forward.15} parent=0 // loop_footer
    %s15 = sadd.s32 1, %s11
  $region7: #{acgan_generator_forward.15} parent=0 // loop_footer_branch
    %10 = sbr.rel target = $region3
  $region8: #{acgan_generator_forward.15} parent=0 // loop_exit
    _

// kernel: acgan_generator_forward.17
$region0: #{acgan_generator_forward.17}
  #allocation0 [shape = 'u32[]', space=smem, size = 0x4, offset = 0x4, fixed_abs, tag = 'smem constant byte address 0x4 - core index']
  #allocation1 [shape = 'u32[144,128]{1,0:T(1,128)}', space=vmem, size = 0x12000, scoped, tag = 'internal scratch']
  %s0 = inlined_call_operand.vmem [shape: bf16[4,2048,16], index: 0, kind: input, shape index: {}]
  %s1 = inlined_call_operand.vmem [shape: bf16[4,16,128], index: 1, kind: input, shape index: {}]
  %s2 = inlined_call_operand.vmem [shape: f32[4,2048,128], index: 2, kind: output, shape index: {}]
  %s3 = sld [smem:[#allocation0]]
  $region41: #{acgan_generator_forward.17} parent=0
    _
  %s5 = ssub.s32 1, %s3
  %s6 = scalar_select 0, %s5, %s3
  loop: start=0, step=1, limit=10
  $region2: #{acgan_generator_forward.17} parent=0 // loop_pre_header
    _
  $region3: #{acgan_generator_forward.17} parent=0 // loop_header
    %s8 = sphi 0, %s12
    %p9 = scmp.ge.s32.totalorder %s8, 10
    %s15 = sphi 0, %s27
    %s16 = sphi 0, %s23
    %s17 = sphi 0, %s15
    %s18 = sphi 0, %s16
    %s19 = sphi 0, %s17
    %s20 = sphi 0, %s18
    %s32 = sphi 0, %s34
    %s35 = sphi 0, %s32
    %s36 = sphi 0, %s35
    %s52 = sphi 0, %s36
    %s58 = sphi 0, %s60
    %s61 = sphi 0, %s58
    %s62 = sphi 0, %s61
    %s78 = sphi 0, %s62
    %s86 = sphi 0, %s88
    %s89 = sphi 0, %s86
    %s90 = sphi 0, %s89
    %s106 = sphi 0, %s90
  $region4: #{acgan_generator_forward.17} parent=0 // loop_header_branch
    %11 = sbr.rel (%p9) target = $region8
  $region5: #{acgan_generator_forward.17} parent=0 // loop_body
    %s13 = ssub.s32 %s8, 1
    %s14 = ssub.s32 %s8, 2
    %s21 = sadd.s32 1, %s16
    %p22 = scmp.ge.s32.totalorder %s21, 2
    %s23 = scalar_select %p22, 0, %s21
    %s24 = sadd.s32 1, %s15
    %s25 = scalar_select %p22, %s24, %s15
    %p26 = scmp.ge.s32.totalorder %s25, 4
    %s27 = scalar_select %p26, 0, %s25
    %s28 = ssub.s32 %s15, %s27
    %s29 = ssub.s32 %s16, %s23
    %s30 = sor.u32 %s28, %s29
    %p31 = scmp.eq.s32.totalorder %s30, 0
    %s33 = sadd.s32 %s32, 1
    %s34 = scalar_select %p31, %s32, %s33
    %p37 = pneg %p31
    %p38 = scmp.eq.s32.totalorder %s8, 7
    %p39 = por %p37, %p38
    %p40 = scmp.ne.s32.totalorder %s32, %s35
    %p41 = scmp.eq.s32.totalorder %s8, 0
    %p42 = por %p40, %p41
    %p43 = scmp.ne.s32.totalorder %s32, %s35
    %p44 = scmp.eq.s32.totalorder %s13, 7
    %p45 = por %p43, %p44
    %p46 = scmp.ne.s32.totalorder %s35, %s36
    %p47 = scmp.eq.s32.totalorder %s13, 0
    %p48 = por %p46, %p47
    %p49 = scmp.ne.s32.totalorder %s35, %s36
    %p50 = scmp.eq.s32.totalorder %s14, 7
    %p51 = por %p49, %p50
    %p53 = scmp.ne.s32.totalorder %s36, %s52
    %p54 = scmp.eq.s32.totalorder %s14, 0
    %p55 = por %p53, %p54
    %s56 = ssub.s32 %s15, %s27
    %p57 = scmp.eq.s32.totalorder %s56, 0
    %s59 = sadd.s32 %s58, 1
    %s60 = scalar_select %p57, %s58, %s59
    %p63 = pneg %p57
    %p64 = scmp.eq.s32.totalorder %s8, 7
    %p65 = por %p63, %p64
    %p66 = scmp.ne.s32.totalorder %s58, %s61
    %p67 = scmp.eq.s32.totalorder %s8, 0
    %p68 = por %p66, %p67
    %p69 = scmp.ne.s32.totalorder %s58, %s61
    %p70 = scmp.eq.s32.totalorder %s13, 7
    %p71 = por %p69, %p70
    %p72 = scmp.ne.s32.totalorder %s61, %s62
    %p73 = scmp.eq.s32.totalorder %s13, 0
    %p74 = por %p72, %p73
    %p75 = scmp.ne.s32.totalorder %s61, %s62
    %p76 = scmp.eq.s32.totalorder %s14, 7
    %p77 = por %p75, %p76
    %p79 = scmp.ne.s32.totalorder %s62, %s78
    %p80 = scmp.eq.s32.totalorder %s14, 0
    %p81 = por %p79, %p80
    %s82 = ssub.s32 %s15, %s27
    %s83 = ssub.s32 %s16, %s23
    %s84 = sor.u32 %s82, %s83
    %p85 = scmp.eq.s32.totalorder %s84, 0
    %s87 = sadd.s32 %s86, 1
    %s88 = scalar_select %p85, %s86, %s87
    %p91 = pneg %p85
    %p92 = scmp.eq.s32.totalorder %s8, 7
    %p93 = por %p91, %p92
    %p94 = scmp.ne.s32.totalorder %s86, %s89
    %p95 = scmp.eq.s32.totalorder %s8, 0
    %p96 = por %p94, %p95
    %p97 = scmp.ne.s32.totalorder %s86, %s89
    %p98 = scmp.eq.s32.totalorder %s13, 7
    %p99 = por %p97, %p98
    %p100 = scmp.ne.s32.totalorder %s89, %s90
    %p101 = scmp.eq.s32.totalorder %s13, 0
    %p102 = por %p100, %p101
    %p103 = scmp.ne.s32.totalorder %s89, %s90
    %p104 = scmp.eq.s32.totalorder %s14, 7
    %p105 = por %p103, %p104
    %p107 = scmp.ne.s32.totalorder %s90, %s106
    %p108 = scmp.eq.s32.totalorder %s14, 0
    %p109 = por %p107, %p108
    %p110 = scmp.le.s32.totalorder 1, %s8
    %p111 = scmp.lt.s32.totalorder %s8, 9
    %p112 = pnand %p110, %p111
    %p113 = pneg %p112
    // Predicated region
    $region9: #{acgan_generator_forward.17} parent=5 // pred_check
      _
    $region10: #{acgan_generator_forward.17} parent=5 // pred_check_branch
      %115 = sbr.rel (%p112) target = $region12
    $region11: #{acgan_generator_forward.17} parent=5 // pred_region
      %s116 = ssub.s32 %s8, 1
    $region12: #{acgan_generator_forward.17} parent=5 // pred_fallthru
      _
    %p117 = scmp.lt.s32.totalorder %s8, 8
    // Predicated region
    $region13: #{acgan_generator_forward.17} parent=5 // pred_check
      %p118 = pneg %p117
    $region14: #{acgan_generator_forward.17} parent=5 // pred_check_branch
      %120 = sbr.rel (%p118) target = $region16
    $region15: #{acgan_generator_forward.17} parent=5 // pred_region
      // Predicated region
      $region17: #{acgan_generator_forward.17} parent=15 // pred_check
        %p121 = pneg %p42
      $region18: #{acgan_generator_forward.17} parent=15 // pred_check_branch
        %123 = sbr.rel (%p121) target = $region20
      $region19: #{acgan_generator_forward.17} parent=15 // pred_region
        %s124 = smul.u32 128, %s16
        %p125 = scmp.lt.s32.totalorder %s15, 3
        %s126 = scalar_select %p125, %s15, 3
        %p127 = scmp.lt.s32.totalorder %s124, 255
        %s128 = scalar_select %p127, %s124, 255
        %s129 = smul.addr %s126, 256
        %s130 = sadd.s32 %s128, %s129
        %s131 = smul.addr %s130, 4
        %s132 = scalar_lea.vmem %s0, %s131
        %s133 = smul.u32 128, %s16
      $region20: #{acgan_generator_forward.17} parent=15 // pred_fallthru
        _
      // Predicated region
      $region21: #{acgan_generator_forward.17} parent=15 // pred_check
        %p134 = pneg %p68
      $region22: #{acgan_generator_forward.17} parent=15 // pred_check_branch
        %136 = sbr.rel (%p134) target = $region24
      $region23: #{acgan_generator_forward.17} parent=15 // pred_region
        %p137 = scmp.lt.s32.totalorder %s15, 3
        %s138 = scalar_select %p137, %s15, 3
        %s139 = smul.addr %s138, 2
        %s140 = smul.addr %s139, 4
        %s141 = scalar_lea.vmem %s1, %s140
      $region24: #{acgan_generator_forward.17} parent=15 // pred_fallthru
        _
    $region16: #{acgan_generator_forward.17} parent=5 // pred_fallthru
      _
    %p142 = scmp.le.s32.totalorder 1, %s8
    %p143 = scmp.lt.s32.totalorder %s8, 9
    %p144 = pnand %p142, %p143
    %p145 = pneg %p144
    // Predicated region
    $region25: #{acgan_generator_forward.17} parent=5 // pred_check
      _
    $region26: #{acgan_generator_forward.17} parent=5 // pred_check_branch
      %147 = sbr.rel (%p144) target = $region28
    $region27: #{acgan_generator_forward.17} parent=5 // pred_region
      %s148 = ssub.s32 %s8, 1
      %s149 = smul.u32 128, %s18
      %p150 = scmp.lt.s32.totalorder %s17, 3
      %s151 = scalar_select %p150, %s17, 3
      %p152 = scmp.lt.s32.totalorder %s149, 255
      %s153 = scalar_select %p152, %s149, 255
      %s154 = smul.addr %s151, 256
      %s155 = sadd.s32 %s153, %s154
      %s156 = smul.addr %s155, 4
      %s157 = scalar_lea.vmem %s0, %s156
      %p158 = pneg %p48
      %p159 = pneg %p45
      %p160 = scmp.lt.s32.totalorder %s17, 3
      %s161 = scalar_select %p160, %s17, 3
      %s162 = smul.addr %s161, 2
      %s163 = smul.addr %s162, 4
      %s164 = scalar_lea.vmem %s1, %s163
      %p165 = pneg %p74
      %p166 = pneg %p71
      %p167 = pneg %p102
      %p168 = pneg %p99
      %s169 = smul.u32 128, %s18
      %p170 = scmp.lt.s32.totalorder %s17, 3
      %s171 = scalar_select %p170, %s17, 3
      %p172 = scmp.lt.s32.totalorder %s169, 255
      %s173 = scalar_select %p172, %s169, 255
      %s174 = smul.addr %s171, 256
      %s175 = sadd.s32 %s173, %s174
      %s176 = smul.addr %s175, 8
      %s177 = scalar_lea.vmem %s2, %s176
      %s178 = smul.u32 128, %s18
      %p179 = scmp.lt.s32.totalorder %s17, 3
      %s180 = scalar_select %p179, %s17, 3
      %p181 = scmp.lt.s32.totalorder %s178, 255
      %s182 = scalar_select %p181, %s178, 255
      %s183 = smul.addr %s180, 256
      %s184 = sadd.s32 %s182, %s183
      %s185 = smul.addr %s184, 4
      %s186 = scalar_lea.vmem %s0, %s185
      %s187 = smul.u32 128, %s18
      %p188 = scmp.lt.s32.totalorder %s17, 3
      %s189 = scalar_select %p188, %s17, 3
      %s190 = smul.addr %s189, 2
      %s191 = smul.addr %s190, 4
      %s192 = scalar_lea.vmem %s1, %s191
      %s193 = smul.u32 128, %s18
      %p194 = scmp.lt.s32.totalorder %s17, 3
      %s195 = scalar_select %p194, %s17, 3
      %p196 = scmp.lt.s32.totalorder %s193, 255
      %s197 = scalar_select %p196, %s193, 255
      %s198 = smul.addr %s195, 256
      %s199 = sadd.s32 %s197, %s198
      %s200 = smul.addr %s199, 8
      %s201 = scalar_lea.vmem %s2, %s200
      %s202 = smul.u32 128, %s18
      %v204 = vld [vmem:[%s186] sm:$0xf]
      %v205 = vld [vmem:[%s186 + $0x4] sm:$0xf]
      %v206 = vld [vmem:[%s186 + $0x8] sm:$0xf]
      %v207 = vld [vmem:[%s186 + $0xc] sm:$0xf]
      %v208 = vld [vmem:[%s186 + $0x10] sm:$0xf]
      %v209 = vld [vmem:[%s186 + $0x14] sm:$0xf]
      %v210 = vld [vmem:[%s186 + $0x18] sm:$0xf]
      %v211 = vld [vmem:[%s186 + $0x1c] sm:$0xf]
      %v212 = vld [vmem:[%s186 + $0x20] sm:$0xf]
      %v213 = vld [vmem:[%s186 + $0x24] sm:$0xf]
      %v214 = vld [vmem:[%s186 + $0x28] sm:$0xf]
      %v215 = vld [vmem:[%s186 + $0x2c] sm:$0xf]
      %v216 = vld [vmem:[%s186 + $0x30] sm:$0xf]
      %v217 = vld [vmem:[%s186 + $0x34] sm:$0xf]
      %v218 = vld [vmem:[%s186 + $0x38] sm:$0xf]
      %v219 = vld [vmem:[%s186 + $0x3c] sm:$0xf]
      %v220 = vld [vmem:[%s186 + $0x40] sm:$0xf]
      %v221 = vld [vmem:[%s186 + $0x44] sm:$0xf]
      %v222 = vld [vmem:[%s186 + $0x48] sm:$0xf]
      %v223 = vld [vmem:[%s186 + $0x4c] sm:$0xf]
      %v224 = vld [vmem:[%s186 + $0x50] sm:$0xf]
      %v225 = vld [vmem:[%s186 + $0x54] sm:$0xf]
      %v226 = vld [vmem:[%s186 + $0x58] sm:$0xf]
      %v227 = vld [vmem:[%s186 + $0x5c] sm:$0xf]
      %v228 = vld [vmem:[%s186 + $0x60] sm:$0xf]
      %v229 = vld [vmem:[%s186 + $0x64] sm:$0xf]
      %v230 = vld [vmem:[%s186 + $0x68] sm:$0xf]
      %v231 = vld [vmem:[%s186 + $0x6c] sm:$0xf]
      %v232 = vld [vmem:[%s186 + $0x70] sm:$0xf]
      %v233 = vld [vmem:[%s186 + $0x74] sm:$0xf]
      %v234 = vld [vmem:[%s186 + $0x78] sm:$0xf]
      %v235 = vld [vmem:[%s186 + $0x7c] sm:$0xf]
      %v236 = vld [vmem:[%s186 + $0x80] sm:$0xf]
      %v237 = vld [vmem:[%s186 + $0x84] sm:$0xf]
      %v238 = vld [vmem:[%s186 + $0x88] sm:$0xf]
      %v239 = vld [vmem:[%s186 + $0x8c] sm:$0xf]
      %v240 = vld [vmem:[%s186 + $0x90] sm:$0xf]
      %v241 = vld [vmem:[%s186 + $0x94] sm:$0xf]
      %v242 = vld [vmem:[%s186 + $0x98] sm:$0xf]
      %v243 = vld [vmem:[%s186 + $0x9c] sm:$0xf]
      %v244 = vld [vmem:[%s186 + $0xa0] sm:$0xf]
      %v245 = vld [vmem:[%s186 + $0xa4] sm:$0xf]
      %v246 = vld [vmem:[%s186 + $0xa8] sm:$0xf]
      %v247 = vld [vmem:[%s186 + $0xac] sm:$0xf]
      %v248 = vld [vmem:[%s186 + $0xb0] sm:$0xf]
      %v249 = vld [vmem:[%s186 + $0xb4] sm:$0xf]
      %v250 = vld [vmem:[%s186 + $0xb8] sm:$0xf]
      %v251 = vld [vmem:[%s186 + $0xbc] sm:$0xf]
      %v252 = vld [vmem:[%s186 + $0xc0] sm:$0xf]
      %v253 = vld [vmem:[%s186 + $0xc4] sm:$0xf]
      %v254 = vld [vmem:[%s186 + $0xc8] sm:$0xf]
      %v255 = vld [vmem:[%s186 + $0xcc] sm:$0xf]
      %v256 = vld [vmem:[%s186 + $0xd0] sm:$0xf]
      %v257 = vld [vmem:[%s186 + $0xd4] sm:$0xf]
      %v258 = vld [vmem:[%s186 + $0xd8] sm:$0xf]
      %v259 = vld [vmem:[%s186 + $0xdc] sm:$0xf]
      %v260 = vld [vmem:[%s186 + $0xe0] sm:$0xf]
      %v261 = vld [vmem:[%s186 + $0xe4] sm:$0xf]
      %v262 = vld [vmem:[%s186 + $0xe8] sm:$0xf]
      %v263 = vld [vmem:[%s186 + $0xec] sm:$0xf]
      %v264 = vld [vmem:[%s186 + $0xf0] sm:$0xf]
      %v265 = vld [vmem:[%s186 + $0xf4] sm:$0xf]
      %v266 = vld [vmem:[%s186 + $0xf8] sm:$0xf]
      %v267 = vld [vmem:[%s186 + $0xfc] sm:$0xf]
      %v268 = vld [vmem:[%s186 + $0x100] sm:$0xf]
      %v269 = vld [vmem:[%s186 + $0x104] sm:$0xf]
      %v270 = vld [vmem:[%s186 + $0x108] sm:$0xf]
      %v271 = vld [vmem:[%s186 + $0x10c] sm:$0xf]
      %v272 = vld [vmem:[%s186 + $0x110] sm:$0xf]
      %v273 = vld [vmem:[%s186 + $0x114] sm:$0xf]
      %v274 = vld [vmem:[%s186 + $0x118] sm:$0xf]
      %v275 = vld [vmem:[%s186 + $0x11c] sm:$0xf]
      %v276 = vld [vmem:[%s186 + $0x120] sm:$0xf]
      %v277 = vld [vmem:[%s186 + $0x124] sm:$0xf]
      %v278 = vld [vmem:[%s186 + $0x128] sm:$0xf]
      %v279 = vld [vmem:[%s186 + $0x12c] sm:$0xf]
      %v280 = vld [vmem:[%s186 + $0x130] sm:$0xf]
      %v281 = vld [vmem:[%s186 + $0x134] sm:$0xf]
      %v282 = vld [vmem:[%s186 + $0x138] sm:$0xf]
      %v283 = vld [vmem:[%s186 + $0x13c] sm:$0xf]
      %v284 = vld [vmem:[%s186 + $0x140] sm:$0xf]
      %v285 = vld [vmem:[%s186 + $0x144] sm:$0xf]
      %v286 = vld [vmem:[%s186 + $0x148] sm:$0xf]
      %v287 = vld [vmem:[%s186 + $0x14c] sm:$0xf]
      %v288 = vld [vmem:[%s186 + $0x150] sm:$0xf]
      %v289 = vld [vmem:[%s186 + $0x154] sm:$0xf]
      %v290 = vld [vmem:[%s186 + $0x158] sm:$0xf]
      %v291 = vld [vmem:[%s186 + $0x15c] sm:$0xf]
      %v292 = vld [vmem:[%s186 + $0x160] sm:$0xf]
      %v293 = vld [vmem:[%s186 + $0x164] sm:$0xf]
      %v294 = vld [vmem:[%s186 + $0x168] sm:$0xf]
      %v295 = vld [vmem:[%s186 + $0x16c] sm:$0xf]
      %v296 = vld [vmem:[%s186 + $0x170] sm:$0xf]
      %v297 = vld [vmem:[%s186 + $0x174] sm:$0xf]
      %v298 = vld [vmem:[%s186 + $0x178] sm:$0xf]
      %v299 = vld [vmem:[%s186 + $0x17c] sm:$0xf]
      %v300 = vld [vmem:[%s186 + $0x180] sm:$0xf]
      %v301 = vld [vmem:[%s186 + $0x184] sm:$0xf]
      %v302 = vld [vmem:[%s186 + $0x188] sm:$0xf]
      %v303 = vld [vmem:[%s186 + $0x18c] sm:$0xf]
      %v304 = vld [vmem:[%s186 + $0x190] sm:$0xf]
      %v305 = vld [vmem:[%s186 + $0x194] sm:$0xf]
      %v306 = vld [vmem:[%s186 + $0x198] sm:$0xf]
      %v307 = vld [vmem:[%s186 + $0x19c] sm:$0xf]
      %v308 = vld [vmem:[%s186 + $0x1a0] sm:$0xf]
      %v309 = vld [vmem:[%s186 + $0x1a4] sm:$0xf]
      %v310 = vld [vmem:[%s186 + $0x1a8] sm:$0xf]
      %v311 = vld [vmem:[%s186 + $0x1ac] sm:$0xf]
      %v312 = vld [vmem:[%s186 + $0x1b0] sm:$0xf]
      %v313 = vld [vmem:[%s186 + $0x1b4] sm:$0xf]
      %v314 = vld [vmem:[%s186 + $0x1b8] sm:$0xf]
      %v315 = vld [vmem:[%s186 + $0x1bc] sm:$0xf]
      %v316 = vld [vmem:[%s186 + $0x1c0] sm:$0xf]
      %v317 = vld [vmem:[%s186 + $0x1c4] sm:$0xf]
      %v318 = vld [vmem:[%s186 + $0x1c8] sm:$0xf]
      %v319 = vld [vmem:[%s186 + $0x1cc] sm:$0xf]
      %v320 = vld [vmem:[%s186 + $0x1d0] sm:$0xf]
      %v321 = vld [vmem:[%s186 + $0x1d4] sm:$0xf]
      %v322 = vld [vmem:[%s186 + $0x1d8] sm:$0xf]
      %v323 = vld [vmem:[%s186 + $0x1dc] sm:$0xf]
      %v324 = vld [vmem:[%s186 + $0x1e0] sm:$0xf]
      %v325 = vld [vmem:[%s186 + $0x1e4] sm:$0xf]
      %v326 = vld [vmem:[%s186 + $0x1e8] sm:$0xf]
      %v327 = vld [vmem:[%s186 + $0x1ec] sm:$0xf]
      %v328 = vld [vmem:[%s186 + $0x1f0] sm:$0xf]
      %v329 = vld [vmem:[%s186 + $0x1f4] sm:$0xf]
      %v330 = vld [vmem:[%s186 + $0x1f8] sm:$0xf]
      %v331 = vld [vmem:[%s186 + $0x1fc] sm:$0xf]
      %v332 = vld [vmem:[%s192] sm:$0xf]
      %v333 = vld [vmem:[%s192 + $0x4] sm:$0xf]
      %v462 = vunpack.c.l.b16 %v204
      %v463 = vunpack.c.l.b16 %v205
      %v464 = vunpack.c.l.b16 %v206
      %v465 = vunpack.c.l.b16 %v207
      %v466 = vunpack.c.l.b16 %v208
      %v467 = vunpack.c.l.b16 %v209
      %v468 = vunpack.c.l.b16 %v210
      %v469 = vunpack.c.l.b16 %v211
      %v470 = vunpack.c.l.b16 %v212
      %v471 = vunpack.c.l.b16 %v213
      %v472 = vunpack.c.l.b16 %v214
      %v473 = vunpack.c.l.b16 %v215
      %v474 = vunpack.c.l.b16 %v216
      %v475 = vunpack.c.l.b16 %v217
      %v476 = vunpack.c.l.b16 %v218
      %v477 = vunpack.c.l.b16 %v219
      %v478 = vunpack.c.l.b16 %v220
      %v479 = vunpack.c.l.b16 %v221
      %v480 = vunpack.c.l.b16 %v222
      %v481 = vunpack.c.l.b16 %v223
      %v482 = vunpack.c.l.b16 %v224
      %v483 = vunpack.c.l.b16 %v225
      %v484 = vunpack.c.l.b16 %v226
      %v485 = vunpack.c.l.b16 %v227
      %v486 = vunpack.c.l.b16 %v228
      %v487 = vunpack.c.l.b16 %v229
      %v488 = vunpack.c.l.b16 %v230
      %v489 = vunpack.c.l.b16 %v231
      %v490 = vunpack.c.l.b16 %v232
      %v491 = vunpack.c.l.b16 %v233
      %v492 = vunpack.c.l.b16 %v234
      %v493 = vunpack.c.l.b16 %v235
      %v494 = vunpack.c.l.b16 %v236
      %v495 = vunpack.c.l.b16 %v237
      %v496 = vunpack.c.l.b16 %v238
      %v497 = vunpack.c.l.b16 %v239
      %v498 = vunpack.c.l.b16 %v240
      %v499 = vunpack.c.l.b16 %v241
      %v500 = vunpack.c.l.b16 %v242
      %v501 = vunpack.c.l.b16 %v243
      %v502 = vunpack.c.l.b16 %v244
      %v503 = vunpack.c.l.b16 %v245
      %v504 = vunpack.c.l.b16 %v246
      %v505 = vunpack.c.l.b16 %v247
      %v506 = vunpack.c.l.b16 %v248
      %v507 = vunpack.c.l.b16 %v249
      %v508 = vunpack.c.l.b16 %v250
      %v509 = vunpack.c.l.b16 %v251
      %v510 = vunpack.c.l.b16 %v252
      %v511 = vunpack.c.l.b16 %v253
      %v512 = vunpack.c.l.b16 %v254
      %v513 = vunpack.c.l.b16 %v255
      %v514 = vunpack.c.l.b16 %v256
      %v515 = vunpack.c.l.b16 %v257
      %v516 = vunpack.c.l.b16 %v258
      %v517 = vunpack.c.l.b16 %v259
      %v518 = vunpack.c.l.b16 %v260
      %v519 = vunpack.c.l.b16 %v261
      %v520 = vunpack.c.l.b16 %v262
      %v521 = vunpack.c.l.b16 %v263
      %v522 = vunpack.c.l.b16 %v264
      %v523 = vunpack.c.l.b16 %v265
      %v524 = vunpack.c.l.b16 %v266
      %v525 = vunpack.c.l.b16 %v267
      %v526 = vunpack.c.l.b16 %v268
      %v527 = vunpack.c.l.b16 %v269
      %v528 = vunpack.c.l.b16 %v270
      %v529 = vunpack.c.l.b16 %v271
      %v530 = vunpack.c.l.b16 %v272
      %v531 = vunpack.c.l.b16 %v273
      %v532 = vunpack.c.l.b16 %v274
      %v533 = vunpack.c.l.b16 %v275
      %v534 = vunpack.c.l.b16 %v276
      %v535 = vunpack.c.l.b16 %v277
      %v536 = vunpack.c.l.b16 %v278
      %v537 = vunpack.c.l.b16 %v279
      %v538 = vunpack.c.l.b16 %v280
      %v539 = vunpack.c.l.b16 %v281
      %v540 = vunpack.c.l.b16 %v282
      %v541 = vunpack.c.l.b16 %v283
      %v542 = vunpack.c.l.b16 %v284
      %v543 = vunpack.c.l.b16 %v285
      %v544 = vunpack.c.l.b16 %v286
      %v545 = vunpack.c.l.b16 %v287
      %v546 = vunpack.c.l.b16 %v288
      %v547 = vunpack.c.l.b16 %v289
      %v548 = vunpack.c.l.b16 %v290
      %v549 = vunpack.c.l.b16 %v291
      %v550 = vunpack.c.l.b16 %v292
      %v551 = vunpack.c.l.b16 %v293
      %v552 = vunpack.c.l.b16 %v294
      %v553 = vunpack.c.l.b16 %v295
      %v554 = vunpack.c.l.b16 %v296
      %v555 = vunpack.c.l.b16 %v297
      %v556 = vunpack.c.l.b16 %v298
      %v557 = vunpack.c.l.b16 %v299
      %v558 = vunpack.c.l.b16 %v300
      %v559 = vunpack.c.l.b16 %v301
      %v560 = vunpack.c.l.b16 %v302
      %v561 = vunpack.c.l.b16 %v303
      %v562 = vunpack.c.l.b16 %v304
      %v563 = vunpack.c.l.b16 %v305
      %v564 = vunpack.c.l.b16 %v306
      %v565 = vunpack.c.l.b16 %v307
      %v566 = vunpack.c.l.b16 %v308
      %v567 = vunpack.c.l.b16 %v309
      %v568 = vunpack.c.l.b16 %v310
      %v569 = vunpack.c.l.b16 %v311
      %v570 = vunpack.c.l.b16 %v312
      %v571 = vunpack.c.l.b16 %v313
      %v572 = vunpack.c.l.b16 %v314
      %v573 = vunpack.c.l.b16 %v315
      %v574 = vunpack.c.l.b16 %v316
      %v575 = vunpack.c.l.b16 %v317
      %v576 = vunpack.c.l.b16 %v318
      %v577 = vunpack.c.l.b16 %v319
      %v578 = vunpack.c.l.b16 %v320
      %v579 = vunpack.c.l.b16 %v321
      %v580 = vunpack.c.l.b16 %v322
      %v581 = vunpack.c.l.b16 %v323
      %v582 = vunpack.c.l.b16 %v324
      %v583 = vunpack.c.l.b16 %v325
      %v584 = vunpack.c.l.b16 %v326
      %v585 = vunpack.c.l.b16 %v327
      %v586 = vunpack.c.l.b16 %v328
      %v587 = vunpack.c.l.b16 %v329
      %v588 = vunpack.c.l.b16 %v330
      %v589 = vunpack.c.l.b16 %v331
      %v590 = vpack.c.b16 %v463, %v462
      %v591 = vpack.c.b16 %v465, %v464
      %v592 = vpack.c.b16 %v467, %v466
      %v593 = vpack.c.b16 %v469, %v468
      %v594 = vpack.c.b16 %v471, %v470
      %v595 = vpack.c.b16 %v473, %v472
      %v596 = vpack.c.b16 %v475, %v474
      %v597 = vpack.c.b16 %v477, %v476
      %v598 = vpack.c.b16 %v479, %v478
      %v599 = vpack.c.b16 %v481, %v480
      %v600 = vpack.c.b16 %v483, %v482
      %v601 = vpack.c.b16 %v485, %v484
      %v602 = vpack.c.b16 %v487, %v486
      %v603 = vpack.c.b16 %v489, %v488
      %v604 = vpack.c.b16 %v491, %v490
      %v605 = vpack.c.b16 %v493, %v492
      %v606 = vpack.c.b16 %v495, %v494
      %v607 = vpack.c.b16 %v497, %v496
      %v608 = vpack.c.b16 %v499, %v498
      %v609 = vpack.c.b16 %v501, %v500
      %v610 = vpack.c.b16 %v503, %v502
      %v611 = vpack.c.b16 %v505, %v504
      %v612 = vpack.c.b16 %v507, %v506
      %v613 = vpack.c.b16 %v509, %v508
      %v614 = vpack.c.b16 %v511, %v510
      %v615 = vpack.c.b16 %v513, %v512
      %v616 = vpack.c.b16 %v515, %v514
      %v617 = vpack.c.b16 %v517, %v516
      %v618 = vpack.c.b16 %v519, %v518
      %v619 = vpack.c.b16 %v521, %v520
      %v620 = vpack.c.b16 %v523, %v522
      %v621 = vpack.c.b16 %v525, %v524
      %v622 = vpack.c.b16 %v527, %v526
      %v623 = vpack.c.b16 %v529, %v528
      %v624 = vpack.c.b16 %v531, %v530
      %v625 = vpack.c.b16 %v533, %v532
      %v626 = vpack.c.b16 %v535, %v534
      %v627 = vpack.c.b16 %v537, %v536
      %v628 = vpack.c.b16 %v539, %v538
      %v629 = vpack.c.b16 %v541, %v540
      %v630 = vpack.c.b16 %v543, %v542
      %v631 = vpack.c.b16 %v545, %v544
      %v632 = vpack.c.b16 %v547, %v546
      %v633 = vpack.c.b16 %v549, %v548
      %v634 = vpack.c.b16 %v551, %v550
      %v635 = vpack.c.b16 %v553, %v552
      %v636 = vpack.c.b16 %v555, %v554
      %v637 = vpack.c.b16 %v557, %v556
      %v638 = vpack.c.b16 %v559, %v558
      %v639 = vpack.c.b16 %v561, %v560
      %v640 = vpack.c.b16 %v563, %v562
      %v641 = vpack.c.b16 %v565, %v564
      %v642 = vpack.c.b16 %v567, %v566
      %v643 = vpack.c.b16 %v569, %v568
      %v644 = vpack.c.b16 %v571, %v570
      %v645 = vpack.c.b16 %v573, %v572
      %v646 = vpack.c.b16 %v575, %v574
      %v647 = vpack.c.b16 %v577, %v576
      %v648 = vpack.c.b16 %v579, %v578
      %v649 = vpack.c.b16 %v581, %v580
      %v650 = vpack.c.b16 %v583, %v582
      %v651 = vpack.c.b16 %v585, %v584
      %v652 = vpack.c.b16 %v587, %v586
      %v653 = vpack.c.b16 %v589, %v588
      %v656 = vunpack.c.l.b16 %v332
      %v657 = vunpack.c.l.b16 %v333
      %v658 = vpack.c.b16 %v657, %v656
      %vm660 = vcmask 130048
      %v662 = vsel %vm660, %v590, 0
      %v665 = vsel %vm660, %v591, 0
      %v668 = vsel %vm660, %v592, 0
      %v671 = vsel %vm660, %v593, 0
      %v674 = vsel %vm660, %v594, 0
      %v677 = vsel %vm660, %v595, 0
      %v680 = vsel %vm660, %v596, 0
      %v683 = vsel %vm660, %v597, 0
      %v686 = vsel %vm660, %v598, 0
      %v689 = vsel %vm660, %v599, 0
      %v692 = vsel %vm660, %v600, 0
      %v695 = vsel %vm660, %v601, 0
      %v698 = vsel %vm660, %v602, 0
      %v701 = vsel %vm660, %v603, 0
      %v704 = vsel %vm660, %v604, 0
      %v707 = vsel %vm660, %v605, 0
      %v710 = vsel %vm660, %v606, 0
      %v713 = vsel %vm660, %v607, 0
      %v716 = vsel %vm660, %v608, 0
      %v719 = vsel %vm660, %v609, 0
      %v722 = vsel %vm660, %v610, 0
      %v725 = vsel %vm660, %v611, 0
      %v728 = vsel %vm660, %v612, 0
      %v731 = vsel %vm660, %v613, 0
      %v734 = vsel %vm660, %v614, 0
      %v737 = vsel %vm660, %v615, 0
      %v740 = vsel %vm660, %v616, 0
      %v743 = vsel %vm660, %v617, 0
      %v746 = vsel %vm660, %v618, 0
      %v749 = vsel %vm660, %v619, 0
      %v752 = vsel %vm660, %v620, 0
      %v755 = vsel %vm660, %v621, 0
      %v758 = vsel %vm660, %v622, 0
      %v761 = vsel %vm660, %v623, 0
      %v764 = vsel %vm660, %v624, 0
      %v767 = vsel %vm660, %v625, 0
      %v770 = vsel %vm660, %v626, 0
      %v773 = vsel %vm660, %v627, 0
      %v776 = vsel %vm660, %v628, 0
      %v779 = vsel %vm660, %v629, 0
      %v782 = vsel %vm660, %v630, 0
      %v785 = vsel %vm660, %v631, 0
      %v788 = vsel %vm660, %v632, 0
      %v791 = vsel %vm660, %v633, 0
      %v794 = vsel %vm660, %v634, 0
      %v797 = vsel %vm660, %v635, 0
      %v800 = vsel %vm660, %v636, 0
      %v803 = vsel %vm660, %v637, 0
      %v806 = vsel %vm660, %v638, 0
      %v809 = vsel %vm660, %v639, 0
      %v812 = vsel %vm660, %v640, 0
      %v815 = vsel %vm660, %v641, 0
      %v818 = vsel %vm660, %v642, 0
      %v821 = vsel %vm660, %v643, 0
      %v824 = vsel %vm660, %v644, 0
      %v827 = vsel %vm660, %v645, 0
      %v830 = vsel %vm660, %v646, 0
      %v833 = vsel %vm660, %v647, 0
      %v836 = vsel %vm660, %v648, 0
      %v839 = vsel %vm660, %v649, 0
      %v842 = vsel %vm660, %v650, 0
      %v845 = vsel %vm660, %v651, 0
      %v848 = vsel %vm660, %v652, 0
      %v851 = vsel %vm660, %v653, 0
      %853 = vmatprep.subr.bf16.mxu0 0
      %854 = vmatpush1.bf16.msra.mxu0 %v658
      %855 = vmatprep.subr.bf16.mxu0 0
      %856 = vmatpush1.bf16.msra.mxu0 0
      %857 = vmatprep.subr.bf16.mxu0 0
      %858 = vmatpush1.bf16.msra.mxu0 0
      %859 = vmatprep.subr.bf16.mxu0 0
      %860 = vmatpush1.bf16.msra.mxu0 0
      %861 = vmatprep.subr.bf16.mxu0 0
      %862 = vmatpush1.bf16.msra.mxu0 0
      %863 = vmatprep.subr.bf16.mxu0 0
      %864 = vmatpush1.bf16.msra.mxu0 0
      %865 = vmatprep.subr.bf16.mxu0 0
      %866 = vmatpush1.bf16.msra.mxu0 0
      %867 = vmatprep.subr.bf16.mxu0 0
      %868 = vmatpush1.bf16.msra.mxu0 0
      %869 = vmatprep.subr.bf16.mxu0 0
      %870 = vmatpush1.bf16.msra.mxu0 0
      %871 = vmatprep.subr.bf16.mxu0 0
      %872 = vmatpush1.bf16.msra.mxu0 0
      %873 = vmatprep.subr.bf16.mxu0 0
      %874 = vmatpush1.bf16.msra.mxu0 0
      %875 = vmatprep.subr.bf16.mxu0 0
      %876 = vmatpush1.bf16.msra.mxu0 0
      %877 = vmatprep.subr.bf16.mxu0 0
      %878 = vmatpush1.bf16.msra.mxu0 0
      %879 = vmatprep.subr.bf16.mxu0 0
      %880 = vmatpush1.bf16.msra.mxu0 0
      %881 = vmatprep.subr.bf16.mxu0 0
      %882 = vmatpush1.bf16.msra.mxu0 0
      %883 = vmatprep.subr.bf16.mxu0 0
      %884 = vmatpush1.bf16.msra.mxu0 0
      %885 = vmatprep.mubr.bf16.mxu0 0
      %886 = vmatmul.mubr.bf16.gmra.mrb[0].mxu0 %v662
      %v887 = vpop.f32.mrb[0].mxu0
      %v888 = vadd.f32 0.0, %v887
      %v889 = vpop.f32.mrb[0].mxu0
      %v890 = vpop.f32.mrb[0].mxu0
      %v891 = vadd.f32 0.0, %v890
      %v892 = vpop.f32.mrb[0].mxu0
      %893 = vmatprep.mubr.bf16.mxu0 0
      %894 = vmatmul.mubr.bf16.gmra.mrb[0].mxu0 %v665
      %v895 = vpop.f32.mrb[0].mxu0
      %v896 = vadd.f32 0.0, %v895
      %v897 = vpop.f32.mrb[0].mxu0
      %v898 = vpop.f32.mrb[0].mxu0
      %v899 = vadd.f32 0.0, %v898
      %v900 = vpop.f32.mrb[0].mxu0
      %901 = vmatprep.mubr.bf16.mxu0 0
      %902 = vmatmul.mubr.bf16.gmra.mrb[0].mxu0 %v668
      %v903 = vpop.f32.mrb[0].mxu0
      %v904 = vadd.f32 0.0, %v903
      %v905 = vpop.f32.mrb[0].mxu0
      %v906 = vpop.f32.mrb[0].mxu0
      %v907 = vadd.f32 0.0, %v906
      %v908 = vpop.f32.mrb[0].mxu0
      %909 = vmatprep.mubr.bf16.mxu0 0
      %910 = vmatmul.mubr.bf16.gmra.mrb[0].mxu0 %v671
      %v911 = vpop.f32.mrb[0].mxu0
      %v912 = vadd.f32 0.0, %v911
      %v913 = vpop.f32.mrb[0].mxu0
      %v914 = vpop.f32.mrb[0].mxu0
      %v915 = vadd.f32 0.0, %v914
      %v916 = vpop.f32.mrb[0].mxu0
      %917 = vmatprep.mubr.bf16.mxu0 0
      %918 = vmatmul.mubr.bf16.gmra.mrb[0].mxu0 %v674
      %v919 = vpop.f32.mrb[0].mxu0
      %v920 = vadd.f32 0.0, %v919
      %v921 = vpop.f32.mrb[0].mxu0
      %v922 = vpop.f32.mrb[0].mxu0
      %v923 = vadd.f32 0.0, %v922
      %v924 = vpop.f32.mrb[0].mxu0
      %925 = vmatprep.mubr.bf16.mxu0 0
      %926 = vmatmul.mubr.bf16.gmra.mrb[0].mxu0 %v677
      %v927 = vpop.f32.mrb[0].mxu0
      %v928 = vadd.f32 0.0, %v927
      %v929 = vpop.f32.mrb[0].mxu0
      %v930 = vpop.f32.mrb[0].mxu0
      %v931 = vadd.f32 0.0, %v930
      %v932 = vpop.f32.mrb[0].mxu0
      %933 = vmatprep.mubr.bf16.mxu0 0
      %934 = vmatmul.mubr.bf16.gmra.mrb[0].mxu0 %v680
      %v935 = vpop.f32.mrb[0].mxu0
      %v936 = vadd.f32 0.0, %v935
      %v937 = vpop.f32.mrb[0].mxu0
      %v938 = vpop.f32.mrb[0].mxu0
      %v939 = vadd.f32 0.0, %v938
      %v940 = vpop.f32.mrb[0].mxu0
      %941 = vmatprep.mubr.bf16.mxu0 0
      %942 = vmatmul.mubr.bf16.gmra.mrb[0].mxu0 %v683
      %v943 = vpop.f32.mrb[0].mxu0
      %v944 = vadd.f32 0.0, %v943
      %v945 = vpop.f32.mrb[0].mxu0
      %v946 = vpop.f32.mrb[0].mxu0
      %v947 = vadd.f32 0.0, %v946
      %v948 = vpop.f32.mrb[0].mxu0
      %949 = vmatprep.mubr.bf16.mxu0 0
      %950 = vmatmul.mubr.bf16.gmra.mrb[0].mxu0 %v686
      %v951 = vpop.f32.mrb[0].mxu0
      %v952 = vadd.f32 0.0, %v951
      %v953 = vpop.f32.mrb[0].mxu0
      %v954 = vpop.f32.mrb[0].mxu0
      %v955 = vadd.f32 0.0, %v954
      %v956 = vpop.f32.mrb[0].mxu0
      %957 = vmatprep.mubr.bf16.mxu0 0
      %958 = vmatmul.mubr.bf16.gmra.mrb[0].mxu0 %v689
      %v959 = vpop.f32.mrb[0].mxu0
      %v960 = vadd.f32 0.0, %v959
      %v961 = vpop.f32.mrb[0].mxu0
      %v962 = vpop.f32.mrb[0].mxu0
      %v963 = vadd.f32 0.0, %v962
      %v964 = vpop.f32.mrb[0].mxu0
      %965 = vmatprep.mubr.bf16.mxu0 0
      %966 = vmatmul.mubr.bf16.gmra.mrb[0].mxu0 %v692
      %v967 = vpop.f32.mrb[0].mxu0
      %v968 = vadd.f32 0.0, %v967
      %v969 = vpop.f32.mrb[0].mxu0
      %v970 = vpop.f32.mrb[0].mxu0
      %v971 = vadd.f32 0.0, %v970
      %v972 = vpop.f32.mrb[0].mxu0
      %973 = vmatprep.mubr.bf16.mxu0 0
      %974 = vmatmul.mubr.bf16.gmra.mrb[0].mxu0 %v695
      %v975 = vpop.f32.mrb[0].mxu0
      %v976 = vadd.f32 0.0, %v975
      %v977 = vpop.f32.mrb[0].mxu0
      %v978 = vpop.f32.mrb[0].mxu0
      %v979 = vadd.f32 0.0, %v978
      %v980 = vpop.f32.mrb[0].mxu0
      %981 = vmatprep.mubr.bf16.mxu0 0
      %982 = vmatmul.mubr.bf16.gmra.mrb[0].mxu0 %v698
      %v983 = vpop.f32.mrb[0].mxu0
      %v984 = vadd.f32 0.0, %v983
      %v985 = vpop.f32.mrb[0].mxu0
      %v986 = vpop.f32.mrb[0].mxu0
      %v987 = vadd.f32 0.0, %v986
      %v988 = vpop.f32.mrb[0].mxu0
      %989 = vmatprep.mubr.bf16.mxu0 0
      %990 = vmatmul.mubr.bf16.gmra.mrb[0].mxu0 %v701
      %v991 = vpop.f32.mrb[0].mxu0
      %v992 = vadd.f32 0.0, %v991
      %v993 = vpop.f32.mrb[0].mxu0
      %v994 = vpop.f32.mrb[0].mxu0
      %v995 = vadd.f32 0.0, %v994
      %v996 = vpop.f32.mrb[0].mxu0
      %997 = vmatprep.mubr.bf16.mxu0 0
      %998 = vmatmul.mubr.bf16.gmra.mrb[0].mxu0 %v704
      %v999 = vpop.f32.mrb[0].mxu0
      %v1000 = vadd.f32 0.0, %v999
      %v1001 = vpop.f32.mrb[0].mxu0
      %v1002 = vpop.f32.mrb[0].mxu0
      %v1003 = vadd.f32 0.0, %v1002
      %v1004 = vpop.f32.mrb[0].mxu0
      %1005 = vmatprep.mubr.bf16.mxu0 0
      %1006 = vmatmul.mubr.bf16.gmra.mrb[0].mxu0 %v707
      %v1007 = vpop.f32.mrb[0].mxu0
      %v1008 = vadd.f32 0.0, %v1007
      %v1009 = vpop.f32.mrb[0].mxu0
      %v1010 = vpop.f32.mrb[0].mxu0
      %v1011 = vadd.f32 0.0, %v1010
      %v1012 = vpop.f32.mrb[0].mxu0
      %1013 = vmatprep.mubr.bf16.mxu0 0
      %1014 = vmatmul.mubr.bf16.gmra.mrb[0].mxu0 %v710
      %v1015 = vpop.f32.mrb[0].mxu0
      %v1016 = vadd.f32 0.0, %v1015
      %v1017 = vpop.f32.mrb[0].mxu0
      %v1018 = vpop.f32.mrb[0].mxu0
      %v1019 = vadd.f32 0.0, %v1018
      %v1020 = vpop.f32.mrb[0].mxu0
      %1021 = vmatprep.mubr.bf16.mxu0 0
      %1022 = vmatmul.mubr.bf16.gmra.mrb[0].mxu0 %v713
      %v1023 = vpop.f32.mrb[0].mxu0
      %v1024 = vadd.f32 0.0, %v1023
      %v1025 = vpop.f32.mrb[0].mxu0
      %v1026 = vpop.f32.mrb[0].mxu0
      %v1027 = vadd.f32 0.0, %v1026
      %v1028 = vpop.f32.mrb[0].mxu0
      %1029 = vmatprep.mubr.bf16.mxu0 0
      %1030 = vmatmul.mubr.bf16.gmra.mrb[0].mxu0 %v716
      %v1031 = vpop.f32.mrb[0].mxu0
      %v1032 = vadd.f32 0.0, %v1031
      %v1033 = vpop.f32.mrb[0].mxu0
      %v1034 = vpop.f32.mrb[0].mxu0
      %v1035 = vadd.f32 0.0, %v1034
      %v1036 = vpop.f32.mrb[0].mxu0
      %1037 = vmatprep.mubr.bf16.mxu0 0
      %1038 = vmatmul.mubr.bf16.gmra.mrb[0].mxu0 %v719
      %v1039 = vpop.f32.mrb[0].mxu0
      %v1040 = vadd.f32 0.0, %v1039
      %v1041 = vpop.f32.mrb[0].mxu0
      %v1042 = vpop.f32.mrb[0].mxu0
      %v1043 = vadd.f32 0.0, %v1042
      %v1044 = vpop.f32.mrb[0].mxu0
      %1045 = vmatprep.mubr.bf16.mxu0 0
      %1046 = vmatmul.mubr.bf16.gmra.mrb[0].mxu0 %v722
      %v1047 = vpop.f32.mrb[0].mxu0
      %v1048 = vadd.f32 0.0, %v1047
      %v1049 = vpop.f32.mrb[0].mxu0
      %v1050 = vpop.f32.mrb[0].mxu0
      %v1051 = vadd.f32 0.0, %v1050
      %v1052 = vpop.f32.mrb[0].mxu0
      %1053 = vmatprep.mubr.bf16.mxu0 0
      %1054 = vmatmul.mubr.bf16.gmra.mrb[0].mxu0 %v725
      %v1055 = vpop.f32.mrb[0].mxu0
      %v1056 = vadd.f32 0.0, %v1055
      %v1057 = vpop.f32.mrb[0].mxu0
      %v1058 = vpop.f32.mrb[0].mxu0
      %v1059 = vadd.f32 0.0, %v1058
      %v1060 = vpop.f32.mrb[0].mxu0
      %1061 = vmatprep.mubr.bf16.mxu0 0
      %1062 = vmatmul.mubr.bf16.gmra.mrb[0].mxu0 %v728
      %v1063 = vpop.f32.mrb[0].mxu0
      %v1064 = vadd.f32 0.0, %v1063
      %v1065 = vpop.f32.mrb[0].mxu0
      %v1066 = vpop.f32.mrb[0].mxu0
      %v1067 = vadd.f32 0.0, %v1066
      %v1068 = vpop.f32.mrb[0].mxu0
      %1069 = vmatprep.mubr.bf16.mxu0 0
      %1070 = vmatmul.mubr.bf16.gmra.mrb[0].mxu0 %v731
      %v1071 = vpop.f32.mrb[0].mxu0
      %v1072 = vadd.f32 0.0, %v1071
      %v1073 = vpop.f32.mrb[0].mxu0
      %v1074 = vpop.f32.mrb[0].mxu0
      %v1075 = vadd.f32 0.0, %v1074
      %v1076 = vpop.f32.mrb[0].mxu0
      %1077 = vmatprep.mubr.bf16.mxu0 0
      %1078 = vmatmul.mubr.bf16.gmra.mrb[0].mxu0 %v734
      %v1079 = vpop.f32.mrb[0].mxu0
      %v1080 = vadd.f32 0.0, %v1079
      %v1081 = vpop.f32.mrb[0].mxu0
      %v1082 = vpop.f32.mrb[0].mxu0
      %v1083 = vadd.f32 0.0, %v1082
      %v1084 = vpop.f32.mrb[0].mxu0
      %1085 = vmatprep.mubr.bf16.mxu0 0
      %1086 = vmatmul.mubr.bf16.gmra.mrb[0].mxu0 %v737
      %v1087 = vpop.f32.mrb[0].mxu0
      %v1088 = vadd.f32 0.0, %v1087
      %v1089 = vpop.f32.mrb[0].mxu0
      %v1090 = vpop.f32.mrb[0].mxu0
      %v1091 = vadd.f32 0.0, %v1090
      %v1092 = vpop.f32.mrb[0].mxu0
      %1093 = vmatprep.mubr.bf16.mxu0 0
      %1094 = vmatmul.mubr.bf16.gmra.mrb[0].mxu0 %v740
      %v1095 = vpop.f32.mrb[0].mxu0
      %v1096 = vadd.f32 0.0, %v1095
      %v1097 = vpop.f32.mrb[0].mxu0
      %v1098 = vpop.f32.mrb[0].mxu0
      %v1099 = vadd.f32 0.0, %v1098
      %v1100 = vpop.f32.mrb[0].mxu0
      %1101 = vmatprep.mubr.bf16.mxu0 0
      %1102 = vmatmul.mubr.bf16.gmra.mrb[0].mxu0 %v743
      %v1103 = vpop.f32.mrb[0].mxu0
      %v1104 = vadd.f32 0.0, %v1103
      %v1105 = vpop.f32.mrb[0].mxu0
      %v1106 = vpop.f32.mrb[0].mxu0
      %v1107 = vadd.f32 0.0, %v1106
      %v1108 = vpop.f32.mrb[0].mxu0
      %1109 = vmatprep.mubr.bf16.mxu0 0
      %1110 = vmatmul.mubr.bf16.gmra.mrb[0].mxu0 %v746
      %v1111 = vpop.f32.mrb[0].mxu0
      %v1112 = vadd.f32 0.0, %v1111
      %v1113 = vpop.f32.mrb[0].mxu0
      %v1114 = vpop.f32.mrb[0].mxu0
      %v1115 = vadd.f32 0.0, %v1114
      %v1116 = vpop.f32.mrb[0].mxu0
      %1117 = vmatprep.mubr.bf16.mxu0 0
      %1118 = vmatmul.mubr.bf16.gmra.mrb[0].mxu0 %v749
      %v1119 = vpop.f32.mrb[0].mxu0
      %v1120 = vadd.f32 0.0, %v1119
      %v1121 = vpop.f32.mrb[0].mxu0
      %v1122 = vpop.f32.mrb[0].mxu0
      %v1123 = vadd.f32 0.0, %v1122
      %v1124 = vpop.f32.mrb[0].mxu0
      %1125 = vmatprep.mubr.bf16.mxu0 0
      %1126 = vmatmul.mubr.bf16.gmra.mrb[0].mxu0 %v752
      %v1127 = vpop.f32.mrb[0].mxu0
      %v1128 = vadd.f32 0.0, %v1127
      %v1129 = vpop.f32.mrb[0].mxu0
      %v1130 = vpop.f32.mrb[0].mxu0
      %v1131 = vadd.f32 0.0, %v1130
      %v1132 = vpop.f32.mrb[0].mxu0
      %1133 = vmatprep.mubr.bf16.mxu0 0
      %1134 = vmatmul.mubr.bf16.gmra.mrb[0].mxu0 %v755
      %v1135 = vpop.f32.mrb[0].mxu0
      %v1136 = vadd.f32 0.0, %v1135
      %v1137 = vpop.f32.mrb[0].mxu0
      %v1138 = vpop.f32.mrb[0].mxu0
      %v1139 = vadd.f32 0.0, %v1138
      %v1140 = vpop.f32.mrb[0].mxu0
      %1141 = vmatprep.mubr.bf16.mxu0 0
      %1142 = vmatmul.mubr.bf16.gmra.mrb[0].mxu0 %v758
      %v1143 = vpop.f32.mrb[0].mxu0
      %v1144 = vadd.f32 0.0, %v1143
      %v1145 = vpop.f32.mrb[0].mxu0
      %v1146 = vpop.f32.mrb[0].mxu0
      %v1147 = vadd.f32 0.0, %v1146
      %v1148 = vpop.f32.mrb[0].mxu0
      %1149 = vmatprep.mubr.bf16.mxu0 0
      %1150 = vmatmul.mubr.bf16.gmra.mrb[0].mxu0 %v761
      %v1151 = vpop.f32.mrb[0].mxu0
      %v1152 = vadd.f32 0.0, %v1151
      %v1153 = vpop.f32.mrb[0].mxu0
      %v1154 = vpop.f32.mrb[0].mxu0
      %v1155 = vadd.f32 0.0, %v1154
      %v1156 = vpop.f32.mrb[0].mxu0
      %1157 = vmatprep.mubr.bf16.mxu0 0
      %1158 = vmatmul.mubr.bf16.gmra.mrb[0].mxu0 %v764
      %v1159 = vpop.f32.mrb[0].mxu0
      %v1160 = vadd.f32 0.0, %v1159
      %v1161 = vpop.f32.mrb[0].mxu0
      %v1162 = vpop.f32.mrb[0].mxu0
      %v1163 = vadd.f32 0.0, %v1162
      %v1164 = vpop.f32.mrb[0].mxu0
      %1165 = vmatprep.mubr.bf16.mxu0 0
      %1166 = vmatmul.mubr.bf16.gmra.mrb[0].mxu0 %v767
      %v1167 = vpop.f32.mrb[0].mxu0
      %v1168 = vadd.f32 0.0, %v1167
      %v1169 = vpop.f32.mrb[0].mxu0
      %v1170 = vpop.f32.mrb[0].mxu0
      %v1171 = vadd.f32 0.0, %v1170
      %v1172 = vpop.f32.mrb[0].mxu0
      %1173 = vmatprep.mubr.bf16.mxu0 0
      %1174 = vmatmul.mubr.bf16.gmra.mrb[0].mxu0 %v770
      %v1175 = vpop.f32.mrb[0].mxu0
      %v1176 = vadd.f32 0.0, %v1175
      %v1177 = vpop.f32.mrb[0].mxu0
      %v1178 = vpop.f32.mrb[0].mxu0
      %v1179 = vadd.f32 0.0, %v1178
      %v1180 = vpop.f32.mrb[0].mxu0
      %1181 = vmatprep.mubr.bf16.mxu0 0
      %1182 = vmatmul.mubr.bf16.gmra.mrb[0].mxu0 %v773
      %v1183 = vpop.f32.mrb[0].mxu0
      %v1184 = vadd.f32 0.0, %v1183
      %v1185 = vpop.f32.mrb[0].mxu0
      %v1186 = vpop.f32.mrb[0].mxu0
      %v1187 = vadd.f32 0.0, %v1186
      %v1188 = vpop.f32.mrb[0].mxu0
      %1189 = vmatprep.mubr.bf16.mxu0 0
      %1190 = vmatmul.mubr.bf16.gmra.mrb[0].mxu0 %v776
      %v1191 = vpop.f32.mrb[0].mxu0
      %v1192 = vadd.f32 0.0, %v1191
      %v1193 = vpop.f32.mrb[0].mxu0
      %v1194 = vpop.f32.mrb[0].mxu0
      %v1195 = vadd.f32 0.0, %v1194
      %v1196 = vpop.f32.mrb[0].mxu0
      %1197 = vmatprep.mubr.bf16.mxu0 0
      %1198 = vmatmul.mubr.bf16.gmra.mrb[0].mxu0 %v779
      %v1199 = vpop.f32.mrb[0].mxu0
      %v1200 = vadd.f32 0.0, %v1199
      %v1201 = vpop.f32.mrb[0].mxu0
      %v1202 = vpop.f32.mrb[0].mxu0
      %v1203 = vadd.f32 0.0, %v1202
      %v1204 = vpop.f32.mrb[0].mxu0
      %1205 = vmatprep.mubr.bf16.mxu0 0
      %1206 = vmatmul.mubr.bf16.gmra.mrb[0].mxu0 %v782
      %v1207 = vpop.f32.mrb[0].mxu0
      %v1208 = vadd.f32 0.0, %v1207
      %v1209 = vpop.f32.mrb[0].mxu0
      %v1210 = vpop.f32.mrb[0].mxu0
      %v1211 = vadd.f32 0.0, %v1210
      %v1212 = vpop.f32.mrb[0].mxu0
      %1213 = vmatprep.mubr.bf16.mxu0 0
      %1214 = vmatmul.mubr.bf16.gmra.mrb[0].mxu0 %v785
      %v1215 = vpop.f32.mrb[0].mxu0
      %v1216 = vadd.f32 0.0, %v1215
      %v1217 = vpop.f32.mrb[0].mxu0
      %v1218 = vpop.f32.mrb[0].mxu0
      %v1219 = vadd.f32 0.0, %v1218
      %v1220 = vpop.f32.mrb[0].mxu0
      %1221 = vmatprep.mubr.bf16.mxu0 0
      %1222 = vmatmul.mubr.bf16.gmra.mrb[0].mxu0 %v788
      %v1223 = vpop.f32.mrb[0].mxu0
      %v1224 = vadd.f32 0.0, %v1223
      %v1225 = vpop.f32.mrb[0].mxu0
      %v1226 = vpop.f32.mrb[0].mxu0
      %v1227 = vadd.f32 0.0, %v1226
      %v1228 = vpop.f32.mrb[0].mxu0
      %1229 = vmatprep.mubr.bf16.mxu0 0
      %1230 = vmatmul.mubr.bf16.gmra.mrb[0].mxu0 %v791
      %v1231 = vpop.f32.mrb[0].mxu0
      %v1232 = vadd.f32 0.0, %v1231
      %v1233 = vpop.f32.mrb[0].mxu0
      %v1234 = vpop.f32.mrb[0].mxu0
      %v1235 = vadd.f32 0.0, %v1234
      %v1236 = vpop.f32.mrb[0].mxu0
      %1237 = vmatprep.mubr.bf16.mxu0 0
      %1238 = vmatmul.mubr.bf16.gmra.mrb[0].mxu0 %v794
      %v1239 = vpop.f32.mrb[0].mxu0
      %v1240 = vadd.f32 0.0, %v1239
      %v1241 = vpop.f32.mrb[0].mxu0
      %v1242 = vpop.f32.mrb[0].mxu0
      %v1243 = vadd.f32 0.0, %v1242
      %v1244 = vpop.f32.mrb[0].mxu0
      %1245 = vmatprep.mubr.bf16.mxu0 0
      %1246 = vmatmul.mubr.bf16.gmra.mrb[0].mxu0 %v797
      %v1247 = vpop.f32.mrb[0].mxu0
      %v1248 = vadd.f32 0.0, %v1247
      %v1249 = vpop.f32.mrb[0].mxu0
      %v1250 = vpop.f32.mrb[0].mxu0
      %v1251 = vadd.f32 0.0, %v1250
      %v1252 = vpop.f32.mrb[0].mxu0
      %1253 = vmatprep.mubr.bf16.mxu0 0
      %1254 = vmatmul.mubr.bf16.gmra.mrb[0].mxu0 %v800
      %v1255 = vpop.f32.mrb[0].mxu0
      %v1256 = vadd.f32 0.0, %v1255
      %v1257 = vpop.f32.mrb[0].mxu0
      %v1258 = vpop.f32.mrb[0].mxu0
      %v1259 = vadd.f32 0.0, %v1258
      %v1260 = vpop.f32.mrb[0].mxu0
      %1261 = vmatprep.mubr.bf16.mxu0 0
      %1262 = vmatmul.mubr.bf16.gmra.mrb[0].mxu0 %v803
      %v1263 = vpop.f32.mrb[0].mxu0
      %v1264 = vadd.f32 0.0, %v1263
      %v1265 = vpop.f32.mrb[0].mxu0
      %v1266 = vpop.f32.mrb[0].mxu0
      %v1267 = vadd.f32 0.0, %v1266
      %v1268 = vpop.f32.mrb[0].mxu0
      %1269 = vmatprep.mubr.bf16.mxu0 0
      %1270 = vmatmul.mubr.bf16.gmra.mrb[0].mxu0 %v806
      %v1271 = vpop.f32.mrb[0].mxu0
      %v1272 = vadd.f32 0.0, %v1271
      %v1273 = vpop.f32.mrb[0].mxu0
      %v1274 = vpop.f32.mrb[0].mxu0
      %v1275 = vadd.f32 0.0, %v1274
      %v1276 = vpop.f32.mrb[0].mxu0
      %1277 = vmatprep.mubr.bf16.mxu0 0
      %1278 = vmatmul.mubr.bf16.gmra.mrb[0].mxu0 %v809
      %v1279 = vpop.f32.mrb[0].mxu0
      %v1280 = vadd.f32 0.0, %v1279
      %v1281 = vpop.f32.mrb[0].mxu0
      %v1282 = vpop.f32.mrb[0].mxu0
      %v1283 = vadd.f32 0.0, %v1282
      %v1284 = vpop.f32.mrb[0].mxu0
      %1285 = vmatprep.mubr.bf16.mxu0 0
      %1286 = vmatmul.mubr.bf16.gmra.mrb[0].mxu0 %v812
      %v1287 = vpop.f32.mrb[0].mxu0
      %v1288 = vadd.f32 0.0, %v1287
      %v1289 = vpop.f32.mrb[0].mxu0
      %v1290 = vpop.f32.mrb[0].mxu0
      %v1291 = vadd.f32 0.0, %v1290
      %v1292 = vpop.f32.mrb[0].mxu0
      %1293 = vmatprep.mubr.bf16.mxu0 0
      %1294 = vmatmul.mubr.bf16.gmra.mrb[0].mxu0 %v815
      %v1295 = vpop.f32.mrb[0].mxu0
      %v1296 = vadd.f32 0.0, %v1295
      %v1297 = vpop.f32.mrb[0].mxu0
      %v1298 = vpop.f32.mrb[0].mxu0
      %v1299 = vadd.f32 0.0, %v1298
      %v1300 = vpop.f32.mrb[0].mxu0
      %1301 = vmatprep.mubr.bf16.mxu0 0
      %1302 = vmatmul.mubr.bf16.gmra.mrb[0].mxu0 %v818
      %v1303 = vpop.f32.mrb[0].mxu0
      %v1304 = vadd.f32 0.0, %v1303
      %v1305 = vpop.f32.mrb[0].mxu0
      %v1306 = vpop.f32.mrb[0].mxu0
      %v1307 = vadd.f32 0.0, %v1306
      %v1308 = vpop.f32.mrb[0].mxu0
      %1309 = vmatprep.mubr.bf16.mxu0 0
      %1310 = vmatmul.mubr.bf16.gmra.mrb[0].mxu0 %v821
      %v1311 = vpop.f32.mrb[0].mxu0
      %v1312 = vadd.f32 0.0, %v1311
      %v1313 = vpop.f32.mrb[0].mxu0
      %v1314 = vpop.f32.mrb[0].mxu0
      %v1315 = vadd.f32 0.0, %v1314
      %v1316 = vpop.f32.mrb[0].mxu0
      %1317 = vmatprep.mubr.bf16.mxu0 0
      %1318 = vmatmul.mubr.bf16.gmra.mrb[0].mxu0 %v824
      %v1319 = vpop.f32.mrb[0].mxu0
      %v1320 = vadd.f32 0.0, %v1319
      %v1321 = vpop.f32.mrb[0].mxu0
      %v1322 = vpop.f32.mrb[0].mxu0
      %v1323 = vadd.f32 0.0, %v1322
      %v1324 = vpop.f32.mrb[0].mxu0
      %1325 = vmatprep.mubr.bf16.mxu0 0
      %1326 = vmatmul.mubr.bf16.gmra.mrb[0].mxu0 %v827
      %v1327 = vpop.f32.mrb[0].mxu0
      %v1328 = vadd.f32 0.0, %v1327
      %v1329 = vpop.f32.mrb[0].mxu0
      %v1330 = vpop.f32.mrb[0].mxu0
      %v1331 = vadd.f32 0.0, %v1330
      %v1332 = vpop.f32.mrb[0].mxu0
      %1333 = vmatprep.mubr.bf16.mxu0 0
      %1334 = vmatmul.mubr.bf16.gmra.mrb[0].mxu0 %v830
      %v1335 = vpop.f32.mrb[0].mxu0
      %v1336 = vadd.f32 0.0, %v1335
      %v1337 = vpop.f32.mrb[0].mxu0
      %v1338 = vpop.f32.mrb[0].mxu0
      %v1339 = vadd.f32 0.0, %v1338
      %v1340 = vpop.f32.mrb[0].mxu0
      %1341 = vmatprep.mubr.bf16.mxu0 0
      %1342 = vmatmul.mubr.bf16.gmra.mrb[0].mxu0 %v833
      %v1343 = vpop.f32.mrb[0].mxu0
      %v1344 = vadd.f32 0.0, %v1343
      %v1345 = vpop.f32.mrb[0].mxu0
      %v1346 = vpop.f32.mrb[0].mxu0
      %v1347 = vadd.f32 0.0, %v1346
      %v1348 = vpop.f32.mrb[0].mxu0
      %1349 = vmatprep.mubr.bf16.mxu0 0
      %1350 = vmatmul.mubr.bf16.gmra.mrb[0].mxu0 %v836
      %v1351 = vpop.f32.mrb[0].mxu0
      %v1352 = vadd.f32 0.0, %v1351
      %v1353 = vpop.f32.mrb[0].mxu0
      %v1354 = vpop.f32.mrb[0].mxu0
      %v1355 = vadd.f32 0.0, %v1354
      %v1356 = vpop.f32.mrb[0].mxu0
      %1357 = vmatprep.mubr.bf16.mxu0 0
      %1358 = vmatmul.mubr.bf16.gmra.mrb[0].mxu0 %v839
      %v1359 = vpop.f32.mrb[0].mxu0
      %v1360 = vadd.f32 0.0, %v1359
      %v1361 = vpop.f32.mrb[0].mxu0
      %v1362 = vpop.f32.mrb[0].mxu0
      %v1363 = vadd.f32 0.0, %v1362
      %v1364 = vpop.f32.mrb[0].mxu0
      %1365 = vmatprep.mubr.bf16.mxu0 0
      %1366 = vmatmul.mubr.bf16.gmra.mrb[0].mxu0 %v842
      %v1367 = vpop.f32.mrb[0].mxu0
      %v1368 = vadd.f32 0.0, %v1367
      %v1369 = vpop.f32.mrb[0].mxu0
      %v1370 = vpop.f32.mrb[0].mxu0
      %v1371 = vadd.f32 0.0, %v1370
      %v1372 = vpop.f32.mrb[0].mxu0
      %1373 = vmatprep.mubr.bf16.mxu0 0
      %1374 = vmatmul.mubr.bf16.gmra.mrb[0].mxu0 %v845
      %v1375 = vpop.f32.mrb[0].mxu0
      %v1376 = vadd.f32 0.0, %v1375
      %v1377 = vpop.f32.mrb[0].mxu0
      %v1378 = vpop.f32.mrb[0].mxu0
      %v1379 = vadd.f32 0.0, %v1378
      %v1380 = vpop.f32.mrb[0].mxu0
      %1381 = vmatprep.mubr.bf16.mxu0 0
      %1382 = vmatmul.mubr.bf16.gmra.mrb[0].mxu0 %v848
      %v1383 = vpop.f32.mrb[0].mxu0
      %v1384 = vadd.f32 0.0, %v1383
      %v1385 = vpop.f32.mrb[0].mxu0
      %v1386 = vpop.f32.mrb[0].mxu0
      %v1387 = vadd.f32 0.0, %v1386
      %v1388 = vpop.f32.mrb[0].mxu0
      %1389 = vmatprep.mubr.bf16.mxu0 0
      %1390 = vmatmul.mubr.bf16.gmra.mrb[0].mxu0 %v851
      %v1391 = vpop.f32.mrb[0].mxu0
      %v1392 = vadd.f32 0.0, %v1391
      %v1393 = vpop.f32.mrb[0].mxu0
      %v1394 = vpop.f32.mrb[0].mxu0
      %v1395 = vadd.f32 0.0, %v1394
      %v1396 = vpop.f32.mrb[0].mxu0
      %1397 = vdwg.mxu0
      %v1398 = vtanh.pop %v888
      %v1399 = vtanh.pop %v891
      %v1400 = vtanh.pop %v896
      %v1401 = vtanh.pop %v899
      %v1402 = vtanh.pop %v904
      %v1403 = vtanh.pop %v907
      %v1404 = vtanh.pop %v912
      %v1405 = vtanh.pop %v915
      %v1406 = vtanh.pop %v920
      %v1407 = vtanh.pop %v923
      %v1408 = vtanh.pop %v928
      %v1409 = vtanh.pop %v931
      %v1410 = vtanh.pop %v936
      %v1411 = vtanh.pop %v939
      %v1412 = vtanh.pop %v944
      %v1413 = vtanh.pop %v947
      %v1414 = vtanh.pop %v952
      %v1415 = vtanh.pop %v955
      %v1416 = vtanh.pop %v960
      %v1417 = vtanh.pop %v963
      %v1418 = vtanh.pop %v968
      %v1419 = vtanh.pop %v971
      %v1420 = vtanh.pop %v976
      %v1421 = vtanh.pop %v979
      %v1422 = vtanh.pop %v984
      %v1423 = vtanh.pop %v987
      %v1424 = vtanh.pop %v992
      %v1425 = vtanh.pop %v995
      %v1426 = vtanh.pop %v1000
      %v1427 = vtanh.pop %v1003
      %v1428 = vtanh.pop %v1008
      %v1429 = vtanh.pop %v1011
      %v1430 = vtanh.pop %v1016
      %v1431 = vtanh.pop %v1019
      %v1432 = vtanh.pop %v1024
      %v1433 = vtanh.pop %v1027
      %v1434 = vtanh.pop %v1032
      %v1435 = vtanh.pop %v1035
      %v1436 = vtanh.pop %v1040
      %v1437 = vtanh.pop %v1043
      %v1438 = vtanh.pop %v1048
      %v1439 = vtanh.pop %v1051
      %v1440 = vtanh.pop %v1056
      %v1441 = vtanh.pop %v1059
      %v1442 = vtanh.pop %v1064
      %v1443 = vtanh.pop %v1067
      %v1444 = vtanh.pop %v1072
      %v1445 = vtanh.pop %v1075
      %v1446 = vtanh.pop %v1080
      %v1447 = vtanh.pop %v1083
      %v1448 = vtanh.pop %v1088
      %v1449 = vtanh.pop %v1091
      %v1450 = vtanh.pop %v1096
      %v1451 = vtanh.pop %v1099
      %v1452 = vtanh.pop %v1104
      %v1453 = vtanh.pop %v1107
      %v1454 = vtanh.pop %v1112
      %v1455 = vtanh.pop %v1115
      %v1456 = vtanh.pop %v1120
      %v1457 = vtanh.pop %v1123
      %v1458 = vtanh.pop %v1128
      %v1459 = vtanh.pop %v1131
      %v1460 = vtanh.pop %v1136
      %v1461 = vtanh.pop %v1139
      %v1462 = vtanh.pop %v1144
      %v1463 = vtanh.pop %v1147
      %v1464 = vtanh.pop %v1152
      %v1465 = vtanh.pop %v1155
      %v1466 = vtanh.pop %v1160
      %v1467 = vtanh.pop %v1163
      %v1468 = vtanh.pop %v1168
      %v1469 = vtanh.pop %v1171
      %v1470 = vtanh.pop %v1176
      %v1471 = vtanh.pop %v1179
      %v1472 = vtanh.pop %v1184
      %v1473 = vtanh.pop %v1187
      %v1474 = vtanh.pop %v1192
      %v1475 = vtanh.pop %v1195
      %v1476 = vtanh.pop %v1200
      %v1477 = vtanh.pop %v1203
      %v1478 = vtanh.pop %v1208
      %v1479 = vtanh.pop %v1211
      %v1480 = vtanh.pop %v1216
      %v1481 = vtanh.pop %v1219
      %v1482 = vtanh.pop %v1224
      %v1483 = vtanh.pop %v1227
      %v1484 = vtanh.pop %v1232
      %v1485 = vtanh.pop %v1235
      %v1486 = vtanh.pop %v1240
      %v1487 = vtanh.pop %v1243
      %v1488 = vtanh.pop %v1248
      %v1489 = vtanh.pop %v1251
      %v1490 = vtanh.pop %v1256
      %v1491 = vtanh.pop %v1259
      %v1492 = vtanh.pop %v1264
      %v1493 = vtanh.pop %v1267
      %v1494 = vtanh.pop %v1272
      %v1495 = vtanh.pop %v1275
      %v1496 = vtanh.pop %v1280
      %v1497 = vtanh.pop %v1283
      %v1498 = vtanh.pop %v1288
      %v1499 = vtanh.pop %v1291
      %v1500 = vtanh.pop %v1296
      %v1501 = vtanh.pop %v1299
      %v1502 = vtanh.pop %v1304
      %v1503 = vtanh.pop %v1307
      %v1504 = vtanh.pop %v1312
      %v1505 = vtanh.pop %v1315
      %v1506 = vtanh.pop %v1320
      %v1507 = vtanh.pop %v1323
      %v1508 = vtanh.pop %v1328
      %v1509 = vtanh.pop %v1331
      %v1510 = vtanh.pop %v1336
      %v1511 = vtanh.pop %v1339
      %v1512 = vtanh.pop %v1344
      %v1513 = vtanh.pop %v1347
      %v1514 = vtanh.pop %v1352
      %v1515 = vtanh.pop %v1355
      %v1516 = vtanh.pop %v1360
      %v1517 = vtanh.pop %v1363
      %v1518 = vtanh.pop %v1368
      %v1519 = vtanh.pop %v1371
      %v1520 = vtanh.pop %v1376
      %v1521 = vtanh.pop %v1379
      %v1522 = vtanh.pop %v1384
      %v1523 = vtanh.pop %v1387
      %v1524 = vtanh.pop %v1392
      %v1525 = vtanh.pop %v1395
      %1526 = vst [vmem:[%s201] sm:$0xff] %v1398
      %1527 = vst [vmem:[%s201 + $0x8] sm:$0xff] %v1399
      %1528 = vst [vmem:[%s201 + $0x10] sm:$0xff] %v1400
      %1529 = vst [vmem:[%s201 + $0x18] sm:$0xff] %v1401
      %1530 = vst [vmem:[%s201 + $0x20] sm:$0xff] %v1402
      %1531 = vst [vmem:[%s201 + $0x28] sm:$0xff] %v1403
      %1532 = vst [vmem:[%s201 + $0x30] sm:$0xff] %v1404
      %1533 = vst [vmem:[%s201 + $0x38] sm:$0xff] %v1405
      %1534 = vst [vmem:[%s201 + $0x40] sm:$0xff] %v1406
      %1535 = vst [vmem:[%s201 + $0x48] sm:$0xff] %v1407
      %1536 = vst [vmem:[%s201 + $0x50] sm:$0xff] %v1408
      %1537 = vst [vmem:[%s201 + $0x58] sm:$0xff] %v1409
      %1538 = vst [vmem:[%s201 + $0x60] sm:$0xff] %v1410
      %1539 = vst [vmem:[%s201 + $0x68] sm:$0xff] %v1411
      %1540 = vst [vmem:[%s201 + $0x70] sm:$0xff] %v1412
      %1541 = vst [vmem:[%s201 + $0x78] sm:$0xff] %v1413
      %1542 = vst [vmem:[%s201 + $0x80] sm:$0xff] %v1414
      %1543 = vst [vmem:[%s201 + $0x88] sm:$0xff] %v1415
      %1544 = vst [vmem:[%s201 + $0x90] sm:$0xff] %v1416
      %1545 = vst [vmem:[%s201 + $0x98] sm:$0xff] %v1417
      %1546 = vst [vmem:[%s201 + $0xa0] sm:$0xff] %v1418
      %1547 = vst [vmem:[%s201 + $0xa8] sm:$0xff] %v1419
      %1548 = vst [vmem:[%s201 + $0xb0] sm:$0xff] %v1420
      %1549 = vst [vmem:[%s201 + $0xb8] sm:$0xff] %v1421
      %1550 = vst [vmem:[%s201 + $0xc0] sm:$0xff] %v1422
      %1551 = vst [vmem:[%s201 + $0xc8] sm:$0xff] %v1423
      %1552 = vst [vmem:[%s201 + $0xd0] sm:$0xff] %v1424
      %1553 = vst [vmem:[%s201 + $0xd8] sm:$0xff] %v1425
      %1554 = vst [vmem:[%s201 + $0xe0] sm:$0xff] %v1426
      %1555 = vst [vmem:[%s201 + $0xe8] sm:$0xff] %v1427
      %1556 = vst [vmem:[%s201 + $0xf0] sm:$0xff] %v1428
      %1557 = vst [vmem:[%s201 + $0xf8] sm:$0xff] %v1429
      %1558 = vst [vmem:[%s201 + $0x100] sm:$0xff] %v1430
      %1559 = vst [vmem:[%s201 + $0x108] sm:$0xff] %v1431
      %1560 = vst [vmem:[%s201 + $0x110] sm:$0xff] %v1432
      %1561 = vst [vmem:[%s201 + $0x118] sm:$0xff] %v1433
      %1562 = vst [vmem:[%s201 + $0x120] sm:$0xff] %v1434
      %1563 = vst [vmem:[%s201 + $0x128] sm:$0xff] %v1435
      %1564 = vst [vmem:[%s201 + $0x130] sm:$0xff] %v1436
      %1565 = vst [vmem:[%s201 + $0x138] sm:$0xff] %v1437
      %1566 = vst [vmem:[%s201 + $0x140] sm:$0xff] %v1438
      %1567 = vst [vmem:[%s201 + $0x148] sm:$0xff] %v1439
      %1568 = vst [vmem:[%s201 + $0x150] sm:$0xff] %v1440
      %1569 = vst [vmem:[%s201 + $0x158] sm:$0xff] %v1441
      %1570 = vst [vmem:[%s201 + $0x160] sm:$0xff] %v1442
      %1571 = vst [vmem:[%s201 + $0x168] sm:$0xff] %v1443
      %1572 = vst [vmem:[%s201 + $0x170] sm:$0xff] %v1444
      %1573 = vst [vmem:[%s201 + $0x178] sm:$0xff] %v1445
      %1574 = vst [vmem:[%s201 + $0x180] sm:$0xff] %v1446
      %1575 = vst [vmem:[%s201 + $0x188] sm:$0xff] %v1447
      %1576 = vst [vmem:[%s201 + $0x190] sm:$0xff] %v1448
      %1577 = vst [vmem:[%s201 + $0x198] sm:$0xff] %v1449
      %1578 = vst [vmem:[%s201 + $0x1a0] sm:$0xff] %v1450
      %1579 = vst [vmem:[%s201 + $0x1a8] sm:$0xff] %v1451
      %1580 = vst [vmem:[%s201 + $0x1b0] sm:$0xff] %v1452
      %1581 = vst [vmem:[%s201 + $0x1b8] sm:$0xff] %v1453
      %1582 = vst [vmem:[%s201 + $0x1c0] sm:$0xff] %v1454
      %1583 = vst [vmem:[%s201 + $0x1c8] sm:$0xff] %v1455
      %1584 = vst [vmem:[%s201 + $0x1d0] sm:$0xff] %v1456
      %1585 = vst [vmem:[%s201 + $0x1d8] sm:$0xff] %v1457
      %1586 = vst [vmem:[%s201 + $0x1e0] sm:$0xff] %v1458
      %1587 = vst [vmem:[%s201 + $0x1e8] sm:$0xff] %v1459
      %1588 = vst [vmem:[%s201 + $0x1f0] sm:$0xff] %v1460
      %1589 = vst [vmem:[%s201 + $0x1f8] sm:$0xff] %v1461
      %1590 = vst [vmem:[%s201 + $0x200] sm:$0xff] %v1462
      %1591 = vst [vmem:[%s201 + $0x208] sm:$0xff] %v1463
      %1592 = vst [vmem:[%s201 + $0x210] sm:$0xff] %v1464
      %1593 = vst [vmem:[%s201 + $0x218] sm:$0xff] %v1465
      %1594 = vst [vmem:[%s201 + $0x220] sm:$0xff] %v1466
      %1595 = vst [vmem:[%s201 + $0x228] sm:$0xff] %v1467
      %1596 = vst [vmem:[%s201 + $0x230] sm:$0xff] %v1468
      %1597 = vst [vmem:[%s201 + $0x238] sm:$0xff] %v1469
      %1598 = vst [vmem:[%s201 + $0x240] sm:$0xff] %v1470
      %1599 = vst [vmem:[%s201 + $0x248] sm:$0xff] %v1471
      %1600 = vst [vmem:[%s201 + $0x250] sm:$0xff] %v1472
      %1601 = vst [vmem:[%s201 + $0x258] sm:$0xff] %v1473
      %1602 = vst [vmem:[%s201 + $0x260] sm:$0xff] %v1474
      %1603 = vst [vmem:[%s201 + $0x268] sm:$0xff] %v1475
      %1604 = vst [vmem:[%s201 + $0x270] sm:$0xff] %v1476
      %1605 = vst [vmem:[%s201 + $0x278] sm:$0xff] %v1477
      %1606 = vst [vmem:[%s201 + $0x280] sm:$0xff] %v1478
      %1607 = vst [vmem:[%s201 + $0x288] sm:$0xff] %v1479
      %1608 = vst [vmem:[%s201 + $0x290] sm:$0xff] %v1480
      %1609 = vst [vmem:[%s201 + $0x298] sm:$0xff] %v1481
      %1610 = vst [vmem:[%s201 + $0x2a0] sm:$0xff] %v1482
      %1611 = vst [vmem:[%s201 + $0x2a8] sm:$0xff] %v1483
      %1612 = vst [vmem:[%s201 + $0x2b0] sm:$0xff] %v1484
      %1613 = vst [vmem:[%s201 + $0x2b8] sm:$0xff] %v1485
      %1614 = vst [vmem:[%s201 + $0x2c0] sm:$0xff] %v1486
      %1615 = vst [vmem:[%s201 + $0x2c8] sm:$0xff] %v1487
      %1616 = vst [vmem:[%s201 + $0x2d0] sm:$0xff] %v1488
      %1617 = vst [vmem:[%s201 + $0x2d8] sm:$0xff] %v1489
      %1618 = vst [vmem:[%s201 + $0x2e0] sm:$0xff] %v1490
      %1619 = vst [vmem:[%s201 + $0x2e8] sm:$0xff] %v1491
      %1620 = vst [vmem:[%s201 + $0x2f0] sm:$0xff] %v1492
      %1621 = vst [vmem:[%s201 + $0x2f8] sm:$0xff] %v1493
      %1622 = vst [vmem:[%s201 + $0x300] sm:$0xff] %v1494
      %1623 = vst [vmem:[%s201 + $0x308] sm:$0xff] %v1495
      %1624 = vst [vmem:[%s201 + $0x310] sm:$0xff] %v1496
      %1625 = vst [vmem:[%s201 + $0x318] sm:$0xff] %v1497
      %1626 = vst [vmem:[%s201 + $0x320] sm:$0xff] %v1498
      %1627 = vst [vmem:[%s201 + $0x328] sm:$0xff] %v1499
      %1628 = vst [vmem:[%s201 + $0x330] sm:$0xff] %v1500
      %1629 = vst [vmem:[%s201 + $0x338] sm:$0xff] %v1501
      %1630 = vst [vmem:[%s201 + $0x340] sm:$0xff] %v1502
      %1631 = vst [vmem:[%s201 + $0x348] sm:$0xff] %v1503
      %1632 = vst [vmem:[%s201 + $0x350] sm:$0xff] %v1504
      %1633 = vst [vmem:[%s201 + $0x358] sm:$0xff] %v1505
      %1634 = vst [vmem:[%s201 + $0x360] sm:$0xff] %v1506
      %1635 = vst [vmem:[%s201 + $0x368] sm:$0xff] %v1507
      %1636 = vst [vmem:[%s201 + $0x370] sm:$0xff] %v1508
      %1637 = vst [vmem:[%s201 + $0x378] sm:$0xff] %v1509
      %1638 = vst [vmem:[%s201 + $0x380] sm:$0xff] %v1510
      %1639 = vst [vmem:[%s201 + $0x388] sm:$0xff] %v1511
      %1640 = vst [vmem:[%s201 + $0x390] sm:$0xff] %v1512
      %1641 = vst [vmem:[%s201 + $0x398] sm:$0xff] %v1513
      %1642 = vst [vmem:[%s201 + $0x3a0] sm:$0xff] %v1514
      %1643 = vst [vmem:[%s201 + $0x3a8] sm:$0xff] %v1515
      %1644 = vst [vmem:[%s201 + $0x3b0] sm:$0xff] %v1516
      %1645 = vst [vmem:[%s201 + $0x3b8] sm:$0xff] %v1517
      %1646 = vst [vmem:[%s201 + $0x3c0] sm:$0xff] %v1518
      %1647 = vst [vmem:[%s201 + $0x3c8] sm:$0xff] %v1519
      %1648 = vst [vmem:[%s201 + $0x3d0] sm:$0xff] %v1520
      %1649 = vst [vmem:[%s201 + $0x3d8] sm:$0xff] %v1521
      %1650 = vst [vmem:[%s201 + $0x3e0] sm:$0xff] %v1522
      %1651 = vst [vmem:[%s201 + $0x3e8] sm:$0xff] %v1523
      %1652 = vst [vmem:[%s201 + $0x3f0] sm:$0xff] %v1524
      %1653 = vst [vmem:[%s201 + $0x3f8] sm:$0xff] %v1525
      %s1654 = smul.u32 128, %s18
      %p1655 = scmp.lt.s32.totalorder %s17, 3
      %s1656 = scalar_select %p1655, %s17, 3
      %p1657 = scmp.lt.s32.totalorder %s1654, 255
      %s1658 = scalar_select %p1657, %s1654, 255
      %s1659 = smul.addr %s1656, 256
      %s1660 = sadd.s32 %s1658, %s1659
      %s1661 = smul.addr %s1660, 8
      %s1662 = scalar_lea.vmem %s2, %s1661
      // Predicated region
      $region29: #{acgan_generator_forward.17} parent=27 // pred_check
        %p1663 = pneg %p99
      $region30: #{acgan_generator_forward.17} parent=27 // pred_check_branch
        %1665 = sbr.rel (%p1663) target = $region32
      $region31: #{acgan_generator_forward.17} parent=27 // pred_region
        %s1666 = smul.u32 128, %s18
      $region32: #{acgan_generator_forward.17} parent=27 // pred_fallthru
        _
    $region28: #{acgan_generator_forward.17} parent=5 // pred_fallthru
      _
    %p1667 = scmp.le.s32.totalorder 2, %s8
    // Predicated region
    $region33: #{acgan_generator_forward.17} parent=5 // pred_check
      %p1668 = pneg %p1667
    $region34: #{acgan_generator_forward.17} parent=5 // pred_check_branch
      %1670 = sbr.rel (%p1668) target = $region36
    $region35: #{acgan_generator_forward.17} parent=5 // pred_region
      %s1671 = ssub.s32 %s8, 2
      // Predicated region
      $region37: #{acgan_generator_forward.17} parent=35 // pred_check
        %p1672 = pneg %p105
      $region38: #{acgan_generator_forward.17} parent=35 // pred_check_branch
        %1674 = sbr.rel (%p1672) target = $region40
      $region39: #{acgan_generator_forward.17} parent=35 // pred_region
        %s1675 = smul.u32 128, %s20
        %p1676 = scmp.lt.s32.totalorder %s19, 3
        %s1677 = scalar_select %p1676, %s19, 3
        %p1678 = scmp.lt.s32.totalorder %s1675, 255
        %s1679 = scalar_select %p1678, %s1675, 255
        %s1680 = smul.addr %s1677, 256
        %s1681 = sadd.s32 %s1679, %s1680
        %s1682 = smul.addr %s1681, 8
        %s1683 = scalar_lea.vmem %s2, %s1682
      $region40: #{acgan_generator_forward.17} parent=35 // pred_fallthru
        _
    $region36: #{acgan_generator_forward.17} parent=5 // pred_fallthru
      _
  $region6: #{acgan_generator_forward.17} parent=0 // loop_footer
    %s12 = sadd.s32 1, %s8
  $region7: #{acgan_generator_forward.17} parent=0 // loop_footer_branch
    %7 = sbr.rel target = $region3
  $region8: #{acgan_generator_forward.17} parent=0 // loop_exit
    _

</llo_original>
